<compile_context>
chip_gen: v7x
topology: tpu7x:2x2x1
jax: 0.10.0
libtpu: 0.0.40
codegen_flags: <defaults>
</compile_context>

<pallas_src>
import functools

import jax
import jax.numpy as jnp
from jax import lax
from jax.experimental import pallas as pl
from jax.experimental.pallas import tpu as pltpu

MAX_GROUPS = 8                       # K  (torch default is 16; small config)
NUM_INIT_GROUPS = 8 * MAX_GROUPS     # G0 = 8 * max_groups, as in the module
FEAT_DIM = 64                        # synthetic feature-extractor output dim
KMEANS_ITERS = 10                    # Lloyd iterations inside the kernel


# --------------------------------------------------------------------------- #
# KMeans (Lloyd) helper, traced inside kernel A's epilogue                     #
# --------------------------------------------------------------------------- #
def _kmeans_onehot(features):
    """Lloyd's algorithm on (G0, D) f32 features -> (G0, K) f32 one-hot labels."""
    G0, K, D = NUM_INIT_GROUPS, MAX_GROUPS, FEAT_DIM
    kid = lax.broadcasted_iota(jnp.int32, (G0, K), 1)      # (G0, K)
    ones_g1 = jnp.ones((G0, 1), jnp.float32)
    ones_1d = jnp.ones((1, D), jnp.float32)

    def assign_labels(centroids):
        # argmin_k ||f - c_k||^2  ==  argmin_k (||c_k||^2 - 2 f.c_k)
        fc = lax.dot_general(features, centroids,
                             (((1,), (1,)), ((), ())),
                             preferred_element_type=jnp.float32)     # (G0, K)
        c2 = lax.dot_general(ones_1d, centroids * centroids,
                             (((1,), (1,)), ((), ())),
                             preferred_element_type=jnp.float32)     # (1, K)
        dist = c2 - 2.0 * fc                                         # (G0, K)
        dmin = jnp.min(dist, axis=1, keepdims=True)                  # (G0, 1)
        # first (lowest k) index achieving the minimum
        return jnp.min(jnp.where(dist <= dmin, kid, K),
                       axis=1, keepdims=True)                        # (G0, 1)

    # TODO(synk): deterministic init (stand-in for sklearn KMeans' k-means++).
    centroids = features[:K, :]                                      # (K, D)

    for _ in range(KMEANS_ITERS):                 # static unroll (short trip count)
        labels = assign_labels(centroids)                            # (G0, 1)
        a = (kid == labels).astype(jnp.float32)                      # (G0, K)
        sums = lax.dot_general(a, features, (((0,), (0,)), ((), ())),
                               preferred_element_type=jnp.float32)   # (K, D)
        counts = lax.dot_general(a, ones_g1, (((0,), (0,)), ((), ())),
                                 preferred_element_type=jnp.float32)  # (K, 1)
        centroids = jnp.where(counts > 0.5,
                              sums / jnp.maximum(counts, 1.0),
                              centroids)

    labels = assign_labels(centroids)                                # (G0, 1)
    return (kid == labels).astype(jnp.float32)                       # (G0, K)


# --------------------------------------------------------------------------- #
# Kernel A: per-tile masked-feature accumulation + fused KMeans epilogue       #
#   feat[g,d] += sum_{hw in tile} mask[g,hw] * (sum_c img[c,hw]*W[c,d,hw])     #
#   at t == T-1: assign = one_hot(kmeans(feat))                                #
# --------------------------------------------------------------------------- #
def _features_kmeans_kernel(segs_ref, img_ref, w_ref, assign_ref, feat_acc,
                            *, thw, w_resident):
    G0 = NUM_INIT_GROUPS
    t = pl.program_id(1)

    @pl.when(t == 0)
    def _():
        feat_acc[...] = jnp.zeros_like(feat_acc)

    segs = segs_ref[0]                                   # (1, THW) int32
    img_bf = img_ref[0].astype(jnp.bfloat16)             # (C, THW)
    C = img_bf.shape[0]

    if w_resident:
        # Full bf16 w_feat lives in VMEM (fetched once, constant index_map);
        # slice the current tile with an aligned dynamic slice.
        start = pl.multiple_of(t * thw, thw)

        def w_slab(c):
            return w_ref[c, :, pl.ds(start, thw)]        # (D, THW) bf16
    else:
        def w_slab(c):
            return w_ref[c]                              # (D, THW) bf16

    # m[d, hw] = sum_c img[c,hw] * W[c,d,hw] — bf16 VPU multiplies, f32
    # accumulation, unrolled over C; never materializes a (C,D,THW) temp.
    m = (img_bf[0:1, :] * w_slab(0)).astype(jnp.float32)          # (D, THW)
    for c in range(1, C):
        m = m + (img_bf[c:c + 1, :] * w_slab(c)).astype(jnp.float32)
    m_bf = m.astype(jnp.bfloat16)                                  # (D, THW)

    gid = lax.broadcasted_iota(jnp.int32, (G0, thw), 0)
    masks = (gid == segs).astype(jnp.bfloat16)                     # (G0, THW), exact 0/1

    # feat += masks @ m^T  (bf16 MXU operands, f32 accumulation)
    feat_acc[...] += lax.dot_general(
        masks, m_bf, (((1,), (1,)), ((), ())),
        preferred_element_type=jnp.float32)                        # (G0, D)

    @pl.when(t == pl.num_programs(1) - 1)
    def _():
        assign_ref[0] = _kmeans_onehot(feat_acc[...])              # (G0, K)


# --------------------------------------------------------------------------- #
# Kernel B: regroup + final one-hot per HW tile                                #
#   out[k, hw] = 1  iff  labels[segs[hw]] == k   (one bf16 MXU matmul + cast)  #
# --------------------------------------------------------------------------- #
def _regroup_kernel(assign_ref, segs_ref, out_ref):
    G0 = NUM_INIT_GROUPS

    segs = segs_ref[0]                                   # (1, THW) int32
    thw = segs.shape[-1]
    gid = lax.broadcasted_iota(jnp.int32, (G0, thw), 0)
    masks = (gid == segs).astype(jnp.bfloat16)           # (G0, THW), exact 0/1
    assign_bf = assign_ref[0].astype(jnp.bfloat16)       # (G0, K),   exact 0/1

    out_f = lax.dot_general(assign_bf, masks,
                            (((0,), (0,)), ((), ())),
                            preferred_element_type=jnp.float32)    # (K, THW)
    out_ref[0] = (out_f > 0.5).astype(jnp.int8)          # exact 0/1 one-hot


def _choose_tiling(hw, requested=None):
    """Pick an HW tile (multiple of 128) and the padded HW it implies."""
    if requested is not None:
        if requested % 128 != 0:
            raise ValueError("tile_hw must be a multiple of 128")
        thw = requested
    else:
        thw = 128
        for cand in (4096, 2048, 1024, 512, 256):
            pad = (-hw) % cand
            if pad == 0 or 8 * pad <= hw:        # accept <= 12.5% padding overhead
                thw = cand
                break
    hw_pad = -(-hw // thw) * thw
    return thw, hw_pad


def neural_quickshift_groups(x, w_feat, *, flat=False, tile_hw=None):
    """x: (B, C, H, W) f32; w_feat: (C, FEAT_DIM, H*W) (bf16 preferred).
    Returns (B, K, H, W) int32 one-hot group map (or (B, H, W) ids if flat)."""
    B, C, H, W = x.shape
    HW = H * W
    K, G0, D = MAX_GROUPS, NUM_INIT_GROUPS, FEAT_DIM
    assert w_feat.shape == (C, D, HW)
    if w_feat.dtype != jnp.bfloat16:
        # Prefer passing w_feat pre-cast to bf16 (static weight) to avoid an
        # in-call HBM round trip of the f32 copy.
        w_feat = w_feat.astype(jnp.bfloat16)

    # --- segmentation glue (host-side skimage op in the torch module) ---------
    # TODO(synk): skimage.segmentation.quickshift has no Pallas/JAX equivalent;
    # a deterministic spatial block segmentation stands in for it here.
    bs = 4
    hh = jnp.arange(H) // bs
    ww = jnp.arange(W) // bs
    wb = (W + bs - 1) // bs
    segs = (hh[:, None] * wb + ww[None, :]).astype(jnp.int32)        # (H, W)
    segs = jnp.broadcast_to(segs, (B, H, W))

    # rescale segment ids into [0, 8*max_groups); guard `>= max_groups`,
    # div_by = (max+1)/num_init_groups — exactly as the torch module.
    seg_max_p1 = segs.reshape(B, -1).max(axis=1) + 1                 # (B,)
    div_by = seg_max_p1.astype(jnp.float32) / float(G0)
    rescaled = jnp.floor(segs.astype(jnp.float32)
                         / div_by[:, None, None]).astype(jnp.int32)
    segs = jnp.where((seg_max_p1 >= K)[:, None, None], rescaled, segs)

    segs_flat = segs.reshape(B, 1, HW)
    img_flat = x.reshape(B, C, HW).astype(jnp.float32)

    THW, HW_pad = _choose_tiling(HW, tile_hw)
    pad = HW_pad - HW
    if pad:
        # pad seg id >= G0 -> all masks zero; padded img/w contribute nothing.
        segs_flat = jnp.pad(segs_flat, ((0, 0), (0, 0), (0, pad)),
                            constant_values=G0)
        img_flat = jnp.pad(img_flat, ((0, 0), (0, 0), (0, pad)))
        w_feat = jnp.pad(w_feat, ((0, 0), (0, 0), (0, pad)))
    T = HW_pad // THW

    # --- w_feat residency plan (biggest operand; avoid re-streaming per b) ----
    w_bytes = C * D * HW_pad * 2                      # bf16
    w_resident = w_bytes <= (20 << 20)                # 2x (dbl-buffer) stays < ~48 MiB
    if w_resident:
        w_spec = pl.BlockSpec((C, D, HW_pad), lambda b, t: (0, 0, 0))
        resident_bytes = 2 * w_bytes
    else:
        # TODO(synk): for very large images w_feat is still streamed once per
        # batch element; a (T, B) grid reorder would reuse each w tile across b.
        w_spec = pl.BlockSpec((C, D, THW), lambda b, t: (0, 0, t))
        resident_bytes = 2 * C * D * THW * 2

    blocks_bytes = 2 * (C + 1) * THW * 4              # img + segs, double buffered
    temps_bytes = (G0 + 3 * D) * THW * 4              # masks + m (f32 + bf16 copies)
    vmem_limit = int(min(100 << 20,
                         max(32 << 20,
                             resident_bytes + blocks_bytes + temps_bytes + (8 << 20))))

    kernel_a = functools.partial(_features_kmeans_kernel,
                                 thw=THW, w_resident=w_resident)

    # ---- A: feature accumulation over HW tiles + fused KMeans epilogue -------
    assign = pl.pallas_call(
        kernel_a,
        out_shape=jax.ShapeDtypeStruct((B, G0, K), jnp.float32),
        grid_spec=pltpu.PrefetchScalarGridSpec(
            num_scalar_prefetch=0,
            grid=(B, T),
            in_specs=[
                pl.BlockSpec((1, 1, THW), lambda b, t: (b, 0, t)),
                pl.BlockSpec((1, C, THW), lambda b, t: (b, 0, t)),
                w_spec,
            ],
            out_specs=pl.BlockSpec((1, G0, K), lambda b, t: (b, 0, 0)),
            scratch_shapes=[pltpu.VMEM((G0, D), jnp.float32)],
        ),
        compiler_params=pltpu.CompilerParams(
            dimension_semantics=("parallel", "arbitrary"),
            vmem_limit_bytes=vmem_limit),
    )(segs_flat, img_flat, w_feat)

    # ---- B: regroup + one-hot emission per HW tile (int8 writeback) ----------
    onehot_i8 = pl.pallas_call(
        _regroup_kernel,
        out_shape=jax.ShapeDtypeStruct((B, K, HW_pad), jnp.int8),
        grid_spec=pltpu.PrefetchScalarGridSpec(
            num_scalar_prefetch=0,
            grid=(B, T),
            in_specs=[
                pl.BlockSpec((1, G0, K), lambda b, t: (b, 0, 0)),
                pl.BlockSpec((1, 1, THW), lambda b, t: (b, 0, t)),
            ],
            out_specs=pl.BlockSpec((1, K, THW), lambda b, t: (b, 0, t)),
        ),
        compiler_params=pltpu.CompilerParams(
            dimension_semantics=("parallel", "parallel")),
    )(assign, segs_flat)

    one_hot = onehot_i8[:, :, :HW].astype(jnp.int32).reshape(B, K, H, W)
    if flat:
        return jnp.argmax(one_hot, axis=1)       # (B, H, W) group ids
    return one_hot                               # F.one_hot(...).permute(0,3,1,2)


if __name__ == "__main__":
    B, C, H, W = 2, 3, 16, 16
    key = jax.random.PRNGKey(0)
    kx, kw = jax.random.split(key)
    x = jax.random.uniform(kx, (B, C, H, W), dtype=jnp.float32)
    # deterministic synthetic feature-extractor weights (stand-in for resnet18),
    # already in the lane-dense (C, FEAT_DIM, H*W) layout.
    w_feat = (jax.random.normal(kw, (C, FEAT_DIM, H * W), dtype=jnp.float32)
              * (1.0 / jnp.sqrt(C * H * W)))
    # bf16 cast hoisted out of the jitted call (static weight).
    w_feat_bf16 = w_feat.astype(jnp.bfloat16)

    fn = jax.jit(neural_quickshift_groups)
    out = jax.block_until_ready(fn(x, w_feat_bf16))

    assert out.shape == (B, MAX_GROUPS, H, W)
    assert out.dtype == jnp.int32
    # every pixel belongs to exactly one group (valid one-hot map)
    assert bool(jnp.all(out.sum(axis=1) == 1))
    # pixels within the same segment must land in the same group
    ids = jnp.argmax(out, axis=1).reshape(B, H // 4, 4, W // 4, 4)
    assert bool(jnp.all(ids == ids[:, :, :1, :, :1]))
    print("KERNEL_OK")
</pallas_src>

<mosaic_0001>
module attributes {stable_mosaic.version = 11 : i64} {
  func.func @_regroup_kernel(%arg0: i32, %arg1: i32, %arg2: memref<1x64x8xf32, #tpu.memory_space<vmem>>, %arg3: memref<1x1x256xi32, #tpu.memory_space<vmem>>, %arg4: memref<1x8x256xi8, #tpu.memory_space<vmem>>) attributes {dimension_semantics = [#tpu.dimension_semantics<parallel>, #tpu.dimension_semantics<parallel>], iteration_bounds = array<i64: 2, 1>, scalar_prefetch = 0 : i64, scratch_operands = 0 : i64, tpu.core_type = #tpu.core_type<tc>, window_params = [{transform_indices = @transform_0, window_bounds = array<i64: 1, 64, 8>}, {transform_indices = @transform_1, window_bounds = array<i64: 1, 1, 256>}, {transform_indices = @transform_2, window_bounds = array<i64: 1, 8, 256>}]} {
    %c0 = arith.constant 0 : index
    %c0_0 = arith.constant 0 : index
    %c0_1 = arith.constant 0 : index
    %0 = vector.load %arg3[%c0, %c0_0, %c0_1] : memref<1x1x256xi32, #tpu.memory_space<vmem>>, vector<1x1x256xi32>
    %1 = vector.shape_cast %0 : vector<1x1x256xi32> to vector<1x256xi32>
    %2 = tpu.iota {dimensions = array<i32: 0>} : vector<64x256xi32>
    %3 = vector.broadcast %1 : vector<1x256xi32> to vector<64x256xi32>
    %4 = arith.cmpi eq, %2, %3 : vector<64x256xi32>
    %5 = arith.extui %4 : vector<64x256xi1> to vector<64x256xi32>
    %6 = arith.sitofp %5 : vector<64x256xi32> to vector<64x256xf32>
    %7 = arith.truncf %6 : vector<64x256xf32> to vector<64x256xbf16>
    %c0_2 = arith.constant 0 : index
    %c0_3 = arith.constant 0 : index
    %c0_4 = arith.constant 0 : index
    %8 = vector.load %arg2[%c0_2, %c0_3, %c0_4] : memref<1x64x8xf32, #tpu.memory_space<vmem>>, vector<1x64x8xf32>
    %9 = vector.shape_cast %8 : vector<1x64x8xf32> to vector<64x8xf32>
    %10 = arith.truncf %9 : vector<64x8xf32> to vector<64x8xbf16>
    %cst = arith.constant dense<0.000000e+00> : vector<8x256xf32>
    %11 = tpu.matmul %10, %7, %cst {dimension_numbers = #tpu.dot_dimension_numbers<[0], [0], [1], [1], [0, 1, 1, 1], [], []>} : vector<64x8xbf16>, vector<64x256xbf16>, vector<8x256xf32> -> vector<8x256xf32>
    %cst_5 = arith.constant 5.000000e-01 : f32
    %12 = vector.broadcast %cst_5 : f32 to vector<8x256xf32>
    %13 = arith.cmpf ogt, %11, %12 : vector<8x256xf32>
    %14 = arith.extui %13 : vector<8x256xi1> to vector<8x256xi8>
    %c0_6 = arith.constant 0 : index
    %c0_7 = arith.constant 0 : index
    %c0_8 = arith.constant 0 : index
    %15 = vector.load %arg4[%c0_6, %c0_7, %c0_8] : memref<1x8x256xi8, #tpu.memory_space<vmem>>, vector<1x8x256xi8>
    %16 = vector.shape_cast %15 : vector<1x8x256xi8> to vector<8x256xi8>
    %17 = vector.shape_cast %14 : vector<8x256xi8> to vector<1x8x256xi8>
    tpu.vector_store %arg4[%c0_6, %c0_7, %c0_8], %17 {strides = array<i32>} : memref<1x8x256xi8, #tpu.memory_space<vmem>>, vector<1x8x256xi8>,
    return
  }
  func.func @transform_0(%arg0: i32, %arg1: i32) -> (i32, i32, i32) {
    %c0_i32 = arith.constant 0 : i32
    %c0_i32_0 = arith.constant 0 : i32
    %c0_i32_1 = arith.constant 0 : i32
    return %arg0, %c0_i32, %c0_i32_0 : i32, i32, i32
  }
  func.func @transform_1(%arg0: i32, %arg1: i32) -> (i32, i32, i32) {
    %c0_i32 = arith.constant 0 : i32
    %c0_i32_0 = arith.constant 0 : i32
    return %arg0, %c0_i32, %arg1 : i32, i32, i32
  }
  func.func @transform_2(%arg0: i32, %arg1: i32) -> (i32, i32, i32) {
    %c0_i32 = arith.constant 0 : i32
    %c0_i32_0 = arith.constant 0 : i32
    return %arg0, %c0_i32, %arg1 : i32, i32, i32
  }
}

module attributes {stable_mosaic.version = 11 : i64} {
  func.func @_features_kmeans_kernel(%arg0: i32, %arg1: i32, %arg2: memref<1x1x256xi32, #tpu.memory_space<vmem>>, %arg3: memref<1x3x256xf32, #tpu.memory_space<vmem>>, %arg4: memref<3x64x256xbf16, #tpu.memory_space<vmem>>, %arg5: memref<1x64x8xf32, #tpu.memory_space<vmem>>, %arg6: memref<64x64xf32, #tpu.memory_space<vmem>>) attributes {dimension_semantics = [#tpu.dimension_semantics<parallel>, #tpu.dimension_semantics<arbitrary>], iteration_bounds = array<i64: 2, 1>, scalar_prefetch = 0 : i64, scratch_operands = 1 : i64, tpu.core_type = #tpu.core_type<tc>, window_params = [{transform_indices = @transform_0, window_bounds = array<i64: 1, 1, 256>}, {transform_indices = @transform_1, window_bounds = array<i64: 1, 3, 256>}, {pipeline_mode = #tpu.pipeline_mode<synchronous>, transform_indices = @transform_2, window_bounds = array<i64: 3, 64, 256>}, {transform_indices = @transform_3, window_bounds = array<i64: 1, 64, 8>}]} {
    %c0_i32 = arith.constant 0 : i32
    %0 = arith.cmpi eq, %arg1, %c0_i32 : i32
    %1 = arith.extui %0 : i1 to i32
    %c0_i32_0 = arith.constant 0 : i32
    %2 = arith.cmpi ne, %1, %c0_i32_0 : i32
    scf.if %2 {
      %cst_16 = arith.constant 0.000000e+00 : f32
      %47 = vector.broadcast %cst_16 : f32 to vector<64x64xf32>
      %c0_17 = arith.constant 0 : index
      %c0_18 = arith.constant 0 : index
      %48 = vector.load %arg6[%c0_17, %c0_18] : memref<64x64xf32, #tpu.memory_space<vmem>>, vector<64x64xf32>
      tpu.vector_store %arg6[%c0_17, %c0_18], %47 {strides = array<i32>} : memref<64x64xf32, #tpu.memory_space<vmem>>, vector<64x64xf32>,
    } else {
    }
    %c0 = arith.constant 0 : index
    %c0_1 = arith.constant 0 : index
    %c0_2 = arith.constant 0 : index
    %3 = vector.load %arg2[%c0, %c0_1, %c0_2] : memref<1x1x256xi32, #tpu.memory_space<vmem>>, vector<1x1x256xi32>
    %4 = vector.shape_cast %3 : vector<1x1x256xi32> to vector<1x256xi32>
    %c0_3 = arith.constant 0 : index
    %c0_4 = arith.constant 0 : index
    %c0_5 = arith.constant 0 : index
    %5 = vector.load %arg3[%c0_3, %c0_4, %c0_5] : memref<1x3x256xf32, #tpu.memory_space<vmem>>, vector<1x3x256xf32>
    %6 = vector.shape_cast %5 : vector<1x3x256xf32> to vector<3x256xf32>
    %7 = arith.truncf %6 : vector<3x256xf32> to vector<3x256xbf16>
    %c256_i32 = arith.constant 256 : i32
    %8 = arith.muli %arg1, %c256_i32 : i32
    %9 = tpu.assume_multiple %8, 256 : i32
    %10 = vector.extract_strided_slice %7 {offsets = [0, 0], sizes = [1, 256], strides = [1, 1]} : vector<3x256xbf16> to vector<1x256xbf16>
    %c0_6 = arith.constant 0 : index
    %c0_7 = arith.constant 0 : index
    %11 = arith.index_cast %9 : i32 to index
    %12 = vector.load %arg4[%c0_6, %c0_7, %11] : memref<3x64x256xbf16, #tpu.memory_space<vmem>>, vector<1x64x256xbf16>
    %13 = vector.shape_cast %12 : vector<1x64x256xbf16> to vector<64x256xbf16>
    %14 = vector.broadcast %10 : vector<1x256xbf16> to vector<64x256xbf16>
    %15 = arith.mulf %14, %13 : vector<64x256xbf16>
    %16 = arith.extf %15 : vector<64x256xbf16> to vector<64x256xf32>
    %17 = vector.extract_strided_slice %7 {offsets = [1, 0], sizes = [1, 256], strides = [1, 1]} : vector<3x256xbf16> to vector<1x256xbf16>
    %c1 = arith.constant 1 : index
    %c0_8 = arith.constant 0 : index
    %18 = arith.index_cast %9 : i32 to index
    %19 = vector.load %arg4[%c1, %c0_8, %18] : memref<3x64x256xbf16, #tpu.memory_space<vmem>>, vector<1x64x256xbf16>
    %20 = vector.shape_cast %19 : vector<1x64x256xbf16> to vector<64x256xbf16>
    %21 = vector.broadcast %17 : vector<1x256xbf16> to vector<64x256xbf16>
    %22 = arith.mulf %21, %20 : vector<64x256xbf16>
    %23 = arith.extf %22 : vector<64x256xbf16> to vector<64x256xf32>
    %24 = arith.addf %16, %23 : vector<64x256xf32>
    %25 = vector.extract_strided_slice %7 {offsets = [2, 0], sizes = [1, 256], strides = [1, 1]} : vector<3x256xbf16> to vector<1x256xbf16>
    %c2 = arith.constant 2 : index
    %c0_9 = arith.constant 0 : index
    %26 = arith.index_cast %9 : i32 to index
    %27 = vector.load %arg4[%c2, %c0_9, %26] : memref<3x64x256xbf16, #tpu.memory_space<vmem>>, vector<1x64x256xbf16>
    %28 = vector.shape_cast %27 : vector<1x64x256xbf16> to vector<64x256xbf16>
    %29 = vector.broadcast %25 : vector<1x256xbf16> to vector<64x256xbf16>
    %30 = arith.mulf %29, %28 : vector<64x256xbf16>
    %31 = arith.extf %30 : vector<64x256xbf16> to vector<64x256xf32>
    %32 = arith.addf %24, %31 : vector<64x256xf32>
    %33 = arith.truncf %32 : vector<64x256xf32> to vector<64x256xbf16>
    %34 = tpu.iota {dimensions = array<i32: 0>} : vector<64x256xi32>
    %35 = vector.broadcast %4 : vector<1x256xi32> to vector<64x256xi32>
    %36 = arith.cmpi eq, %34, %35 : vector<64x256xi32>
    %37 = arith.extui %36 : vector<64x256xi1> to vector<64x256xi32>
    %38 = arith.sitofp %37 : vector<64x256xi32> to vector<64x256xf32>
    %39 = arith.truncf %38 : vector<64x256xf32> to vector<64x256xbf16>
    %c0_10 = arith.constant 0 : index
    %c0_11 = arith.constant 0 : index
    %40 = vector.load %arg6[%c0_10, %c0_11] : memref<64x64xf32, #tpu.memory_space<vmem>>, vector<64x64xf32>
    %cst = arith.constant dense<0.000000e+00> : vector<64x64xf32>
    %41 = tpu.matmul %39, %33, %cst {dimension_numbers = #tpu.dot_dimension_numbers<[1], [1], [0], [0], [0, 0, 1, 0], [], []>} : vector<64x256xbf16>, vector<64x256xbf16>, vector<64x64xf32> -> vector<64x64xf32>
    %42 = arith.addf %40, %41 : vector<64x64xf32>
    %c0_12 = arith.constant 0 : index
    %c0_13 = arith.constant 0 : index
    %43 = vector.load %arg6[%c0_12, %c0_13] : memref<64x64xf32, #tpu.memory_space<vmem>>, vector<64x64xf32>
    tpu.vector_store %arg6[%c0_12, %c0_13], %42 {strides = array<i32>} : memref<64x64xf32, #tpu.memory_space<vmem>>, vector<64x64xf32>,
    %c0_i32_14 = arith.constant 0 : i32
    %44 = arith.cmpi eq, %arg1, %c0_i32_14 : i32
    %45 = arith.extui %44 : i1 to i32
    %c0_i32_15 = arith.constant 0 : i32
    %46 = arith.cmpi ne, %45, %c0_i32_15 : i32
    scf.if %46 {
      %c0_16 = arith.constant 0 : index
      %c0_17 = arith.constant 0 : index
      %47 = vector.load %arg6[%c0_16, %c0_17] : memref<64x64xf32, #tpu.memory_space<vmem>>, vector<64x64xf32>
      %48 = tpu.iota {dimensions = array<i32: 1>} : vector<64x8xi32>
      %cst_18 = arith.constant 1.000000e+00 : f32
      %49 = vector.broadcast %cst_18 : f32 to vector<64x1xf32>
      %cst_19 = arith.constant 1.000000e+00 : f32
      %50 = vector.broadcast %cst_19 : f32 to vector<1x64xf32>
      %51 = vector.extract_strided_slice %47 {offsets = [0, 0], sizes = [8, 64], strides = [1, 1]} : vector<64x64xf32> to vector<8x64xf32>
      %cst_20 = arith.constant dense<0.000000e+00> : vector<64x8xf32>
      %52 = tpu.matmul %47, %51, %cst_20 {dimension_numbers = #tpu.dot_dimension_numbers<[1], [1], [0], [0], [0, 0, 1, 0], [], []>} : vector<64x64xf32>, vector<8x64xf32>, vector<64x8xf32> -> vector<64x8xf32>
      %53 = arith.mulf %51, %51 : vector<8x64xf32>
      %cst_21 = arith.constant dense<0.000000e+00> : vector<1x8xf32>
      %54 = tpu.matmul %50, %53, %cst_21 {dimension_numbers = #tpu.dot_dimension_numbers<[1], [1], [0], [0], [0, 0, 1, 0], [], []>} : vector<1x64xf32>, vector<8x64xf32>, vector<1x8xf32> -> vector<1x8xf32>
      %cst_22 = arith.constant 2.000000e+00 : f32
      %55 = vector.broadcast %cst_22 : f32 to vector<64x8xf32>
      %56 = arith.mulf %55, %52 : vector<64x8xf32>
      %57 = vector.broadcast %54 : vector<1x8xf32> to vector<64x8xf32>
      %58 = arith.subf %57, %56 : vector<64x8xf32>
      %cst_23 = arith.constant dense<0x7F800000> : vector<64xf32>
      %59 = vector.multi_reduction <minimumf>, %58, %cst_23 [1] : vector<64x8xf32> to vector<64xf32>
      %60 = vector.shape_cast %59 : vector<64xf32> to vector<64x1xf32>
      %61 = vector.broadcast %60 : vector<64x1xf32> to vector<64x8xf32>
      %62 = arith.cmpf ole, %58, %61 : vector<64x8xf32>
      %c8_i32 = arith.constant 8 : i32
      %63 = vector.broadcast %c8_i32 : i32 to vector<64x8xi32>
      %64 = arith.select %62, %48, %63 : vector<64x8xi1>, vector<64x8xi32>
      %cst_24 = arith.constant dense<2147483647> : vector<64xi32>
      %65 = vector.multi_reduction <minsi>, %64, %cst_24 [1] : vector<64x8xi32> to vector<64xi32>
      %66 = vector.shape_cast %65 : vector<64xi32> to vector<64x1xi32>
      %67 = vector.broadcast %66 : vector<64x1xi32> to vector<64x8xi32>
      %68 = arith.cmpi eq, %48, %67 : vector<64x8xi32>
      %69 = arith.extui %68 : vector<64x8xi1> to vector<64x8xi32>
      %70 = arith.sitofp %69 : vector<64x8xi32> to vector<64x8xf32>
      %cst_25 = arith.constant dense<0.000000e+00> : vector<8x64xf32>
      %71 = tpu.matmul %70, %47, %cst_25 {dimension_numbers = #tpu.dot_dimension_numbers<[0], [0], [1], [1], [0, 1, 1, 1], [], []>} : vector<64x8xf32>, vector<64x64xf32>, vector<8x64xf32> -> vector<8x64xf32>
      %cst_26 = arith.constant dense<0.000000e+00> : vector<8x1xf32>
      %72 = tpu.matmul %70, %49, %cst_26 {dimension_numbers = #tpu.dot_dimension_numbers<[0], [0], [1], [1], [0, 1, 1, 1], [], []>} : vector<64x8xf32>, vector<64x1xf32>, vector<8x1xf32> -> vector<8x1xf32>
      %cst_27 = arith.constant 5.000000e-01 : f32
      %73 = vector.broadcast %cst_27 : f32 to vector<8x1xf32>
      %74 = arith.cmpf ogt, %72, %73 : vector<8x1xf32>
      %cst_28 = arith.constant 1.000000e+00 : f32
      %75 = vector.broadcast %cst_28 : f32 to vector<8x1xf32>
      %76 = arith.maximumf %72, %75 : vector<8x1xf32>
      %77 = vector.broadcast %76 : vector<8x1xf32> to vector<8x64xf32>
      %78 = arith.divf %71, %77 : vector<8x64xf32>
      %79 = vector.shape_cast %74 : vector<8x1xi1> to vector<8x1xi1>
      %80 = vector.broadcast %79 : vector<8x1xi1> to vector<8x64xi1>
      %81 = arith.select %80, %78, %51 : vector<8x64xi1>, vector<8x64xf32>
      %cst_29 = arith.constant dense<0.000000e+00> : vector<64x8xf32>
      %82 = tpu.matmul %47, %81, %cst_29 {dimension_numbers = #tpu.dot_dimension_numbers<[1], [1], [0], [0], [0, 0, 1, 0], [], []>} : vector<64x64xf32>, vector<8x64xf32>, vector<64x8xf32> -> vector<64x8xf32>
      %83 = arith.mulf %81, %81 : vector<8x64xf32>
      %cst_30 = arith.constant dense<0.000000e+00> : vector<1x8xf32>
      %84 = tpu.matmul %50, %83, %cst_30 {dimension_numbers = #tpu.dot_dimension_numbers<[1], [1], [0], [0], [0, 0, 1, 0], [], []>} : vector<1x64xf32>, vector<8x64xf32>, vector<1x8xf32> -> vector<1x8xf32>
      %cst_31 = arith.constant 2.000000e+00 : f32
      %85 = vector.broadcast %cst_31 : f32 to vector<64x8xf32>
      %86 = arith.mulf %85, %82 : vector<64x8xf32>
      %87 = vector.broadcast %84 : vector<1x8xf32> to vector<64x8xf32>
      %88 = arith.subf %87, %86 : vector<64x8xf32>
      %cst_32 = arith.constant dense<0x7F800000> : vector<64xf32>
      %89 = vector.multi_reduction <minimumf>, %88, %cst_32 [1] : vector<64x8xf32> to vector<64xf32>
      %90 = vector.shape_cast %89 : vector<64xf32> to vector<64x1xf32>
      %91 = vector.broadcast %90 : vector<64x1xf32> to vector<64x8xf32>
      %92 = arith.cmpf ole, %88, %91 : vector<64x8xf32>
      %c8_i32_33 = arith.constant 8 : i32
      %93 = vector.broadcast %c8_i32_33 : i32 to vector<64x8xi32>
      %94 = arith.select %92, %48, %93 : vector<64x8xi1>, vector<64x8xi32>
      %cst_34 = arith.constant dense<2147483647> : vector<64xi32>
      %95 = vector.multi_reduction <minsi>, %94, %cst_34 [1] : vector<64x8xi32> to vector<64xi32>
      %96 = vector.shape_cast %95 : vector<64xi32> to vector<64x1xi32>
      %97 = vector.broadcast %96 : vector<64x1xi32> to vector<64x8xi32>
      %98 = arith.cmpi eq, %48, %97 : vector<64x8xi32>
      %99 = arith.extui %98 : vector<64x8xi1> to vector<64x8xi32>
      %100 = arith.sitofp %99 : vector<64x8xi32> to vector<64x8xf32>
      %cst_35 = arith.constant dense<0.000000e+00> : vector<8x64xf32>
      %101 = tpu.matmul %100, %47, %cst_35 {dimension_numbers = #tpu.dot_dimension_numbers<[0], [0], [1], [1], [0, 1, 1, 1], [], []>} : vector<64x8xf32>, vector<64x64xf32>, vector<8x64xf32> -> vector<8x64xf32>
      %cst_36 = arith.constant dense<0.000000e+00> : vector<8x1xf32>
      %102 = tpu.matmul %100, %49, %cst_36 {dimension_numbers = #tpu.dot_dimension_numbers<[0], [0], [1], [1], [0, 1, 1, 1], [], []>} : vector<64x8xf32>, vector<64x1xf32>, vector<8x1xf32> -> vector<8x1xf32>
      %cst_37 = arith.constant 5.000000e-01 : f32
      %103 = vector.broadcast %cst_37 : f32 to vector<8x1xf32>
      %104 = arith.cmpf ogt, %102, %103 : vector<8x1xf32>
      %cst_38 = arith.constant 1.000000e+00 : f32
      %105 = vector.broadcast %cst_38 : f32 to vector<8x1xf32>
      %106 = arith.maximumf %102, %105 : vector<8x1xf32>
      %107 = vector.broadcast %106 : vector<8x1xf32> to vector<8x64xf32>
      %108 = arith.divf %101, %107 : vector<8x64xf32>
      %109 = vector.shape_cast %104 : vector<8x1xi1> to vector<8x1xi1>
      %110 = vector.broadcast %109 : vector<8x1xi1> to vector<8x64xi1>
      %111 = arith.select %110, %108, %81 : vector<8x64xi1>, vector<8x64xf32>
      %cst_39 = arith.constant dense<0.000000e+00> : vector<64x8xf32>
      %112 = tpu.matmul %47, %111, %cst_39 {dimension_numbers = #tpu.dot_dimension_numbers<[1], [1], [0], [0], [0, 0, 1, 0], [], []>} : vector<64x64xf32>, vector<8x64xf32>, vector<64x8xf32> -> vector<64x8xf32>
      %113 = arith.mulf %111, %111 : vector<8x64xf32>
      %cst_40 = arith.constant dense<0.000000e+00> : vector<1x8xf32>
      %114 = tpu.matmul %50, %113, %cst_40 {dimension_numbers = #tpu.dot_dimension_numbers<[1], [1], [0], [0], [0, 0, 1, 0], [], []>} : vector<1x64xf32>, vector<8x64xf32>, vector<1x8xf32> -> vector<1x8xf32>
      %cst_41 = arith.constant 2.000000e+00 : f32
      %115 = vector.broadcast %cst_41 : f32 to vector<64x8xf32>
      %116 = arith.mulf %115, %112 : vector<64x8xf32>
      %117 = vector.broadcast %114 : vector<1x8xf32> to vector<64x8xf32>
      %118 = arith.subf %117, %116 : vector<64x8xf32>
      %cst_42 = arith.constant dense<0x7F800000> : vector<64xf32>
      %119 = vector.multi_reduction <minimumf>, %118, %cst_42 [1] : vector<64x8xf32> to vector<64xf32>
      %120 = vector.shape_cast %119 : vector<64xf32> to vector<64x1xf32>
      %121 = vector.broadcast %120 : vector<64x1xf32> to vector<64x8xf32>
      %122 = arith.cmpf ole, %118, %121 : vector<64x8xf32>
      %c8_i32_43 = arith.constant 8 : i32
      %123 = vector.broadcast %c8_i32_43 : i32 to vector<64x8xi32>
      %124 = arith.select %122, %48, %123 : vector<64x8xi1>, vector<64x8xi32>
      %cst_44 = arith.constant dense<2147483647> : vector<64xi32>
      %125 = vector.multi_reduction <minsi>, %124, %cst_44 [1] : vector<64x8xi32> to vector<64xi32>
      %126 = vector.shape_cast %125 : vector<64xi32> to vector<64x1xi32>
      %127 = vector.broadcast %126 : vector<64x1xi32> to vector<64x8xi32>
      %128 = arith.cmpi eq, %48, %127 : vector<64x8xi32>
      %129 = arith.extui %128 : vector<64x8xi1> to vector<64x8xi32>
      %130 = arith.sitofp %129 : vector<64x8xi32> to vector<64x8xf32>
      %cst_45 = arith.constant dense<0.000000e+00> : vector<8x64xf32>
      %131 = tpu.matmul %130, %47, %cst_45 {dimension_numbers = #tpu.dot_dimension_numbers<[0], [0], [1], [1], [0, 1, 1, 1], [], []>} : vector<64x8xf32>, vector<64x64xf32>, vector<8x64xf32> -> vector<8x64xf32>
      %cst_46 = arith.constant dense<0.000000e+00> : vector<8x1xf32>
      %132 = tpu.matmul %130, %49, %cst_46 {dimension_numbers = #tpu.dot_dimension_numbers<[0], [0], [1], [1], [0, 1, 1, 1], [], []>} : vector<64x8xf32>, vector<64x1xf32>, vector<8x1xf32> -> vector<8x1xf32>
      %cst_47 = arith.constant 5.000000e-01 : f32
      %133 = vector.broadcast %cst_47 : f32 to vector<8x1xf32>
      %134 = arith.cmpf ogt, %132, %133 : vector<8x1xf32>
      %cst_48 = arith.constant 1.000000e+00 : f32
      %135 = vector.broadcast %cst_48 : f32 to vector<8x1xf32>
      %136 = arith.maximumf %132, %135 : vector<8x1xf32>
      %137 = vector.broadcast %136 : vector<8x1xf32> to vector<8x64xf32>
      %138 = arith.divf %131, %137 : vector<8x64xf32>
      %139 = vector.shape_cast %134 : vector<8x1xi1> to vector<8x1xi1>
      %140 = vector.broadcast %139 : vector<8x1xi1> to vector<8x64xi1>
      %141 = arith.select %140, %138, %111 : vector<8x64xi1>, vector<8x64xf32>
      %cst_49 = arith.constant dense<0.000000e+00> : vector<64x8xf32>
      %142 = tpu.matmul %47, %141, %cst_49 {dimension_numbers = #tpu.dot_dimension_numbers<[1], [1], [0], [0], [0, 0, 1, 0], [], []>} : vector<64x64xf32>, vector<8x64xf32>, vector<64x8xf32> -> vector<64x8xf32>
      %143 = arith.mulf %141, %141 : vector<8x64xf32>
      %cst_50 = arith.constant dense<0.000000e+00> : vector<1x8xf32>
      %144 = tpu.matmul %50, %143, %cst_50 {dimension_numbers = #tpu.dot_dimension_numbers<[1], [1], [0], [0], [0, 0, 1, 0], [], []>} : vector<1x64xf32>, vector<8x64xf32>, vector<1x8xf32> -> vector<1x8xf32>
      %cst_51 = arith.constant 2.000000e+00 : f32
      %145 = vector.broadcast %cst_51 : f32 to vector<64x8xf32>
      %146 = arith.mulf %145, %142 : vector<64x8xf32>
      %147 = vector.broadcast %144 : vector<1x8xf32> to vector<64x8xf32>
      %148 = arith.subf %147, %146 : vector<64x8xf32>
      %cst_52 = arith.constant dense<0x7F800000> : vector<64xf32>
      %149 = vector.multi_reduction <minimumf>, %148, %cst_52 [1] : vector<64x8xf32> to vector<64xf32>
      %150 = vector.shape_cast %149 : vector<64xf32> to vector<64x1xf32>
      %151 = vector.broadcast %150 : vector<64x1xf32> to vector<64x8xf32>
      %152 = arith.cmpf ole, %148, %151 : vector<64x8xf32>
      %c8_i32_53 = arith.constant 8 : i32
      %153 = vector.broadcast %c8_i32_53 : i32 to vector<64x8xi32>
      %154 = arith.select %152, %48, %153 : vector<64x8xi1>, vector<64x8xi32>
      %cst_54 = arith.constant dense<2147483647> : vector<64xi32>
      %155 = vector.multi_reduction <minsi>, %154, %cst_54 [1] : vector<64x8xi32> to vector<64xi32>
      %156 = vector.shape_cast %155 : vector<64xi32> to vector<64x1xi32>
      %157 = vector.broadcast %156 : vector<64x1xi32> to vector<64x8xi32>
      %158 = arith.cmpi eq, %48, %157 : vector<64x8xi32>
      %159 = arith.extui %158 : vector<64x8xi1> to vector<64x8xi32>
      %160 = arith.sitofp %159 : vector<64x8xi32> to vector<64x8xf32>
      %cst_55 = arith.constant dense<0.000000e+00> : vector<8x64xf32>
      %161 = tpu.matmul %160, %47, %cst_55 {dimension_numbers = #tpu.dot_dimension_numbers<[0], [0], [1], [1], [0, 1, 1, 1], [], []>} : vector<64x8xf32>, vector<64x64xf32>, vector<8x64xf32> -> vector<8x64xf32>
      %cst_56 = arith.constant dense<0.000000e+00> : vector<8x1xf32>
      %162 = tpu.matmul %160, %49, %cst_56 {dimension_numbers = #tpu.dot_dimension_numbers<[0], [0], [1], [1], [0, 1, 1, 1], [], []>} : vector<64x8xf32>, vector<64x1xf32>, vector<8x1xf32> -> vector<8x1xf32>
      %cst_57 = arith.constant 5.000000e-01 : f32
      %163 = vector.broadcast %cst_57 : f32 to vector<8x1xf32>
      %164 = arith.cmpf ogt, %162, %163 : vector<8x1xf32>
      %cst_58 = arith.constant 1.000000e+00 : f32
      %165 = vector.broadcast %cst_58 : f32 to vector<8x1xf32>
      %166 = arith.maximumf %162, %165 : vector<8x1xf32>
      %167 = vector.broadcast %166 : vector<8x1xf32> to vector<8x64xf32>
      %168 = arith.divf %161, %167 : vector<8x64xf32>
      %169 = vector.shape_cast %164 : vector<8x1xi1> to vector<8x1xi1>
      %170 = vector.broadcast %169 : vector<8x1xi1> to vector<8x64xi1>
      %171 = arith.select %170, %168, %141 : vector<8x64xi1>, vector<8x64xf32>
      %cst_59 = arith.constant dense<0.000000e+00> : vector<64x8xf32>
      %172 = tpu.matmul %47, %171, %cst_59 {dimension_numbers = #tpu.dot_dimension_numbers<[1], [1], [0], [0], [0, 0, 1, 0], [], []>} : vector<64x64xf32>, vector<8x64xf32>, vector<64x8xf32> -> vector<64x8xf32>
      %173 = arith.mulf %171, %171 : vector<8x64xf32>
      %cst_60 = arith.constant dense<0.000000e+00> : vector<1x8xf32>
      %174 = tpu.matmul %50, %173, %cst_60 {dimension_numbers = #tpu.dot_dimension_numbers<[1], [1], [0], [0], [0, 0, 1, 0], [], []>} : vector<1x64xf32>, vector<8x64xf32>, vector<1x8xf32> -> vector<1x8xf32>
      %cst_61 = arith.constant 2.000000e+00 : f32
      %175 = vector.broadcast %cst_61 : f32 to vector<64x8xf32>
      %176 = arith.mulf %175, %172 : vector<64x8xf32>
      %177 = vector.broadcast %174 : vector<1x8xf32> to vector<64x8xf32>
      %178 = arith.subf %177, %176 : vector<64x8xf32>
      %cst_62 = arith.constant dense<0x7F800000> : vector<64xf32>
      %179 = vector.multi_reduction <minimumf>, %178, %cst_62 [1] : vector<64x8xf32> to vector<64xf32>
      %180 = vector.shape_cast %179 : vector<64xf32> to vector<64x1xf32>
      %181 = vector.broadcast %180 : vector<64x1xf32> to vector<64x8xf32>
      %182 = arith.cmpf ole, %178, %181 : vector<64x8xf32>
      %c8_i32_63 = arith.constant 8 : i32
      %183 = vector.broadcast %c8_i32_63 : i32 to vector<64x8xi32>
      %184 = arith.select %182, %48, %183 : vector<64x8xi1>, vector<64x8xi32>
      %cst_64 = arith.constant dense<2147483647> : vector<64xi32>
      %185 = vector.multi_reduction <minsi>, %184, %cst_64 [1] : vector<64x8xi32> to vector<64xi32>
      %186 = vector.shape_cast %185 : vector<64xi32> to vector<64x1xi32>
      %187 = vector.broadcast %186 : vector<64x1xi32> to vector<64x8xi32>
      %188 = arith.cmpi eq, %48, %187 : vector<64x8xi32>
      %189 = arith.extui %188 : vector<64x8xi1> to vector<64x8xi32>
      %190 = arith.sitofp %189 : vector<64x8xi32> to vector<64x8xf32>
      %cst_65 = arith.constant dense<0.000000e+00> : vector<8x64xf32>
      %191 = tpu.matmul %190, %47, %cst_65 {dimension_numbers = #tpu.dot_dimension_numbers<[0], [0], [1], [1], [0, 1, 1, 1], [], []>} : vector<64x8xf32>, vector<64x64xf32>, vector<8x64xf32> -> vector<8x64xf32>
      %cst_66 = arith.constant dense<0.000000e+00> : vector<8x1xf32>
      %192 = tpu.matmul %190, %49, %cst_66 {dimension_numbers = #tpu.dot_dimension_numbers<[0], [0], [1], [1], [0, 1, 1, 1], [], []>} : vector<64x8xf32>, vector<64x1xf32>, vector<8x1xf32> -> vector<8x1xf32>
      %cst_67 = arith.constant 5.000000e-01 : f32
      %193 = vector.broadcast %cst_67 : f32 to vector<8x1xf32>
      %194 = arith.cmpf ogt, %192, %193 : vector<8x1xf32>
      %cst_68 = arith.constant 1.000000e+00 : f32
      %195 = vector.broadcast %cst_68 : f32 to vector<8x1xf32>
      %196 = arith.maximumf %192, %195 : vector<8x1xf32>
      %197 = vector.broadcast %196 : vector<8x1xf32> to vector<8x64xf32>
      %198 = arith.divf %191, %197 : vector<8x64xf32>
      %199 = vector.shape_cast %194 : vector<8x1xi1> to vector<8x1xi1>
      %200 = vector.broadcast %199 : vector<8x1xi1> to vector<8x64xi1>
      %201 = arith.select %200, %198, %171 : vector<8x64xi1>, vector<8x64xf32>
      %cst_69 = arith.constant dense<0.000000e+00> : vector<64x8xf32>
      %202 = tpu.matmul %47, %201, %cst_69 {dimension_numbers = #tpu.dot_dimension_numbers<[1], [1], [0], [0], [0, 0, 1, 0], [], []>} : vector<64x64xf32>, vector<8x64xf32>, vector<64x8xf32> -> vector<64x8xf32>
      %203 = arith.mulf %201, %201 : vector<8x64xf32>
      %cst_70 = arith.constant dense<0.000000e+00> : vector<1x8xf32>
      %204 = tpu.matmul %50, %203, %cst_70 {dimension_numbers = #tpu.dot_dimension_numbers<[1], [1], [0], [0], [0, 0, 1, 0], [], []>} : vector<1x64xf32>, vector<8x64xf32>, vector<1x8xf32> -> vector<1x8xf32>
      %cst_71 = arith.constant 2.000000e+00 : f32
      %205 = vector.broadcast %cst_71 : f32 to vector<64x8xf32>
      %206 = arith.mulf %205, %202 : vector<64x8xf32>
      %207 = vector.broadcast %204 : vector<1x8xf32> to vector<64x8xf32>
      %208 = arith.subf %207, %206 : vector<64x8xf32>
      %cst_72 = arith.constant dense<0x7F800000> : vector<64xf32>
      %209 = vector.multi_reduction <minimumf>, %208, %cst_72 [1] : vector<64x8xf32> to vector<64xf32>
      %210 = vector.shape_cast %209 : vector<64xf32> to vector<64x1xf32>
      %211 = vector.broadcast %210 : vector<64x1xf32> to vector<64x8xf32>
      %212 = arith.cmpf ole, %208, %211 : vector<64x8xf32>
      %c8_i32_73 = arith.constant 8 : i32
      %213 = vector.broadcast %c8_i32_73 : i32 to vector<64x8xi32>
      %214 = arith.select %212, %48, %213 : vector<64x8xi1>, vector<64x8xi32>
      %cst_74 = arith.constant dense<2147483647> : vector<64xi32>
      %215 = vector.multi_reduction <minsi>, %214, %cst_74 [1] : vector<64x8xi32> to vector<64xi32>
      %216 = vector.shape_cast %215 : vector<64xi32> to vector<64x1xi32>
      %217 = vector.broadcast %216 : vector<64x1xi32> to vector<64x8xi32>
      %218 = arith.cmpi eq, %48, %217 : vector<64x8xi32>
      %219 = arith.extui %218 : vector<64x8xi1> to vector<64x8xi32>
      %220 = arith.sitofp %219 : vector<64x8xi32> to vector<64x8xf32>
      %cst_75 = arith.constant dense<0.000000e+00> : vector<8x64xf32>
      %221 = tpu.matmul %220, %47, %cst_75 {dimension_numbers = #tpu.dot_dimension_numbers<[0], [0], [1], [1], [0, 1, 1, 1], [], []>} : vector<64x8xf32>, vector<64x64xf32>, vector<8x64xf32> -> vector<8x64xf32>
      %cst_76 = arith.constant dense<0.000000e+00> : vector<8x1xf32>
      %222 = tpu.matmul %220, %49, %cst_76 {dimension_numbers = #tpu.dot_dimension_numbers<[0], [0], [1], [1], [0, 1, 1, 1], [], []>} : vector<64x8xf32>, vector<64x1xf32>, vector<8x1xf32> -> vector<8x1xf32>
      %cst_77 = arith.constant 5.000000e-01 : f32
      %223 = vector.broadcast %cst_77 : f32 to vector<8x1xf32>
      %224 = arith.cmpf ogt, %222, %223 : vector<8x1xf32>
      %cst_78 = arith.constant 1.000000e+00 : f32
      %225 = vector.broadcast %cst_78 : f32 to vector<8x1xf32>
      %226 = arith.maximumf %222, %225 : vector<8x1xf32>
      %227 = vector.broadcast %226 : vector<8x1xf32> to vector<8x64xf32>
      %228 = arith.divf %221, %227 : vector<8x64xf32>
      %229 = vector.shape_cast %224 : vector<8x1xi1> to vector<8x1xi1>
      %230 = vector.broadcast %229 : vector<8x1xi1> to vector<8x64xi1>
      %231 = arith.select %230, %228, %201 : vector<8x64xi1>, vector<8x64xf32>
      %cst_79 = arith.constant dense<0.000000e+00> : vector<64x8xf32>
      %232 = tpu.matmul %47, %231, %cst_79 {dimension_numbers = #tpu.dot_dimension_numbers<[1], [1], [0], [0], [0, 0, 1, 0], [], []>} : vector<64x64xf32>, vector<8x64xf32>, vector<64x8xf32> -> vector<64x8xf32>
      %233 = arith.mulf %231, %231 : vector<8x64xf32>
      %cst_80 = arith.constant dense<0.000000e+00> : vector<1x8xf32>
      %234 = tpu.matmul %50, %233, %cst_80 {dimension_numbers = #tpu.dot_dimension_numbers<[1], [1], [0], [0], [0, 0, 1, 0], [], []>} : vector<1x64xf32>, vector<8x64xf32>, vector<1x8xf32> -> vector<1x8xf32>
      %cst_81 = arith.constant 2.000000e+00 : f32
      %235 = vector.broadcast %cst_81 : f32 to vector<64x8xf32>
      %236 = arith.mulf %235, %232 : vector<64x8xf32>
      %237 = vector.broadcast %234 : vector<1x8xf32> to vector<64x8xf32>
      %238 = arith.subf %237, %236 : vector<64x8xf32>
      %cst_82 = arith.constant dense<0x7F800000> : vector<64xf32>
      %239 = vector.multi_reduction <minimumf>, %238, %cst_82 [1] : vector<64x8xf32> to vector<64xf32>
      %240 = vector.shape_cast %239 : vector<64xf32> to vector<64x1xf32>
      %241 = vector.broadcast %240 : vector<64x1xf32> to vector<64x8xf32>
      %242 = arith.cmpf ole, %238, %241 : vector<64x8xf32>
      %c8_i32_83 = arith.constant 8 : i32
      %243 = vector.broadcast %c8_i32_83 : i32 to vector<64x8xi32>
      %244 = arith.select %242, %48, %243 : vector<64x8xi1>, vector<64x8xi32>
      %cst_84 = arith.constant dense<2147483647> : vector<64xi32>
      %245 = vector.multi_reduction <minsi>, %244, %cst_84 [1] : vector<64x8xi32> to vector<64xi32>
      %246 = vector.shape_cast %245 : vector<64xi32> to vector<64x1xi32>
      %247 = vector.broadcast %246 : vector<64x1xi32> to vector<64x8xi32>
      %248 = arith.cmpi eq, %48, %247 : vector<64x8xi32>
      %249 = arith.extui %248 : vector<64x8xi1> to vector<64x8xi32>
      %250 = arith.sitofp %249 : vector<64x8xi32> to vector<64x8xf32>
      %cst_85 = arith.constant dense<0.000000e+00> : vector<8x64xf32>
      %251 = tpu.matmul %250, %47, %cst_85 {dimension_numbers = #tpu.dot_dimension_numbers<[0], [0], [1], [1], [0, 1, 1, 1], [], []>} : vector<64x8xf32>, vector<64x64xf32>, vector<8x64xf32> -> vector<8x64xf32>
      %cst_86 = arith.constant dense<0.000000e+00> : vector<8x1xf32>
      %252 = tpu.matmul %250, %49, %cst_86 {dimension_numbers = #tpu.dot_dimension_numbers<[0], [0], [1], [1], [0, 1, 1, 1], [], []>} : vector<64x8xf32>, vector<64x1xf32>, vector<8x1xf32> -> vector<8x1xf32>
      %cst_87 = arith.constant 5.000000e-01 : f32
      %253 = vector.broadcast %cst_87 : f32 to vector<8x1xf32>
      %254 = arith.cmpf ogt, %252, %253 : vector<8x1xf32>
      %cst_88 = arith.constant 1.000000e+00 : f32
      %255 = vector.broadcast %cst_88 : f32 to vector<8x1xf32>
      %256 = arith.maximumf %252, %255 : vector<8x1xf32>
      %257 = vector.broadcast %256 : vector<8x1xf32> to vector<8x64xf32>
      %258 = arith.divf %251, %257 : vector<8x64xf32>
      %259 = vector.shape_cast %254 : vector<8x1xi1> to vector<8x1xi1>
      %260 = vector.broadcast %259 : vector<8x1xi1> to vector<8x64xi1>
      %261 = arith.select %260, %258, %231 : vector<8x64xi1>, vector<8x64xf32>
      %cst_89 = arith.constant dense<0.000000e+00> : vector<64x8xf32>
      %262 = tpu.matmul %47, %261, %cst_89 {dimension_numbers = #tpu.dot_dimension_numbers<[1], [1], [0], [0], [0, 0, 1, 0], [], []>} : vector<64x64xf32>, vector<8x64xf32>, vector<64x8xf32> -> vector<64x8xf32>
      %263 = arith.mulf %261, %261 : vector<8x64xf32>
      %cst_90 = arith.constant dense<0.000000e+00> : vector<1x8xf32>
      %264 = tpu.matmul %50, %263, %cst_90 {dimension_numbers = #tpu.dot_dimension_numbers<[1], [1], [0], [0], [0, 0, 1, 0], [], []>} : vector<1x64xf32>, vector<8x64xf32>, vector<1x8xf32> -> vector<1x8xf32>
      %cst_91 = arith.constant 2.000000e+00 : f32
      %265 = vector.broadcast %cst_91 : f32 to vector<64x8xf32>
      %266 = arith.mulf %265, %262 : vector<64x8xf32>
      %267 = vector.broadcast %264 : vector<1x8xf32> to vector<64x8xf32>
      %268 = arith.subf %267, %266 : vector<64x8xf32>
      %cst_92 = arith.constant dense<0x7F800000> : vector<64xf32>
      %269 = vector.multi_reduction <minimumf>, %268, %cst_92 [1] : vector<64x8xf32> to vector<64xf32>
      %270 = vector.shape_cast %269 : vector<64xf32> to vector<64x1xf32>
      %271 = vector.broadcast %270 : vector<64x1xf32> to vector<64x8xf32>
      %272 = arith.cmpf ole, %268, %271 : vector<64x8xf32>
      %c8_i32_93 = arith.constant 8 : i32
      %273 = vector.broadcast %c8_i32_93 : i32 to vector<64x8xi32>
      %274 = arith.select %272, %48, %273 : vector<64x8xi1>, vector<64x8xi32>
      %cst_94 = arith.constant dense<2147483647> : vector<64xi32>
      %275 = vector.multi_reduction <minsi>, %274, %cst_94 [1] : vector<64x8xi32> to vector<64xi32>
      %276 = vector.shape_cast %275 : vector<64xi32> to vector<64x1xi32>
      %277 = vector.broadcast %276 : vector<64x1xi32> to vector<64x8xi32>
      %278 = arith.cmpi eq, %48, %277 : vector<64x8xi32>
      %279 = arith.extui %278 : vector<64x8xi1> to vector<64x8xi32>
      %280 = arith.sitofp %279 : vector<64x8xi32> to vector<64x8xf32>
      %cst_95 = arith.constant dense<0.000000e+00> : vector<8x64xf32>
      %281 = tpu.matmul %280, %47, %cst_95 {dimension_numbers = #tpu.dot_dimension_numbers<[0], [0], [1], [1], [0, 1, 1, 1], [], []>} : vector<64x8xf32>, vector<64x64xf32>, vector<8x64xf32> -> vector<8x64xf32>
      %cst_96 = arith.constant dense<0.000000e+00> : vector<8x1xf32>
      %282 = tpu.matmul %280, %49, %cst_96 {dimension_numbers = #tpu.dot_dimension_numbers<[0], [0], [1], [1], [0, 1, 1, 1], [], []>} : vector<64x8xf32>, vector<64x1xf32>, vector<8x1xf32> -> vector<8x1xf32>
      %cst_97 = arith.constant 5.000000e-01 : f32
      %283 = vector.broadcast %cst_97 : f32 to vector<8x1xf32>
      %284 = arith.cmpf ogt, %282, %283 : vector<8x1xf32>
      %cst_98 = arith.constant 1.000000e+00 : f32
      %285 = vector.broadcast %cst_98 : f32 to vector<8x1xf32>
      %286 = arith.maximumf %282, %285 : vector<8x1xf32>
      %287 = vector.broadcast %286 : vector<8x1xf32> to vector<8x64xf32>
      %288 = arith.divf %281, %287 : vector<8x64xf32>
      %289 = vector.shape_cast %284 : vector<8x1xi1> to vector<8x1xi1>
      %290 = vector.broadcast %289 : vector<8x1xi1> to vector<8x64xi1>
      %291 = arith.select %290, %288, %261 : vector<8x64xi1>, vector<8x64xf32>
      %cst_99 = arith.constant dense<0.000000e+00> : vector<64x8xf32>
      %292 = tpu.matmul %47, %291, %cst_99 {dimension_numbers = #tpu.dot_dimension_numbers<[1], [1], [0], [0], [0, 0, 1, 0], [], []>} : vector<64x64xf32>, vector<8x64xf32>, vector<64x8xf32> -> vector<64x8xf32>
      %293 = arith.mulf %291, %291 : vector<8x64xf32>
      %cst_100 = arith.constant dense<0.000000e+00> : vector<1x8xf32>
      %294 = tpu.matmul %50, %293, %cst_100 {dimension_numbers = #tpu.dot_dimension_numbers<[1], [1], [0], [0], [0, 0, 1, 0], [], []>} : vector<1x64xf32>, vector<8x64xf32>, vector<1x8xf32> -> vector<1x8xf32>
      %cst_101 = arith.constant 2.000000e+00 : f32
      %295 = vector.broadcast %cst_101 : f32 to vector<64x8xf32>
      %296 = arith.mulf %295, %292 : vector<64x8xf32>
      %297 = vector.broadcast %294 : vector<1x8xf32> to vector<64x8xf32>
      %298 = arith.subf %297, %296 : vector<64x8xf32>
      %cst_102 = arith.constant dense<0x7F800000> : vector<64xf32>
      %299 = vector.multi_reduction <minimumf>, %298, %cst_102 [1] : vector<64x8xf32> to vector<64xf32>
      %300 = vector.shape_cast %299 : vector<64xf32> to vector<64x1xf32>
      %301 = vector.broadcast %300 : vector<64x1xf32> to vector<64x8xf32>
      %302 = arith.cmpf ole, %298, %301 : vector<64x8xf32>
      %c8_i32_103 = arith.constant 8 : i32
      %303 = vector.broadcast %c8_i32_103 : i32 to vector<64x8xi32>
      %304 = arith.select %302, %48, %303 : vector<64x8xi1>, vector<64x8xi32>
      %cst_104 = arith.constant dense<2147483647> : vector<64xi32>
      %305 = vector.multi_reduction <minsi>, %304, %cst_104 [1] : vector<64x8xi32> to vector<64xi32>
      %306 = vector.shape_cast %305 : vector<64xi32> to vector<64x1xi32>
      %307 = vector.broadcast %306 : vector<64x1xi32> to vector<64x8xi32>
      %308 = arith.cmpi eq, %48, %307 : vector<64x8xi32>
      %309 = arith.extui %308 : vector<64x8xi1> to vector<64x8xi32>
      %310 = arith.sitofp %309 : vector<64x8xi32> to vector<64x8xf32>
      %cst_105 = arith.constant dense<0.000000e+00> : vector<8x64xf32>
      %311 = tpu.matmul %310, %47, %cst_105 {dimension_numbers = #tpu.dot_dimension_numbers<[0], [0], [1], [1], [0, 1, 1, 1], [], []>} : vector<64x8xf32>, vector<64x64xf32>, vector<8x64xf32> -> vector<8x64xf32>
      %cst_106 = arith.constant dense<0.000000e+00> : vector<8x1xf32>
      %312 = tpu.matmul %310, %49, %cst_106 {dimension_numbers = #tpu.dot_dimension_numbers<[0], [0], [1], [1], [0, 1, 1, 1], [], []>} : vector<64x8xf32>, vector<64x1xf32>, vector<8x1xf32> -> vector<8x1xf32>
      %cst_107 = arith.constant 5.000000e-01 : f32
      %313 = vector.broadcast %cst_107 : f32 to vector<8x1xf32>
      %314 = arith.cmpf ogt, %312, %313 : vector<8x1xf32>
      %cst_108 = arith.constant 1.000000e+00 : f32
      %315 = vector.broadcast %cst_108 : f32 to vector<8x1xf32>
      %316 = arith.maximumf %312, %315 : vector<8x1xf32>
      %317 = vector.broadcast %316 : vector<8x1xf32> to vector<8x64xf32>
      %318 = arith.divf %311, %317 : vector<8x64xf32>
      %319 = vector.shape_cast %314 : vector<8x1xi1> to vector<8x1xi1>
      %320 = vector.broadcast %319 : vector<8x1xi1> to vector<8x64xi1>
      %321 = arith.select %320, %318, %291 : vector<8x64xi1>, vector<8x64xf32>
      %cst_109 = arith.constant dense<0.000000e+00> : vector<64x8xf32>
      %322 = tpu.matmul %47, %321, %cst_109 {dimension_numbers = #tpu.dot_dimension_numbers<[1], [1], [0], [0], [0, 0, 1, 0], [], []>} : vector<64x64xf32>, vector<8x64xf32>, vector<64x8xf32> -> vector<64x8xf32>
      %323 = arith.mulf %321, %321 : vector<8x64xf32>
      %cst_110 = arith.constant dense<0.000000e+00> : vector<1x8xf32>
      %324 = tpu.matmul %50, %323, %cst_110 {dimension_numbers = #tpu.dot_dimension_numbers<[1], [1], [0], [0], [0, 0, 1, 0], [], []>} : vector<1x64xf32>, vector<8x64xf32>, vector<1x8xf32> -> vector<1x8xf32>
      %cst_111 = arith.constant 2.000000e+00 : f32
      %325 = vector.broadcast %cst_111 : f32 to vector<64x8xf32>
      %326 = arith.mulf %325, %322 : vector<64x8xf32>
      %327 = vector.broadcast %324 : vector<1x8xf32> to vector<64x8xf32>
      %328 = arith.subf %327, %326 : vector<64x8xf32>
      %cst_112 = arith.constant dense<0x7F800000> : vector<64xf32>
      %329 = vector.multi_reduction <minimumf>, %328, %cst_112 [1] : vector<64x8xf32> to vector<64xf32>
      %330 = vector.shape_cast %329 : vector<64xf32> to vector<64x1xf32>
      %331 = vector.broadcast %330 : vector<64x1xf32> to vector<64x8xf32>
      %332 = arith.cmpf ole, %328, %331 : vector<64x8xf32>
      %c8_i32_113 = arith.constant 8 : i32
      %333 = vector.broadcast %c8_i32_113 : i32 to vector<64x8xi32>
      %334 = arith.select %332, %48, %333 : vector<64x8xi1>, vector<64x8xi32>
      %cst_114 = arith.constant dense<2147483647> : vector<64xi32>
      %335 = vector.multi_reduction <minsi>, %334, %cst_114 [1] : vector<64x8xi32> to vector<64xi32>
      %336 = vector.shape_cast %335 : vector<64xi32> to vector<64x1xi32>
      %337 = vector.broadcast %336 : vector<64x1xi32> to vector<64x8xi32>
      %338 = arith.cmpi eq, %48, %337 : vector<64x8xi32>
      %339 = arith.extui %338 : vector<64x8xi1> to vector<64x8xi32>
      %340 = arith.sitofp %339 : vector<64x8xi32> to vector<64x8xf32>
      %cst_115 = arith.constant dense<0.000000e+00> : vector<8x64xf32>
      %341 = tpu.matmul %340, %47, %cst_115 {dimension_numbers = #tpu.dot_dimension_numbers<[0], [0], [1], [1], [0, 1, 1, 1], [], []>} : vector<64x8xf32>, vector<64x64xf32>, vector<8x64xf32> -> vector<8x64xf32>
      %cst_116 = arith.constant dense<0.000000e+00> : vector<8x1xf32>
      %342 = tpu.matmul %340, %49, %cst_116 {dimension_numbers = #tpu.dot_dimension_numbers<[0], [0], [1], [1], [0, 1, 1, 1], [], []>} : vector<64x8xf32>, vector<64x1xf32>, vector<8x1xf32> -> vector<8x1xf32>
      %cst_117 = arith.constant 5.000000e-01 : f32
      %343 = vector.broadcast %cst_117 : f32 to vector<8x1xf32>
      %344 = arith.cmpf ogt, %342, %343 : vector<8x1xf32>
      %cst_118 = arith.constant 1.000000e+00 : f32
      %345 = vector.broadcast %cst_118 : f32 to vector<8x1xf32>
      %346 = arith.maximumf %342, %345 : vector<8x1xf32>
      %347 = vector.broadcast %346 : vector<8x1xf32> to vector<8x64xf32>
      %348 = arith.divf %341, %347 : vector<8x64xf32>
      %349 = vector.shape_cast %344 : vector<8x1xi1> to vector<8x1xi1>
      %350 = vector.broadcast %349 : vector<8x1xi1> to vector<8x64xi1>
      %351 = arith.select %350, %348, %321 : vector<8x64xi1>, vector<8x64xf32>
      %cst_119 = arith.constant dense<0.000000e+00> : vector<64x8xf32>
      %352 = tpu.matmul %47, %351, %cst_119 {dimension_numbers = #tpu.dot_dimension_numbers<[1], [1], [0], [0], [0, 0, 1, 0], [], []>} : vector<64x64xf32>, vector<8x64xf32>, vector<64x8xf32> -> vector<64x8xf32>
      %353 = arith.mulf %351, %351 : vector<8x64xf32>
      %cst_120 = arith.constant dense<0.000000e+00> : vector<1x8xf32>
      %354 = tpu.matmul %50, %353, %cst_120 {dimension_numbers = #tpu.dot_dimension_numbers<[1], [1], [0], [0], [0, 0, 1, 0], [], []>} : vector<1x64xf32>, vector<8x64xf32>, vector<1x8xf32> -> vector<1x8xf32>
      %cst_121 = arith.constant 2.000000e+00 : f32
      %355 = vector.broadcast %cst_121 : f32 to vector<64x8xf32>
      %356 = arith.mulf %355, %352 : vector<64x8xf32>
      %357 = vector.broadcast %354 : vector<1x8xf32> to vector<64x8xf32>
      %358 = arith.subf %357, %356 : vector<64x8xf32>
      %cst_122 = arith.constant dense<0x7F800000> : vector<64xf32>
      %359 = vector.multi_reduction <minimumf>, %358, %cst_122 [1] : vector<64x8xf32> to vector<64xf32>
      %360 = vector.shape_cast %359 : vector<64xf32> to vector<64x1xf32>
      %361 = vector.broadcast %360 : vector<64x1xf32> to vector<64x8xf32>
      %362 = arith.cmpf ole, %358, %361 : vector<64x8xf32>
      %c8_i32_123 = arith.constant 8 : i32
      %363 = vector.broadcast %c8_i32_123 : i32 to vector<64x8xi32>
      %364 = arith.select %362, %48, %363 : vector<64x8xi1>, vector<64x8xi32>
      %cst_124 = arith.constant dense<2147483647> : vector<64xi32>
      %365 = vector.multi_reduction <minsi>, %364, %cst_124 [1] : vector<64x8xi32> to vector<64xi32>
      %366 = vector.shape_cast %365 : vector<64xi32> to vector<64x1xi32>
      %367 = vector.broadcast %366 : vector<64x1xi32> to vector<64x8xi32>
      %368 = arith.cmpi eq, %48, %367 : vector<64x8xi32>
      %369 = arith.extui %368 : vector<64x8xi1> to vector<64x8xi32>
      %370 = arith.sitofp %369 : vector<64x8xi32> to vector<64x8xf32>
      %c0_125 = arith.constant 0 : index
      %c0_126 = arith.constant 0 : index
      %c0_127 = arith.constant 0 : index
      %371 = vector.load %arg5[%c0_125, %c0_126, %c0_127] : memref<1x64x8xf32, #tpu.memory_space<vmem>>, vector<1x64x8xf32>
      %372 = vector.shape_cast %371 : vector<1x64x8xf32> to vector<64x8xf32>
      %373 = vector.shape_cast %370 : vector<64x8xf32> to vector<1x64x8xf32>
      tpu.vector_store %arg5[%c0_125, %c0_126, %c0_127], %373 {strides = array<i32>} : memref<1x64x8xf32, #tpu.memory_space<vmem>>, vector<1x64x8xf32>,
    } else {
    }
    return
  }
  func.func @transform_0(%arg0: i32, %arg1: i32) -> (i32, i32, i32) {
    %c0_i32 = arith.constant 0 : i32
    %c0_i32_0 = arith.constant 0 : i32
    return %arg0, %c0_i32, %arg1 : i32, i32, i32
  }
  func.func @transform_1(%arg0: i32, %arg1: i32) -> (i32, i32, i32) {
    %c0_i32 = arith.constant 0 : i32
    %c0_i32_0 = arith.constant 0 : i32
    return %arg0, %c0_i32, %arg1 : i32, i32, i32
  }
  func.func @transform_2(%arg0: i32, %arg1: i32) -> (i32, i32, i32) {
    %c0_i32 = arith.constant 0 : i32
    %c0_i32_0 = arith.constant 0 : i32
    %c0_i32_1 = arith.constant 0 : i32
    %c0_i32_2 = arith.constant 0 : i32
    return %c0_i32, %c0_i32_0, %c0_i32_1 : i32, i32, i32
  }
  func.func @transform_3(%arg0: i32, %arg1: i32) -> (i32, i32, i32) {
    %c0_i32 = arith.constant 0 : i32
    %c0_i32_0 = arith.constant 0 : i32
    %c0_i32_1 = arith.constant 0 : i32
    return %arg0, %c0_i32, %c0_i32_0 : i32, i32, i32
  }
}

</mosaic_0001>

<llo_original>
// kernel: neural_quickshift_groups.3
$region0: #{neural_quickshift_groups.3}
  #allocation0 [shape = 'u32[]', space=smem, size = 0x4, offset = 0x4, fixed_abs, tag = 'smem constant byte address 0x4 - core index']
  #allocation1 [shape = 'u32[144,128]{1,0:T(1,128)}', space=vmem, size = 0x12000, scoped, tag = 'internal scratch']
  %s0 = inlined_call_operand.vmem [shape: f32[2,64,8], index: 0, kind: input, shape index: {}]
  %s1 = inlined_call_operand.vmem [shape: s32[2,1,256], index: 1, kind: input, shape index: {}]
  %s2 = inlined_call_operand.vmem [shape: s8[2,8,256], index: 2, kind: output, shape index: {}]
  %s3 = sld [smem:[#allocation0]]
  $region41: #{neural_quickshift_groups.3} parent=0
    _
  %s5 = ssub.s32 1, %s3
  %s6 = scalar_select 0, %s5, %s3
  loop: start=0, step=1, limit=4
  $region2: #{neural_quickshift_groups.3} parent=0 // loop_pre_header
    _
  $region3: #{neural_quickshift_groups.3} parent=0 // loop_header
    %s8 = sphi 0, %s12
    %p9 = scmp.ge.s32.totalorder %s8, 4
    %s15 = sphi 0, %s27
    %s16 = sphi 0, %s23
    %s17 = sphi 0, %s15
    %s18 = sphi 0, %s16
    %s19 = sphi 0, %s17
    %s20 = sphi 0, %s18
    %s30 = sphi 0, %s32
    %s33 = sphi 0, %s30
    %s34 = sphi 0, %s33
    %s50 = sphi 0, %s34
    %s58 = sphi 0, %s60
    %s61 = sphi 0, %s58
    %s62 = sphi 0, %s61
    %s78 = sphi 0, %s62
    %s86 = sphi 0, %s88
    %s89 = sphi 0, %s86
    %s90 = sphi 0, %s89
    %s106 = sphi 0, %s90
  $region4: #{neural_quickshift_groups.3} parent=0 // loop_header_branch
    %11 = sbr.rel (%p9) target = $region8
  $region5: #{neural_quickshift_groups.3} parent=0 // loop_body
    %s13 = ssub.s32 %s8, 1
    %s14 = ssub.s32 %s8, 2
    %s21 = sadd.s32 1, %s16
    %p22 = scmp.ge.s32.totalorder %s21, 1
    %s23 = scalar_select %p22, 0, %s21
    %s24 = sadd.s32 1, %s15
    %s25 = scalar_select %p22, %s24, %s15
    %p26 = scmp.ge.s32.totalorder %s25, 2
    %s27 = scalar_select %p26, 0, %s25
    %s28 = ssub.s32 %s15, %s27
    %p29 = scmp.eq.s32.totalorder %s28, 0
    %s31 = sadd.s32 %s30, 1
    %s32 = scalar_select %p29, %s30, %s31
    %p35 = pneg %p29
    %p36 = scmp.eq.s32.totalorder %s8, 1
    %p37 = por %p35, %p36
    %p38 = scmp.ne.s32.totalorder %s30, %s33
    %p39 = scmp.eq.s32.totalorder %s8, 0
    %p40 = por %p38, %p39
    %p41 = scmp.ne.s32.totalorder %s30, %s33
    %p42 = scmp.eq.s32.totalorder %s13, 1
    %p43 = por %p41, %p42
    %p44 = scmp.ne.s32.totalorder %s33, %s34
    %p45 = scmp.eq.s32.totalorder %s13, 0
    %p46 = por %p44, %p45
    %p47 = scmp.ne.s32.totalorder %s33, %s34
    %p48 = scmp.eq.s32.totalorder %s14, 1
    %p49 = por %p47, %p48
    %p51 = scmp.ne.s32.totalorder %s34, %s50
    %p52 = scmp.eq.s32.totalorder %s14, 0
    %p53 = por %p51, %p52
    %s54 = ssub.s32 %s15, %s27
    %s55 = ssub.s32 %s16, %s23
    %s56 = sor.u32 %s54, %s55
    %p57 = scmp.eq.s32.totalorder %s56, 0
    %s59 = sadd.s32 %s58, 1
    %s60 = scalar_select %p57, %s58, %s59
    %p63 = pneg %p57
    %p64 = scmp.eq.s32.totalorder %s8, 1
    %p65 = por %p63, %p64
    %p66 = scmp.ne.s32.totalorder %s58, %s61
    %p67 = scmp.eq.s32.totalorder %s8, 0
    %p68 = por %p66, %p67
    %p69 = scmp.ne.s32.totalorder %s58, %s61
    %p70 = scmp.eq.s32.totalorder %s13, 1
    %p71 = por %p69, %p70
    %p72 = scmp.ne.s32.totalorder %s61, %s62
    %p73 = scmp.eq.s32.totalorder %s13, 0
    %p74 = por %p72, %p73
    %p75 = scmp.ne.s32.totalorder %s61, %s62
    %p76 = scmp.eq.s32.totalorder %s14, 1
    %p77 = por %p75, %p76
    %p79 = scmp.ne.s32.totalorder %s62, %s78
    %p80 = scmp.eq.s32.totalorder %s14, 0
    %p81 = por %p79, %p80
    %s82 = ssub.s32 %s15, %s27
    %s83 = ssub.s32 %s16, %s23
    %s84 = sor.u32 %s82, %s83
    %p85 = scmp.eq.s32.totalorder %s84, 0
    %s87 = sadd.s32 %s86, 1
    %s88 = scalar_select %p85, %s86, %s87
    %p91 = pneg %p85
    %p92 = scmp.eq.s32.totalorder %s8, 1
    %p93 = por %p91, %p92
    %p94 = scmp.ne.s32.totalorder %s86, %s89
    %p95 = scmp.eq.s32.totalorder %s8, 0
    %p96 = por %p94, %p95
    %p97 = scmp.ne.s32.totalorder %s86, %s89
    %p98 = scmp.eq.s32.totalorder %s13, 1
    %p99 = por %p97, %p98
    %p100 = scmp.ne.s32.totalorder %s89, %s90
    %p101 = scmp.eq.s32.totalorder %s13, 0
    %p102 = por %p100, %p101
    %p103 = scmp.ne.s32.totalorder %s89, %s90
    %p104 = scmp.eq.s32.totalorder %s14, 1
    %p105 = por %p103, %p104
    %p107 = scmp.ne.s32.totalorder %s90, %s106
    %p108 = scmp.eq.s32.totalorder %s14, 0
    %p109 = por %p107, %p108
    %p110 = scmp.le.s32.totalorder 1, %s8
    %p111 = scmp.lt.s32.totalorder %s8, 3
    %p112 = pnand %p110, %p111
    %p113 = pneg %p112
    // Predicated region
    $region9: #{neural_quickshift_groups.3} parent=5 // pred_check
      _
    $region10: #{neural_quickshift_groups.3} parent=5 // pred_check_branch
      %115 = sbr.rel (%p112) target = $region12
    $region11: #{neural_quickshift_groups.3} parent=5 // pred_region
      %s116 = ssub.s32 %s8, 1
    $region12: #{neural_quickshift_groups.3} parent=5 // pred_fallthru
      _
    %p117 = scmp.lt.s32.totalorder %s8, 2
    // Predicated region
    $region13: #{neural_quickshift_groups.3} parent=5 // pred_check
      %p118 = pneg %p117
    $region14: #{neural_quickshift_groups.3} parent=5 // pred_check_branch
      %120 = sbr.rel (%p118) target = $region16
    $region15: #{neural_quickshift_groups.3} parent=5 // pred_region
      // Predicated region
      $region17: #{neural_quickshift_groups.3} parent=15 // pred_check
        %p121 = pneg %p40
      $region18: #{neural_quickshift_groups.3} parent=15 // pred_check_branch
        %123 = sbr.rel (%p121) target = $region20
      $region19: #{neural_quickshift_groups.3} parent=15 // pred_region
        %p124 = scmp.lt.s32.totalorder %s15, 1
        %s125 = scalar_select %p124, %s15, 1
        %s126 = smul.addr %s125, 8
        %s127 = smul.addr %s126, 8
        %s128 = scalar_lea.vmem %s0, %s127
      $region20: #{neural_quickshift_groups.3} parent=15 // pred_fallthru
        _
      // Predicated region
      $region21: #{neural_quickshift_groups.3} parent=15 // pred_check
        %p129 = pneg %p68
      $region22: #{neural_quickshift_groups.3} parent=15 // pred_check_branch
        %131 = sbr.rel (%p129) target = $region24
      $region23: #{neural_quickshift_groups.3} parent=15 // pred_region
        %s132 = smul.u32 2, %s16
        %p133 = scmp.lt.s32.totalorder %s15, 1
        %s134 = scalar_select %p133, %s15, 1
        %p135 = scmp.lt.s32.totalorder %s132, 1
        %s136 = scalar_select %p135, %s132, 1
        %s137 = smul.addr %s134, 2
        %s138 = sadd.s32 %s136, %s137
        %s139 = scalar_lea.vmem %s1, %s138
        %s140 = smul.u32 2, %s16
      $region24: #{neural_quickshift_groups.3} parent=15 // pred_fallthru
        _
    $region16: #{neural_quickshift_groups.3} parent=5 // pred_fallthru
      _
    %p141 = scmp.le.s32.totalorder 1, %s8
    %p142 = scmp.lt.s32.totalorder %s8, 3
    %p143 = pnand %p141, %p142
    %p144 = pneg %p143
    // Predicated region
    $region25: #{neural_quickshift_groups.3} parent=5 // pred_check
      _
    $region26: #{neural_quickshift_groups.3} parent=5 // pred_check_branch
      %146 = sbr.rel (%p143) target = $region28
    $region27: #{neural_quickshift_groups.3} parent=5 // pred_region
      %s147 = ssub.s32 %s8, 1
      %p148 = scmp.lt.s32.totalorder %s17, 1
      %s149 = scalar_select %p148, %s17, 1
      %s150 = smul.addr %s149, 8
      %s151 = smul.addr %s150, 8
      %s152 = scalar_lea.vmem %s0, %s151
      %p153 = pneg %p46
      %p154 = pneg %p43
      %s155 = smul.u32 2, %s18
      %p156 = scmp.lt.s32.totalorder %s17, 1
      %s157 = scalar_select %p156, %s17, 1
      %p158 = scmp.lt.s32.totalorder %s155, 1
      %s159 = scalar_select %p158, %s155, 1
      %s160 = smul.addr %s157, 2
      %s161 = sadd.s32 %s159, %s160
      %s162 = scalar_lea.vmem %s1, %s161
      %p163 = pneg %p74
      %p164 = pneg %p71
      %p165 = pneg %p102
      %p166 = pneg %p99
      %s167 = smul.u32 2, %s18
      %p168 = scmp.lt.s32.totalorder %s17, 1
      %s169 = scalar_select %p168, %s17, 1
      %p170 = scmp.lt.s32.totalorder %s167, 1
      %s171 = scalar_select %p170, %s167, 1
      %s172 = smul.addr %s169, 2
      %s173 = sadd.s32 %s171, %s172
      %s174 = smul.addr %s173, 2
      %s175 = scalar_lea.vmem %s2, %s174
      %p176 = scmp.lt.s32.totalorder %s17, 1
      %s177 = scalar_select %p176, %s17, 1
      %s178 = smul.addr %s177, 8
      %s179 = smul.addr %s178, 8
      %s180 = scalar_lea.vmem %s0, %s179
      %s181 = smul.u32 2, %s18
      %p182 = scmp.lt.s32.totalorder %s17, 1
      %s183 = scalar_select %p182, %s17, 1
      %p184 = scmp.lt.s32.totalorder %s181, 1
      %s185 = scalar_select %p184, %s181, 1
      %s186 = smul.addr %s183, 2
      %s187 = sadd.s32 %s185, %s186
      %s188 = scalar_lea.vmem %s1, %s187
      %s189 = smul.u32 2, %s18
      %s190 = smul.u32 2, %s18
      %p191 = scmp.lt.s32.totalorder %s17, 1
      %s192 = scalar_select %p191, %s17, 1
      %p193 = scmp.lt.s32.totalorder %s190, 1
      %s194 = scalar_select %p193, %s190, 1
      %s195 = smul.addr %s192, 2
      %s196 = sadd.s32 %s194, %s195
      %s197 = smul.addr %s196, 2
      %s198 = scalar_lea.vmem %s2, %s197
      %s199 = smul.u32 2, %s18
      %v203 = vld [vmem:[%s188] sm:$0x3]
      %v204 = vlaneseq
      %v205 = vshrl.u32 %v204, 7
      %v206 = vadd.s32 %v205, 8
      %v207 = vadd.s32 %v205, 16
      %v208 = vadd.s32 %v205, 24
      %v209 = vadd.s32 %v205, 32
      %v210 = vadd.s32 %v205, 40
      %v211 = vadd.s32 %v205, 48
      %v212 = vadd.s32 %v205, 56
      %v213 = vlaneseq
      %v214 = vshrl.u32 %v213, 7
      %v215 = vsub.s32 0, %v214
      %v216 = vrot.slane %v203, %v215
      %v217 = vlaneseq
      %v218 = vshrl.u32 %v217, 7
      %v219 = vsub.s32 1, %v218
      %v220 = vrot.slane %v203, %v219
      %vm221 = vcmp.eq.s32.totalorder %v205, %v216
      %vm222 = vcmp.eq.s32.totalorder %v205, %v220
      %vm223 = vcmp.eq.s32.totalorder %v206, %v216
      %vm224 = vcmp.eq.s32.totalorder %v206, %v220
      %vm225 = vcmp.eq.s32.totalorder %v207, %v216
      %vm226 = vcmp.eq.s32.totalorder %v207, %v220
      %vm227 = vcmp.eq.s32.totalorder %v208, %v216
      %vm228 = vcmp.eq.s32.totalorder %v208, %v220
      %vm229 = vcmp.eq.s32.totalorder %v209, %v216
      %vm230 = vcmp.eq.s32.totalorder %v209, %v220
      %vm231 = vcmp.eq.s32.totalorder %v210, %v216
      %vm232 = vcmp.eq.s32.totalorder %v210, %v220
      %vm233 = vcmp.eq.s32.totalorder %v211, %v216
      %vm234 = vcmp.eq.s32.totalorder %v211, %v220
      %vm235 = vcmp.eq.s32.totalorder %v212, %v216
      %vm236 = vcmp.eq.s32.totalorder %v212, %v220
      %v237 = vsel %vm221, 1, 0
      %v238 = vsel %vm222, 1, 0
      %v239 = vsel %vm223, 1, 0
      %v240 = vsel %vm224, 1, 0
      %v241 = vsel %vm225, 1, 0
      %v242 = vsel %vm226, 1, 0
      %v243 = vsel %vm227, 1, 0
      %v244 = vsel %vm228, 1, 0
      %v245 = vsel %vm229, 1, 0
      %v246 = vsel %vm230, 1, 0
      %v247 = vsel %vm231, 1, 0
      %v248 = vsel %vm232, 1, 0
      %v249 = vsel %vm233, 1, 0
      %v250 = vsel %vm234, 1, 0
      %v251 = vsel %vm235, 1, 0
      %v252 = vsel %vm236, 1, 0
      %v253 = vcvt.s32.f32 %v237
      %v254 = vcvt.s32.f32 %v238
      %v255 = vcvt.s32.f32 %v239
      %v256 = vcvt.s32.f32 %v240
      %v257 = vcvt.s32.f32 %v241
      %v258 = vcvt.s32.f32 %v242
      %v259 = vcvt.s32.f32 %v243
      %v260 = vcvt.s32.f32 %v244
      %v261 = vcvt.s32.f32 %v245
      %v262 = vcvt.s32.f32 %v246
      %v263 = vcvt.s32.f32 %v247
      %v264 = vcvt.s32.f32 %v248
      %v265 = vcvt.s32.f32 %v249
      %v266 = vcvt.s32.f32 %v250
      %v267 = vcvt.s32.f32 %v251
      %v268 = vcvt.s32.f32 %v252
      %v269 = vpack.c.bf16 %v255, %v253
      %v270 = vpack.c.bf16 %v256, %v254
      %v271 = vpack.c.bf16 %v259, %v257
      %v272 = vpack.c.bf16 %v260, %v258
      %v273 = vpack.c.bf16 %v263, %v261
      %v274 = vpack.c.bf16 %v264, %v262
      %v275 = vpack.c.bf16 %v267, %v265
      %v276 = vpack.c.bf16 %v268, %v266
      %v277 = vld [vmem:[%s180] sm:$0xff]
      %v278 = vld [vmem:[%s180 + $0x8] sm:$0xff]
      %v279 = vld [vmem:[%s180 + $0x10] sm:$0xff]
      %v280 = vld [vmem:[%s180 + $0x18] sm:$0xff]
      %v281 = vld [vmem:[%s180 + $0x20] sm:$0xff]
      %v282 = vld [vmem:[%s180 + $0x28] sm:$0xff]
      %v283 = vld [vmem:[%s180 + $0x30] sm:$0xff]
      %v284 = vld [vmem:[%s180 + $0x38] sm:$0xff]
      %v285 = vpack.c.bf16 %v278, %v277
      %v286 = vpack.c.bf16 %v280, %v279
      %v287 = vpack.c.bf16 %v282, %v281
      %v288 = vpack.c.bf16 %v284, %v283
      %289 = vxpose.xlu0.c.b16.start [1/8] %v285, 128
      %290 = vxpose.xlu0.c.b16.cont [2/8] %v286, 128
      %291 = vxpose.xlu0.c.b16.cont [3/8] %v287, 128
      %292 = vxpose.xlu0.c.b16.cont [4/8] %v288, 128
      %293 = vxpose.xlu0.c.b16.cont [5/8] 0, 128
      %294 = vxpose.xlu0.c.b16.cont [6/8] 0, 128
      %295 = vxpose.xlu0.c.b16.cont [7/8] 0, 128
      %296 = vxpose.xlu0.c.b16.end [8/8] 0, 128
      %v297 = vpop.trf.xlu0
      %v298 = vpop.trf.xlu0
      %v299 = vpop.trf.xlu0
      %v300 = vpop.trf.xlu0
      %v301 = vpop.trf.xlu0
      %v302 = vpop.trf.xlu0
      %v303 = vpop.trf.xlu0
      %v304 = vpop.trf.xlu0
      %vm305 = vcmask 523264
      %v307 = vsel %vm305, %v297, 0
      %309 = vmatprep.subr.bf16.mxu0 %v270
      %310 = vmatpush1.bf16.msra.mxu0 %v269
      %311 = vmatprep.subr.bf16.mxu0 %v272
      %312 = vmatpush1.bf16.msra.mxu0 %v271
      %313 = vmatprep.subr.bf16.mxu0 %v274
      %314 = vmatpush1.bf16.msra.mxu0 %v273
      %315 = vmatprep.subr.bf16.mxu0 %v276
      %316 = vmatpush1.bf16.msra.mxu0 %v275
      %317 = vmatprep.subr.bf16.mxu0 0
      %318 = vmatpush1.bf16.msra.mxu0 0
      %319 = vmatprep.subr.bf16.mxu0 0
      %320 = vmatpush1.bf16.msra.mxu0 0
      %321 = vmatprep.subr.bf16.mxu0 0
      %322 = vmatpush1.bf16.msra.mxu0 0
      %323 = vmatprep.subr.bf16.mxu0 0
      %324 = vmatpush1.bf16.msra.mxu0 0
      %325 = vmatprep.subr.bf16.mxu0 0
      %326 = vmatpush1.bf16.msra.mxu0 0
      %327 = vmatprep.subr.bf16.mxu0 0
      %328 = vmatpush1.bf16.msra.mxu0 0
      %329 = vmatprep.subr.bf16.mxu0 0
      %330 = vmatpush1.bf16.msra.mxu0 0
      %331 = vmatprep.subr.bf16.mxu0 0
      %332 = vmatpush1.bf16.msra.mxu0 0
      %333 = vmatprep.subr.bf16.mxu0 0
      %334 = vmatpush1.bf16.msra.mxu0 0
      %335 = vmatprep.subr.bf16.mxu0 0
      %336 = vmatpush1.bf16.msra.mxu0 0
      %337 = vmatprep.subr.bf16.mxu0 0
      %338 = vmatpush1.bf16.msra.mxu0 0
      %339 = vmatprep.subr.bf16.mxu0 0
      %340 = vmatpush1.bf16.msra.mxu0 0
      %341 = vmatprep.mubr.bf16.mxu0 0
      %342 = vmatmul.mubr.bf16.gmra.mrb[0].mxu0 %v307
      %v343 = vpop.f32.mrb[0].mxu0
      %v344 = vadd.f32 0.0, %v343
      %v345 = vpop.f32.mrb[0].mxu0
      %v346 = vadd.f32 0.0, %v345
      %v347 = vpop.f32.mrb[0].mxu0
      %v348 = vpop.f32.mrb[0].mxu0
      %349 = vdwg.mxu0
      %vm350 = vcmp.gt.f32.partialorder %v344, 0.5
      %vm351 = vcmp.gt.f32.partialorder %v346, 0.5
      %vm352 = vmpackc.low %vm350, %vm350
      %vm353 = vmpackc.even %vm352, %vm352
      %vm354 = vmpackc.low %vm351, %vm351
      %vm355 = vmpackc.even %vm354, %vm354
      %v356 = vsel %vm353, 16843009, 0
      %v357 = vsel %vm355, 16843009, 0
      %v358 = vunpack.c.0.s8 %v356
      %v359 = vunpack.c.0.s8 %v357
      %v360 = vpack.c.b16 %v359, %v358
      %v361 = vpack.c.b8 %v360, %v360
      %362 = vst [vmem:[%s198] sm:$0xf] %v361
      %s363 = smul.u32 2, %s18
      %p364 = scmp.lt.s32.totalorder %s17, 1
      %s365 = scalar_select %p364, %s17, 1
      %p366 = scmp.lt.s32.totalorder %s363, 1
      %s367 = scalar_select %p366, %s363, 1
      %s368 = smul.addr %s365, 2
      %s369 = sadd.s32 %s367, %s368
      %s370 = smul.addr %s369, 2
      %s371 = scalar_lea.vmem %s2, %s370
      // Predicated region
      $region29: #{neural_quickshift_groups.3} parent=27 // pred_check
        %p372 = pneg %p99
      $region30: #{neural_quickshift_groups.3} parent=27 // pred_check_branch
        %374 = sbr.rel (%p372) target = $region32
      $region31: #{neural_quickshift_groups.3} parent=27 // pred_region
        %s375 = smul.u32 2, %s18
      $region32: #{neural_quickshift_groups.3} parent=27 // pred_fallthru
        _
    $region28: #{neural_quickshift_groups.3} parent=5 // pred_fallthru
      _
    %p376 = scmp.le.s32.totalorder 2, %s8
    // Predicated region
    $region33: #{neural_quickshift_groups.3} parent=5 // pred_check
      %p377 = pneg %p376
    $region34: #{neural_quickshift_groups.3} parent=5 // pred_check_branch
      %379 = sbr.rel (%p377) target = $region36
    $region35: #{neural_quickshift_groups.3} parent=5 // pred_region
      %s380 = ssub.s32 %s8, 2
      // Predicated region
      $region37: #{neural_quickshift_groups.3} parent=35 // pred_check
        %p381 = pneg %p105
      $region38: #{neural_quickshift_groups.3} parent=35 // pred_check_branch
        %383 = sbr.rel (%p381) target = $region40
      $region39: #{neural_quickshift_groups.3} parent=35 // pred_region
        %s384 = smul.u32 2, %s20
        %p385 = scmp.lt.s32.totalorder %s19, 1
        %s386 = scalar_select %p385, %s19, 1
        %p387 = scmp.lt.s32.totalorder %s384, 1
        %s388 = scalar_select %p387, %s384, 1
        %s389 = smul.addr %s386, 2
        %s390 = sadd.s32 %s388, %s389
        %s391 = smul.addr %s390, 2
        %s392 = scalar_lea.vmem %s2, %s391
      $region40: #{neural_quickshift_groups.3} parent=35 // pred_fallthru
        _
    $region36: #{neural_quickshift_groups.3} parent=5 // pred_fallthru
      _
  $region6: #{neural_quickshift_groups.3} parent=0 // loop_footer
    %s12 = sadd.s32 1, %s8
  $region7: #{neural_quickshift_groups.3} parent=0 // loop_footer_branch
    %7 = sbr.rel target = $region3
  $region8: #{neural_quickshift_groups.3} parent=0 // loop_exit
    _

// kernel: neural_quickshift_groups.2
$region0: #{neural_quickshift_groups.2}
  #allocation0 [shape = 'u32[]', space=smem, size = 0x4, offset = 0x4, fixed_abs, tag = 'smem constant byte address 0x4 - core index']
  #allocation1 [shape = 'u32[144,128]{1,0:T(1,128)}', space=vmem, size = 0x12000, scoped, tag = 'internal scratch']
  #allocation2 [shape = 'f32[64,64]{1,0:T(8,128)}', space=vmem, size = 0x8000, scoped, tag = 'scratch operand']
  %s0 = inlined_call_operand.vmem [shape: s32[2,1,256], index: 0, kind: input, shape index: {}]
  %s1 = inlined_call_operand.vmem [shape: f32[2,3,256], index: 1, kind: input, shape index: {}]
  %s2 = inlined_call_operand.hbm [shape: bf16[3,64,256], index: 2, kind: input, shape index: {}]
  %s3 = inlined_call_operand.vmem [shape: f32[2,64,8], index: 3, kind: output, shape index: {}]
  %s4 = sld [smem:[#allocation0]]
  $region57: #{neural_quickshift_groups.2} parent=0
    _
  %s6 = ssub.s32 1, %s4
  %s7 = scalar_select 0, %s6, %s4
  $region1: #{neural_quickshift_groups.2} parent=0
    #allocation3 [shape = 'u8[98304]{0}', space=vmem, size = 0x18000, scoped, tag = 'input window, operand 2, single buffered']
    #allocation4 [shape = 's32[2]{0}', space=sflag, size = 0x8, scoped, tag = 'scoped memory for neural_quickshift_groups.2']
    %8 = vsyncpa [#allocation4], 0
    loop: start=0, step=1, limit=4
    $region2: #{neural_quickshift_groups.2} parent=1 // loop_pre_header
      _
    $region3: #{neural_quickshift_groups.2} parent=1 // loop_header
      %s10 = sphi 0, %s14
      %p11 = scmp.ge.s32.totalorder %s10, 4
      %s17 = sphi 0, %s29
      %s18 = sphi 0, %s25
      %s19 = sphi 0, %s17
      %s20 = sphi 0, %s18
      %s21 = sphi 0, %s19
      %s22 = sphi 0, %s20
      %s34 = sphi 0, %s36
      %s37 = sphi 0, %s34
      %s38 = sphi 0, %s37
      %s54 = sphi 0, %s38
      %s62 = sphi 0, %s64
      %s65 = sphi 0, %s62
      %s66 = sphi 0, %s65
      %s82 = sphi 0, %s66
      %s86 = sphi 0, %s86
      %s88 = sphi 0, %s86
      %s89 = sphi 0, %s88
      %s103 = sphi 0, %s89
      %s109 = sphi 0, %s111
      %s112 = sphi 0, %s109
      %s113 = sphi 0, %s112
      %s129 = sphi 0, %s113
    $region4: #{neural_quickshift_groups.2} parent=1 // loop_header_branch
      %13 = sbr.rel (%p11) target = $region8
    $region5: #{neural_quickshift_groups.2} parent=1 // loop_body
      %s15 = ssub.s32 %s10, 1
      %s16 = ssub.s32 %s10, 2
      %s23 = sadd.s32 1, %s18
      %p24 = scmp.ge.s32.totalorder %s23, 1
      %s25 = scalar_select %p24, 0, %s23
      %s26 = sadd.s32 1, %s17
      %s27 = scalar_select %p24, %s26, %s17
      %p28 = scmp.ge.s32.totalorder %s27, 2
      %s29 = scalar_select %p28, 0, %s27
      %s30 = ssub.s32 %s17, %s29
      %s31 = ssub.s32 %s18, %s25
      %s32 = sor.u32 %s30, %s31
      %p33 = scmp.eq.s32.totalorder %s32, 0
      %s35 = sadd.s32 %s34, 1
      %s36 = scalar_select %p33, %s34, %s35
      %p39 = pneg %p33
      %p40 = scmp.eq.s32.totalorder %s10, 1
      %p41 = por %p39, %p40
      %p42 = scmp.ne.s32.totalorder %s34, %s37
      %p43 = scmp.eq.s32.totalorder %s10, 0
      %p44 = por %p42, %p43
      %p45 = scmp.ne.s32.totalorder %s34, %s37
      %p46 = scmp.eq.s32.totalorder %s15, 1
      %p47 = por %p45, %p46
      %p48 = scmp.ne.s32.totalorder %s37, %s38
      %p49 = scmp.eq.s32.totalorder %s15, 0
      %p50 = por %p48, %p49
      %p51 = scmp.ne.s32.totalorder %s37, %s38
      %p52 = scmp.eq.s32.totalorder %s16, 1
      %p53 = por %p51, %p52
      %p55 = scmp.ne.s32.totalorder %s38, %s54
      %p56 = scmp.eq.s32.totalorder %s16, 0
      %p57 = por %p55, %p56
      %s58 = ssub.s32 %s17, %s29
      %s59 = ssub.s32 %s18, %s25
      %s60 = sor.u32 %s58, %s59
      %p61 = scmp.eq.s32.totalorder %s60, 0
      %s63 = sadd.s32 %s62, 1
      %s64 = scalar_select %p61, %s62, %s63
      %p67 = pneg %p61
      %p68 = scmp.eq.s32.totalorder %s10, 1
      %p69 = por %p67, %p68
      %p70 = scmp.ne.s32.totalorder %s62, %s65
      %p71 = scmp.eq.s32.totalorder %s10, 0
      %p72 = por %p70, %p71
      %p73 = scmp.ne.s32.totalorder %s62, %s65
      %p74 = scmp.eq.s32.totalorder %s15, 1
      %p75 = por %p73, %p74
      %p76 = scmp.ne.s32.totalorder %s65, %s66
      %p77 = scmp.eq.s32.totalorder %s15, 0
      %p78 = por %p76, %p77
      %p79 = scmp.ne.s32.totalorder %s65, %s66
      %p80 = scmp.eq.s32.totalorder %s16, 1
      %p81 = por %p79, %p80
      %p83 = scmp.ne.s32.totalorder %s66, %s82
      %p84 = scmp.eq.s32.totalorder %s16, 0
      %p85 = por %p83, %p84
      %s87 = sadd.s32 %s86, 1
      %p90 = scmp.eq.s32.totalorder %s10, 1
      %p91 = scmp.ne.s32.totalorder %s86, %s88
      %p92 = scmp.eq.s32.totalorder %s10, 0
      %p93 = por %p91, %p92
      %p94 = scmp.ne.s32.totalorder %s86, %s88
      %p95 = scmp.eq.s32.totalorder %s15, 1
      %p96 = por %p94, %p95
      %p97 = scmp.ne.s32.totalorder %s88, %s89
      %p98 = scmp.eq.s32.totalorder %s15, 0
      %p99 = por %p97, %p98
      %p100 = scmp.ne.s32.totalorder %s88, %s89
      %p101 = scmp.eq.s32.totalorder %s16, 1
      %p102 = por %p100, %p101
      %p104 = scmp.ne.s32.totalorder %s89, %s103
      %p105 = scmp.eq.s32.totalorder %s16, 0
      %p106 = por %p104, %p105
      %s107 = ssub.s32 %s17, %s29
      %p108 = scmp.eq.s32.totalorder %s107, 0
      %s110 = sadd.s32 %s109, 1
      %s111 = scalar_select %p108, %s109, %s110
      %p114 = pneg %p108
      %p115 = scmp.eq.s32.totalorder %s10, 1
      %p116 = por %p114, %p115
      %p117 = scmp.ne.s32.totalorder %s109, %s112
      %p118 = scmp.eq.s32.totalorder %s10, 0
      %p119 = por %p117, %p118
      %p120 = scmp.ne.s32.totalorder %s109, %s112
      %p121 = scmp.eq.s32.totalorder %s15, 1
      %p122 = por %p120, %p121
      %p123 = scmp.ne.s32.totalorder %s112, %s113
      %p124 = scmp.eq.s32.totalorder %s15, 0
      %p125 = por %p123, %p124
      %p126 = scmp.ne.s32.totalorder %s112, %s113
      %p127 = scmp.eq.s32.totalorder %s16, 1
      %p128 = por %p126, %p127
      %p130 = scmp.ne.s32.totalorder %s113, %s129
      %p131 = scmp.eq.s32.totalorder %s16, 0
      %p132 = por %p130, %p131
      %p133 = scmp.le.s32.totalorder 1, %s10
      %p134 = scmp.lt.s32.totalorder %s10, 3
      %p135 = pnand %p133, %p134
      %p136 = pneg %p135
      // Predicated region
      $region9: #{neural_quickshift_groups.2} parent=5 // pred_check
        _
      $region10: #{neural_quickshift_groups.2} parent=5 // pred_check_branch
        %138 = sbr.rel (%p135) target = $region12
      $region11: #{neural_quickshift_groups.2} parent=5 // pred_region
        %s139 = ssub.s32 %s10, 1
        // Predicated region
        $region13: #{neural_quickshift_groups.2} parent=11 // pred_check
          %p140 = pneg %p99
        $region14: #{neural_quickshift_groups.2} parent=11 // pred_check_branch
          %142 = sbr.rel (%p140) target = $region16
        $region15: #{neural_quickshift_groups.2} parent=11 // pred_region
          %s144 = ssub.s32 3072, 3072
          %145 = vsyncadd [#allocation4], %s144
          %s146 = sshll.u32 [#allocation3], 4
          %s147 = int_to_ptr.vmem [resolvable:$true] %s146
          %152 = dma.hbm_to_vmem [thread:$0]  %s2, 3072, %s147, [#allocation4], 128, 128, 8
        $region16: #{neural_quickshift_groups.2} parent=11 // pred_fallthru
          _
      $region12: #{neural_quickshift_groups.2} parent=5 // pred_fallthru
        _
      %p153 = scmp.lt.s32.totalorder %s10, 2
      // Predicated region
      $region17: #{neural_quickshift_groups.2} parent=5 // pred_check
        %p154 = pneg %p153
      $region18: #{neural_quickshift_groups.2} parent=5 // pred_check_branch
        %156 = sbr.rel (%p154) target = $region20
      $region19: #{neural_quickshift_groups.2} parent=5 // pred_region
        // Predicated region
        $region21: #{neural_quickshift_groups.2} parent=19 // pred_check
          %p157 = pneg %p44
        $region22: #{neural_quickshift_groups.2} parent=19 // pred_check_branch
          %159 = sbr.rel (%p157) target = $region24
        $region23: #{neural_quickshift_groups.2} parent=19 // pred_region
          %s160 = smul.u32 2, %s18
          %p161 = scmp.lt.s32.totalorder %s17, 1
          %s162 = scalar_select %p161, %s17, 1
          %p163 = scmp.lt.s32.totalorder %s160, 1
          %s164 = scalar_select %p163, %s160, 1
          %s165 = smul.addr %s162, 2
          %s166 = sadd.s32 %s164, %s165
          %s167 = scalar_lea.vmem %s0, %s166
          %s168 = smul.u32 2, %s18
        $region24: #{neural_quickshift_groups.2} parent=19 // pred_fallthru
          _
        // Predicated region
        $region25: #{neural_quickshift_groups.2} parent=19 // pred_check
          %p169 = pneg %p72
        $region26: #{neural_quickshift_groups.2} parent=19 // pred_check_branch
          %171 = sbr.rel (%p169) target = $region28
        $region27: #{neural_quickshift_groups.2} parent=19 // pred_region
          %s172 = smul.u32 2, %s18
          %p173 = scmp.lt.s32.totalorder %s17, 1
          %s174 = scalar_select %p173, %s17, 1
          %p175 = scmp.lt.s32.totalorder %s172, 1
          %s176 = scalar_select %p175, %s172, 1
          %s177 = smul.addr %s174, 2
          %s178 = sadd.s32 %s176, %s177
          %s179 = smul.addr %s178, 4
          %s180 = scalar_lea.vmem %s1, %s179
          %s181 = smul.u32 2, %s18
        $region28: #{neural_quickshift_groups.2} parent=19 // pred_fallthru
          _
      $region20: #{neural_quickshift_groups.2} parent=5 // pred_fallthru
        _
      %p182 = scmp.le.s32.totalorder 1, %s10
      %p183 = scmp.lt.s32.totalorder %s10, 3
      %p184 = pnand %p182, %p183
      %p185 = pneg %p184
      // Predicated region
      $region29: #{neural_quickshift_groups.2} parent=5 // pred_check
        _
      $region30: #{neural_quickshift_groups.2} parent=5 // pred_check_branch
        %187 = sbr.rel (%p184) target = $region32
      $region31: #{neural_quickshift_groups.2} parent=5 // pred_region
        %s188 = ssub.s32 %s10, 1
        // Predicated region
        $region33: #{neural_quickshift_groups.2} parent=31 // pred_check
          %p189 = pneg %p99
        $region34: #{neural_quickshift_groups.2} parent=31 // pred_check_branch
          %191 = sbr.rel (%p189) target = $region36
        $region35: #{neural_quickshift_groups.2} parent=31 // pred_region
          %192 = dma.done [#allocation4], 3072
        $region36: #{neural_quickshift_groups.2} parent=31 // pred_fallthru
          _
        %s193 = smul.u32 2, %s20
        %p194 = scmp.lt.s32.totalorder %s19, 1
        %s195 = scalar_select %p194, %s19, 1
        %p196 = scmp.lt.s32.totalorder %s193, 1
        %s197 = scalar_select %p196, %s193, 1
        %s198 = smul.addr %s195, 2
        %s199 = sadd.s32 %s197, %s198
        %s200 = scalar_lea.vmem %s0, %s199
        %p201 = pneg %p50
        %p202 = pneg %p47
        %s203 = smul.u32 2, %s20
        %p204 = scmp.lt.s32.totalorder %s19, 1
        %s205 = scalar_select %p204, %s19, 1
        %p206 = scmp.lt.s32.totalorder %s203, 1
        %s207 = scalar_select %p206, %s203, 1
        %s208 = smul.addr %s205, 2
        %s209 = sadd.s32 %s207, %s208
        %s210 = smul.addr %s209, 4
        %s211 = scalar_lea.vmem %s1, %s210
        %p212 = pneg %p78
        %p213 = pneg %p75
        %p214 = pneg %p99
        %p215 = pneg %p96
        %p216 = pneg %p125
        %p217 = pneg %p122
        %p218 = scmp.lt.s32.totalorder %s19, 1
        %s219 = scalar_select %p218, %s19, 1
        %s220 = smul.addr %s219, 8
        %s221 = smul.addr %s220, 8
        %s222 = scalar_lea.vmem %s3, %s221
        %s223 = smul.u32 2, %s20
        %p224 = scmp.lt.s32.totalorder %s19, 1
        %s225 = scalar_select %p224, %s19, 1
        %p226 = scmp.lt.s32.totalorder %s223, 1
        %s227 = scalar_select %p226, %s223, 1
        %s228 = smul.addr %s225, 2
        %s229 = sadd.s32 %s227, %s228
        %s230 = scalar_lea.vmem %s0, %s229
        %s231 = smul.u32 2, %s20
        %s232 = smul.u32 2, %s20
        %p233 = scmp.lt.s32.totalorder %s19, 1
        %s234 = scalar_select %p233, %s19, 1
        %p235 = scmp.lt.s32.totalorder %s232, 1
        %s236 = scalar_select %p235, %s232, 1
        %s237 = smul.addr %s234, 2
        %s238 = sadd.s32 %s236, %s237
        %s239 = smul.addr %s238, 4
        %s240 = scalar_lea.vmem %s1, %s239
        %s241 = smul.u32 2, %s20
        %p242 = scmp.lt.s32.totalorder %s19, 1
        %s243 = scalar_select %p242, %s19, 1
        %s244 = smul.addr %s243, 8
        %s245 = smul.addr %s244, 8
        %s246 = scalar_lea.vmem %s3, %s245
        %p248 = scmp.eq.s32.totalorder %s20, 0
        // Predicated region
        $region37: #{neural_quickshift_groups.2} parent=31 // pred_check
          %p249 = pneg %p248
        $region38: #{neural_quickshift_groups.2} parent=31 // pred_check_branch
          %251 = sbr.rel (%p249) target = $region40
        $region39: #{neural_quickshift_groups.2} parent=31 // pred_region
          %vm252 = vcmask 523264
          %253 = vst.msk [vmem:[#allocation2] sm:$0xff] %vm252, 0.0
          %254 = vst.msk [vmem:[#allocation2 + $0x8] sm:$0xff] %vm252, 0.0
          %255 = vst.msk [vmem:[#allocation2 + $0x10] sm:$0xff] %vm252, 0.0
          %256 = vst.msk [vmem:[#allocation2 + $0x18] sm:$0xff] %vm252, 0.0
          %257 = vst.msk [vmem:[#allocation2 + $0x20] sm:$0xff] %vm252, 0.0
          %258 = vst.msk [vmem:[#allocation2 + $0x28] sm:$0xff] %vm252, 0.0
          %259 = vst.msk [vmem:[#allocation2 + $0x30] sm:$0xff] %vm252, 0.0
          %260 = vst.msk [vmem:[#allocation2 + $0x38] sm:$0xff] %vm252, 0.0
        $region40: #{neural_quickshift_groups.2} parent=31 // pred_fallthru
          _
        %v261 = vld [vmem:[%s230] sm:$0x3]
        %v262 = vld [vmem:[%s240] sm:$0x77]
        %v264 = vcombine.high %v262, %v262
        %v266 = vpack.c.bf16 %v262, %v262
        %v267 = vpack.c.bf16 %v264, %v264
        %s268 = smul.u32 %s20, 256
        %s269 = sshra.s32 %s268, 7
        %s270 = sand.u32 %s268, 127
        %s271 = smul.addr %s269, 4
        %s272 = scalar_lea.vmem [#allocation3], %s271
        %v273 = vld [vmem:[%s272] sm:$0xff]
        %v274 = vld [vmem:[%s272 + $0x8] sm:$0xff]
        %v275 = vld [vmem:[%s272 + $0x10] sm:$0xff]
        %v276 = vld [vmem:[%s272 + $0x18] sm:$0xff]
        %v277 = vld [vmem:[%s272 + $0x20] sm:$0xff]
        %v278 = vld [vmem:[%s272 + $0x28] sm:$0xff]
        %v279 = vld [vmem:[%s272 + $0x30] sm:$0xff]
        %v280 = vld [vmem:[%s272 + $0x38] sm:$0xff]
        %v282 = vpack.i.b16 %v266, %v266
        %v284 = vlaneseq
        %v285 = vshrl.u32 %v284, 7
        %v286 = vsub.s32 0, %v285
        %v287 = vrot.slane %v282, %v286
        %v289 = vpack.i.b16 %v267, %v267
        %v291 = vlaneseq
        %v292 = vshrl.u32 %v291, 7
        %v293 = vsub.s32 0, %v292
        %v294 = vrot.slane %v289, %v293
        %v303 = vunpack.c.l.b16 %v273
        %v304 = vunpack.c.h.b16 %v273
        %v305 = vunpack.c.l.b16 %v274
        %v306 = vunpack.c.h.b16 %v274
        %v307 = vunpack.c.l.b16 %v275
        %v308 = vunpack.c.h.b16 %v275
        %v309 = vunpack.c.l.b16 %v276
        %v310 = vunpack.c.h.b16 %v276
        %v311 = vunpack.c.l.b16 %v277
        %v312 = vunpack.c.h.b16 %v277
        %v313 = vunpack.c.l.b16 %v278
        %v314 = vunpack.c.h.b16 %v278
        %v315 = vunpack.c.l.b16 %v279
        %v316 = vunpack.c.h.b16 %v279
        %v317 = vunpack.c.l.b16 %v280
        %v318 = vunpack.c.h.b16 %v280
        %v319 = vpack.c.b16 %v305, %v303
        %v320 = vpack.c.b16 %v306, %v304
        %v321 = vpack.c.b16 %v309, %v307
        %v322 = vpack.c.b16 %v310, %v308
        %v323 = vpack.c.b16 %v313, %v311
        %v324 = vpack.c.b16 %v314, %v312
        %v325 = vpack.c.b16 %v317, %v315
        %v326 = vpack.c.b16 %v318, %v316
        %v335 = vmul.bf16 %v287, %v319
        %v336 = vmul.bf16 %v294, %v320
        %v337 = vmul.bf16 %v287, %v321
        %v338 = vmul.bf16 %v294, %v322
        %v339 = vmul.bf16 %v287, %v323
        %v340 = vmul.bf16 %v294, %v324
        %v341 = vmul.bf16 %v287, %v325
        %v342 = vmul.bf16 %v294, %v326
        %v343 = vunpack.c.l.bf16 %v335
        %v344 = vunpack.c.l.bf16 %v336
        %v345 = vunpack.c.h.bf16 %v335
        %v346 = vunpack.c.h.bf16 %v336
        %v347 = vunpack.c.l.bf16 %v337
        %v348 = vunpack.c.l.bf16 %v338
        %v349 = vunpack.c.h.bf16 %v337
        %v350 = vunpack.c.h.bf16 %v338
        %v351 = vunpack.c.l.bf16 %v339
        %v352 = vunpack.c.l.bf16 %v340
        %v353 = vunpack.c.h.bf16 %v339
        %v354 = vunpack.c.h.bf16 %v340
        %v355 = vunpack.c.l.bf16 %v341
        %v356 = vunpack.c.l.bf16 %v342
        %v357 = vunpack.c.h.bf16 %v341
        %v358 = vunpack.c.h.bf16 %v342
        %s359 = sadd.s32 %s269, 16
        %s360 = smul.addr %s359, 4
        %s361 = scalar_lea.vmem [#allocation3], %s360
        %v362 = vld [vmem:[%s361] sm:$0xff]
        %v363 = vld [vmem:[%s361 + $0x8] sm:$0xff]
        %v364 = vld [vmem:[%s361 + $0x10] sm:$0xff]
        %v365 = vld [vmem:[%s361 + $0x18] sm:$0xff]
        %v366 = vld [vmem:[%s361 + $0x20] sm:$0xff]
        %v367 = vld [vmem:[%s361 + $0x28] sm:$0xff]
        %v368 = vld [vmem:[%s361 + $0x30] sm:$0xff]
        %v369 = vld [vmem:[%s361 + $0x38] sm:$0xff]
        %v370 = vshrl.u32 %v266, 16
        %v371 = vpack.i.b16 %v370, %v370
        %v373 = vlaneseq
        %v374 = vshrl.u32 %v373, 7
        %v375 = vsub.s32 0, %v374
        %v376 = vrot.slane %v371, %v375
        %v377 = vshrl.u32 %v267, 16
        %v378 = vpack.i.b16 %v377, %v377
        %v380 = vlaneseq
        %v381 = vshrl.u32 %v380, 7
        %v382 = vsub.s32 0, %v381
        %v383 = vrot.slane %v378, %v382
        %v392 = vunpack.c.l.b16 %v362
        %v393 = vunpack.c.h.b16 %v362
        %v394 = vunpack.c.l.b16 %v363
        %v395 = vunpack.c.h.b16 %v363
        %v396 = vunpack.c.l.b16 %v364
        %v397 = vunpack.c.h.b16 %v364
        %v398 = vunpack.c.l.b16 %v365
        %v399 = vunpack.c.h.b16 %v365
        %v400 = vunpack.c.l.b16 %v366
        %v401 = vunpack.c.h.b16 %v366
        %v402 = vunpack.c.l.b16 %v367
        %v403 = vunpack.c.h.b16 %v367
        %v404 = vunpack.c.l.b16 %v368
        %v405 = vunpack.c.h.b16 %v368
        %v406 = vunpack.c.l.b16 %v369
        %v407 = vunpack.c.h.b16 %v369
        %v408 = vpack.c.b16 %v394, %v392
        %v409 = vpack.c.b16 %v395, %v393
        %v410 = vpack.c.b16 %v398, %v396
        %v411 = vpack.c.b16 %v399, %v397
        %v412 = vpack.c.b16 %v402, %v400
        %v413 = vpack.c.b16 %v403, %v401
        %v414 = vpack.c.b16 %v406, %v404
        %v415 = vpack.c.b16 %v407, %v405
        %v424 = vmul.bf16 %v376, %v408
        %v425 = vmul.bf16 %v383, %v409
        %v426 = vmul.bf16 %v376, %v410
        %v427 = vmul.bf16 %v383, %v411
        %v428 = vmul.bf16 %v376, %v412
        %v429 = vmul.bf16 %v383, %v413
        %v430 = vmul.bf16 %v376, %v414
        %v431 = vmul.bf16 %v383, %v415
        %v432 = vunpack.c.l.bf16 %v424
        %v433 = vunpack.c.l.bf16 %v425
        %v434 = vunpack.c.h.bf16 %v424
        %v435 = vunpack.c.h.bf16 %v425
        %v436 = vunpack.c.l.bf16 %v426
        %v437 = vunpack.c.l.bf16 %v427
        %v438 = vunpack.c.h.bf16 %v426
        %v439 = vunpack.c.h.bf16 %v427
        %v440 = vunpack.c.l.bf16 %v428
        %v441 = vunpack.c.l.bf16 %v429
        %v442 = vunpack.c.h.bf16 %v428
        %v443 = vunpack.c.h.bf16 %v429
        %v444 = vunpack.c.l.bf16 %v430
        %v445 = vunpack.c.l.bf16 %v431
        %v446 = vunpack.c.h.bf16 %v430
        %v447 = vunpack.c.h.bf16 %v431
        %v448 = vadd.f32 %v343, %v432
        %v449 = vadd.f32 %v344, %v433
        %v450 = vadd.f32 %v345, %v434
        %v451 = vadd.f32 %v346, %v435
        %v452 = vadd.f32 %v347, %v436
        %v453 = vadd.f32 %v348, %v437
        %v454 = vadd.f32 %v349, %v438
        %v455 = vadd.f32 %v350, %v439
        %v456 = vadd.f32 %v351, %v440
        %v457 = vadd.f32 %v352, %v441
        %v458 = vadd.f32 %v353, %v442
        %v459 = vadd.f32 %v354, %v443
        %v460 = vadd.f32 %v355, %v444
        %v461 = vadd.f32 %v356, %v445
        %v462 = vadd.f32 %v357, %v446
        %v463 = vadd.f32 %v358, %v447
        %s464 = sadd.s32 %s269, 32
        %s465 = smul.addr %s464, 4
        %s466 = scalar_lea.vmem [#allocation3], %s465
        %v467 = vld [vmem:[%s466] sm:$0xff]
        %v468 = vld [vmem:[%s466 + $0x8] sm:$0xff]
        %v469 = vld [vmem:[%s466 + $0x10] sm:$0xff]
        %v470 = vld [vmem:[%s466 + $0x18] sm:$0xff]
        %v471 = vld [vmem:[%s466 + $0x20] sm:$0xff]
        %v472 = vld [vmem:[%s466 + $0x28] sm:$0xff]
        %v473 = vld [vmem:[%s466 + $0x30] sm:$0xff]
        %v474 = vld [vmem:[%s466 + $0x38] sm:$0xff]
        %v475 = vlaneseq
        %v476 = vshrl.u32 %v475, 7
        %v477 = vsub.s32 1, %v476
        %v478 = vrot.slane %v282, %v477
        %v479 = vlaneseq
        %v480 = vshrl.u32 %v479, 7
        %v481 = vsub.s32 1, %v480
        %v482 = vrot.slane %v289, %v481
        %v491 = vunpack.c.l.b16 %v467
        %v492 = vunpack.c.h.b16 %v467
        %v493 = vunpack.c.l.b16 %v468
        %v494 = vunpack.c.h.b16 %v468
        %v495 = vunpack.c.l.b16 %v469
        %v496 = vunpack.c.h.b16 %v469
        %v497 = vunpack.c.l.b16 %v470
        %v498 = vunpack.c.h.b16 %v470
        %v499 = vunpack.c.l.b16 %v471
        %v500 = vunpack.c.h.b16 %v471
        %v501 = vunpack.c.l.b16 %v472
        %v502 = vunpack.c.h.b16 %v472
        %v503 = vunpack.c.l.b16 %v473
        %v504 = vunpack.c.h.b16 %v473
        %v505 = vunpack.c.l.b16 %v474
        %v506 = vunpack.c.h.b16 %v474
        %v507 = vpack.c.b16 %v493, %v491
        %v508 = vpack.c.b16 %v494, %v492
        %v509 = vpack.c.b16 %v497, %v495
        %v510 = vpack.c.b16 %v498, %v496
        %v511 = vpack.c.b16 %v501, %v499
        %v512 = vpack.c.b16 %v502, %v500
        %v513 = vpack.c.b16 %v505, %v503
        %v514 = vpack.c.b16 %v506, %v504
        %v523 = vmul.bf16 %v478, %v507
        %v524 = vmul.bf16 %v482, %v508
        %v525 = vmul.bf16 %v478, %v509
        %v526 = vmul.bf16 %v482, %v510
        %v527 = vmul.bf16 %v478, %v511
        %v528 = vmul.bf16 %v482, %v512
        %v529 = vmul.bf16 %v478, %v513
        %v530 = vmul.bf16 %v482, %v514
        %v531 = vunpack.c.l.bf16 %v523
        %v532 = vunpack.c.l.bf16 %v524
        %v533 = vunpack.c.h.bf16 %v523
        %v534 = vunpack.c.h.bf16 %v524
        %v535 = vunpack.c.l.bf16 %v525
        %v536 = vunpack.c.l.bf16 %v526
        %v537 = vunpack.c.h.bf16 %v525
        %v538 = vunpack.c.h.bf16 %v526
        %v539 = vunpack.c.l.bf16 %v527
        %v540 = vunpack.c.l.bf16 %v528
        %v541 = vunpack.c.h.bf16 %v527
        %v542 = vunpack.c.h.bf16 %v528
        %v543 = vunpack.c.l.bf16 %v529
        %v544 = vunpack.c.l.bf16 %v530
        %v545 = vunpack.c.h.bf16 %v529
        %v546 = vunpack.c.h.bf16 %v530
        %v547 = vadd.f32 %v448, %v531
        %v548 = vadd.f32 %v449, %v532
        %v549 = vadd.f32 %v450, %v533
        %v550 = vadd.f32 %v451, %v534
        %v551 = vadd.f32 %v452, %v535
        %v552 = vadd.f32 %v453, %v536
        %v553 = vadd.f32 %v454, %v537
        %v554 = vadd.f32 %v455, %v538
        %v555 = vadd.f32 %v456, %v539
        %v556 = vadd.f32 %v457, %v540
        %v557 = vadd.f32 %v458, %v541
        %v558 = vadd.f32 %v459, %v542
        %v559 = vadd.f32 %v460, %v543
        %v560 = vadd.f32 %v461, %v544
        %v561 = vadd.f32 %v462, %v545
        %v562 = vadd.f32 %v463, %v546
        %v563 = vpack.c.bf16 %v549, %v547
        %v564 = vpack.c.bf16 %v550, %v548
        %v565 = vpack.c.bf16 %v553, %v551
        %v566 = vpack.c.bf16 %v554, %v552
        %v567 = vpack.c.bf16 %v557, %v555
        %v568 = vpack.c.bf16 %v558, %v556
        %v569 = vpack.c.bf16 %v561, %v559
        %v570 = vpack.c.bf16 %v562, %v560
        %v571 = vlaneseq
        %v572 = vshrl.u32 %v571, 7
        %v573 = vadd.s32 %v572, 8
        %v574 = vadd.s32 %v572, 16
        %v575 = vadd.s32 %v572, 24
        %v576 = vadd.s32 %v572, 32
        %v577 = vadd.s32 %v572, 40
        %v578 = vadd.s32 %v572, 48
        %v579 = vadd.s32 %v572, 56
        %v580 = vlaneseq
        %v581 = vshrl.u32 %v580, 7
        %v582 = vsub.s32 0, %v581
        %v583 = vrot.slane %v261, %v582
        %v584 = vlaneseq
        %v585 = vshrl.u32 %v584, 7
        %v586 = vsub.s32 1, %v585
        %v587 = vrot.slane %v261, %v586
        %vm588 = vcmp.eq.s32.totalorder %v572, %v583
        %vm589 = vcmp.eq.s32.totalorder %v572, %v587
        %vm590 = vcmp.eq.s32.totalorder %v573, %v583
        %vm591 = vcmp.eq.s32.totalorder %v573, %v587
        %vm592 = vcmp.eq.s32.totalorder %v574, %v583
        %vm593 = vcmp.eq.s32.totalorder %v574, %v587
        %vm594 = vcmp.eq.s32.totalorder %v575, %v583
        %vm595 = vcmp.eq.s32.totalorder %v575, %v587
        %vm596 = vcmp.eq.s32.totalorder %v576, %v583
        %vm597 = vcmp.eq.s32.totalorder %v576, %v587
        %vm598 = vcmp.eq.s32.totalorder %v577, %v583
        %vm599 = vcmp.eq.s32.totalorder %v577, %v587
        %vm600 = vcmp.eq.s32.totalorder %v578, %v583
        %vm601 = vcmp.eq.s32.totalorder %v578, %v587
        %vm602 = vcmp.eq.s32.totalorder %v579, %v583
        %vm603 = vcmp.eq.s32.totalorder %v579, %v587
        %v604 = vsel %vm588, 1, 0
        %v605 = vsel %vm589, 1, 0
        %v606 = vsel %vm590, 1, 0
        %v607 = vsel %vm591, 1, 0
        %v608 = vsel %vm592, 1, 0
        %v609 = vsel %vm593, 1, 0
        %v610 = vsel %vm594, 1, 0
        %v611 = vsel %vm595, 1, 0
        %v612 = vsel %vm596, 1, 0
        %v613 = vsel %vm597, 1, 0
        %v614 = vsel %vm598, 1, 0
        %v615 = vsel %vm599, 1, 0
        %v616 = vsel %vm600, 1, 0
        %v617 = vsel %vm601, 1, 0
        %v618 = vsel %vm602, 1, 0
        %v619 = vsel %vm603, 1, 0
        %v620 = vcvt.s32.f32 %v604
        %v621 = vcvt.s32.f32 %v605
        %v622 = vcvt.s32.f32 %v606
        %v623 = vcvt.s32.f32 %v607
        %v624 = vcvt.s32.f32 %v608
        %v625 = vcvt.s32.f32 %v609
        %v626 = vcvt.s32.f32 %v610
        %v627 = vcvt.s32.f32 %v611
        %v628 = vcvt.s32.f32 %v612
        %v629 = vcvt.s32.f32 %v613
        %v630 = vcvt.s32.f32 %v614
        %v631 = vcvt.s32.f32 %v615
        %v632 = vcvt.s32.f32 %v616
        %v633 = vcvt.s32.f32 %v617
        %v634 = vcvt.s32.f32 %v618
        %v635 = vcvt.s32.f32 %v619
        %v636 = vpack.c.bf16 %v622, %v620
        %v637 = vpack.c.bf16 %v623, %v621
        %v638 = vpack.c.bf16 %v626, %v624
        %v639 = vpack.c.bf16 %v627, %v625
        %v640 = vpack.c.bf16 %v630, %v628
        %v641 = vpack.c.bf16 %v631, %v629
        %v642 = vpack.c.bf16 %v634, %v632
        %v643 = vpack.c.bf16 %v635, %v633
        %v644 = vld [vmem:[#allocation2] sm:$0xff]
        %v645 = vld [vmem:[#allocation2 + $0x8] sm:$0xff]
        %v646 = vld [vmem:[#allocation2 + $0x10] sm:$0xff]
        %v647 = vld [vmem:[#allocation2 + $0x18] sm:$0xff]
        %v648 = vld [vmem:[#allocation2 + $0x20] sm:$0xff]
        %v649 = vld [vmem:[#allocation2 + $0x28] sm:$0xff]
        %v650 = vld [vmem:[#allocation2 + $0x30] sm:$0xff]
        %v651 = vld [vmem:[#allocation2 + $0x38] sm:$0xff]
        %652 = vmatprep.subr.bf16.mxu0 %v564
        %653 = vmatpush1.bf16.xpose.msra.mxu0 %v563
        %654 = vmatprep.subr.bf16.mxu0 %v566
        %655 = vmatpush1.bf16.xpose.msra.mxu0 %v565
        %656 = vmatprep.subr.bf16.mxu0 %v568
        %657 = vmatpush1.bf16.xpose.msra.mxu0 %v567
        %658 = vmatprep.subr.bf16.mxu0 %v570
        %659 = vmatpush1.bf16.xpose.msra.mxu0 %v569
        %660 = vmatprep.subr.bf16.mxu0 0
        %661 = vmatpush1.bf16.xpose.msra.mxu0 0
        %662 = vmatprep.subr.bf16.mxu0 0
        %663 = vmatpush1.bf16.xpose.msra.mxu0 0
        %664 = vmatprep.subr.bf16.mxu0 0
        %665 = vmatpush1.bf16.xpose.msra.mxu0 0
        %666 = vmatprep.subr.bf16.mxu0 0
        %667 = vmatpush1.bf16.xpose.msra.mxu0 0
        %668 = vmatprep.subr.bf16.mxu0 0
        %669 = vmatpush1.bf16.xpose.msra.mxu0 0
        %670 = vmatprep.subr.bf16.mxu0 0
        %671 = vmatpush1.bf16.xpose.msra.mxu0 0
        %672 = vmatprep.subr.bf16.mxu0 0
        %673 = vmatpush1.bf16.xpose.msra.mxu0 0
        %674 = vmatprep.subr.bf16.mxu0 0
        %675 = vmatpush1.bf16.xpose.msra.mxu0 0
        %676 = vmatprep.subr.bf16.mxu0 0
        %677 = vmatpush1.bf16.xpose.msra.mxu0 0
        %678 = vmatprep.subr.bf16.mxu0 0
        %679 = vmatpush1.bf16.xpose.msra.mxu0 0
        %680 = vmatprep.subr.bf16.mxu0 0
        %681 = vmatpush1.bf16.xpose.msra.mxu0 0
        %682 = vmatprep.subr.bf16.mxu0 0
        %683 = vmatpush1.bf16.xpose.msra.mxu0 0
        %684 = vmatprep.mubr.bf16.mxu0 %v637
        %685 = vmatmul.mubr.bf16.gmra.mrb[0].mxu0 %v636
        %v686 = vpop.f32.mrb[0].mxu0
        %v687 = vadd.f32 0.0, %v686
        %v688 = vpop.f32.mrb[0].mxu0
        %v689 = vpop.f32.mrb[0].mxu0
        %v690 = vadd.f32 0.0, %v689
        %v691 = vpop.f32.mrb[0].mxu0
        %692 = vmatprep.mubr.bf16.mxu0 %v639
        %693 = vmatmul.mubr.bf16.gmra.mrb[0].mxu0 %v638
        %v694 = vpop.f32.mrb[0].mxu0
        %v695 = vadd.f32 0.0, %v694
        %v696 = vpop.f32.mrb[0].mxu0
        %v697 = vpop.f32.mrb[0].mxu0
        %v698 = vadd.f32 0.0, %v697
        %v699 = vpop.f32.mrb[0].mxu0
        %700 = vmatprep.mubr.bf16.mxu0 %v641
        %701 = vmatmul.mubr.bf16.gmra.mrb[0].mxu0 %v640
        %v702 = vpop.f32.mrb[0].mxu0
        %v703 = vadd.f32 0.0, %v702
        %v704 = vpop.f32.mrb[0].mxu0
        %v705 = vpop.f32.mrb[0].mxu0
        %v706 = vadd.f32 0.0, %v705
        %v707 = vpop.f32.mrb[0].mxu0
        %708 = vmatprep.mubr.bf16.mxu0 %v643
        %709 = vmatmul.mubr.bf16.gmra.mrb[0].mxu0 %v642
        %v710 = vpop.f32.mrb[0].mxu0
        %v711 = vadd.f32 0.0, %v710
        %v712 = vpop.f32.mrb[0].mxu0
        %v713 = vpop.f32.mrb[0].mxu0
        %v714 = vadd.f32 0.0, %v713
        %v715 = vpop.f32.mrb[0].mxu0
        %716 = vdwg.mxu0
        %v717 = vadd.f32 %v644, %v687
        %v718 = vadd.f32 %v645, %v690
        %v719 = vadd.f32 %v646, %v695
        %v720 = vadd.f32 %v647, %v698
        %v721 = vadd.f32 %v648, %v703
        %v722 = vadd.f32 %v649, %v706
        %v723 = vadd.f32 %v650, %v711
        %v724 = vadd.f32 %v651, %v714
        %vm725 = vcmask 523264
        %726 = vst.msk [vmem:[#allocation2] sm:$0xff] %vm725, %v717
        %727 = vst.msk [vmem:[#allocation2 + $0x8] sm:$0xff] %vm725, %v718
        %728 = vst.msk [vmem:[#allocation2 + $0x10] sm:$0xff] %vm725, %v719
        %729 = vst.msk [vmem:[#allocation2 + $0x18] sm:$0xff] %vm725, %v720
        %730 = vst.msk [vmem:[#allocation2 + $0x20] sm:$0xff] %vm725, %v721
        %731 = vst.msk [vmem:[#allocation2 + $0x28] sm:$0xff] %vm725, %v722
        %732 = vst.msk [vmem:[#allocation2 + $0x30] sm:$0xff] %vm725, %v723
        %733 = vst.msk [vmem:[#allocation2 + $0x38] sm:$0xff] %vm725, %v724
        // Predicated region
        $region41: #{neural_quickshift_groups.2} parent=31 // pred_check
          %p734 = pneg %p248
        $region42: #{neural_quickshift_groups.2} parent=31 // pred_check_branch
          %736 = sbr.rel (%p734) target = $region44
        $region43: #{neural_quickshift_groups.2} parent=31 // pred_region
          %v737 = vld [vmem:[#allocation2] sm:$0xff]
          %v738 = vld [vmem:[#allocation2 + $0x8] sm:$0xff]
          %v739 = vld [vmem:[#allocation2 + $0x10] sm:$0xff]
          %v740 = vld [vmem:[#allocation2 + $0x18] sm:$0xff]
          %v741 = vld [vmem:[#allocation2 + $0x20] sm:$0xff]
          %v742 = vld [vmem:[#allocation2 + $0x28] sm:$0xff]
          %v743 = vld [vmem:[#allocation2 + $0x30] sm:$0xff]
          %v744 = vld [vmem:[#allocation2 + $0x38] sm:$0xff]
          %v745 = vlaneseq
          %v746 = vand.u32 %v745, 127
          %v748 = vsel %vm725, %v737, 0
          %v751 = vsel %vm725, %v738, 0
          %v754 = vsel %vm725, %v739, 0
          %v757 = vsel %vm725, %v740, 0
          %v760 = vsel %vm725, %v741, 0
          %v763 = vsel %vm725, %v742, 0
          %v766 = vsel %vm725, %v743, 0
          %v769 = vsel %vm725, %v744, 0
          %771 = vmatprep.subr.mxu0 0.0
          %772 = vmatpush1.xpose.msra.mxu0 %v748
          %773 = vmatprep.subr.mxu0 0.0
          %774 = vmatpush1.xpose.msra.mxu0 0.0
          %775 = vmatprep.subr.mxu0 0.0
          %776 = vmatpush1.xpose.msra.mxu0 0.0
          %777 = vmatprep.subr.mxu0 0.0
          %778 = vmatpush1.xpose.msra.mxu0 0.0
          %779 = vmatprep.subr.mxu0 0.0
          %780 = vmatpush1.xpose.msra.mxu0 0.0
          %781 = vmatprep.subr.mxu0 0.0
          %782 = vmatpush1.xpose.msra.mxu0 0.0
          %783 = vmatprep.subr.mxu0 0.0
          %784 = vmatpush1.xpose.msra.mxu0 0.0
          %785 = vmatprep.subr.mxu0 0.0
          %786 = vmatpush1.xpose.msra.mxu0 0.0
          %787 = vmatprep.subr.mxu0 0.0
          %788 = vmatpush1.xpose.msra.mxu0 0.0
          %789 = vmatprep.subr.mxu0 0.0
          %790 = vmatpush1.xpose.msra.mxu0 0.0
          %791 = vmatprep.subr.mxu0 0.0
          %792 = vmatpush1.xpose.msra.mxu0 0.0
          %793 = vmatprep.subr.mxu0 0.0
          %794 = vmatpush1.xpose.msra.mxu0 0.0
          %795 = vmatprep.subr.mxu0 0.0
          %796 = vmatpush1.xpose.msra.mxu0 0.0
          %797 = vmatprep.subr.mxu0 0.0
          %798 = vmatpush1.xpose.msra.mxu0 0.0
          %799 = vmatprep.subr.mxu0 0.0
          %800 = vmatpush1.xpose.msra.mxu0 0.0
          %801 = vmatprep.subr.mxu0 0.0
          %802 = vmatpush1.xpose.msra.mxu0 0.0
          %803 = vmatprep.subr.mxu0 0.0
          %804 = vmatpush1.xpose.msra.mxu0 0.0
          %805 = vmatprep.subr.mxu0 0.0
          %806 = vmatpush1.xpose.msra.mxu0 0.0
          %807 = vmatprep.subr.mxu0 0.0
          %808 = vmatpush1.xpose.msra.mxu0 0.0
          %809 = vmatprep.subr.mxu0 0.0
          %810 = vmatpush1.xpose.msra.mxu0 0.0
          %811 = vmatprep.subr.mxu0 0.0
          %812 = vmatpush1.xpose.msra.mxu0 0.0
          %813 = vmatprep.subr.mxu0 0.0
          %814 = vmatpush1.xpose.msra.mxu0 0.0
          %815 = vmatprep.subr.mxu0 0.0
          %816 = vmatpush1.xpose.msra.mxu0 0.0
          %817 = vmatprep.subr.mxu0 0.0
          %818 = vmatpush1.xpose.msra.mxu0 0.0
          %819 = vmatprep.subr.mxu0 0.0
          %820 = vmatpush1.xpose.msra.mxu0 0.0
          %821 = vmatprep.subr.mxu0 0.0
          %822 = vmatpush1.xpose.msra.mxu0 0.0
          %823 = vmatprep.subr.mxu0 0.0
          %824 = vmatpush1.xpose.msra.mxu0 0.0
          %825 = vmatprep.subr.mxu0 0.0
          %826 = vmatpush1.xpose.msra.mxu0 0.0
          %827 = vmatprep.subr.mxu0 0.0
          %828 = vmatpush1.xpose.msra.mxu0 0.0
          %829 = vmatprep.subr.mxu0 0.0
          %830 = vmatpush1.xpose.msra.mxu0 0.0
          %831 = vmatprep.subr.mxu0 0.0
          %832 = vmatpush1.xpose.msra.mxu0 0.0
          %833 = vmatprep.subr.mxu0 0.0
          %834 = vmatpush1.xpose.msra.mxu0 0.0
          %835 = vmatprep.mubr.f32.mxu0 0.0
          %836 = vmatmul.mubr.f32.gmra.mrb[0].mxu0 %v748
          %v837 = vpop.f32.mrb[0].mxu0
          %v838 = vadd.f32 0.0, %v837
          %v839 = vpop.f32.mrb[0].mxu0
          %840 = vmatprep.mubr.f32.mxu0 0.0
          %841 = vmatmul.mubr.f32.gmra.mrb[0].mxu0 %v751
          %v842 = vpop.f32.mrb[0].mxu0
          %v843 = vadd.f32 0.0, %v842
          %v844 = vpop.f32.mrb[0].mxu0
          %845 = vmatprep.mubr.f32.mxu0 0.0
          %846 = vmatmul.mubr.f32.gmra.mrb[0].mxu0 %v754
          %v847 = vpop.f32.mrb[0].mxu0
          %v848 = vadd.f32 0.0, %v847
          %v849 = vpop.f32.mrb[0].mxu0
          %850 = vmatprep.mubr.f32.mxu0 0.0
          %851 = vmatmul.mubr.f32.gmra.mrb[0].mxu0 %v757
          %v852 = vpop.f32.mrb[0].mxu0
          %v853 = vadd.f32 0.0, %v852
          %v854 = vpop.f32.mrb[0].mxu0
          %855 = vmatprep.mubr.f32.mxu0 0.0
          %856 = vmatmul.mubr.f32.gmra.mrb[0].mxu0 %v760
          %v857 = vpop.f32.mrb[0].mxu0
          %v858 = vadd.f32 0.0, %v857
          %v859 = vpop.f32.mrb[0].mxu0
          %860 = vmatprep.mubr.f32.mxu0 0.0
          %861 = vmatmul.mubr.f32.gmra.mrb[0].mxu0 %v763
          %v862 = vpop.f32.mrb[0].mxu0
          %v863 = vadd.f32 0.0, %v862
          %v864 = vpop.f32.mrb[0].mxu0
          %865 = vmatprep.mubr.f32.mxu0 0.0
          %866 = vmatmul.mubr.f32.gmra.mrb[0].mxu0 %v766
          %v867 = vpop.f32.mrb[0].mxu0
          %v868 = vadd.f32 0.0, %v867
          %v869 = vpop.f32.mrb[0].mxu0
          %870 = vmatprep.mubr.f32.mxu0 0.0
          %871 = vmatmul.mubr.f32.gmra.mrb[0].mxu0 %v769
          %v872 = vpop.f32.mrb[0].mxu0
          %v873 = vadd.f32 0.0, %v872
          %v874 = vpop.f32.mrb[0].mxu0
          %875 = vdwg.mxu0
          %v876 = vmul.f32 %v737, %v737
          %v878 = vsel %vm725, 1.0, 0
          %v881 = vsel %vm725, %v876, 0
          %883 = vmatprep.subr.mxu0 0.0
          %884 = vmatpush1.xpose.msra.mxu0 %v881
          %885 = vmatprep.subr.mxu0 0.0
          %886 = vmatpush1.xpose.msra.mxu0 0.0
          %887 = vmatprep.subr.mxu0 0.0
          %888 = vmatpush1.xpose.msra.mxu0 0.0
          %889 = vmatprep.subr.mxu0 0.0
          %890 = vmatpush1.xpose.msra.mxu0 0.0
          %891 = vmatprep.subr.mxu0 0.0
          %892 = vmatpush1.xpose.msra.mxu0 0.0
          %893 = vmatprep.subr.mxu0 0.0
          %894 = vmatpush1.xpose.msra.mxu0 0.0
          %895 = vmatprep.subr.mxu0 0.0
          %896 = vmatpush1.xpose.msra.mxu0 0.0
          %897 = vmatprep.subr.mxu0 0.0
          %898 = vmatpush1.xpose.msra.mxu0 0.0
          %899 = vmatprep.subr.mxu0 0.0
          %900 = vmatpush1.xpose.msra.mxu0 0.0
          %901 = vmatprep.subr.mxu0 0.0
          %902 = vmatpush1.xpose.msra.mxu0 0.0
          %903 = vmatprep.subr.mxu0 0.0
          %904 = vmatpush1.xpose.msra.mxu0 0.0
          %905 = vmatprep.subr.mxu0 0.0
          %906 = vmatpush1.xpose.msra.mxu0 0.0
          %907 = vmatprep.subr.mxu0 0.0
          %908 = vmatpush1.xpose.msra.mxu0 0.0
          %909 = vmatprep.subr.mxu0 0.0
          %910 = vmatpush1.xpose.msra.mxu0 0.0
          %911 = vmatprep.subr.mxu0 0.0
          %912 = vmatpush1.xpose.msra.mxu0 0.0
          %913 = vmatprep.subr.mxu0 0.0
          %914 = vmatpush1.xpose.msra.mxu0 0.0
          %915 = vmatprep.subr.mxu0 0.0
          %916 = vmatpush1.xpose.msra.mxu0 0.0
          %917 = vmatprep.subr.mxu0 0.0
          %918 = vmatpush1.xpose.msra.mxu0 0.0
          %919 = vmatprep.subr.mxu0 0.0
          %920 = vmatpush1.xpose.msra.mxu0 0.0
          %921 = vmatprep.subr.mxu0 0.0
          %922 = vmatpush1.xpose.msra.mxu0 0.0
          %923 = vmatprep.subr.mxu0 0.0
          %924 = vmatpush1.xpose.msra.mxu0 0.0
          %925 = vmatprep.subr.mxu0 0.0
          %926 = vmatpush1.xpose.msra.mxu0 0.0
          %927 = vmatprep.subr.mxu0 0.0
          %928 = vmatpush1.xpose.msra.mxu0 0.0
          %929 = vmatprep.subr.mxu0 0.0
          %930 = vmatpush1.xpose.msra.mxu0 0.0
          %931 = vmatprep.subr.mxu0 0.0
          %932 = vmatpush1.xpose.msra.mxu0 0.0
          %933 = vmatprep.subr.mxu0 0.0
          %934 = vmatpush1.xpose.msra.mxu0 0.0
          %935 = vmatprep.subr.mxu0 0.0
          %936 = vmatpush1.xpose.msra.mxu0 0.0
          %937 = vmatprep.subr.mxu0 0.0
          %938 = vmatpush1.xpose.msra.mxu0 0.0
          %939 = vmatprep.subr.mxu0 0.0
          %940 = vmatpush1.xpose.msra.mxu0 0.0
          %941 = vmatprep.subr.mxu0 0.0
          %942 = vmatpush1.xpose.msra.mxu0 0.0
          %943 = vmatprep.subr.mxu0 0.0
          %944 = vmatpush1.xpose.msra.mxu0 0.0
          %945 = vmatprep.subr.mxu0 0.0
          %946 = vmatpush1.xpose.msra.mxu0 0.0
          %947 = vmatprep.mubr.f32.mxu0 0.0
          %948 = vmatmul.mubr.f32.gmra.mrb[0].mxu0 %v878
          %v949 = vpop.f32.mrb[0].mxu0
          %v950 = vadd.f32 0.0, %v949
          %v951 = vpop.f32.mrb[0].mxu0
          %952 = vdwg.mxu0
          %v953 = vmul.f32 %v838, 2.0
          %v954 = vmul.f32 %v843, 2.0
          %v955 = vmul.f32 %v848, 2.0
          %v956 = vmul.f32 %v853, 2.0
          %v957 = vmul.f32 %v858, 2.0
          %v958 = vmul.f32 %v863, 2.0
          %v959 = vmul.f32 %v868, 2.0
          %v960 = vmul.f32 %v873, 2.0
          %v961 = vlaneseq
          %v962 = vshrl.u32 %v961, 7
          %v963 = vsub.s32 0, %v962
          %v964 = vrot.slane %v950, %v963
          %v965 = vsub.f32 %v964, %v953
          %v966 = vsub.f32 %v964, %v954
          %v967 = vsub.f32 %v964, %v955
          %v968 = vsub.f32 %v964, %v956
          %v969 = vsub.f32 %v964, %v957
          %v970 = vsub.f32 %v964, %v958
          %v971 = vsub.f32 %v964, %v959
          %v972 = vsub.f32 %v964, %v960
          %vm973 = vcmask 64512
          %v974 = vsel %vm973, %v965, inf
          %975 = vmin.xlane.f32.xlu0 %v974
          %v976 = vpop.xlane.xlu0 %975
          %v977 = vsel %vm973, %v966, inf
          %978 = vmin.xlane.f32.xlu0 %v977
          %v979 = vpop.xlane.xlu0 %978
          %v980 = vsel %vm973, %v967, inf
          %981 = vmin.xlane.f32.xlu0 %v980
          %v982 = vpop.xlane.xlu0 %981
          %v983 = vsel %vm973, %v968, inf
          %984 = vmin.xlane.f32.xlu0 %v983
          %v985 = vpop.xlane.xlu0 %984
          %v986 = vsel %vm973, %v969, inf
          %987 = vmin.xlane.f32.xlu0 %v986
          %v988 = vpop.xlane.xlu0 %987
          %v989 = vsel %vm973, %v970, inf
          %990 = vmin.xlane.f32.xlu0 %v989
          %v991 = vpop.xlane.xlu0 %990
          %v992 = vsel %vm973, %v971, inf
          %993 = vmin.xlane.f32.xlu0 %v992
          %v994 = vpop.xlane.xlu0 %993
          %v995 = vsel %vm973, %v972, inf
          %996 = vmin.xlane.f32.xlu0 %v995
          %v997 = vpop.xlane.xlu0 %996
          %vm998 = vcmp.le.f32.partialorder %v965, %v976
          %vm999 = vcmp.le.f32.partialorder %v966, %v979
          %vm1000 = vcmp.le.f32.partialorder %v967, %v982
          %vm1001 = vcmp.le.f32.partialorder %v968, %v985
          %vm1002 = vcmp.le.f32.partialorder %v969, %v988
          %vm1003 = vcmp.le.f32.partialorder %v970, %v991
          %vm1004 = vcmp.le.f32.partialorder %v971, %v994
          %vm1005 = vcmp.le.f32.partialorder %v972, %v997
          %v1006 = vsel %vm998, %v746, 8
          %v1007 = vsel %vm999, %v746, 8
          %v1008 = vsel %vm1000, %v746, 8
          %v1009 = vsel %vm1001, %v746, 8
          %v1010 = vsel %vm1002, %v746, 8
          %v1011 = vsel %vm1003, %v746, 8
          %v1012 = vsel %vm1004, %v746, 8
          %v1013 = vsel %vm1005, %v746, 8
          %v1014 = vsel %vm973, %v1006, 2147483647
          %v1015 = vand.u32 %v1014, 65535
          %v1016 = vshra.s32 %v1014, 16
          %v1017 = vcvt.s32.f32 %v1015
          %v1018 = vcvt.s32.f32 %v1016
          %1019 = vmin.xlane.f32.xlu0 %v1018
          %v1020 = vpop.xlane.xlu0 %1019
          %vm1021 = vcmp.eq.f32.partialorder %v1018, %v1020
          %v1022 = vsel %vm1021, %v1017, inf
          %1023 = vmin.xlane.f32.xlu0 %v1022
          %v1024 = vpop.xlane.xlu0 %1023
          %v1025 = vcvt.f32.s32 %v1024
          %v1026 = vcvt.f32.s32 %v1020
          %v1027 = vshll.u32 %v1026, 16
          %v1028 = vadd.s32 %v1027, %v1025
          %v1029 = vsel %vm973, %v1007, 2147483647
          %v1030 = vand.u32 %v1029, 65535
          %v1031 = vshra.s32 %v1029, 16
          %v1032 = vcvt.s32.f32 %v1030
          %v1033 = vcvt.s32.f32 %v1031
          %1034 = vmin.xlane.f32.xlu0 %v1033
          %v1035 = vpop.xlane.xlu0 %1034
          %vm1036 = vcmp.eq.f32.partialorder %v1033, %v1035
          %v1037 = vsel %vm1036, %v1032, inf
          %1038 = vmin.xlane.f32.xlu0 %v1037
          %v1039 = vpop.xlane.xlu0 %1038
          %v1040 = vcvt.f32.s32 %v1039
          %v1041 = vcvt.f32.s32 %v1035
          %v1042 = vshll.u32 %v1041, 16
          %v1043 = vadd.s32 %v1042, %v1040
          %v1044 = vsel %vm973, %v1008, 2147483647
          %v1045 = vand.u32 %v1044, 65535
          %v1046 = vshra.s32 %v1044, 16
          %v1047 = vcvt.s32.f32 %v1045
          %v1048 = vcvt.s32.f32 %v1046
          %1049 = vmin.xlane.f32.xlu0 %v1048
          %v1050 = vpop.xlane.xlu0 %1049
          %vm1051 = vcmp.eq.f32.partialorder %v1048, %v1050
          %v1052 = vsel %vm1051, %v1047, inf
          %1053 = vmin.xlane.f32.xlu0 %v1052
          %v1054 = vpop.xlane.xlu0 %1053
          %v1055 = vcvt.f32.s32 %v1054
          %v1056 = vcvt.f32.s32 %v1050
          %v1057 = vshll.u32 %v1056, 16
          %v1058 = vadd.s32 %v1057, %v1055
          %v1059 = vsel %vm973, %v1009, 2147483647
          %v1060 = vand.u32 %v1059, 65535
          %v1061 = vshra.s32 %v1059, 16
          %v1062 = vcvt.s32.f32 %v1060
          %v1063 = vcvt.s32.f32 %v1061
          %1064 = vmin.xlane.f32.xlu0 %v1063
          %v1065 = vpop.xlane.xlu0 %1064
          %vm1066 = vcmp.eq.f32.partialorder %v1063, %v1065
          %v1067 = vsel %vm1066, %v1062, inf
          %1068 = vmin.xlane.f32.xlu0 %v1067
          %v1069 = vpop.xlane.xlu0 %1068
          %v1070 = vcvt.f32.s32 %v1069
          %v1071 = vcvt.f32.s32 %v1065
          %v1072 = vshll.u32 %v1071, 16
          %v1073 = vadd.s32 %v1072, %v1070
          %v1074 = vsel %vm973, %v1010, 2147483647
          %v1075 = vand.u32 %v1074, 65535
          %v1076 = vshra.s32 %v1074, 16
          %v1077 = vcvt.s32.f32 %v1075
          %v1078 = vcvt.s32.f32 %v1076
          %1079 = vmin.xlane.f32.xlu0 %v1078
          %v1080 = vpop.xlane.xlu0 %1079
          %vm1081 = vcmp.eq.f32.partialorder %v1078, %v1080
          %v1082 = vsel %vm1081, %v1077, inf
          %1083 = vmin.xlane.f32.xlu0 %v1082
          %v1084 = vpop.xlane.xlu0 %1083
          %v1085 = vcvt.f32.s32 %v1084
          %v1086 = vcvt.f32.s32 %v1080
          %v1087 = vshll.u32 %v1086, 16
          %v1088 = vadd.s32 %v1087, %v1085
          %v1089 = vsel %vm973, %v1011, 2147483647
          %v1090 = vand.u32 %v1089, 65535
          %v1091 = vshra.s32 %v1089, 16
          %v1092 = vcvt.s32.f32 %v1090
          %v1093 = vcvt.s32.f32 %v1091
          %1094 = vmin.xlane.f32.xlu0 %v1093
          %v1095 = vpop.xlane.xlu0 %1094
          %vm1096 = vcmp.eq.f32.partialorder %v1093, %v1095
          %v1097 = vsel %vm1096, %v1092, inf
          %1098 = vmin.xlane.f32.xlu0 %v1097
          %v1099 = vpop.xlane.xlu0 %1098
          %v1100 = vcvt.f32.s32 %v1099
          %v1101 = vcvt.f32.s32 %v1095
          %v1102 = vshll.u32 %v1101, 16
          %v1103 = vadd.s32 %v1102, %v1100
          %v1104 = vsel %vm973, %v1012, 2147483647
          %v1105 = vand.u32 %v1104, 65535
          %v1106 = vshra.s32 %v1104, 16
          %v1107 = vcvt.s32.f32 %v1105
          %v1108 = vcvt.s32.f32 %v1106
          %1109 = vmin.xlane.f32.xlu0 %v1108
          %v1110 = vpop.xlane.xlu0 %1109
          %vm1111 = vcmp.eq.f32.partialorder %v1108, %v1110
          %v1112 = vsel %vm1111, %v1107, inf
          %1113 = vmin.xlane.f32.xlu0 %v1112
          %v1114 = vpop.xlane.xlu0 %1113
          %v1115 = vcvt.f32.s32 %v1114
          %v1116 = vcvt.f32.s32 %v1110
          %v1117 = vshll.u32 %v1116, 16
          %v1118 = vadd.s32 %v1117, %v1115
          %v1119 = vsel %vm973, %v1013, 2147483647
          %v1120 = vand.u32 %v1119, 65535
          %v1121 = vshra.s32 %v1119, 16
          %v1122 = vcvt.s32.f32 %v1120
          %v1123 = vcvt.s32.f32 %v1121
          %1124 = vmin.xlane.f32.xlu0 %v1123
          %v1125 = vpop.xlane.xlu0 %1124
          %vm1126 = vcmp.eq.f32.partialorder %v1123, %v1125
          %v1127 = vsel %vm1126, %v1122, inf
          %1128 = vmin.xlane.f32.xlu0 %v1127
          %v1129 = vpop.xlane.xlu0 %1128
          %v1130 = vcvt.f32.s32 %v1129
          %v1131 = vcvt.f32.s32 %v1125
          %v1132 = vshll.u32 %v1131, 16
          %v1133 = vadd.s32 %v1132, %v1130
          %vm1134 = vcmp.eq.s32.totalorder %v746, %v1028
          %vm1135 = vcmp.eq.s32.totalorder %v746, %v1043
          %vm1136 = vcmp.eq.s32.totalorder %v746, %v1058
          %vm1137 = vcmp.eq.s32.totalorder %v746, %v1073
          %vm1138 = vcmp.eq.s32.totalorder %v746, %v1088
          %vm1139 = vcmp.eq.s32.totalorder %v746, %v1103
          %vm1140 = vcmp.eq.s32.totalorder %v746, %v1118
          %vm1141 = vcmp.eq.s32.totalorder %v746, %v1133
          %v1142 = vsel %vm1134, 1, 0
          %v1143 = vsel %vm1135, 1, 0
          %v1144 = vsel %vm1136, 1, 0
          %v1145 = vsel %vm1137, 1, 0
          %v1146 = vsel %vm1138, 1, 0
          %v1147 = vsel %vm1139, 1, 0
          %v1148 = vsel %vm1140, 1, 0
          %v1149 = vsel %vm1141, 1, 0
          %v1150 = vcvt.s32.f32 %v1142
          %v1151 = vcvt.s32.f32 %v1143
          %v1152 = vcvt.s32.f32 %v1144
          %v1153 = vcvt.s32.f32 %v1145
          %v1154 = vcvt.s32.f32 %v1146
          %v1155 = vcvt.s32.f32 %v1147
          %v1156 = vcvt.s32.f32 %v1148
          %v1157 = vcvt.s32.f32 %v1149
          %1158 = vxpose.xlu0.b32.start [1/16] %v1150, 128
          %1159 = vxpose.xlu0.b32.cont [2/16] %v1151, 128
          %1160 = vxpose.xlu0.b32.cont [3/16] %v1152, 128
          %1161 = vxpose.xlu0.b32.cont [4/16] %v1153, 128
          %1162 = vxpose.xlu0.b32.cont [5/16] %v1154, 128
          %1163 = vxpose.xlu0.b32.cont [6/16] %v1155, 128
          %1164 = vxpose.xlu0.b32.cont [7/16] %v1156, 128
          %1165 = vxpose.xlu0.b32.cont [8/16] %v1157, 128
          %1166 = vxpose.xlu0.b32.cont [9/16] 0.0, 128
          %1167 = vxpose.xlu0.b32.cont [10/16] 0.0, 128
          %1168 = vxpose.xlu0.b32.cont [11/16] 0.0, 128
          %1169 = vxpose.xlu0.b32.cont [12/16] 0.0, 128
          %1170 = vxpose.xlu0.b32.cont [13/16] 0.0, 128
          %1171 = vxpose.xlu0.b32.cont [14/16] 0.0, 128
          %1172 = vxpose.xlu0.b32.cont [15/16] 0.0, 128
          %1173 = vxpose.xlu0.b32.end [16/16] 0.0, 128
          %v1174 = vpop.trf.xlu0
          %v1175 = vpop.trf.xlu0
          %v1176 = vpop.trf.xlu0
          %v1177 = vpop.trf.xlu0
          %v1178 = vpop.trf.xlu0
          %v1179 = vpop.trf.xlu0
          %v1180 = vpop.trf.xlu0
          %v1181 = vpop.trf.xlu0
          %v1182 = vpop.trf.xlu0
          %v1183 = vpop.trf.xlu0
          %v1184 = vpop.trf.xlu0
          %v1185 = vpop.trf.xlu0
          %v1186 = vpop.trf.xlu0
          %v1187 = vpop.trf.xlu0
          %v1188 = vpop.trf.xlu0
          %v1189 = vpop.trf.xlu0
          %v1191 = vsel %vm725, %v1174, 0
          %1193 = vmatprep.subr.mxu0 0.0
          %1194 = vmatpush1.msra.mxu0 %v737
          %1195 = vmatprep.subr.mxu0 0.0
          %1196 = vmatpush1.msra.mxu0 %v738
          %1197 = vmatprep.subr.mxu0 0.0
          %1198 = vmatpush1.msra.mxu0 %v739
          %1199 = vmatprep.subr.mxu0 0.0
          %1200 = vmatpush1.msra.mxu0 %v740
          %1201 = vmatprep.subr.mxu0 0.0
          %1202 = vmatpush1.msra.mxu0 %v741
          %1203 = vmatprep.subr.mxu0 0.0
          %1204 = vmatpush1.msra.mxu0 %v742
          %1205 = vmatprep.subr.mxu0 0.0
          %1206 = vmatpush1.msra.mxu0 %v743
          %1207 = vmatprep.subr.mxu0 0.0
          %1208 = vmatpush1.msra.mxu0 %v744
          %1209 = vmatprep.subr.mxu0 0.0
          %1210 = vmatpush1.msra.mxu0 0.0
          %1211 = vmatprep.subr.mxu0 0.0
          %1212 = vmatpush1.msra.mxu0 0.0
          %1213 = vmatprep.subr.mxu0 0.0
          %1214 = vmatpush1.msra.mxu0 0.0
          %1215 = vmatprep.subr.mxu0 0.0
          %1216 = vmatpush1.msra.mxu0 0.0
          %1217 = vmatprep.subr.mxu0 0.0
          %1218 = vmatpush1.msra.mxu0 0.0
          %1219 = vmatprep.subr.mxu0 0.0
          %1220 = vmatpush1.msra.mxu0 0.0
          %1221 = vmatprep.subr.mxu0 0.0
          %1222 = vmatpush1.msra.mxu0 0.0
          %1223 = vmatprep.subr.mxu0 0.0
          %1224 = vmatpush1.msra.mxu0 0.0
          %1225 = vmatprep.subr.mxu0 0.0
          %1226 = vmatpush1.msra.mxu0 0.0
          %1227 = vmatprep.subr.mxu0 0.0
          %1228 = vmatpush1.msra.mxu0 0.0
          %1229 = vmatprep.subr.mxu0 0.0
          %1230 = vmatpush1.msra.mxu0 0.0
          %1231 = vmatprep.subr.mxu0 0.0
          %1232 = vmatpush1.msra.mxu0 0.0
          %1233 = vmatprep.subr.mxu0 0.0
          %1234 = vmatpush1.msra.mxu0 0.0
          %1235 = vmatprep.subr.mxu0 0.0
          %1236 = vmatpush1.msra.mxu0 0.0
          %1237 = vmatprep.subr.mxu0 0.0
          %1238 = vmatpush1.msra.mxu0 0.0
          %1239 = vmatprep.subr.mxu0 0.0
          %1240 = vmatpush1.msra.mxu0 0.0
          %1241 = vmatprep.subr.mxu0 0.0
          %1242 = vmatpush1.msra.mxu0 0.0
          %1243 = vmatprep.subr.mxu0 0.0
          %1244 = vmatpush1.msra.mxu0 0.0
          %1245 = vmatprep.subr.mxu0 0.0
          %1246 = vmatpush1.msra.mxu0 0.0
          %1247 = vmatprep.subr.mxu0 0.0
          %1248 = vmatpush1.msra.mxu0 0.0
          %1249 = vmatprep.subr.mxu0 0.0
          %1250 = vmatpush1.msra.mxu0 0.0
          %1251 = vmatprep.subr.mxu0 0.0
          %1252 = vmatpush1.msra.mxu0 0.0
          %1253 = vmatprep.subr.mxu0 0.0
          %1254 = vmatpush1.msra.mxu0 0.0
          %1255 = vmatprep.subr.mxu0 0.0
          %1256 = vmatpush1.msra.mxu0 0.0
          %1257 = vmatprep.mubr.f32.mxu0 0.0
          %1258 = vmatmul.mubr.f32.gmra.mrb[0].mxu0 %v1191
          %v1259 = vpop.f32.mrb[0].mxu0
          %v1260 = vadd.f32 0.0, %v1259
          %v1261 = vpop.f32.mrb[0].mxu0
          %1262 = vdwg.mxu0
          %1263 = vmatprep.subr.mxu0 0.0
          %1264 = vmatpush1.msra.mxu0 1.0
          %1265 = vmatprep.subr.mxu0 0.0
          %1266 = vmatpush1.msra.mxu0 1.0
          %1267 = vmatprep.subr.mxu0 0.0
          %1268 = vmatpush1.msra.mxu0 1.0
          %1269 = vmatprep.subr.mxu0 0.0
          %1270 = vmatpush1.msra.mxu0 1.0
          %1271 = vmatprep.subr.mxu0 0.0
          %1272 = vmatpush1.msra.mxu0 1.0
          %1273 = vmatprep.subr.mxu0 0.0
          %1274 = vmatpush1.msra.mxu0 1.0
          %1275 = vmatprep.subr.mxu0 0.0
          %1276 = vmatpush1.msra.mxu0 1.0
          %1277 = vmatprep.subr.mxu0 0.0
          %1278 = vmatpush1.msra.mxu0 1.0
          %1279 = vmatprep.subr.mxu0 0.0
          %1280 = vmatpush1.msra.mxu0 0.0
          %1281 = vmatprep.subr.mxu0 0.0
          %1282 = vmatpush1.msra.mxu0 0.0
          %1283 = vmatprep.subr.mxu0 0.0
          %1284 = vmatpush1.msra.mxu0 0.0
          %1285 = vmatprep.subr.mxu0 0.0
          %1286 = vmatpush1.msra.mxu0 0.0
          %1287 = vmatprep.subr.mxu0 0.0
          %1288 = vmatpush1.msra.mxu0 0.0
          %1289 = vmatprep.subr.mxu0 0.0
          %1290 = vmatpush1.msra.mxu0 0.0
          %1291 = vmatprep.subr.mxu0 0.0
          %1292 = vmatpush1.msra.mxu0 0.0
          %1293 = vmatprep.subr.mxu0 0.0
          %1294 = vmatpush1.msra.mxu0 0.0
          %1295 = vmatprep.subr.mxu0 0.0
          %1296 = vmatpush1.msra.mxu0 0.0
          %1297 = vmatprep.subr.mxu0 0.0
          %1298 = vmatpush1.msra.mxu0 0.0
          %1299 = vmatprep.subr.mxu0 0.0
          %1300 = vmatpush1.msra.mxu0 0.0
          %1301 = vmatprep.subr.mxu0 0.0
          %1302 = vmatpush1.msra.mxu0 0.0
          %1303 = vmatprep.subr.mxu0 0.0
          %1304 = vmatpush1.msra.mxu0 0.0
          %1305 = vmatprep.subr.mxu0 0.0
          %1306 = vmatpush1.msra.mxu0 0.0
          %1307 = vmatprep.subr.mxu0 0.0
          %1308 = vmatpush1.msra.mxu0 0.0
          %1309 = vmatprep.subr.mxu0 0.0
          %1310 = vmatpush1.msra.mxu0 0.0
          %1311 = vmatprep.subr.mxu0 0.0
          %1312 = vmatpush1.msra.mxu0 0.0
          %1313 = vmatprep.subr.mxu0 0.0
          %1314 = vmatpush1.msra.mxu0 0.0
          %1315 = vmatprep.subr.mxu0 0.0
          %1316 = vmatpush1.msra.mxu0 0.0
          %1317 = vmatprep.subr.mxu0 0.0
          %1318 = vmatpush1.msra.mxu0 0.0
          %1319 = vmatprep.subr.mxu0 0.0
          %1320 = vmatpush1.msra.mxu0 0.0
          %1321 = vmatprep.subr.mxu0 0.0
          %1322 = vmatpush1.msra.mxu0 0.0
          %1323 = vmatprep.subr.mxu0 0.0
          %1324 = vmatpush1.msra.mxu0 0.0
          %1325 = vmatprep.subr.mxu0 0.0
          %1326 = vmatpush1.msra.mxu0 0.0
          %1327 = vmatprep.mubr.f32.mxu0 0.0
          %1328 = vmatmul.mubr.f32.gmra.mrb[0].mxu0 %v1191
          %v1329 = vpop.f32.mrb[0].mxu0
          %v1330 = vadd.f32 0.0, %v1329
          %v1331 = vpop.f32.mrb[0].mxu0
          %1332 = vdwg.mxu0
          %vm1333 = vcmp.gt.f32.partialorder %v1330, 0.5
          %v1334 = vmax.f32 %v1330, 1.0
          %1336 = vset.pattern.permute.xlu0 0
          %1337 = vperm.xlu0 %1336, %v1334
          %v1338 = vpop.permute.xlu0 %1337
          %v1340 = vrcp.pop %v1338
          %v1341 = vmul.f32 %v1260, %v1340
          %v1342 = vsel %vm1333, 1, 0
          %1343 = vset.pattern.permute.xlu0 0
          %1344 = vperm.xlu0 %1343, %v1342
          %v1345 = vpop.permute.xlu0 %1344
          %vm1346 = vcmp.eq.s32.totalorder %v1345, 1
          %v1347 = vsel %vm1346, %v1341, %v737
          %v1349 = vsel %vm725, %v1347, 0
          %1351 = vmatprep.subr.mxu0 0.0
          %1352 = vmatpush1.xpose.msra.mxu0 %v1349
          %1353 = vmatprep.subr.mxu0 0.0
          %1354 = vmatpush1.xpose.msra.mxu0 0.0
          %1355 = vmatprep.subr.mxu0 0.0
          %1356 = vmatpush1.xpose.msra.mxu0 0.0
          %1357 = vmatprep.subr.mxu0 0.0
          %1358 = vmatpush1.xpose.msra.mxu0 0.0
          %1359 = vmatprep.subr.mxu0 0.0
          %1360 = vmatpush1.xpose.msra.mxu0 0.0
          %1361 = vmatprep.subr.mxu0 0.0
          %1362 = vmatpush1.xpose.msra.mxu0 0.0
          %1363 = vmatprep.subr.mxu0 0.0
          %1364 = vmatpush1.xpose.msra.mxu0 0.0
          %1365 = vmatprep.subr.mxu0 0.0
          %1366 = vmatpush1.xpose.msra.mxu0 0.0
          %1367 = vmatprep.subr.mxu0 0.0
          %1368 = vmatpush1.xpose.msra.mxu0 0.0
          %1369 = vmatprep.subr.mxu0 0.0
          %1370 = vmatpush1.xpose.msra.mxu0 0.0
          %1371 = vmatprep.subr.mxu0 0.0
          %1372 = vmatpush1.xpose.msra.mxu0 0.0
          %1373 = vmatprep.subr.mxu0 0.0
          %1374 = vmatpush1.xpose.msra.mxu0 0.0
          %1375 = vmatprep.subr.mxu0 0.0
          %1376 = vmatpush1.xpose.msra.mxu0 0.0
          %1377 = vmatprep.subr.mxu0 0.0
          %1378 = vmatpush1.xpose.msra.mxu0 0.0
          %1379 = vmatprep.subr.mxu0 0.0
          %1380 = vmatpush1.xpose.msra.mxu0 0.0
          %1381 = vmatprep.subr.mxu0 0.0
          %1382 = vmatpush1.xpose.msra.mxu0 0.0
          %1383 = vmatprep.subr.mxu0 0.0
          %1384 = vmatpush1.xpose.msra.mxu0 0.0
          %1385 = vmatprep.subr.mxu0 0.0
          %1386 = vmatpush1.xpose.msra.mxu0 0.0
          %1387 = vmatprep.subr.mxu0 0.0
          %1388 = vmatpush1.xpose.msra.mxu0 0.0
          %1389 = vmatprep.subr.mxu0 0.0
          %1390 = vmatpush1.xpose.msra.mxu0 0.0
          %1391 = vmatprep.subr.mxu0 0.0
          %1392 = vmatpush1.xpose.msra.mxu0 0.0
          %1393 = vmatprep.subr.mxu0 0.0
          %1394 = vmatpush1.xpose.msra.mxu0 0.0
          %1395 = vmatprep.subr.mxu0 0.0
          %1396 = vmatpush1.xpose.msra.mxu0 0.0
          %1397 = vmatprep.subr.mxu0 0.0
          %1398 = vmatpush1.xpose.msra.mxu0 0.0
          %1399 = vmatprep.subr.mxu0 0.0
          %1400 = vmatpush1.xpose.msra.mxu0 0.0
          %1401 = vmatprep.subr.mxu0 0.0
          %1402 = vmatpush1.xpose.msra.mxu0 0.0
          %1403 = vmatprep.subr.mxu0 0.0
          %1404 = vmatpush1.xpose.msra.mxu0 0.0
          %1405 = vmatprep.subr.mxu0 0.0
          %1406 = vmatpush1.xpose.msra.mxu0 0.0
          %1407 = vmatprep.subr.mxu0 0.0
          %1408 = vmatpush1.xpose.msra.mxu0 0.0
          %1409 = vmatprep.subr.mxu0 0.0
          %1410 = vmatpush1.xpose.msra.mxu0 0.0
          %1411 = vmatprep.subr.mxu0 0.0
          %1412 = vmatpush1.xpose.msra.mxu0 0.0
          %1413 = vmatprep.subr.mxu0 0.0
          %1414 = vmatpush1.xpose.msra.mxu0 0.0
          %1415 = vmatprep.mubr.f32.mxu0 0.0
          %1416 = vmatmul.mubr.f32.gmra.mrb[0].mxu0 %v748
          %v1417 = vpop.f32.mrb[0].mxu0
          %v1418 = vadd.f32 0.0, %v1417
          %v1419 = vpop.f32.mrb[0].mxu0
          %1420 = vmatprep.mubr.f32.mxu0 0.0
          %1421 = vmatmul.mubr.f32.gmra.mrb[0].mxu0 %v751
          %v1422 = vpop.f32.mrb[0].mxu0
          %v1423 = vadd.f32 0.0, %v1422
          %v1424 = vpop.f32.mrb[0].mxu0
          %1425 = vmatprep.mubr.f32.mxu0 0.0
          %1426 = vmatmul.mubr.f32.gmra.mrb[0].mxu0 %v754
          %v1427 = vpop.f32.mrb[0].mxu0
          %v1428 = vadd.f32 0.0, %v1427
          %v1429 = vpop.f32.mrb[0].mxu0
          %1430 = vmatprep.mubr.f32.mxu0 0.0
          %1431 = vmatmul.mubr.f32.gmra.mrb[0].mxu0 %v757
          %v1432 = vpop.f32.mrb[0].mxu0
          %v1433 = vadd.f32 0.0, %v1432
          %v1434 = vpop.f32.mrb[0].mxu0
          %1435 = vmatprep.mubr.f32.mxu0 0.0
          %1436 = vmatmul.mubr.f32.gmra.mrb[0].mxu0 %v760
          %v1437 = vpop.f32.mrb[0].mxu0
          %v1438 = vadd.f32 0.0, %v1437
          %v1439 = vpop.f32.mrb[0].mxu0
          %1440 = vmatprep.mubr.f32.mxu0 0.0
          %1441 = vmatmul.mubr.f32.gmra.mrb[0].mxu0 %v763
          %v1442 = vpop.f32.mrb[0].mxu0
          %v1443 = vadd.f32 0.0, %v1442
          %v1444 = vpop.f32.mrb[0].mxu0
          %1445 = vmatprep.mubr.f32.mxu0 0.0
          %1446 = vmatmul.mubr.f32.gmra.mrb[0].mxu0 %v766
          %v1447 = vpop.f32.mrb[0].mxu0
          %v1448 = vadd.f32 0.0, %v1447
          %v1449 = vpop.f32.mrb[0].mxu0
          %1450 = vmatprep.mubr.f32.mxu0 0.0
          %1451 = vmatmul.mubr.f32.gmra.mrb[0].mxu0 %v769
          %v1452 = vpop.f32.mrb[0].mxu0
          %v1453 = vadd.f32 0.0, %v1452
          %v1454 = vpop.f32.mrb[0].mxu0
          %1455 = vdwg.mxu0
          %v1456 = vmul.f32 %v1347, %v1347
          %v1458 = vsel %vm725, %v1456, 0
          %1460 = vmatprep.subr.mxu0 0.0
          %1461 = vmatpush1.xpose.msra.mxu0 %v1458
          %1462 = vmatprep.subr.mxu0 0.0
          %1463 = vmatpush1.xpose.msra.mxu0 0.0
          %1464 = vmatprep.subr.mxu0 0.0
          %1465 = vmatpush1.xpose.msra.mxu0 0.0
          %1466 = vmatprep.subr.mxu0 0.0
          %1467 = vmatpush1.xpose.msra.mxu0 0.0
          %1468 = vmatprep.subr.mxu0 0.0
          %1469 = vmatpush1.xpose.msra.mxu0 0.0
          %1470 = vmatprep.subr.mxu0 0.0
          %1471 = vmatpush1.xpose.msra.mxu0 0.0
          %1472 = vmatprep.subr.mxu0 0.0
          %1473 = vmatpush1.xpose.msra.mxu0 0.0
          %1474 = vmatprep.subr.mxu0 0.0
          %1475 = vmatpush1.xpose.msra.mxu0 0.0
          %1476 = vmatprep.subr.mxu0 0.0
          %1477 = vmatpush1.xpose.msra.mxu0 0.0
          %1478 = vmatprep.subr.mxu0 0.0
          %1479 = vmatpush1.xpose.msra.mxu0 0.0
          %1480 = vmatprep.subr.mxu0 0.0
          %1481 = vmatpush1.xpose.msra.mxu0 0.0
          %1482 = vmatprep.subr.mxu0 0.0
          %1483 = vmatpush1.xpose.msra.mxu0 0.0
          %1484 = vmatprep.subr.mxu0 0.0
          %1485 = vmatpush1.xpose.msra.mxu0 0.0
          %1486 = vmatprep.subr.mxu0 0.0
          %1487 = vmatpush1.xpose.msra.mxu0 0.0
          %1488 = vmatprep.subr.mxu0 0.0
          %1489 = vmatpush1.xpose.msra.mxu0 0.0
          %1490 = vmatprep.subr.mxu0 0.0
          %1491 = vmatpush1.xpose.msra.mxu0 0.0
          %1492 = vmatprep.subr.mxu0 0.0
          %1493 = vmatpush1.xpose.msra.mxu0 0.0
          %1494 = vmatprep.subr.mxu0 0.0
          %1495 = vmatpush1.xpose.msra.mxu0 0.0
          %1496 = vmatprep.subr.mxu0 0.0
          %1497 = vmatpush1.xpose.msra.mxu0 0.0
          %1498 = vmatprep.subr.mxu0 0.0
          %1499 = vmatpush1.xpose.msra.mxu0 0.0
          %1500 = vmatprep.subr.mxu0 0.0
          %1501 = vmatpush1.xpose.msra.mxu0 0.0
          %1502 = vmatprep.subr.mxu0 0.0
          %1503 = vmatpush1.xpose.msra.mxu0 0.0
          %1504 = vmatprep.subr.mxu0 0.0
          %1505 = vmatpush1.xpose.msra.mxu0 0.0
          %1506 = vmatprep.subr.mxu0 0.0
          %1507 = vmatpush1.xpose.msra.mxu0 0.0
          %1508 = vmatprep.subr.mxu0 0.0
          %1509 = vmatpush1.xpose.msra.mxu0 0.0
          %1510 = vmatprep.subr.mxu0 0.0
          %1511 = vmatpush1.xpose.msra.mxu0 0.0
          %1512 = vmatprep.subr.mxu0 0.0
          %1513 = vmatpush1.xpose.msra.mxu0 0.0
          %1514 = vmatprep.subr.mxu0 0.0
          %1515 = vmatpush1.xpose.msra.mxu0 0.0
          %1516 = vmatprep.subr.mxu0 0.0
          %1517 = vmatpush1.xpose.msra.mxu0 0.0
          %1518 = vmatprep.subr.mxu0 0.0
          %1519 = vmatpush1.xpose.msra.mxu0 0.0
          %1520 = vmatprep.subr.mxu0 0.0
          %1521 = vmatpush1.xpose.msra.mxu0 0.0
          %1522 = vmatprep.subr.mxu0 0.0
          %1523 = vmatpush1.xpose.msra.mxu0 0.0
          %1524 = vmatprep.mubr.f32.mxu0 0.0
          %1525 = vmatmul.mubr.f32.gmra.mrb[0].mxu0 %v878
          %v1526 = vpop.f32.mrb[0].mxu0
          %v1527 = vadd.f32 0.0, %v1526
          %v1528 = vpop.f32.mrb[0].mxu0
          %1529 = vdwg.mxu0
          %v1530 = vmul.f32 %v1418, 2.0
          %v1531 = vmul.f32 %v1423, 2.0
          %v1532 = vmul.f32 %v1428, 2.0
          %v1533 = vmul.f32 %v1433, 2.0
          %v1534 = vmul.f32 %v1438, 2.0
          %v1535 = vmul.f32 %v1443, 2.0
          %v1536 = vmul.f32 %v1448, 2.0
          %v1537 = vmul.f32 %v1453, 2.0
          %v1538 = vlaneseq
          %v1539 = vshrl.u32 %v1538, 7
          %v1540 = vsub.s32 0, %v1539
          %v1541 = vrot.slane %v1527, %v1540
          %v1542 = vsub.f32 %v1541, %v1530
          %v1543 = vsub.f32 %v1541, %v1531
          %v1544 = vsub.f32 %v1541, %v1532
          %v1545 = vsub.f32 %v1541, %v1533
          %v1546 = vsub.f32 %v1541, %v1534
          %v1547 = vsub.f32 %v1541, %v1535
          %v1548 = vsub.f32 %v1541, %v1536
          %v1549 = vsub.f32 %v1541, %v1537
          %v1550 = vsel %vm973, %v1542, inf
          %1551 = vmin.xlane.f32.xlu0 %v1550
          %v1552 = vpop.xlane.xlu0 %1551
          %v1553 = vsel %vm973, %v1543, inf
          %1554 = vmin.xlane.f32.xlu0 %v1553
          %v1555 = vpop.xlane.xlu0 %1554
          %v1556 = vsel %vm973, %v1544, inf
          %1557 = vmin.xlane.f32.xlu0 %v1556
          %v1558 = vpop.xlane.xlu0 %1557
          %v1559 = vsel %vm973, %v1545, inf
          %1560 = vmin.xlane.f32.xlu0 %v1559
          %v1561 = vpop.xlane.xlu0 %1560
          %v1562 = vsel %vm973, %v1546, inf
          %1563 = vmin.xlane.f32.xlu0 %v1562
          %v1564 = vpop.xlane.xlu0 %1563
          %v1565 = vsel %vm973, %v1547, inf
          %1566 = vmin.xlane.f32.xlu0 %v1565
          %v1567 = vpop.xlane.xlu0 %1566
          %v1568 = vsel %vm973, %v1548, inf
          %1569 = vmin.xlane.f32.xlu0 %v1568
          %v1570 = vpop.xlane.xlu0 %1569
          %v1571 = vsel %vm973, %v1549, inf
          %1572 = vmin.xlane.f32.xlu0 %v1571
          %v1573 = vpop.xlane.xlu0 %1572
          %vm1574 = vcmp.le.f32.partialorder %v1542, %v1552
          %vm1575 = vcmp.le.f32.partialorder %v1543, %v1555
          %vm1576 = vcmp.le.f32.partialorder %v1544, %v1558
          %vm1577 = vcmp.le.f32.partialorder %v1545, %v1561
          %vm1578 = vcmp.le.f32.partialorder %v1546, %v1564
          %vm1579 = vcmp.le.f32.partialorder %v1547, %v1567
          %vm1580 = vcmp.le.f32.partialorder %v1548, %v1570
          %vm1581 = vcmp.le.f32.partialorder %v1549, %v1573
          %v1582 = vsel %vm1574, %v746, 8
          %v1583 = vsel %vm1575, %v746, 8
          %v1584 = vsel %vm1576, %v746, 8
          %v1585 = vsel %vm1577, %v746, 8
          %v1586 = vsel %vm1578, %v746, 8
          %v1587 = vsel %vm1579, %v746, 8
          %v1588 = vsel %vm1580, %v746, 8
          %v1589 = vsel %vm1581, %v746, 8
          %v1590 = vsel %vm973, %v1582, 2147483647
          %v1591 = vand.u32 %v1590, 65535
          %v1592 = vshra.s32 %v1590, 16
          %v1593 = vcvt.s32.f32 %v1591
          %v1594 = vcvt.s32.f32 %v1592
          %1595 = vmin.xlane.f32.xlu0 %v1594
          %v1596 = vpop.xlane.xlu0 %1595
          %vm1597 = vcmp.eq.f32.partialorder %v1594, %v1596
          %v1598 = vsel %vm1597, %v1593, inf
          %1599 = vmin.xlane.f32.xlu0 %v1598
          %v1600 = vpop.xlane.xlu0 %1599
          %v1601 = vcvt.f32.s32 %v1600
          %v1602 = vcvt.f32.s32 %v1596
          %v1603 = vshll.u32 %v1602, 16
          %v1604 = vadd.s32 %v1603, %v1601
          %v1605 = vsel %vm973, %v1583, 2147483647
          %v1606 = vand.u32 %v1605, 65535
          %v1607 = vshra.s32 %v1605, 16
          %v1608 = vcvt.s32.f32 %v1606
          %v1609 = vcvt.s32.f32 %v1607
          %1610 = vmin.xlane.f32.xlu0 %v1609
          %v1611 = vpop.xlane.xlu0 %1610
          %vm1612 = vcmp.eq.f32.partialorder %v1609, %v1611
          %v1613 = vsel %vm1612, %v1608, inf
          %1614 = vmin.xlane.f32.xlu0 %v1613
          %v1615 = vpop.xlane.xlu0 %1614
          %v1616 = vcvt.f32.s32 %v1615
          %v1617 = vcvt.f32.s32 %v1611
          %v1618 = vshll.u32 %v1617, 16
          %v1619 = vadd.s32 %v1618, %v1616
          %v1620 = vsel %vm973, %v1584, 2147483647
          %v1621 = vand.u32 %v1620, 65535
          %v1622 = vshra.s32 %v1620, 16
          %v1623 = vcvt.s32.f32 %v1621
          %v1624 = vcvt.s32.f32 %v1622
          %1625 = vmin.xlane.f32.xlu0 %v1624
          %v1626 = vpop.xlane.xlu0 %1625
          %vm1627 = vcmp.eq.f32.partialorder %v1624, %v1626
          %v1628 = vsel %vm1627, %v1623, inf
          %1629 = vmin.xlane.f32.xlu0 %v1628
          %v1630 = vpop.xlane.xlu0 %1629
          %v1631 = vcvt.f32.s32 %v1630
          %v1632 = vcvt.f32.s32 %v1626
          %v1633 = vshll.u32 %v1632, 16
          %v1634 = vadd.s32 %v1633, %v1631
          %v1635 = vsel %vm973, %v1585, 2147483647
          %v1636 = vand.u32 %v1635, 65535
          %v1637 = vshra.s32 %v1635, 16
          %v1638 = vcvt.s32.f32 %v1636
          %v1639 = vcvt.s32.f32 %v1637
          %1640 = vmin.xlane.f32.xlu0 %v1639
          %v1641 = vpop.xlane.xlu0 %1640
          %vm1642 = vcmp.eq.f32.partialorder %v1639, %v1641
          %v1643 = vsel %vm1642, %v1638, inf
          %1644 = vmin.xlane.f32.xlu0 %v1643
          %v1645 = vpop.xlane.xlu0 %1644
          %v1646 = vcvt.f32.s32 %v1645
          %v1647 = vcvt.f32.s32 %v1641
          %v1648 = vshll.u32 %v1647, 16
          %v1649 = vadd.s32 %v1648, %v1646
          %v1650 = vsel %vm973, %v1586, 2147483647
          %v1651 = vand.u32 %v1650, 65535
          %v1652 = vshra.s32 %v1650, 16
          %v1653 = vcvt.s32.f32 %v1651
          %v1654 = vcvt.s32.f32 %v1652
          %1655 = vmin.xlane.f32.xlu0 %v1654
          %v1656 = vpop.xlane.xlu0 %1655
          %vm1657 = vcmp.eq.f32.partialorder %v1654, %v1656
          %v1658 = vsel %vm1657, %v1653, inf
          %1659 = vmin.xlane.f32.xlu0 %v1658
          %v1660 = vpop.xlane.xlu0 %1659
          %v1661 = vcvt.f32.s32 %v1660
          %v1662 = vcvt.f32.s32 %v1656
          %v1663 = vshll.u32 %v1662, 16
          %v1664 = vadd.s32 %v1663, %v1661
          %v1665 = vsel %vm973, %v1587, 2147483647
          %v1666 = vand.u32 %v1665, 65535
          %v1667 = vshra.s32 %v1665, 16
          %v1668 = vcvt.s32.f32 %v1666
          %v1669 = vcvt.s32.f32 %v1667
          %1670 = vmin.xlane.f32.xlu0 %v1669
          %v1671 = vpop.xlane.xlu0 %1670
          %vm1672 = vcmp.eq.f32.partialorder %v1669, %v1671
          %v1673 = vsel %vm1672, %v1668, inf
          %1674 = vmin.xlane.f32.xlu0 %v1673
          %v1675 = vpop.xlane.xlu0 %1674
          %v1676 = vcvt.f32.s32 %v1675
          %v1677 = vcvt.f32.s32 %v1671
          %v1678 = vshll.u32 %v1677, 16
          %v1679 = vadd.s32 %v1678, %v1676
          %v1680 = vsel %vm973, %v1588, 2147483647
          %v1681 = vand.u32 %v1680, 65535
          %v1682 = vshra.s32 %v1680, 16
          %v1683 = vcvt.s32.f32 %v1681
          %v1684 = vcvt.s32.f32 %v1682
          %1685 = vmin.xlane.f32.xlu0 %v1684
          %v1686 = vpop.xlane.xlu0 %1685
          %vm1687 = vcmp.eq.f32.partialorder %v1684, %v1686
          %v1688 = vsel %vm1687, %v1683, inf
          %1689 = vmin.xlane.f32.xlu0 %v1688
          %v1690 = vpop.xlane.xlu0 %1689
          %v1691 = vcvt.f32.s32 %v1690
          %v1692 = vcvt.f32.s32 %v1686
          %v1693 = vshll.u32 %v1692, 16
          %v1694 = vadd.s32 %v1693, %v1691
          %v1695 = vsel %vm973, %v1589, 2147483647
          %v1696 = vand.u32 %v1695, 65535
          %v1697 = vshra.s32 %v1695, 16
          %v1698 = vcvt.s32.f32 %v1696
          %v1699 = vcvt.s32.f32 %v1697
          %1700 = vmin.xlane.f32.xlu0 %v1699
          %v1701 = vpop.xlane.xlu0 %1700
          %vm1702 = vcmp.eq.f32.partialorder %v1699, %v1701
          %v1703 = vsel %vm1702, %v1698, inf
          %1704 = vmin.xlane.f32.xlu0 %v1703
          %v1705 = vpop.xlane.xlu0 %1704
          %v1706 = vcvt.f32.s32 %v1705
          %v1707 = vcvt.f32.s32 %v1701
          %v1708 = vshll.u32 %v1707, 16
          %v1709 = vadd.s32 %v1708, %v1706
          %vm1710 = vcmp.eq.s32.totalorder %v746, %v1604
          %vm1711 = vcmp.eq.s32.totalorder %v746, %v1619
          %vm1712 = vcmp.eq.s32.totalorder %v746, %v1634
          %vm1713 = vcmp.eq.s32.totalorder %v746, %v1649
          %vm1714 = vcmp.eq.s32.totalorder %v746, %v1664
          %vm1715 = vcmp.eq.s32.totalorder %v746, %v1679
          %vm1716 = vcmp.eq.s32.totalorder %v746, %v1694
          %vm1717 = vcmp.eq.s32.totalorder %v746, %v1709
          %v1718 = vsel %vm1710, 1, 0
          %v1719 = vsel %vm1711, 1, 0
          %v1720 = vsel %vm1712, 1, 0
          %v1721 = vsel %vm1713, 1, 0
          %v1722 = vsel %vm1714, 1, 0
          %v1723 = vsel %vm1715, 1, 0
          %v1724 = vsel %vm1716, 1, 0
          %v1725 = vsel %vm1717, 1, 0
          %v1726 = vcvt.s32.f32 %v1718
          %v1727 = vcvt.s32.f32 %v1719
          %v1728 = vcvt.s32.f32 %v1720
          %v1729 = vcvt.s32.f32 %v1721
          %v1730 = vcvt.s32.f32 %v1722
          %v1731 = vcvt.s32.f32 %v1723
          %v1732 = vcvt.s32.f32 %v1724
          %v1733 = vcvt.s32.f32 %v1725
          %1734 = vxpose.xlu0.b32.start [1/16] %v1726, 128
          %1735 = vxpose.xlu0.b32.cont [2/16] %v1727, 128
          %1736 = vxpose.xlu0.b32.cont [3/16] %v1728, 128
          %1737 = vxpose.xlu0.b32.cont [4/16] %v1729, 128
          %1738 = vxpose.xlu0.b32.cont [5/16] %v1730, 128
          %1739 = vxpose.xlu0.b32.cont [6/16] %v1731, 128
          %1740 = vxpose.xlu0.b32.cont [7/16] %v1732, 128
          %1741 = vxpose.xlu0.b32.cont [8/16] %v1733, 128
          %1742 = vxpose.xlu0.b32.cont [9/16] 0.0, 128
          %1743 = vxpose.xlu0.b32.cont [10/16] 0.0, 128
          %1744 = vxpose.xlu0.b32.cont [11/16] 0.0, 128
          %1745 = vxpose.xlu0.b32.cont [12/16] 0.0, 128
          %1746 = vxpose.xlu0.b32.cont [13/16] 0.0, 128
          %1747 = vxpose.xlu0.b32.cont [14/16] 0.0, 128
          %1748 = vxpose.xlu0.b32.cont [15/16] 0.0, 128
          %1749 = vxpose.xlu0.b32.end [16/16] 0.0, 128
          %v1750 = vpop.trf.xlu0
          %v1751 = vpop.trf.xlu0
          %v1752 = vpop.trf.xlu0
          %v1753 = vpop.trf.xlu0
          %v1754 = vpop.trf.xlu0
          %v1755 = vpop.trf.xlu0
          %v1756 = vpop.trf.xlu0
          %v1757 = vpop.trf.xlu0
          %v1758 = vpop.trf.xlu0
          %v1759 = vpop.trf.xlu0
          %v1760 = vpop.trf.xlu0
          %v1761 = vpop.trf.xlu0
          %v1762 = vpop.trf.xlu0
          %v1763 = vpop.trf.xlu0
          %v1764 = vpop.trf.xlu0
          %v1765 = vpop.trf.xlu0
          %v1767 = vsel %vm725, %v1750, 0
          %1769 = vmatprep.subr.mxu0 0.0
          %1770 = vmatpush1.msra.mxu0 %v737
          %1771 = vmatprep.subr.mxu0 0.0
          %1772 = vmatpush1.msra.mxu0 %v738
          %1773 = vmatprep.subr.mxu0 0.0
          %1774 = vmatpush1.msra.mxu0 %v739
          %1775 = vmatprep.subr.mxu0 0.0
          %1776 = vmatpush1.msra.mxu0 %v740
          %1777 = vmatprep.subr.mxu0 0.0
          %1778 = vmatpush1.msra.mxu0 %v741
          %1779 = vmatprep.subr.mxu0 0.0
          %1780 = vmatpush1.msra.mxu0 %v742
          %1781 = vmatprep.subr.mxu0 0.0
          %1782 = vmatpush1.msra.mxu0 %v743
          %1783 = vmatprep.subr.mxu0 0.0
          %1784 = vmatpush1.msra.mxu0 %v744
          %1785 = vmatprep.subr.mxu0 0.0
          %1786 = vmatpush1.msra.mxu0 0.0
          %1787 = vmatprep.subr.mxu0 0.0
          %1788 = vmatpush1.msra.mxu0 0.0
          %1789 = vmatprep.subr.mxu0 0.0
          %1790 = vmatpush1.msra.mxu0 0.0
          %1791 = vmatprep.subr.mxu0 0.0
          %1792 = vmatpush1.msra.mxu0 0.0
          %1793 = vmatprep.subr.mxu0 0.0
          %1794 = vmatpush1.msra.mxu0 0.0
          %1795 = vmatprep.subr.mxu0 0.0
          %1796 = vmatpush1.msra.mxu0 0.0
          %1797 = vmatprep.subr.mxu0 0.0
          %1798 = vmatpush1.msra.mxu0 0.0
          %1799 = vmatprep.subr.mxu0 0.0
          %1800 = vmatpush1.msra.mxu0 0.0
          %1801 = vmatprep.subr.mxu0 0.0
          %1802 = vmatpush1.msra.mxu0 0.0
          %1803 = vmatprep.subr.mxu0 0.0
          %1804 = vmatpush1.msra.mxu0 0.0
          %1805 = vmatprep.subr.mxu0 0.0
          %1806 = vmatpush1.msra.mxu0 0.0
          %1807 = vmatprep.subr.mxu0 0.0
          %1808 = vmatpush1.msra.mxu0 0.0
          %1809 = vmatprep.subr.mxu0 0.0
          %1810 = vmatpush1.msra.mxu0 0.0
          %1811 = vmatprep.subr.mxu0 0.0
          %1812 = vmatpush1.msra.mxu0 0.0
          %1813 = vmatprep.subr.mxu0 0.0
          %1814 = vmatpush1.msra.mxu0 0.0
          %1815 = vmatprep.subr.mxu0 0.0
          %1816 = vmatpush1.msra.mxu0 0.0
          %1817 = vmatprep.subr.mxu0 0.0
          %1818 = vmatpush1.msra.mxu0 0.0
          %1819 = vmatprep.subr.mxu0 0.0
          %1820 = vmatpush1.msra.mxu0 0.0
          %1821 = vmatprep.subr.mxu0 0.0
          %1822 = vmatpush1.msra.mxu0 0.0
          %1823 = vmatprep.subr.mxu0 0.0
          %1824 = vmatpush1.msra.mxu0 0.0
          %1825 = vmatprep.subr.mxu0 0.0
          %1826 = vmatpush1.msra.mxu0 0.0
          %1827 = vmatprep.subr.mxu0 0.0
          %1828 = vmatpush1.msra.mxu0 0.0
          %1829 = vmatprep.subr.mxu0 0.0
          %1830 = vmatpush1.msra.mxu0 0.0
          %1831 = vmatprep.subr.mxu0 0.0
          %1832 = vmatpush1.msra.mxu0 0.0
          %1833 = vmatprep.mubr.f32.mxu0 0.0
          %1834 = vmatmul.mubr.f32.gmra.mrb[0].mxu0 %v1767
          %v1835 = vpop.f32.mrb[0].mxu0
          %v1836 = vadd.f32 0.0, %v1835
          %v1837 = vpop.f32.mrb[0].mxu0
          %1838 = vdwg.mxu0
          %1839 = vmatprep.subr.mxu0 0.0
          %1840 = vmatpush1.msra.mxu0 1.0
          %1841 = vmatprep.subr.mxu0 0.0
          %1842 = vmatpush1.msra.mxu0 1.0
          %1843 = vmatprep.subr.mxu0 0.0
          %1844 = vmatpush1.msra.mxu0 1.0
          %1845 = vmatprep.subr.mxu0 0.0
          %1846 = vmatpush1.msra.mxu0 1.0
          %1847 = vmatprep.subr.mxu0 0.0
          %1848 = vmatpush1.msra.mxu0 1.0
          %1849 = vmatprep.subr.mxu0 0.0
          %1850 = vmatpush1.msra.mxu0 1.0
          %1851 = vmatprep.subr.mxu0 0.0
          %1852 = vmatpush1.msra.mxu0 1.0
          %1853 = vmatprep.subr.mxu0 0.0
          %1854 = vmatpush1.msra.mxu0 1.0
          %1855 = vmatprep.subr.mxu0 0.0
          %1856 = vmatpush1.msra.mxu0 0.0
          %1857 = vmatprep.subr.mxu0 0.0
          %1858 = vmatpush1.msra.mxu0 0.0
          %1859 = vmatprep.subr.mxu0 0.0
          %1860 = vmatpush1.msra.mxu0 0.0
          %1861 = vmatprep.subr.mxu0 0.0
          %1862 = vmatpush1.msra.mxu0 0.0
          %1863 = vmatprep.subr.mxu0 0.0
          %1864 = vmatpush1.msra.mxu0 0.0
          %1865 = vmatprep.subr.mxu0 0.0
          %1866 = vmatpush1.msra.mxu0 0.0
          %1867 = vmatprep.subr.mxu0 0.0
          %1868 = vmatpush1.msra.mxu0 0.0
          %1869 = vmatprep.subr.mxu0 0.0
          %1870 = vmatpush1.msra.mxu0 0.0
          %1871 = vmatprep.subr.mxu0 0.0
          %1872 = vmatpush1.msra.mxu0 0.0
          %1873 = vmatprep.subr.mxu0 0.0
          %1874 = vmatpush1.msra.mxu0 0.0
          %1875 = vmatprep.subr.mxu0 0.0
          %1876 = vmatpush1.msra.mxu0 0.0
          %1877 = vmatprep.subr.mxu0 0.0
          %1878 = vmatpush1.msra.mxu0 0.0
          %1879 = vmatprep.subr.mxu0 0.0
          %1880 = vmatpush1.msra.mxu0 0.0
          %1881 = vmatprep.subr.mxu0 0.0
          %1882 = vmatpush1.msra.mxu0 0.0
          %1883 = vmatprep.subr.mxu0 0.0
          %1884 = vmatpush1.msra.mxu0 0.0
          %1885 = vmatprep.subr.mxu0 0.0
          %1886 = vmatpush1.msra.mxu0 0.0
          %1887 = vmatprep.subr.mxu0 0.0
          %1888 = vmatpush1.msra.mxu0 0.0
          %1889 = vmatprep.subr.mxu0 0.0
          %1890 = vmatpush1.msra.mxu0 0.0
          %1891 = vmatprep.subr.mxu0 0.0
          %1892 = vmatpush1.msra.mxu0 0.0
          %1893 = vmatprep.subr.mxu0 0.0
          %1894 = vmatpush1.msra.mxu0 0.0
          %1895 = vmatprep.subr.mxu0 0.0
          %1896 = vmatpush1.msra.mxu0 0.0
          %1897 = vmatprep.subr.mxu0 0.0
          %1898 = vmatpush1.msra.mxu0 0.0
          %1899 = vmatprep.subr.mxu0 0.0
          %1900 = vmatpush1.msra.mxu0 0.0
          %1901 = vmatprep.subr.mxu0 0.0
          %1902 = vmatpush1.msra.mxu0 0.0
          %1903 = vmatprep.mubr.f32.mxu0 0.0
          %1904 = vmatmul.mubr.f32.gmra.mrb[0].mxu0 %v1767
          %v1905 = vpop.f32.mrb[0].mxu0
          %v1906 = vadd.f32 0.0, %v1905
          %v1907 = vpop.f32.mrb[0].mxu0
          %1908 = vdwg.mxu0
          %vm1909 = vcmp.gt.f32.partialorder %v1906, 0.5
          %v1910 = vmax.f32 %v1906, 1.0
          %1912 = vset.pattern.permute.xlu0 0
          %1913 = vperm.xlu0 %1912, %v1910
          %v1914 = vpop.permute.xlu0 %1913
          %v1916 = vrcp.pop %v1914
          %v1917 = vmul.f32 %v1836, %v1916
          %v1918 = vsel %vm1909, 1, 0
          %1919 = vset.pattern.permute.xlu0 0
          %1920 = vperm.xlu0 %1919, %v1918
          %v1921 = vpop.permute.xlu0 %1920
          %vm1922 = vcmp.eq.s32.totalorder %v1921, 1
          %v1923 = vsel %vm1922, %v1917, %v1347
          %v1925 = vsel %vm725, %v1923, 0
          %1927 = vmatprep.subr.mxu0 0.0
          %1928 = vmatpush1.xpose.msra.mxu0 %v1925
          %1929 = vmatprep.subr.mxu0 0.0
          %1930 = vmatpush1.xpose.msra.mxu0 0.0
          %1931 = vmatprep.subr.mxu0 0.0
          %1932 = vmatpush1.xpose.msra.mxu0 0.0
          %1933 = vmatprep.subr.mxu0 0.0
          %1934 = vmatpush1.xpose.msra.mxu0 0.0
          %1935 = vmatprep.subr.mxu0 0.0
          %1936 = vmatpush1.xpose.msra.mxu0 0.0
          %1937 = vmatprep.subr.mxu0 0.0
          %1938 = vmatpush1.xpose.msra.mxu0 0.0
          %1939 = vmatprep.subr.mxu0 0.0
          %1940 = vmatpush1.xpose.msra.mxu0 0.0
          %1941 = vmatprep.subr.mxu0 0.0
          %1942 = vmatpush1.xpose.msra.mxu0 0.0
          %1943 = vmatprep.subr.mxu0 0.0
          %1944 = vmatpush1.xpose.msra.mxu0 0.0
          %1945 = vmatprep.subr.mxu0 0.0
          %1946 = vmatpush1.xpose.msra.mxu0 0.0
          %1947 = vmatprep.subr.mxu0 0.0
          %1948 = vmatpush1.xpose.msra.mxu0 0.0
          %1949 = vmatprep.subr.mxu0 0.0
          %1950 = vmatpush1.xpose.msra.mxu0 0.0
          %1951 = vmatprep.subr.mxu0 0.0
          %1952 = vmatpush1.xpose.msra.mxu0 0.0
          %1953 = vmatprep.subr.mxu0 0.0
          %1954 = vmatpush1.xpose.msra.mxu0 0.0
          %1955 = vmatprep.subr.mxu0 0.0
          %1956 = vmatpush1.xpose.msra.mxu0 0.0
          %1957 = vmatprep.subr.mxu0 0.0
          %1958 = vmatpush1.xpose.msra.mxu0 0.0
          %1959 = vmatprep.subr.mxu0 0.0
          %1960 = vmatpush1.xpose.msra.mxu0 0.0
          %1961 = vmatprep.subr.mxu0 0.0
          %1962 = vmatpush1.xpose.msra.mxu0 0.0
          %1963 = vmatprep.subr.mxu0 0.0
          %1964 = vmatpush1.xpose.msra.mxu0 0.0
          %1965 = vmatprep.subr.mxu0 0.0
          %1966 = vmatpush1.xpose.msra.mxu0 0.0
          %1967 = vmatprep.subr.mxu0 0.0
          %1968 = vmatpush1.xpose.msra.mxu0 0.0
          %1969 = vmatprep.subr.mxu0 0.0
          %1970 = vmatpush1.xpose.msra.mxu0 0.0
          %1971 = vmatprep.subr.mxu0 0.0
          %1972 = vmatpush1.xpose.msra.mxu0 0.0
          %1973 = vmatprep.subr.mxu0 0.0
          %1974 = vmatpush1.xpose.msra.mxu0 0.0
          %1975 = vmatprep.subr.mxu0 0.0
          %1976 = vmatpush1.xpose.msra.mxu0 0.0
          %1977 = vmatprep.subr.mxu0 0.0
          %1978 = vmatpush1.xpose.msra.mxu0 0.0
          %1979 = vmatprep.subr.mxu0 0.0
          %1980 = vmatpush1.xpose.msra.mxu0 0.0
          %1981 = vmatprep.subr.mxu0 0.0
          %1982 = vmatpush1.xpose.msra.mxu0 0.0
          %1983 = vmatprep.subr.mxu0 0.0
          %1984 = vmatpush1.xpose.msra.mxu0 0.0
          %1985 = vmatprep.subr.mxu0 0.0
          %1986 = vmatpush1.xpose.msra.mxu0 0.0
          %1987 = vmatprep.subr.mxu0 0.0
          %1988 = vmatpush1.xpose.msra.mxu0 0.0
          %1989 = vmatprep.subr.mxu0 0.0
          %1990 = vmatpush1.xpose.msra.mxu0 0.0
          %1991 = vmatprep.mubr.f32.mxu0 0.0
          %1992 = vmatmul.mubr.f32.gmra.mrb[0].mxu0 %v748
          %v1993 = vpop.f32.mrb[0].mxu0
          %v1994 = vadd.f32 0.0, %v1993
          %v1995 = vpop.f32.mrb[0].mxu0
          %1996 = vmatprep.mubr.f32.mxu0 0.0
          %1997 = vmatmul.mubr.f32.gmra.mrb[0].mxu0 %v751
          %v1998 = vpop.f32.mrb[0].mxu0
          %v1999 = vadd.f32 0.0, %v1998
          %v2000 = vpop.f32.mrb[0].mxu0
          %2001 = vmatprep.mubr.f32.mxu0 0.0
          %2002 = vmatmul.mubr.f32.gmra.mrb[0].mxu0 %v754
          %v2003 = vpop.f32.mrb[0].mxu0
          %v2004 = vadd.f32 0.0, %v2003
          %v2005 = vpop.f32.mrb[0].mxu0
          %2006 = vmatprep.mubr.f32.mxu0 0.0
          %2007 = vmatmul.mubr.f32.gmra.mrb[0].mxu0 %v757
          %v2008 = vpop.f32.mrb[0].mxu0
          %v2009 = vadd.f32 0.0, %v2008
          %v2010 = vpop.f32.mrb[0].mxu0
          %2011 = vmatprep.mubr.f32.mxu0 0.0
          %2012 = vmatmul.mubr.f32.gmra.mrb[0].mxu0 %v760
          %v2013 = vpop.f32.mrb[0].mxu0
          %v2014 = vadd.f32 0.0, %v2013
          %v2015 = vpop.f32.mrb[0].mxu0
          %2016 = vmatprep.mubr.f32.mxu0 0.0
          %2017 = vmatmul.mubr.f32.gmra.mrb[0].mxu0 %v763
          %v2018 = vpop.f32.mrb[0].mxu0
          %v2019 = vadd.f32 0.0, %v2018
          %v2020 = vpop.f32.mrb[0].mxu0
          %2021 = vmatprep.mubr.f32.mxu0 0.0
          %2022 = vmatmul.mubr.f32.gmra.mrb[0].mxu0 %v766
          %v2023 = vpop.f32.mrb[0].mxu0
          %v2024 = vadd.f32 0.0, %v2023
          %v2025 = vpop.f32.mrb[0].mxu0
          %2026 = vmatprep.mubr.f32.mxu0 0.0
          %2027 = vmatmul.mubr.f32.gmra.mrb[0].mxu0 %v769
          %v2028 = vpop.f32.mrb[0].mxu0
          %v2029 = vadd.f32 0.0, %v2028
          %v2030 = vpop.f32.mrb[0].mxu0
          %2031 = vdwg.mxu0
          %v2032 = vmul.f32 %v1923, %v1923
          %v2034 = vsel %vm725, %v2032, 0
          %2036 = vmatprep.subr.mxu0 0.0
          %2037 = vmatpush1.xpose.msra.mxu0 %v2034
          %2038 = vmatprep.subr.mxu0 0.0
          %2039 = vmatpush1.xpose.msra.mxu0 0.0
          %2040 = vmatprep.subr.mxu0 0.0
          %2041 = vmatpush1.xpose.msra.mxu0 0.0
          %2042 = vmatprep.subr.mxu0 0.0
          %2043 = vmatpush1.xpose.msra.mxu0 0.0
          %2044 = vmatprep.subr.mxu0 0.0
          %2045 = vmatpush1.xpose.msra.mxu0 0.0
          %2046 = vmatprep.subr.mxu0 0.0
          %2047 = vmatpush1.xpose.msra.mxu0 0.0
          %2048 = vmatprep.subr.mxu0 0.0
          %2049 = vmatpush1.xpose.msra.mxu0 0.0
          %2050 = vmatprep.subr.mxu0 0.0
          %2051 = vmatpush1.xpose.msra.mxu0 0.0
          %2052 = vmatprep.subr.mxu0 0.0
          %2053 = vmatpush1.xpose.msra.mxu0 0.0
          %2054 = vmatprep.subr.mxu0 0.0
          %2055 = vmatpush1.xpose.msra.mxu0 0.0
          %2056 = vmatprep.subr.mxu0 0.0
          %2057 = vmatpush1.xpose.msra.mxu0 0.0
          %2058 = vmatprep.subr.mxu0 0.0
          %2059 = vmatpush1.xpose.msra.mxu0 0.0
          %2060 = vmatprep.subr.mxu0 0.0
          %2061 = vmatpush1.xpose.msra.mxu0 0.0
          %2062 = vmatprep.subr.mxu0 0.0
          %2063 = vmatpush1.xpose.msra.mxu0 0.0
          %2064 = vmatprep.subr.mxu0 0.0
          %2065 = vmatpush1.xpose.msra.mxu0 0.0
          %2066 = vmatprep.subr.mxu0 0.0
          %2067 = vmatpush1.xpose.msra.mxu0 0.0
          %2068 = vmatprep.subr.mxu0 0.0
          %2069 = vmatpush1.xpose.msra.mxu0 0.0
          %2070 = vmatprep.subr.mxu0 0.0
          %2071 = vmatpush1.xpose.msra.mxu0 0.0
          %2072 = vmatprep.subr.mxu0 0.0
          %2073 = vmatpush1.xpose.msra.mxu0 0.0
          %2074 = vmatprep.subr.mxu0 0.0
          %2075 = vmatpush1.xpose.msra.mxu0 0.0
          %2076 = vmatprep.subr.mxu0 0.0
          %2077 = vmatpush1.xpose.msra.mxu0 0.0
          %2078 = vmatprep.subr.mxu0 0.0
          %2079 = vmatpush1.xpose.msra.mxu0 0.0
          %2080 = vmatprep.subr.mxu0 0.0
          %2081 = vmatpush1.xpose.msra.mxu0 0.0
          %2082 = vmatprep.subr.mxu0 0.0
          %2083 = vmatpush1.xpose.msra.mxu0 0.0
          %2084 = vmatprep.subr.mxu0 0.0
          %2085 = vmatpush1.xpose.msra.mxu0 0.0
          %2086 = vmatprep.subr.mxu0 0.0
          %2087 = vmatpush1.xpose.msra.mxu0 0.0
          %2088 = vmatprep.subr.mxu0 0.0
          %2089 = vmatpush1.xpose.msra.mxu0 0.0
          %2090 = vmatprep.subr.mxu0 0.0
          %2091 = vmatpush1.xpose.msra.mxu0 0.0
          %2092 = vmatprep.subr.mxu0 0.0
          %2093 = vmatpush1.xpose.msra.mxu0 0.0
          %2094 = vmatprep.subr.mxu0 0.0
          %2095 = vmatpush1.xpose.msra.mxu0 0.0
          %2096 = vmatprep.subr.mxu0 0.0
          %2097 = vmatpush1.xpose.msra.mxu0 0.0
          %2098 = vmatprep.subr.mxu0 0.0
          %2099 = vmatpush1.xpose.msra.mxu0 0.0
          %2100 = vmatprep.mubr.f32.mxu0 0.0
          %2101 = vmatmul.mubr.f32.gmra.mrb[0].mxu0 %v878
          %v2102 = vpop.f32.mrb[0].mxu0
          %v2103 = vadd.f32 0.0, %v2102
          %v2104 = vpop.f32.mrb[0].mxu0
          %2105 = vdwg.mxu0
          %v2106 = vmul.f32 %v1994, 2.0
          %v2107 = vmul.f32 %v1999, 2.0
          %v2108 = vmul.f32 %v2004, 2.0
          %v2109 = vmul.f32 %v2009, 2.0
          %v2110 = vmul.f32 %v2014, 2.0
          %v2111 = vmul.f32 %v2019, 2.0
          %v2112 = vmul.f32 %v2024, 2.0
          %v2113 = vmul.f32 %v2029, 2.0
          %v2114 = vlaneseq
          %v2115 = vshrl.u32 %v2114, 7
          %v2116 = vsub.s32 0, %v2115
          %v2117 = vrot.slane %v2103, %v2116
          %v2118 = vsub.f32 %v2117, %v2106
          %v2119 = vsub.f32 %v2117, %v2107
          %v2120 = vsub.f32 %v2117, %v2108
          %v2121 = vsub.f32 %v2117, %v2109
          %v2122 = vsub.f32 %v2117, %v2110
          %v2123 = vsub.f32 %v2117, %v2111
          %v2124 = vsub.f32 %v2117, %v2112
          %v2125 = vsub.f32 %v2117, %v2113
          %v2126 = vsel %vm973, %v2118, inf
          %2127 = vmin.xlane.f32.xlu0 %v2126
          %v2128 = vpop.xlane.xlu0 %2127
          %v2129 = vsel %vm973, %v2119, inf
          %2130 = vmin.xlane.f32.xlu0 %v2129
          %v2131 = vpop.xlane.xlu0 %2130
          %v2132 = vsel %vm973, %v2120, inf
          %2133 = vmin.xlane.f32.xlu0 %v2132
          %v2134 = vpop.xlane.xlu0 %2133
          %v2135 = vsel %vm973, %v2121, inf
          %2136 = vmin.xlane.f32.xlu0 %v2135
          %v2137 = vpop.xlane.xlu0 %2136
          %v2138 = vsel %vm973, %v2122, inf
          %2139 = vmin.xlane.f32.xlu0 %v2138
          %v2140 = vpop.xlane.xlu0 %2139
          %v2141 = vsel %vm973, %v2123, inf
          %2142 = vmin.xlane.f32.xlu0 %v2141
          %v2143 = vpop.xlane.xlu0 %2142
          %v2144 = vsel %vm973, %v2124, inf
          %2145 = vmin.xlane.f32.xlu0 %v2144
          %v2146 = vpop.xlane.xlu0 %2145
          %v2147 = vsel %vm973, %v2125, inf
          %2148 = vmin.xlane.f32.xlu0 %v2147
          %v2149 = vpop.xlane.xlu0 %2148
          %vm2150 = vcmp.le.f32.partialorder %v2118, %v2128
          %vm2151 = vcmp.le.f32.partialorder %v2119, %v2131
          %vm2152 = vcmp.le.f32.partialorder %v2120, %v2134
          %vm2153 = vcmp.le.f32.partialorder %v2121, %v2137
          %vm2154 = vcmp.le.f32.partialorder %v2122, %v2140
          %vm2155 = vcmp.le.f32.partialorder %v2123, %v2143
          %vm2156 = vcmp.le.f32.partialorder %v2124, %v2146
          %vm2157 = vcmp.le.f32.partialorder %v2125, %v2149
          %v2158 = vsel %vm2150, %v746, 8
          %v2159 = vsel %vm2151, %v746, 8
          %v2160 = vsel %vm2152, %v746, 8
          %v2161 = vsel %vm2153, %v746, 8
          %v2162 = vsel %vm2154, %v746, 8
          %v2163 = vsel %vm2155, %v746, 8
          %v2164 = vsel %vm2156, %v746, 8
          %v2165 = vsel %vm2157, %v746, 8
          %v2166 = vsel %vm973, %v2158, 2147483647
          %v2167 = vand.u32 %v2166, 65535
          %v2168 = vshra.s32 %v2166, 16
          %v2169 = vcvt.s32.f32 %v2167
          %v2170 = vcvt.s32.f32 %v2168
          %2171 = vmin.xlane.f32.xlu0 %v2170
          %v2172 = vpop.xlane.xlu0 %2171
          %vm2173 = vcmp.eq.f32.partialorder %v2170, %v2172
          %v2174 = vsel %vm2173, %v2169, inf
          %2175 = vmin.xlane.f32.xlu0 %v2174
          %v2176 = vpop.xlane.xlu0 %2175
          %v2177 = vcvt.f32.s32 %v2176
          %v2178 = vcvt.f32.s32 %v2172
          %v2179 = vshll.u32 %v2178, 16
          %v2180 = vadd.s32 %v2179, %v2177
          %v2181 = vsel %vm973, %v2159, 2147483647
          %v2182 = vand.u32 %v2181, 65535
          %v2183 = vshra.s32 %v2181, 16
          %v2184 = vcvt.s32.f32 %v2182
          %v2185 = vcvt.s32.f32 %v2183
          %2186 = vmin.xlane.f32.xlu0 %v2185
          %v2187 = vpop.xlane.xlu0 %2186
          %vm2188 = vcmp.eq.f32.partialorder %v2185, %v2187
          %v2189 = vsel %vm2188, %v2184, inf
          %2190 = vmin.xlane.f32.xlu0 %v2189
          %v2191 = vpop.xlane.xlu0 %2190
          %v2192 = vcvt.f32.s32 %v2191
          %v2193 = vcvt.f32.s32 %v2187
          %v2194 = vshll.u32 %v2193, 16
          %v2195 = vadd.s32 %v2194, %v2192
          %v2196 = vsel %vm973, %v2160, 2147483647
          %v2197 = vand.u32 %v2196, 65535
          %v2198 = vshra.s32 %v2196, 16
          %v2199 = vcvt.s32.f32 %v2197
          %v2200 = vcvt.s32.f32 %v2198
          %2201 = vmin.xlane.f32.xlu0 %v2200
          %v2202 = vpop.xlane.xlu0 %2201
          %vm2203 = vcmp.eq.f32.partialorder %v2200, %v2202
          %v2204 = vsel %vm2203, %v2199, inf
          %2205 = vmin.xlane.f32.xlu0 %v2204
          %v2206 = vpop.xlane.xlu0 %2205
          %v2207 = vcvt.f32.s32 %v2206
          %v2208 = vcvt.f32.s32 %v2202
          %v2209 = vshll.u32 %v2208, 16
          %v2210 = vadd.s32 %v2209, %v2207
          %v2211 = vsel %vm973, %v2161, 2147483647
          %v2212 = vand.u32 %v2211, 65535
          %v2213 = vshra.s32 %v2211, 16
          %v2214 = vcvt.s32.f32 %v2212
          %v2215 = vcvt.s32.f32 %v2213
          %2216 = vmin.xlane.f32.xlu0 %v2215
          %v2217 = vpop.xlane.xlu0 %2216
          %vm2218 = vcmp.eq.f32.partialorder %v2215, %v2217
          %v2219 = vsel %vm2218, %v2214, inf
          %2220 = vmin.xlane.f32.xlu0 %v2219
          %v2221 = vpop.xlane.xlu0 %2220
          %v2222 = vcvt.f32.s32 %v2221
          %v2223 = vcvt.f32.s32 %v2217
          %v2224 = vshll.u32 %v2223, 16
          %v2225 = vadd.s32 %v2224, %v2222
          %v2226 = vsel %vm973, %v2162, 2147483647
          %v2227 = vand.u32 %v2226, 65535
          %v2228 = vshra.s32 %v2226, 16
          %v2229 = vcvt.s32.f32 %v2227
          %v2230 = vcvt.s32.f32 %v2228
          %2231 = vmin.xlane.f32.xlu0 %v2230
          %v2232 = vpop.xlane.xlu0 %2231
          %vm2233 = vcmp.eq.f32.partialorder %v2230, %v2232
          %v2234 = vsel %vm2233, %v2229, inf
          %2235 = vmin.xlane.f32.xlu0 %v2234
          %v2236 = vpop.xlane.xlu0 %2235
          %v2237 = vcvt.f32.s32 %v2236
          %v2238 = vcvt.f32.s32 %v2232
          %v2239 = vshll.u32 %v2238, 16
          %v2240 = vadd.s32 %v2239, %v2237
          %v2241 = vsel %vm973, %v2163, 2147483647
          %v2242 = vand.u32 %v2241, 65535
          %v2243 = vshra.s32 %v2241, 16
          %v2244 = vcvt.s32.f32 %v2242
          %v2245 = vcvt.s32.f32 %v2243
          %2246 = vmin.xlane.f32.xlu0 %v2245
          %v2247 = vpop.xlane.xlu0 %2246
          %vm2248 = vcmp.eq.f32.partialorder %v2245, %v2247
          %v2249 = vsel %vm2248, %v2244, inf
          %2250 = vmin.xlane.f32.xlu0 %v2249
          %v2251 = vpop.xlane.xlu0 %2250
          %v2252 = vcvt.f32.s32 %v2251
          %v2253 = vcvt.f32.s32 %v2247
          %v2254 = vshll.u32 %v2253, 16
          %v2255 = vadd.s32 %v2254, %v2252
          %v2256 = vsel %vm973, %v2164, 2147483647
          %v2257 = vand.u32 %v2256, 65535
          %v2258 = vshra.s32 %v2256, 16
          %v2259 = vcvt.s32.f32 %v2257
          %v2260 = vcvt.s32.f32 %v2258
          %2261 = vmin.xlane.f32.xlu0 %v2260
          %v2262 = vpop.xlane.xlu0 %2261
          %vm2263 = vcmp.eq.f32.partialorder %v2260, %v2262
          %v2264 = vsel %vm2263, %v2259, inf
          %2265 = vmin.xlane.f32.xlu0 %v2264
          %v2266 = vpop.xlane.xlu0 %2265
          %v2267 = vcvt.f32.s32 %v2266
          %v2268 = vcvt.f32.s32 %v2262
          %v2269 = vshll.u32 %v2268, 16
          %v2270 = vadd.s32 %v2269, %v2267
          %v2271 = vsel %vm973, %v2165, 2147483647
          %v2272 = vand.u32 %v2271, 65535
          %v2273 = vshra.s32 %v2271, 16
          %v2274 = vcvt.s32.f32 %v2272
          %v2275 = vcvt.s32.f32 %v2273
          %2276 = vmin.xlane.f32.xlu0 %v2275
          %v2277 = vpop.xlane.xlu0 %2276
          %vm2278 = vcmp.eq.f32.partialorder %v2275, %v2277
          %v2279 = vsel %vm2278, %v2274, inf
          %2280 = vmin.xlane.f32.xlu0 %v2279
          %v2281 = vpop.xlane.xlu0 %2280
          %v2282 = vcvt.f32.s32 %v2281
          %v2283 = vcvt.f32.s32 %v2277
          %v2284 = vshll.u32 %v2283, 16
          %v2285 = vadd.s32 %v2284, %v2282
          %vm2286 = vcmp.eq.s32.totalorder %v746, %v2180
          %vm2287 = vcmp.eq.s32.totalorder %v746, %v2195
          %vm2288 = vcmp.eq.s32.totalorder %v746, %v2210
          %vm2289 = vcmp.eq.s32.totalorder %v746, %v2225
          %vm2290 = vcmp.eq.s32.totalorder %v746, %v2240
          %vm2291 = vcmp.eq.s32.totalorder %v746, %v2255
          %vm2292 = vcmp.eq.s32.totalorder %v746, %v2270
          %vm2293 = vcmp.eq.s32.totalorder %v746, %v2285
          %v2294 = vsel %vm2286, 1, 0
          %v2295 = vsel %vm2287, 1, 0
          %v2296 = vsel %vm2288, 1, 0
          %v2297 = vsel %vm2289, 1, 0
          %v2298 = vsel %vm2290, 1, 0
          %v2299 = vsel %vm2291, 1, 0
          %v2300 = vsel %vm2292, 1, 0
          %v2301 = vsel %vm2293, 1, 0
          %v2302 = vcvt.s32.f32 %v2294
          %v2303 = vcvt.s32.f32 %v2295
          %v2304 = vcvt.s32.f32 %v2296
          %v2305 = vcvt.s32.f32 %v2297
          %v2306 = vcvt.s32.f32 %v2298
          %v2307 = vcvt.s32.f32 %v2299
          %v2308 = vcvt.s32.f32 %v2300
          %v2309 = vcvt.s32.f32 %v2301
          %2310 = vxpose.xlu0.b32.start [1/16] %v2302, 128
          %2311 = vxpose.xlu0.b32.cont [2/16] %v2303, 128
          %2312 = vxpose.xlu0.b32.cont [3/16] %v2304, 128
          %2313 = vxpose.xlu0.b32.cont [4/16] %v2305, 128
          %2314 = vxpose.xlu0.b32.cont [5/16] %v2306, 128
          %2315 = vxpose.xlu0.b32.cont [6/16] %v2307, 128
          %2316 = vxpose.xlu0.b32.cont [7/16] %v2308, 128
          %2317 = vxpose.xlu0.b32.cont [8/16] %v2309, 128
          %2318 = vxpose.xlu0.b32.cont [9/16] 0.0, 128
          %2319 = vxpose.xlu0.b32.cont [10/16] 0.0, 128
          %2320 = vxpose.xlu0.b32.cont [11/16] 0.0, 128
          %2321 = vxpose.xlu0.b32.cont [12/16] 0.0, 128
          %2322 = vxpose.xlu0.b32.cont [13/16] 0.0, 128
          %2323 = vxpose.xlu0.b32.cont [14/16] 0.0, 128
          %2324 = vxpose.xlu0.b32.cont [15/16] 0.0, 128
          %2325 = vxpose.xlu0.b32.end [16/16] 0.0, 128
          %v2326 = vpop.trf.xlu0
          %v2327 = vpop.trf.xlu0
          %v2328 = vpop.trf.xlu0
          %v2329 = vpop.trf.xlu0
          %v2330 = vpop.trf.xlu0
          %v2331 = vpop.trf.xlu0
          %v2332 = vpop.trf.xlu0
          %v2333 = vpop.trf.xlu0
          %v2334 = vpop.trf.xlu0
          %v2335 = vpop.trf.xlu0
          %v2336 = vpop.trf.xlu0
          %v2337 = vpop.trf.xlu0
          %v2338 = vpop.trf.xlu0
          %v2339 = vpop.trf.xlu0
          %v2340 = vpop.trf.xlu0
          %v2341 = vpop.trf.xlu0
          %v2343 = vsel %vm725, %v2326, 0
          %2345 = vmatprep.subr.mxu0 0.0
          %2346 = vmatpush1.msra.mxu0 %v737
          %2347 = vmatprep.subr.mxu0 0.0
          %2348 = vmatpush1.msra.mxu0 %v738
          %2349 = vmatprep.subr.mxu0 0.0
          %2350 = vmatpush1.msra.mxu0 %v739
          %2351 = vmatprep.subr.mxu0 0.0
          %2352 = vmatpush1.msra.mxu0 %v740
          %2353 = vmatprep.subr.mxu0 0.0
          %2354 = vmatpush1.msra.mxu0 %v741
          %2355 = vmatprep.subr.mxu0 0.0
          %2356 = vmatpush1.msra.mxu0 %v742
          %2357 = vmatprep.subr.mxu0 0.0
          %2358 = vmatpush1.msra.mxu0 %v743
          %2359 = vmatprep.subr.mxu0 0.0
          %2360 = vmatpush1.msra.mxu0 %v744
          %2361 = vmatprep.subr.mxu0 0.0
          %2362 = vmatpush1.msra.mxu0 0.0
          %2363 = vmatprep.subr.mxu0 0.0
          %2364 = vmatpush1.msra.mxu0 0.0
          %2365 = vmatprep.subr.mxu0 0.0
          %2366 = vmatpush1.msra.mxu0 0.0
          %2367 = vmatprep.subr.mxu0 0.0
          %2368 = vmatpush1.msra.mxu0 0.0
          %2369 = vmatprep.subr.mxu0 0.0
          %2370 = vmatpush1.msra.mxu0 0.0
          %2371 = vmatprep.subr.mxu0 0.0
          %2372 = vmatpush1.msra.mxu0 0.0
          %2373 = vmatprep.subr.mxu0 0.0
          %2374 = vmatpush1.msra.mxu0 0.0
          %2375 = vmatprep.subr.mxu0 0.0
          %2376 = vmatpush1.msra.mxu0 0.0
          %2377 = vmatprep.subr.mxu0 0.0
          %2378 = vmatpush1.msra.mxu0 0.0
          %2379 = vmatprep.subr.mxu0 0.0
          %2380 = vmatpush1.msra.mxu0 0.0
          %2381 = vmatprep.subr.mxu0 0.0
          %2382 = vmatpush1.msra.mxu0 0.0
          %2383 = vmatprep.subr.mxu0 0.0
          %2384 = vmatpush1.msra.mxu0 0.0
          %2385 = vmatprep.subr.mxu0 0.0
          %2386 = vmatpush1.msra.mxu0 0.0
          %2387 = vmatprep.subr.mxu0 0.0
          %2388 = vmatpush1.msra.mxu0 0.0
          %2389 = vmatprep.subr.mxu0 0.0
          %2390 = vmatpush1.msra.mxu0 0.0
          %2391 = vmatprep.subr.mxu0 0.0
          %2392 = vmatpush1.msra.mxu0 0.0
          %2393 = vmatprep.subr.mxu0 0.0
          %2394 = vmatpush1.msra.mxu0 0.0
          %2395 = vmatprep.subr.mxu0 0.0
          %2396 = vmatpush1.msra.mxu0 0.0
          %2397 = vmatprep.subr.mxu0 0.0
          %2398 = vmatpush1.msra.mxu0 0.0
          %2399 = vmatprep.subr.mxu0 0.0
          %2400 = vmatpush1.msra.mxu0 0.0
          %2401 = vmatprep.subr.mxu0 0.0
          %2402 = vmatpush1.msra.mxu0 0.0
          %2403 = vmatprep.subr.mxu0 0.0
          %2404 = vmatpush1.msra.mxu0 0.0
          %2405 = vmatprep.subr.mxu0 0.0
          %2406 = vmatpush1.msra.mxu0 0.0
          %2407 = vmatprep.subr.mxu0 0.0
          %2408 = vmatpush1.msra.mxu0 0.0
          %2409 = vmatprep.mubr.f32.mxu0 0.0
          %2410 = vmatmul.mubr.f32.gmra.mrb[0].mxu0 %v2343
          %v2411 = vpop.f32.mrb[0].mxu0
          %v2412 = vadd.f32 0.0, %v2411
          %v2413 = vpop.f32.mrb[0].mxu0
          %2414 = vdwg.mxu0
          %2415 = vmatprep.subr.mxu0 0.0
          %2416 = vmatpush1.msra.mxu0 1.0
          %2417 = vmatprep.subr.mxu0 0.0
          %2418 = vmatpush1.msra.mxu0 1.0
          %2419 = vmatprep.subr.mxu0 0.0
          %2420 = vmatpush1.msra.mxu0 1.0
          %2421 = vmatprep.subr.mxu0 0.0
          %2422 = vmatpush1.msra.mxu0 1.0
          %2423 = vmatprep.subr.mxu0 0.0
          %2424 = vmatpush1.msra.mxu0 1.0
          %2425 = vmatprep.subr.mxu0 0.0
          %2426 = vmatpush1.msra.mxu0 1.0
          %2427 = vmatprep.subr.mxu0 0.0
          %2428 = vmatpush1.msra.mxu0 1.0
          %2429 = vmatprep.subr.mxu0 0.0
          %2430 = vmatpush1.msra.mxu0 1.0
          %2431 = vmatprep.subr.mxu0 0.0
          %2432 = vmatpush1.msra.mxu0 0.0
          %2433 = vmatprep.subr.mxu0 0.0
          %2434 = vmatpush1.msra.mxu0 0.0
          %2435 = vmatprep.subr.mxu0 0.0
          %2436 = vmatpush1.msra.mxu0 0.0
          %2437 = vmatprep.subr.mxu0 0.0
          %2438 = vmatpush1.msra.mxu0 0.0
          %2439 = vmatprep.subr.mxu0 0.0
          %2440 = vmatpush1.msra.mxu0 0.0
          %2441 = vmatprep.subr.mxu0 0.0
          %2442 = vmatpush1.msra.mxu0 0.0
          %2443 = vmatprep.subr.mxu0 0.0
          %2444 = vmatpush1.msra.mxu0 0.0
          %2445 = vmatprep.subr.mxu0 0.0
          %2446 = vmatpush1.msra.mxu0 0.0
          %2447 = vmatprep.subr.mxu0 0.0
          %2448 = vmatpush1.msra.mxu0 0.0
          %2449 = vmatprep.subr.mxu0 0.0
          %2450 = vmatpush1.msra.mxu0 0.0
          %2451 = vmatprep.subr.mxu0 0.0
          %2452 = vmatpush1.msra.mxu0 0.0
          %2453 = vmatprep.subr.mxu0 0.0
          %2454 = vmatpush1.msra.mxu0 0.0
          %2455 = vmatprep.subr.mxu0 0.0
          %2456 = vmatpush1.msra.mxu0 0.0
          %2457 = vmatprep.subr.mxu0 0.0
          %2458 = vmatpush1.msra.mxu0 0.0
          %2459 = vmatprep.subr.mxu0 0.0
          %2460 = vmatpush1.msra.mxu0 0.0
          %2461 = vmatprep.subr.mxu0 0.0
          %2462 = vmatpush1.msra.mxu0 0.0
          %2463 = vmatprep.subr.mxu0 0.0
          %2464 = vmatpush1.msra.mxu0 0.0
          %2465 = vmatprep.subr.mxu0 0.0
          %2466 = vmatpush1.msra.mxu0 0.0
          %2467 = vmatprep.subr.mxu0 0.0
          %2468 = vmatpush1.msra.mxu0 0.0
          %2469 = vmatprep.subr.mxu0 0.0
          %2470 = vmatpush1.msra.mxu0 0.0
          %2471 = vmatprep.subr.mxu0 0.0
          %2472 = vmatpush1.msra.mxu0 0.0
          %2473 = vmatprep.subr.mxu0 0.0
          %2474 = vmatpush1.msra.mxu0 0.0
          %2475 = vmatprep.subr.mxu0 0.0
          %2476 = vmatpush1.msra.mxu0 0.0
          %2477 = vmatprep.subr.mxu0 0.0
          %2478 = vmatpush1.msra.mxu0 0.0
          %2479 = vmatprep.mubr.f32.mxu0 0.0
          %2480 = vmatmul.mubr.f32.gmra.mrb[0].mxu0 %v2343
          %v2481 = vpop.f32.mrb[0].mxu0
          %v2482 = vadd.f32 0.0, %v2481
          %v2483 = vpop.f32.mrb[0].mxu0
          %2484 = vdwg.mxu0
          %vm2485 = vcmp.gt.f32.partialorder %v2482, 0.5
          %v2486 = vmax.f32 %v2482, 1.0
          %2488 = vset.pattern.permute.xlu0 0
          %2489 = vperm.xlu0 %2488, %v2486
          %v2490 = vpop.permute.xlu0 %2489
          %v2492 = vrcp.pop %v2490
          %v2493 = vmul.f32 %v2412, %v2492
          %v2494 = vsel %vm2485, 1, 0
          %2495 = vset.pattern.permute.xlu0 0
          %2496 = vperm.xlu0 %2495, %v2494
          %v2497 = vpop.permute.xlu0 %2496
          %vm2498 = vcmp.eq.s32.totalorder %v2497, 1
          %v2499 = vsel %vm2498, %v2493, %v1923
          %v2501 = vsel %vm725, %v2499, 0
          %2503 = vmatprep.subr.mxu0 0.0
          %2504 = vmatpush1.xpose.msra.mxu0 %v2501
          %2505 = vmatprep.subr.mxu0 0.0
          %2506 = vmatpush1.xpose.msra.mxu0 0.0
          %2507 = vmatprep.subr.mxu0 0.0
          %2508 = vmatpush1.xpose.msra.mxu0 0.0
          %2509 = vmatprep.subr.mxu0 0.0
          %2510 = vmatpush1.xpose.msra.mxu0 0.0
          %2511 = vmatprep.subr.mxu0 0.0
          %2512 = vmatpush1.xpose.msra.mxu0 0.0
          %2513 = vmatprep.subr.mxu0 0.0
          %2514 = vmatpush1.xpose.msra.mxu0 0.0
          %2515 = vmatprep.subr.mxu0 0.0
          %2516 = vmatpush1.xpose.msra.mxu0 0.0
          %2517 = vmatprep.subr.mxu0 0.0
          %2518 = vmatpush1.xpose.msra.mxu0 0.0
          %2519 = vmatprep.subr.mxu0 0.0
          %2520 = vmatpush1.xpose.msra.mxu0 0.0
          %2521 = vmatprep.subr.mxu0 0.0
          %2522 = vmatpush1.xpose.msra.mxu0 0.0
          %2523 = vmatprep.subr.mxu0 0.0
          %2524 = vmatpush1.xpose.msra.mxu0 0.0
          %2525 = vmatprep.subr.mxu0 0.0
          %2526 = vmatpush1.xpose.msra.mxu0 0.0
          %2527 = vmatprep.subr.mxu0 0.0
          %2528 = vmatpush1.xpose.msra.mxu0 0.0
          %2529 = vmatprep.subr.mxu0 0.0
          %2530 = vmatpush1.xpose.msra.mxu0 0.0
          %2531 = vmatprep.subr.mxu0 0.0
          %2532 = vmatpush1.xpose.msra.mxu0 0.0
          %2533 = vmatprep.subr.mxu0 0.0
          %2534 = vmatpush1.xpose.msra.mxu0 0.0
          %2535 = vmatprep.subr.mxu0 0.0
          %2536 = vmatpush1.xpose.msra.mxu0 0.0
          %2537 = vmatprep.subr.mxu0 0.0
          %2538 = vmatpush1.xpose.msra.mxu0 0.0
          %2539 = vmatprep.subr.mxu0 0.0
          %2540 = vmatpush1.xpose.msra.mxu0 0.0
          %2541 = vmatprep.subr.mxu0 0.0
          %2542 = vmatpush1.xpose.msra.mxu0 0.0
          %2543 = vmatprep.subr.mxu0 0.0
          %2544 = vmatpush1.xpose.msra.mxu0 0.0
          %2545 = vmatprep.subr.mxu0 0.0
          %2546 = vmatpush1.xpose.msra.mxu0 0.0
          %2547 = vmatprep.subr.mxu0 0.0
          %2548 = vmatpush1.xpose.msra.mxu0 0.0
          %2549 = vmatprep.subr.mxu0 0.0
          %2550 = vmatpush1.xpose.msra.mxu0 0.0
          %2551 = vmatprep.subr.mxu0 0.0
          %2552 = vmatpush1.xpose.msra.mxu0 0.0
          %2553 = vmatprep.subr.mxu0 0.0
          %2554 = vmatpush1.xpose.msra.mxu0 0.0
          %2555 = vmatprep.subr.mxu0 0.0
          %2556 = vmatpush1.xpose.msra.mxu0 0.0
          %2557 = vmatprep.subr.mxu0 0.0
          %2558 = vmatpush1.xpose.msra.mxu0 0.0
          %2559 = vmatprep.subr.mxu0 0.0
          %2560 = vmatpush1.xpose.msra.mxu0 0.0
          %2561 = vmatprep.subr.mxu0 0.0
          %2562 = vmatpush1.xpose.msra.mxu0 0.0
          %2563 = vmatprep.subr.mxu0 0.0
          %2564 = vmatpush1.xpose.msra.mxu0 0.0
          %2565 = vmatprep.subr.mxu0 0.0
          %2566 = vmatpush1.xpose.msra.mxu0 0.0
          %2567 = vmatprep.mubr.f32.mxu0 0.0
          %2568 = vmatmul.mubr.f32.gmra.mrb[0].mxu0 %v748
          %v2569 = vpop.f32.mrb[0].mxu0
          %v2570 = vadd.f32 0.0, %v2569
          %v2571 = vpop.f32.mrb[0].mxu0
          %2572 = vmatprep.mubr.f32.mxu0 0.0
          %2573 = vmatmul.mubr.f32.gmra.mrb[0].mxu0 %v751
          %v2574 = vpop.f32.mrb[0].mxu0
          %v2575 = vadd.f32 0.0, %v2574
          %v2576 = vpop.f32.mrb[0].mxu0
          %2577 = vmatprep.mubr.f32.mxu0 0.0
          %2578 = vmatmul.mubr.f32.gmra.mrb[0].mxu0 %v754
          %v2579 = vpop.f32.mrb[0].mxu0
          %v2580 = vadd.f32 0.0, %v2579
          %v2581 = vpop.f32.mrb[0].mxu0
          %2582 = vmatprep.mubr.f32.mxu0 0.0
          %2583 = vmatmul.mubr.f32.gmra.mrb[0].mxu0 %v757
          %v2584 = vpop.f32.mrb[0].mxu0
          %v2585 = vadd.f32 0.0, %v2584
          %v2586 = vpop.f32.mrb[0].mxu0
          %2587 = vmatprep.mubr.f32.mxu0 0.0
          %2588 = vmatmul.mubr.f32.gmra.mrb[0].mxu0 %v760
          %v2589 = vpop.f32.mrb[0].mxu0
          %v2590 = vadd.f32 0.0, %v2589
          %v2591 = vpop.f32.mrb[0].mxu0
          %2592 = vmatprep.mubr.f32.mxu0 0.0
          %2593 = vmatmul.mubr.f32.gmra.mrb[0].mxu0 %v763
          %v2594 = vpop.f32.mrb[0].mxu0
          %v2595 = vadd.f32 0.0, %v2594
          %v2596 = vpop.f32.mrb[0].mxu0
          %2597 = vmatprep.mubr.f32.mxu0 0.0
          %2598 = vmatmul.mubr.f32.gmra.mrb[0].mxu0 %v766
          %v2599 = vpop.f32.mrb[0].mxu0
          %v2600 = vadd.f32 0.0, %v2599
          %v2601 = vpop.f32.mrb[0].mxu0
          %2602 = vmatprep.mubr.f32.mxu0 0.0
          %2603 = vmatmul.mubr.f32.gmra.mrb[0].mxu0 %v769
          %v2604 = vpop.f32.mrb[0].mxu0
          %v2605 = vadd.f32 0.0, %v2604
          %v2606 = vpop.f32.mrb[0].mxu0
          %2607 = vdwg.mxu0
          %v2608 = vmul.f32 %v2499, %v2499
          %v2610 = vsel %vm725, %v2608, 0
          %2612 = vmatprep.subr.mxu0 0.0
          %2613 = vmatpush1.xpose.msra.mxu0 %v2610
          %2614 = vmatprep.subr.mxu0 0.0
          %2615 = vmatpush1.xpose.msra.mxu0 0.0
          %2616 = vmatprep.subr.mxu0 0.0
          %2617 = vmatpush1.xpose.msra.mxu0 0.0
          %2618 = vmatprep.subr.mxu0 0.0
          %2619 = vmatpush1.xpose.msra.mxu0 0.0
          %2620 = vmatprep.subr.mxu0 0.0
          %2621 = vmatpush1.xpose.msra.mxu0 0.0
          %2622 = vmatprep.subr.mxu0 0.0
          %2623 = vmatpush1.xpose.msra.mxu0 0.0
          %2624 = vmatprep.subr.mxu0 0.0
          %2625 = vmatpush1.xpose.msra.mxu0 0.0
          %2626 = vmatprep.subr.mxu0 0.0
          %2627 = vmatpush1.xpose.msra.mxu0 0.0
          %2628 = vmatprep.subr.mxu0 0.0
          %2629 = vmatpush1.xpose.msra.mxu0 0.0
          %2630 = vmatprep.subr.mxu0 0.0
          %2631 = vmatpush1.xpose.msra.mxu0 0.0
          %2632 = vmatprep.subr.mxu0 0.0
          %2633 = vmatpush1.xpose.msra.mxu0 0.0
          %2634 = vmatprep.subr.mxu0 0.0
          %2635 = vmatpush1.xpose.msra.mxu0 0.0
          %2636 = vmatprep.subr.mxu0 0.0
          %2637 = vmatpush1.xpose.msra.mxu0 0.0
          %2638 = vmatprep.subr.mxu0 0.0
          %2639 = vmatpush1.xpose.msra.mxu0 0.0
          %2640 = vmatprep.subr.mxu0 0.0
          %2641 = vmatpush1.xpose.msra.mxu0 0.0
          %2642 = vmatprep.subr.mxu0 0.0
          %2643 = vmatpush1.xpose.msra.mxu0 0.0
          %2644 = vmatprep.subr.mxu0 0.0
          %2645 = vmatpush1.xpose.msra.mxu0 0.0
          %2646 = vmatprep.subr.mxu0 0.0
          %2647 = vmatpush1.xpose.msra.mxu0 0.0
          %2648 = vmatprep.subr.mxu0 0.0
          %2649 = vmatpush1.xpose.msra.mxu0 0.0
          %2650 = vmatprep.subr.mxu0 0.0
          %2651 = vmatpush1.xpose.msra.mxu0 0.0
          %2652 = vmatprep.subr.mxu0 0.0
          %2653 = vmatpush1.xpose.msra.mxu0 0.0
          %2654 = vmatprep.subr.mxu0 0.0
          %2655 = vmatpush1.xpose.msra.mxu0 0.0
          %2656 = vmatprep.subr.mxu0 0.0
          %2657 = vmatpush1.xpose.msra.mxu0 0.0
          %2658 = vmatprep.subr.mxu0 0.0
          %2659 = vmatpush1.xpose.msra.mxu0 0.0
          %2660 = vmatprep.subr.mxu0 0.0
          %2661 = vmatpush1.xpose.msra.mxu0 0.0
          %2662 = vmatprep.subr.mxu0 0.0
          %2663 = vmatpush1.xpose.msra.mxu0 0.0
          %2664 = vmatprep.subr.mxu0 0.0
          %2665 = vmatpush1.xpose.msra.mxu0 0.0
          %2666 = vmatprep.subr.mxu0 0.0
          %2667 = vmatpush1.xpose.msra.mxu0 0.0
          %2668 = vmatprep.subr.mxu0 0.0
          %2669 = vmatpush1.xpose.msra.mxu0 0.0
          %2670 = vmatprep.subr.mxu0 0.0
          %2671 = vmatpush1.xpose.msra.mxu0 0.0
          %2672 = vmatprep.subr.mxu0 0.0
          %2673 = vmatpush1.xpose.msra.mxu0 0.0
          %2674 = vmatprep.subr.mxu0 0.0
          %2675 = vmatpush1.xpose.msra.mxu0 0.0
          %2676 = vmatprep.mubr.f32.mxu0 0.0
          %2677 = vmatmul.mubr.f32.gmra.mrb[0].mxu0 %v878
          %v2678 = vpop.f32.mrb[0].mxu0
          %v2679 = vadd.f32 0.0, %v2678
          %v2680 = vpop.f32.mrb[0].mxu0
          %2681 = vdwg.mxu0
          %v2682 = vmul.f32 %v2570, 2.0
          %v2683 = vmul.f32 %v2575, 2.0
          %v2684 = vmul.f32 %v2580, 2.0
          %v2685 = vmul.f32 %v2585, 2.0
          %v2686 = vmul.f32 %v2590, 2.0
          %v2687 = vmul.f32 %v2595, 2.0
          %v2688 = vmul.f32 %v2600, 2.0
          %v2689 = vmul.f32 %v2605, 2.0
          %v2690 = vlaneseq
          %v2691 = vshrl.u32 %v2690, 7
          %v2692 = vsub.s32 0, %v2691
          %v2693 = vrot.slane %v2679, %v2692
          %v2694 = vsub.f32 %v2693, %v2682
          %v2695 = vsub.f32 %v2693, %v2683
          %v2696 = vsub.f32 %v2693, %v2684
          %v2697 = vsub.f32 %v2693, %v2685
          %v2698 = vsub.f32 %v2693, %v2686
          %v2699 = vsub.f32 %v2693, %v2687
          %v2700 = vsub.f32 %v2693, %v2688
          %v2701 = vsub.f32 %v2693, %v2689
          %v2702 = vsel %vm973, %v2694, inf
          %2703 = vmin.xlane.f32.xlu0 %v2702
          %v2704 = vpop.xlane.xlu0 %2703
          %v2705 = vsel %vm973, %v2695, inf
          %2706 = vmin.xlane.f32.xlu0 %v2705
          %v2707 = vpop.xlane.xlu0 %2706
          %v2708 = vsel %vm973, %v2696, inf
          %2709 = vmin.xlane.f32.xlu0 %v2708
          %v2710 = vpop.xlane.xlu0 %2709
          %v2711 = vsel %vm973, %v2697, inf
          %2712 = vmin.xlane.f32.xlu0 %v2711
          %v2713 = vpop.xlane.xlu0 %2712
          %v2714 = vsel %vm973, %v2698, inf
          %2715 = vmin.xlane.f32.xlu0 %v2714
          %v2716 = vpop.xlane.xlu0 %2715
          %v2717 = vsel %vm973, %v2699, inf
          %2718 = vmin.xlane.f32.xlu0 %v2717
          %v2719 = vpop.xlane.xlu0 %2718
          %v2720 = vsel %vm973, %v2700, inf
          %2721 = vmin.xlane.f32.xlu0 %v2720
          %v2722 = vpop.xlane.xlu0 %2721
          %v2723 = vsel %vm973, %v2701, inf
          %2724 = vmin.xlane.f32.xlu0 %v2723
          %v2725 = vpop.xlane.xlu0 %2724
          %vm2726 = vcmp.le.f32.partialorder %v2694, %v2704
          %vm2727 = vcmp.le.f32.partialorder %v2695, %v2707
          %vm2728 = vcmp.le.f32.partialorder %v2696, %v2710
          %vm2729 = vcmp.le.f32.partialorder %v2697, %v2713
          %vm2730 = vcmp.le.f32.partialorder %v2698, %v2716
          %vm2731 = vcmp.le.f32.partialorder %v2699, %v2719
          %vm2732 = vcmp.le.f32.partialorder %v2700, %v2722
          %vm2733 = vcmp.le.f32.partialorder %v2701, %v2725
          %v2734 = vsel %vm2726, %v746, 8
          %v2735 = vsel %vm2727, %v746, 8
          %v2736 = vsel %vm2728, %v746, 8
          %v2737 = vsel %vm2729, %v746, 8
          %v2738 = vsel %vm2730, %v746, 8
          %v2739 = vsel %vm2731, %v746, 8
          %v2740 = vsel %vm2732, %v746, 8
          %v2741 = vsel %vm2733, %v746, 8
          %v2742 = vsel %vm973, %v2734, 2147483647
          %v2743 = vand.u32 %v2742, 65535
          %v2744 = vshra.s32 %v2742, 16
          %v2745 = vcvt.s32.f32 %v2743
          %v2746 = vcvt.s32.f32 %v2744
          %2747 = vmin.xlane.f32.xlu0 %v2746
          %v2748 = vpop.xlane.xlu0 %2747
          %vm2749 = vcmp.eq.f32.partialorder %v2746, %v2748
          %v2750 = vsel %vm2749, %v2745, inf
          %2751 = vmin.xlane.f32.xlu0 %v2750
          %v2752 = vpop.xlane.xlu0 %2751
          %v2753 = vcvt.f32.s32 %v2752
          %v2754 = vcvt.f32.s32 %v2748
          %v2755 = vshll.u32 %v2754, 16
          %v2756 = vadd.s32 %v2755, %v2753
          %v2757 = vsel %vm973, %v2735, 2147483647
          %v2758 = vand.u32 %v2757, 65535
          %v2759 = vshra.s32 %v2757, 16
          %v2760 = vcvt.s32.f32 %v2758
          %v2761 = vcvt.s32.f32 %v2759
          %2762 = vmin.xlane.f32.xlu0 %v2761
          %v2763 = vpop.xlane.xlu0 %2762
          %vm2764 = vcmp.eq.f32.partialorder %v2761, %v2763
          %v2765 = vsel %vm2764, %v2760, inf
          %2766 = vmin.xlane.f32.xlu0 %v2765
          %v2767 = vpop.xlane.xlu0 %2766
          %v2768 = vcvt.f32.s32 %v2767
          %v2769 = vcvt.f32.s32 %v2763
          %v2770 = vshll.u32 %v2769, 16
          %v2771 = vadd.s32 %v2770, %v2768
          %v2772 = vsel %vm973, %v2736, 2147483647
          %v2773 = vand.u32 %v2772, 65535
          %v2774 = vshra.s32 %v2772, 16
          %v2775 = vcvt.s32.f32 %v2773
          %v2776 = vcvt.s32.f32 %v2774
          %2777 = vmin.xlane.f32.xlu0 %v2776
          %v2778 = vpop.xlane.xlu0 %2777
          %vm2779 = vcmp.eq.f32.partialorder %v2776, %v2778
          %v2780 = vsel %vm2779, %v2775, inf
          %2781 = vmin.xlane.f32.xlu0 %v2780
          %v2782 = vpop.xlane.xlu0 %2781
          %v2783 = vcvt.f32.s32 %v2782
          %v2784 = vcvt.f32.s32 %v2778
          %v2785 = vshll.u32 %v2784, 16
          %v2786 = vadd.s32 %v2785, %v2783
          %v2787 = vsel %vm973, %v2737, 2147483647
          %v2788 = vand.u32 %v2787, 65535
          %v2789 = vshra.s32 %v2787, 16
          %v2790 = vcvt.s32.f32 %v2788
          %v2791 = vcvt.s32.f32 %v2789
          %2792 = vmin.xlane.f32.xlu0 %v2791
          %v2793 = vpop.xlane.xlu0 %2792
          %vm2794 = vcmp.eq.f32.partialorder %v2791, %v2793
          %v2795 = vsel %vm2794, %v2790, inf
          %2796 = vmin.xlane.f32.xlu0 %v2795
          %v2797 = vpop.xlane.xlu0 %2796
          %v2798 = vcvt.f32.s32 %v2797
          %v2799 = vcvt.f32.s32 %v2793
          %v2800 = vshll.u32 %v2799, 16
          %v2801 = vadd.s32 %v2800, %v2798
          %v2802 = vsel %vm973, %v2738, 2147483647
          %v2803 = vand.u32 %v2802, 65535
          %v2804 = vshra.s32 %v2802, 16
          %v2805 = vcvt.s32.f32 %v2803
          %v2806 = vcvt.s32.f32 %v2804
          %2807 = vmin.xlane.f32.xlu0 %v2806
          %v2808 = vpop.xlane.xlu0 %2807
          %vm2809 = vcmp.eq.f32.partialorder %v2806, %v2808
          %v2810 = vsel %vm2809, %v2805, inf
          %2811 = vmin.xlane.f32.xlu0 %v2810
          %v2812 = vpop.xlane.xlu0 %2811
          %v2813 = vcvt.f32.s32 %v2812
          %v2814 = vcvt.f32.s32 %v2808
          %v2815 = vshll.u32 %v2814, 16
          %v2816 = vadd.s32 %v2815, %v2813
          %v2817 = vsel %vm973, %v2739, 2147483647
          %v2818 = vand.u32 %v2817, 65535
          %v2819 = vshra.s32 %v2817, 16
          %v2820 = vcvt.s32.f32 %v2818
          %v2821 = vcvt.s32.f32 %v2819
          %2822 = vmin.xlane.f32.xlu0 %v2821
          %v2823 = vpop.xlane.xlu0 %2822
          %vm2824 = vcmp.eq.f32.partialorder %v2821, %v2823
          %v2825 = vsel %vm2824, %v2820, inf
          %2826 = vmin.xlane.f32.xlu0 %v2825
          %v2827 = vpop.xlane.xlu0 %2826
          %v2828 = vcvt.f32.s32 %v2827
          %v2829 = vcvt.f32.s32 %v2823
          %v2830 = vshll.u32 %v2829, 16
          %v2831 = vadd.s32 %v2830, %v2828
          %v2832 = vsel %vm973, %v2740, 2147483647
          %v2833 = vand.u32 %v2832, 65535
          %v2834 = vshra.s32 %v2832, 16
          %v2835 = vcvt.s32.f32 %v2833
          %v2836 = vcvt.s32.f32 %v2834
          %2837 = vmin.xlane.f32.xlu0 %v2836
          %v2838 = vpop.xlane.xlu0 %2837
          %vm2839 = vcmp.eq.f32.partialorder %v2836, %v2838
          %v2840 = vsel %vm2839, %v2835, inf
          %2841 = vmin.xlane.f32.xlu0 %v2840
          %v2842 = vpop.xlane.xlu0 %2841
          %v2843 = vcvt.f32.s32 %v2842
          %v2844 = vcvt.f32.s32 %v2838
          %v2845 = vshll.u32 %v2844, 16
          %v2846 = vadd.s32 %v2845, %v2843
          %v2847 = vsel %vm973, %v2741, 2147483647
          %v2848 = vand.u32 %v2847, 65535
          %v2849 = vshra.s32 %v2847, 16
          %v2850 = vcvt.s32.f32 %v2848
          %v2851 = vcvt.s32.f32 %v2849
          %2852 = vmin.xlane.f32.xlu0 %v2851
          %v2853 = vpop.xlane.xlu0 %2852
          %vm2854 = vcmp.eq.f32.partialorder %v2851, %v2853
          %v2855 = vsel %vm2854, %v2850, inf
          %2856 = vmin.xlane.f32.xlu0 %v2855
          %v2857 = vpop.xlane.xlu0 %2856
          %v2858 = vcvt.f32.s32 %v2857
          %v2859 = vcvt.f32.s32 %v2853
          %v2860 = vshll.u32 %v2859, 16
          %v2861 = vadd.s32 %v2860, %v2858
          %vm2862 = vcmp.eq.s32.totalorder %v746, %v2756
          %vm2863 = vcmp.eq.s32.totalorder %v746, %v2771
          %vm2864 = vcmp.eq.s32.totalorder %v746, %v2786
          %vm2865 = vcmp.eq.s32.totalorder %v746, %v2801
          %vm2866 = vcmp.eq.s32.totalorder %v746, %v2816
          %vm2867 = vcmp.eq.s32.totalorder %v746, %v2831
          %vm2868 = vcmp.eq.s32.totalorder %v746, %v2846
          %vm2869 = vcmp.eq.s32.totalorder %v746, %v2861
          %v2870 = vsel %vm2862, 1, 0
          %v2871 = vsel %vm2863, 1, 0
          %v2872 = vsel %vm2864, 1, 0
          %v2873 = vsel %vm2865, 1, 0
          %v2874 = vsel %vm2866, 1, 0
          %v2875 = vsel %vm2867, 1, 0
          %v2876 = vsel %vm2868, 1, 0
          %v2877 = vsel %vm2869, 1, 0
          %v2878 = vcvt.s32.f32 %v2870
          %v2879 = vcvt.s32.f32 %v2871
          %v2880 = vcvt.s32.f32 %v2872
          %v2881 = vcvt.s32.f32 %v2873
          %v2882 = vcvt.s32.f32 %v2874
          %v2883 = vcvt.s32.f32 %v2875
          %v2884 = vcvt.s32.f32 %v2876
          %v2885 = vcvt.s32.f32 %v2877
          %2886 = vxpose.xlu0.b32.start [1/16] %v2878, 128
          %2887 = vxpose.xlu0.b32.cont [2/16] %v2879, 128
          %2888 = vxpose.xlu0.b32.cont [3/16] %v2880, 128
          %2889 = vxpose.xlu0.b32.cont [4/16] %v2881, 128
          %2890 = vxpose.xlu0.b32.cont [5/16] %v2882, 128
          %2891 = vxpose.xlu0.b32.cont [6/16] %v2883, 128
          %2892 = vxpose.xlu0.b32.cont [7/16] %v2884, 128
          %2893 = vxpose.xlu0.b32.cont [8/16] %v2885, 128
          %2894 = vxpose.xlu0.b32.cont [9/16] 0.0, 128
          %2895 = vxpose.xlu0.b32.cont [10/16] 0.0, 128
          %2896 = vxpose.xlu0.b32.cont [11/16] 0.0, 128
          %2897 = vxpose.xlu0.b32.cont [12/16] 0.0, 128
          %2898 = vxpose.xlu0.b32.cont [13/16] 0.0, 128
          %2899 = vxpose.xlu0.b32.cont [14/16] 0.0, 128
          %2900 = vxpose.xlu0.b32.cont [15/16] 0.0, 128
          %2901 = vxpose.xlu0.b32.end [16/16] 0.0, 128
          %v2902 = vpop.trf.xlu0
          %v2903 = vpop.trf.xlu0
          %v2904 = vpop.trf.xlu0
          %v2905 = vpop.trf.xlu0
          %v2906 = vpop.trf.xlu0
          %v2907 = vpop.trf.xlu0
          %v2908 = vpop.trf.xlu0
          %v2909 = vpop.trf.xlu0
          %v2910 = vpop.trf.xlu0
          %v2911 = vpop.trf.xlu0
          %v2912 = vpop.trf.xlu0
          %v2913 = vpop.trf.xlu0
          %v2914 = vpop.trf.xlu0
          %v2915 = vpop.trf.xlu0
          %v2916 = vpop.trf.xlu0
          %v2917 = vpop.trf.xlu0
          %v2919 = vsel %vm725, %v2902, 0
          %2921 = vmatprep.subr.mxu0 0.0
          %2922 = vmatpush1.msra.mxu0 %v737
          %2923 = vmatprep.subr.mxu0 0.0
          %2924 = vmatpush1.msra.mxu0 %v738
          %2925 = vmatprep.subr.mxu0 0.0
          %2926 = vmatpush1.msra.mxu0 %v739
          %2927 = vmatprep.subr.mxu0 0.0
          %2928 = vmatpush1.msra.mxu0 %v740
          %2929 = vmatprep.subr.mxu0 0.0
          %2930 = vmatpush1.msra.mxu0 %v741
          %2931 = vmatprep.subr.mxu0 0.0
          %2932 = vmatpush1.msra.mxu0 %v742
          %2933 = vmatprep.subr.mxu0 0.0
          %2934 = vmatpush1.msra.mxu0 %v743
          %2935 = vmatprep.subr.mxu0 0.0
          %2936 = vmatpush1.msra.mxu0 %v744
          %2937 = vmatprep.subr.mxu0 0.0
          %2938 = vmatpush1.msra.mxu0 0.0
          %2939 = vmatprep.subr.mxu0 0.0
          %2940 = vmatpush1.msra.mxu0 0.0
          %2941 = vmatprep.subr.mxu0 0.0
          %2942 = vmatpush1.msra.mxu0 0.0
          %2943 = vmatprep.subr.mxu0 0.0
          %2944 = vmatpush1.msra.mxu0 0.0
          %2945 = vmatprep.subr.mxu0 0.0
          %2946 = vmatpush1.msra.mxu0 0.0
          %2947 = vmatprep.subr.mxu0 0.0
          %2948 = vmatpush1.msra.mxu0 0.0
          %2949 = vmatprep.subr.mxu0 0.0
          %2950 = vmatpush1.msra.mxu0 0.0
          %2951 = vmatprep.subr.mxu0 0.0
          %2952 = vmatpush1.msra.mxu0 0.0
          %2953 = vmatprep.subr.mxu0 0.0
          %2954 = vmatpush1.msra.mxu0 0.0
          %2955 = vmatprep.subr.mxu0 0.0
          %2956 = vmatpush1.msra.mxu0 0.0
          %2957 = vmatprep.subr.mxu0 0.0
          %2958 = vmatpush1.msra.mxu0 0.0
          %2959 = vmatprep.subr.mxu0 0.0
          %2960 = vmatpush1.msra.mxu0 0.0
          %2961 = vmatprep.subr.mxu0 0.0
          %2962 = vmatpush1.msra.mxu0 0.0
          %2963 = vmatprep.subr.mxu0 0.0
          %2964 = vmatpush1.msra.mxu0 0.0
          %2965 = vmatprep.subr.mxu0 0.0
          %2966 = vmatpush1.msra.mxu0 0.0
          %2967 = vmatprep.subr.mxu0 0.0
          %2968 = vmatpush1.msra.mxu0 0.0
          %2969 = vmatprep.subr.mxu0 0.0
          %2970 = vmatpush1.msra.mxu0 0.0
          %2971 = vmatprep.subr.mxu0 0.0
          %2972 = vmatpush1.msra.mxu0 0.0
          %2973 = vmatprep.subr.mxu0 0.0
          %2974 = vmatpush1.msra.mxu0 0.0
          %2975 = vmatprep.subr.mxu0 0.0
          %2976 = vmatpush1.msra.mxu0 0.0
          %2977 = vmatprep.subr.mxu0 0.0
          %2978 = vmatpush1.msra.mxu0 0.0
          %2979 = vmatprep.subr.mxu0 0.0
          %2980 = vmatpush1.msra.mxu0 0.0
          %2981 = vmatprep.subr.mxu0 0.0
          %2982 = vmatpush1.msra.mxu0 0.0
          %2983 = vmatprep.subr.mxu0 0.0
          %2984 = vmatpush1.msra.mxu0 0.0
          %2985 = vmatprep.mubr.f32.mxu0 0.0
          %2986 = vmatmul.mubr.f32.gmra.mrb[0].mxu0 %v2919
          %v2987 = vpop.f32.mrb[0].mxu0
          %v2988 = vadd.f32 0.0, %v2987
          %v2989 = vpop.f32.mrb[0].mxu0
          %2990 = vdwg.mxu0
          %2991 = vmatprep.subr.mxu0 0.0
          %2992 = vmatpush1.msra.mxu0 1.0
          %2993 = vmatprep.subr.mxu0 0.0
          %2994 = vmatpush1.msra.mxu0 1.0
          %2995 = vmatprep.subr.mxu0 0.0
          %2996 = vmatpush1.msra.mxu0 1.0
          %2997 = vmatprep.subr.mxu0 0.0
          %2998 = vmatpush1.msra.mxu0 1.0
          %2999 = vmatprep.subr.mxu0 0.0
          %3000 = vmatpush1.msra.mxu0 1.0
          %3001 = vmatprep.subr.mxu0 0.0
          %3002 = vmatpush1.msra.mxu0 1.0
          %3003 = vmatprep.subr.mxu0 0.0
          %3004 = vmatpush1.msra.mxu0 1.0
          %3005 = vmatprep.subr.mxu0 0.0
          %3006 = vmatpush1.msra.mxu0 1.0
          %3007 = vmatprep.subr.mxu0 0.0
          %3008 = vmatpush1.msra.mxu0 0.0
          %3009 = vmatprep.subr.mxu0 0.0
          %3010 = vmatpush1.msra.mxu0 0.0
          %3011 = vmatprep.subr.mxu0 0.0
          %3012 = vmatpush1.msra.mxu0 0.0
          %3013 = vmatprep.subr.mxu0 0.0
          %3014 = vmatpush1.msra.mxu0 0.0
          %3015 = vmatprep.subr.mxu0 0.0
          %3016 = vmatpush1.msra.mxu0 0.0
          %3017 = vmatprep.subr.mxu0 0.0
          %3018 = vmatpush1.msra.mxu0 0.0
          %3019 = vmatprep.subr.mxu0 0.0
          %3020 = vmatpush1.msra.mxu0 0.0
          %3021 = vmatprep.subr.mxu0 0.0
          %3022 = vmatpush1.msra.mxu0 0.0
          %3023 = vmatprep.subr.mxu0 0.0
          %3024 = vmatpush1.msra.mxu0 0.0
          %3025 = vmatprep.subr.mxu0 0.0
          %3026 = vmatpush1.msra.mxu0 0.0
          %3027 = vmatprep.subr.mxu0 0.0
          %3028 = vmatpush1.msra.mxu0 0.0
          %3029 = vmatprep.subr.mxu0 0.0
          %3030 = vmatpush1.msra.mxu0 0.0
          %3031 = vmatprep.subr.mxu0 0.0
          %3032 = vmatpush1.msra.mxu0 0.0
          %3033 = vmatprep.subr.mxu0 0.0
          %3034 = vmatpush1.msra.mxu0 0.0
          %3035 = vmatprep.subr.mxu0 0.0
          %3036 = vmatpush1.msra.mxu0 0.0
          %3037 = vmatprep.subr.mxu0 0.0
          %3038 = vmatpush1.msra.mxu0 0.0
          %3039 = vmatprep.subr.mxu0 0.0
          %3040 = vmatpush1.msra.mxu0 0.0
          %3041 = vmatprep.subr.mxu0 0.0
          %3042 = vmatpush1.msra.mxu0 0.0
          %3043 = vmatprep.subr.mxu0 0.0
          %3044 = vmatpush1.msra.mxu0 0.0
          %3045 = vmatprep.subr.mxu0 0.0
          %3046 = vmatpush1.msra.mxu0 0.0
          %3047 = vmatprep.subr.mxu0 0.0
          %3048 = vmatpush1.msra.mxu0 0.0
          %3049 = vmatprep.subr.mxu0 0.0
          %3050 = vmatpush1.msra.mxu0 0.0
          %3051 = vmatprep.subr.mxu0 0.0
          %3052 = vmatpush1.msra.mxu0 0.0
          %3053 = vmatprep.subr.mxu0 0.0
          %3054 = vmatpush1.msra.mxu0 0.0
          %3055 = vmatprep.mubr.f32.mxu0 0.0
          %3056 = vmatmul.mubr.f32.gmra.mrb[0].mxu0 %v2919
          %v3057 = vpop.f32.mrb[0].mxu0
          %v3058 = vadd.f32 0.0, %v3057
          %v3059 = vpop.f32.mrb[0].mxu0
          %3060 = vdwg.mxu0
          %vm3061 = vcmp.gt.f32.partialorder %v3058, 0.5
          %v3062 = vmax.f32 %v3058, 1.0
          %3064 = vset.pattern.permute.xlu0 0
          %3065 = vperm.xlu0 %3064, %v3062
          %v3066 = vpop.permute.xlu0 %3065
          %v3068 = vrcp.pop %v3066
          %v3069 = vmul.f32 %v2988, %v3068
          %v3070 = vsel %vm3061, 1, 0
          %3071 = vset.pattern.permute.xlu0 0
          %3072 = vperm.xlu0 %3071, %v3070
          %v3073 = vpop.permute.xlu0 %3072
          %vm3074 = vcmp.eq.s32.totalorder %v3073, 1
          %v3075 = vsel %vm3074, %v3069, %v2499
          %v3077 = vsel %vm725, %v3075, 0
          %3079 = vmatprep.subr.mxu0 0.0
          %3080 = vmatpush1.xpose.msra.mxu0 %v3077
          %3081 = vmatprep.subr.mxu0 0.0
          %3082 = vmatpush1.xpose.msra.mxu0 0.0
          %3083 = vmatprep.subr.mxu0 0.0
          %3084 = vmatpush1.xpose.msra.mxu0 0.0
          %3085 = vmatprep.subr.mxu0 0.0
          %3086 = vmatpush1.xpose.msra.mxu0 0.0
          %3087 = vmatprep.subr.mxu0 0.0
          %3088 = vmatpush1.xpose.msra.mxu0 0.0
          %3089 = vmatprep.subr.mxu0 0.0
          %3090 = vmatpush1.xpose.msra.mxu0 0.0
          %3091 = vmatprep.subr.mxu0 0.0
          %3092 = vmatpush1.xpose.msra.mxu0 0.0
          %3093 = vmatprep.subr.mxu0 0.0
          %3094 = vmatpush1.xpose.msra.mxu0 0.0
          %3095 = vmatprep.subr.mxu0 0.0
          %3096 = vmatpush1.xpose.msra.mxu0 0.0
          %3097 = vmatprep.subr.mxu0 0.0
          %3098 = vmatpush1.xpose.msra.mxu0 0.0
          %3099 = vmatprep.subr.mxu0 0.0
          %3100 = vmatpush1.xpose.msra.mxu0 0.0
          %3101 = vmatprep.subr.mxu0 0.0
          %3102 = vmatpush1.xpose.msra.mxu0 0.0
          %3103 = vmatprep.subr.mxu0 0.0
          %3104 = vmatpush1.xpose.msra.mxu0 0.0
          %3105 = vmatprep.subr.mxu0 0.0
          %3106 = vmatpush1.xpose.msra.mxu0 0.0
          %3107 = vmatprep.subr.mxu0 0.0
          %3108 = vmatpush1.xpose.msra.mxu0 0.0
          %3109 = vmatprep.subr.mxu0 0.0
          %3110 = vmatpush1.xpose.msra.mxu0 0.0
          %3111 = vmatprep.subr.mxu0 0.0
          %3112 = vmatpush1.xpose.msra.mxu0 0.0
          %3113 = vmatprep.subr.mxu0 0.0
          %3114 = vmatpush1.xpose.msra.mxu0 0.0
          %3115 = vmatprep.subr.mxu0 0.0
          %3116 = vmatpush1.xpose.msra.mxu0 0.0
          %3117 = vmatprep.subr.mxu0 0.0
          %3118 = vmatpush1.xpose.msra.mxu0 0.0
          %3119 = vmatprep.subr.mxu0 0.0
          %3120 = vmatpush1.xpose.msra.mxu0 0.0
          %3121 = vmatprep.subr.mxu0 0.0
          %3122 = vmatpush1.xpose.msra.mxu0 0.0
          %3123 = vmatprep.subr.mxu0 0.0
          %3124 = vmatpush1.xpose.msra.mxu0 0.0
          %3125 = vmatprep.subr.mxu0 0.0
          %3126 = vmatpush1.xpose.msra.mxu0 0.0
          %3127 = vmatprep.subr.mxu0 0.0
          %3128 = vmatpush1.xpose.msra.mxu0 0.0
          %3129 = vmatprep.subr.mxu0 0.0
          %3130 = vmatpush1.xpose.msra.mxu0 0.0
          %3131 = vmatprep.subr.mxu0 0.0
          %3132 = vmatpush1.xpose.msra.mxu0 0.0
          %3133 = vmatprep.subr.mxu0 0.0
          %3134 = vmatpush1.xpose.msra.mxu0 0.0
          %3135 = vmatprep.subr.mxu0 0.0
          %3136 = vmatpush1.xpose.msra.mxu0 0.0
          %3137 = vmatprep.subr.mxu0 0.0
          %3138 = vmatpush1.xpose.msra.mxu0 0.0
          %3139 = vmatprep.subr.mxu0 0.0
          %3140 = vmatpush1.xpose.msra.mxu0 0.0
          %3141 = vmatprep.subr.mxu0 0.0
          %3142 = vmatpush1.xpose.msra.mxu0 0.0
          %3143 = vmatprep.mubr.f32.mxu0 0.0
          %3144 = vmatmul.mubr.f32.gmra.mrb[0].mxu0 %v748
          %v3145 = vpop.f32.mrb[0].mxu0
          %v3146 = vadd.f32 0.0, %v3145
          %v3147 = vpop.f32.mrb[0].mxu0
          %3148 = vmatprep.mubr.f32.mxu0 0.0
          %3149 = vmatmul.mubr.f32.gmra.mrb[0].mxu0 %v751
          %v3150 = vpop.f32.mrb[0].mxu0
          %v3151 = vadd.f32 0.0, %v3150
          %v3152 = vpop.f32.mrb[0].mxu0
          %3153 = vmatprep.mubr.f32.mxu0 0.0
          %3154 = vmatmul.mubr.f32.gmra.mrb[0].mxu0 %v754
          %v3155 = vpop.f32.mrb[0].mxu0
          %v3156 = vadd.f32 0.0, %v3155
          %v3157 = vpop.f32.mrb[0].mxu0
          %3158 = vmatprep.mubr.f32.mxu0 0.0
          %3159 = vmatmul.mubr.f32.gmra.mrb[0].mxu0 %v757
          %v3160 = vpop.f32.mrb[0].mxu0
          %v3161 = vadd.f32 0.0, %v3160
          %v3162 = vpop.f32.mrb[0].mxu0
          %3163 = vmatprep.mubr.f32.mxu0 0.0
          %3164 = vmatmul.mubr.f32.gmra.mrb[0].mxu0 %v760
          %v3165 = vpop.f32.mrb[0].mxu0
          %v3166 = vadd.f32 0.0, %v3165
          %v3167 = vpop.f32.mrb[0].mxu0
          %3168 = vmatprep.mubr.f32.mxu0 0.0
          %3169 = vmatmul.mubr.f32.gmra.mrb[0].mxu0 %v763
          %v3170 = vpop.f32.mrb[0].mxu0
          %v3171 = vadd.f32 0.0, %v3170
          %v3172 = vpop.f32.mrb[0].mxu0
          %3173 = vmatprep.mubr.f32.mxu0 0.0
          %3174 = vmatmul.mubr.f32.gmra.mrb[0].mxu0 %v766
          %v3175 = vpop.f32.mrb[0].mxu0
          %v3176 = vadd.f32 0.0, %v3175
          %v3177 = vpop.f32.mrb[0].mxu0
          %3178 = vmatprep.mubr.f32.mxu0 0.0
          %3179 = vmatmul.mubr.f32.gmra.mrb[0].mxu0 %v769
          %v3180 = vpop.f32.mrb[0].mxu0
          %v3181 = vadd.f32 0.0, %v3180
          %v3182 = vpop.f32.mrb[0].mxu0
          %3183 = vdwg.mxu0
          %v3184 = vmul.f32 %v3075, %v3075
          %v3186 = vsel %vm725, %v3184, 0
          %3188 = vmatprep.subr.mxu0 0.0
          %3189 = vmatpush1.xpose.msra.mxu0 %v3186
          %3190 = vmatprep.subr.mxu0 0.0
          %3191 = vmatpush1.xpose.msra.mxu0 0.0
          %3192 = vmatprep.subr.mxu0 0.0
          %3193 = vmatpush1.xpose.msra.mxu0 0.0
          %3194 = vmatprep.subr.mxu0 0.0
          %3195 = vmatpush1.xpose.msra.mxu0 0.0
          %3196 = vmatprep.subr.mxu0 0.0
          %3197 = vmatpush1.xpose.msra.mxu0 0.0
          %3198 = vmatprep.subr.mxu0 0.0
          %3199 = vmatpush1.xpose.msra.mxu0 0.0
          %3200 = vmatprep.subr.mxu0 0.0
          %3201 = vmatpush1.xpose.msra.mxu0 0.0
          %3202 = vmatprep.subr.mxu0 0.0
          %3203 = vmatpush1.xpose.msra.mxu0 0.0
          %3204 = vmatprep.subr.mxu0 0.0
          %3205 = vmatpush1.xpose.msra.mxu0 0.0
          %3206 = vmatprep.subr.mxu0 0.0
          %3207 = vmatpush1.xpose.msra.mxu0 0.0
          %3208 = vmatprep.subr.mxu0 0.0
          %3209 = vmatpush1.xpose.msra.mxu0 0.0
          %3210 = vmatprep.subr.mxu0 0.0
          %3211 = vmatpush1.xpose.msra.mxu0 0.0
          %3212 = vmatprep.subr.mxu0 0.0
          %3213 = vmatpush1.xpose.msra.mxu0 0.0
          %3214 = vmatprep.subr.mxu0 0.0
          %3215 = vmatpush1.xpose.msra.mxu0 0.0
          %3216 = vmatprep.subr.mxu0 0.0
          %3217 = vmatpush1.xpose.msra.mxu0 0.0
          %3218 = vmatprep.subr.mxu0 0.0
          %3219 = vmatpush1.xpose.msra.mxu0 0.0
          %3220 = vmatprep.subr.mxu0 0.0
          %3221 = vmatpush1.xpose.msra.mxu0 0.0
          %3222 = vmatprep.subr.mxu0 0.0
          %3223 = vmatpush1.xpose.msra.mxu0 0.0
          %3224 = vmatprep.subr.mxu0 0.0
          %3225 = vmatpush1.xpose.msra.mxu0 0.0
          %3226 = vmatprep.subr.mxu0 0.0
          %3227 = vmatpush1.xpose.msra.mxu0 0.0
          %3228 = vmatprep.subr.mxu0 0.0
          %3229 = vmatpush1.xpose.msra.mxu0 0.0
          %3230 = vmatprep.subr.mxu0 0.0
          %3231 = vmatpush1.xpose.msra.mxu0 0.0
          %3232 = vmatprep.subr.mxu0 0.0
          %3233 = vmatpush1.xpose.msra.mxu0 0.0
          %3234 = vmatprep.subr.mxu0 0.0
          %3235 = vmatpush1.xpose.msra.mxu0 0.0
          %3236 = vmatprep.subr.mxu0 0.0
          %3237 = vmatpush1.xpose.msra.mxu0 0.0
          %3238 = vmatprep.subr.mxu0 0.0
          %3239 = vmatpush1.xpose.msra.mxu0 0.0
          %3240 = vmatprep.subr.mxu0 0.0
          %3241 = vmatpush1.xpose.msra.mxu0 0.0
          %3242 = vmatprep.subr.mxu0 0.0
          %3243 = vmatpush1.xpose.msra.mxu0 0.0
          %3244 = vmatprep.subr.mxu0 0.0
          %3245 = vmatpush1.xpose.msra.mxu0 0.0
          %3246 = vmatprep.subr.mxu0 0.0
          %3247 = vmatpush1.xpose.msra.mxu0 0.0
          %3248 = vmatprep.subr.mxu0 0.0
          %3249 = vmatpush1.xpose.msra.mxu0 0.0
          %3250 = vmatprep.subr.mxu0 0.0
          %3251 = vmatpush1.xpose.msra.mxu0 0.0
          %3252 = vmatprep.mubr.f32.mxu0 0.0
          %3253 = vmatmul.mubr.f32.gmra.mrb[0].mxu0 %v878
          %v3254 = vpop.f32.mrb[0].mxu0
          %v3255 = vadd.f32 0.0, %v3254
          %v3256 = vpop.f32.mrb[0].mxu0
          %3257 = vdwg.mxu0
          %v3258 = vmul.f32 %v3146, 2.0
          %v3259 = vmul.f32 %v3151, 2.0
          %v3260 = vmul.f32 %v3156, 2.0
          %v3261 = vmul.f32 %v3161, 2.0
          %v3262 = vmul.f32 %v3166, 2.0
          %v3263 = vmul.f32 %v3171, 2.0
          %v3264 = vmul.f32 %v3176, 2.0
          %v3265 = vmul.f32 %v3181, 2.0
          %v3266 = vlaneseq
          %v3267 = vshrl.u32 %v3266, 7
          %v3268 = vsub.s32 0, %v3267
          %v3269 = vrot.slane %v3255, %v3268
          %v3270 = vsub.f32 %v3269, %v3258
          %v3271 = vsub.f32 %v3269, %v3259
          %v3272 = vsub.f32 %v3269, %v3260
          %v3273 = vsub.f32 %v3269, %v3261
          %v3274 = vsub.f32 %v3269, %v3262
          %v3275 = vsub.f32 %v3269, %v3263
          %v3276 = vsub.f32 %v3269, %v3264
          %v3277 = vsub.f32 %v3269, %v3265
          %v3278 = vsel %vm973, %v3270, inf
          %3279 = vmin.xlane.f32.xlu0 %v3278
          %v3280 = vpop.xlane.xlu0 %3279
          %v3281 = vsel %vm973, %v3271, inf
          %3282 = vmin.xlane.f32.xlu0 %v3281
          %v3283 = vpop.xlane.xlu0 %3282
          %v3284 = vsel %vm973, %v3272, inf
          %3285 = vmin.xlane.f32.xlu0 %v3284
          %v3286 = vpop.xlane.xlu0 %3285
          %v3287 = vsel %vm973, %v3273, inf
          %3288 = vmin.xlane.f32.xlu0 %v3287
          %v3289 = vpop.xlane.xlu0 %3288
          %v3290 = vsel %vm973, %v3274, inf
          %3291 = vmin.xlane.f32.xlu0 %v3290
          %v3292 = vpop.xlane.xlu0 %3291
          %v3293 = vsel %vm973, %v3275, inf
          %3294 = vmin.xlane.f32.xlu0 %v3293
          %v3295 = vpop.xlane.xlu0 %3294
          %v3296 = vsel %vm973, %v3276, inf
          %3297 = vmin.xlane.f32.xlu0 %v3296
          %v3298 = vpop.xlane.xlu0 %3297
          %v3299 = vsel %vm973, %v3277, inf
          %3300 = vmin.xlane.f32.xlu0 %v3299
          %v3301 = vpop.xlane.xlu0 %3300
          %vm3302 = vcmp.le.f32.partialorder %v3270, %v3280
          %vm3303 = vcmp.le.f32.partialorder %v3271, %v3283
          %vm3304 = vcmp.le.f32.partialorder %v3272, %v3286
          %vm3305 = vcmp.le.f32.partialorder %v3273, %v3289
          %vm3306 = vcmp.le.f32.partialorder %v3274, %v3292
          %vm3307 = vcmp.le.f32.partialorder %v3275, %v3295
          %vm3308 = vcmp.le.f32.partialorder %v3276, %v3298
          %vm3309 = vcmp.le.f32.partialorder %v3277, %v3301
          %v3310 = vsel %vm3302, %v746, 8
          %v3311 = vsel %vm3303, %v746, 8
          %v3312 = vsel %vm3304, %v746, 8
          %v3313 = vsel %vm3305, %v746, 8
          %v3314 = vsel %vm3306, %v746, 8
          %v3315 = vsel %vm3307, %v746, 8
          %v3316 = vsel %vm3308, %v746, 8
          %v3317 = vsel %vm3309, %v746, 8
          %v3318 = vsel %vm973, %v3310, 2147483647
          %v3319 = vand.u32 %v3318, 65535
          %v3320 = vshra.s32 %v3318, 16
          %v3321 = vcvt.s32.f32 %v3319
          %v3322 = vcvt.s32.f32 %v3320
          %3323 = vmin.xlane.f32.xlu0 %v3322
          %v3324 = vpop.xlane.xlu0 %3323
          %vm3325 = vcmp.eq.f32.partialorder %v3322, %v3324
          %v3326 = vsel %vm3325, %v3321, inf
          %3327 = vmin.xlane.f32.xlu0 %v3326
          %v3328 = vpop.xlane.xlu0 %3327
          %v3329 = vcvt.f32.s32 %v3328
          %v3330 = vcvt.f32.s32 %v3324
          %v3331 = vshll.u32 %v3330, 16
          %v3332 = vadd.s32 %v3331, %v3329
          %v3333 = vsel %vm973, %v3311, 2147483647
          %v3334 = vand.u32 %v3333, 65535
          %v3335 = vshra.s32 %v3333, 16
          %v3336 = vcvt.s32.f32 %v3334
          %v3337 = vcvt.s32.f32 %v3335
          %3338 = vmin.xlane.f32.xlu0 %v3337
          %v3339 = vpop.xlane.xlu0 %3338
          %vm3340 = vcmp.eq.f32.partialorder %v3337, %v3339
          %v3341 = vsel %vm3340, %v3336, inf
          %3342 = vmin.xlane.f32.xlu0 %v3341
          %v3343 = vpop.xlane.xlu0 %3342
          %v3344 = vcvt.f32.s32 %v3343
          %v3345 = vcvt.f32.s32 %v3339
          %v3346 = vshll.u32 %v3345, 16
          %v3347 = vadd.s32 %v3346, %v3344
          %v3348 = vsel %vm973, %v3312, 2147483647
          %v3349 = vand.u32 %v3348, 65535
          %v3350 = vshra.s32 %v3348, 16
          %v3351 = vcvt.s32.f32 %v3349
          %v3352 = vcvt.s32.f32 %v3350
          %3353 = vmin.xlane.f32.xlu0 %v3352
          %v3354 = vpop.xlane.xlu0 %3353
          %vm3355 = vcmp.eq.f32.partialorder %v3352, %v3354
          %v3356 = vsel %vm3355, %v3351, inf
          %3357 = vmin.xlane.f32.xlu0 %v3356
          %v3358 = vpop.xlane.xlu0 %3357
          %v3359 = vcvt.f32.s32 %v3358
          %v3360 = vcvt.f32.s32 %v3354
          %v3361 = vshll.u32 %v3360, 16
          %v3362 = vadd.s32 %v3361, %v3359
          %v3363 = vsel %vm973, %v3313, 2147483647
          %v3364 = vand.u32 %v3363, 65535
          %v3365 = vshra.s32 %v3363, 16
          %v3366 = vcvt.s32.f32 %v3364
          %v3367 = vcvt.s32.f32 %v3365
          %3368 = vmin.xlane.f32.xlu0 %v3367
          %v3369 = vpop.xlane.xlu0 %3368
          %vm3370 = vcmp.eq.f32.partialorder %v3367, %v3369
          %v3371 = vsel %vm3370, %v3366, inf
          %3372 = vmin.xlane.f32.xlu0 %v3371
          %v3373 = vpop.xlane.xlu0 %3372
          %v3374 = vcvt.f32.s32 %v3373
          %v3375 = vcvt.f32.s32 %v3369
          %v3376 = vshll.u32 %v3375, 16
          %v3377 = vadd.s32 %v3376, %v3374
          %v3378 = vsel %vm973, %v3314, 2147483647
          %v3379 = vand.u32 %v3378, 65535
          %v3380 = vshra.s32 %v3378, 16
          %v3381 = vcvt.s32.f32 %v3379
          %v3382 = vcvt.s32.f32 %v3380
          %3383 = vmin.xlane.f32.xlu0 %v3382
          %v3384 = vpop.xlane.xlu0 %3383
          %vm3385 = vcmp.eq.f32.partialorder %v3382, %v3384
          %v3386 = vsel %vm3385, %v3381, inf
          %3387 = vmin.xlane.f32.xlu0 %v3386
          %v3388 = vpop.xlane.xlu0 %3387
          %v3389 = vcvt.f32.s32 %v3388
          %v3390 = vcvt.f32.s32 %v3384
          %v3391 = vshll.u32 %v3390, 16
          %v3392 = vadd.s32 %v3391, %v3389
          %v3393 = vsel %vm973, %v3315, 2147483647
          %v3394 = vand.u32 %v3393, 65535
          %v3395 = vshra.s32 %v3393, 16
          %v3396 = vcvt.s32.f32 %v3394
          %v3397 = vcvt.s32.f32 %v3395
          %3398 = vmin.xlane.f32.xlu0 %v3397
          %v3399 = vpop.xlane.xlu0 %3398
          %vm3400 = vcmp.eq.f32.partialorder %v3397, %v3399
          %v3401 = vsel %vm3400, %v3396, inf
          %3402 = vmin.xlane.f32.xlu0 %v3401
          %v3403 = vpop.xlane.xlu0 %3402
          %v3404 = vcvt.f32.s32 %v3403
          %v3405 = vcvt.f32.s32 %v3399
          %v3406 = vshll.u32 %v3405, 16
          %v3407 = vadd.s32 %v3406, %v3404
          %v3408 = vsel %vm973, %v3316, 2147483647
          %v3409 = vand.u32 %v3408, 65535
          %v3410 = vshra.s32 %v3408, 16
          %v3411 = vcvt.s32.f32 %v3409
          %v3412 = vcvt.s32.f32 %v3410
          %3413 = vmin.xlane.f32.xlu0 %v3412
          %v3414 = vpop.xlane.xlu0 %3413
          %vm3415 = vcmp.eq.f32.partialorder %v3412, %v3414
          %v3416 = vsel %vm3415, %v3411, inf
          %3417 = vmin.xlane.f32.xlu0 %v3416
          %v3418 = vpop.xlane.xlu0 %3417
          %v3419 = vcvt.f32.s32 %v3418
          %v3420 = vcvt.f32.s32 %v3414
          %v3421 = vshll.u32 %v3420, 16
          %v3422 = vadd.s32 %v3421, %v3419
          %v3423 = vsel %vm973, %v3317, 2147483647
          %v3424 = vand.u32 %v3423, 65535
          %v3425 = vshra.s32 %v3423, 16
          %v3426 = vcvt.s32.f32 %v3424
          %v3427 = vcvt.s32.f32 %v3425
          %3428 = vmin.xlane.f32.xlu0 %v3427
          %v3429 = vpop.xlane.xlu0 %3428
          %vm3430 = vcmp.eq.f32.partialorder %v3427, %v3429
          %v3431 = vsel %vm3430, %v3426, inf
          %3432 = vmin.xlane.f32.xlu0 %v3431
          %v3433 = vpop.xlane.xlu0 %3432
          %v3434 = vcvt.f32.s32 %v3433
          %v3435 = vcvt.f32.s32 %v3429
          %v3436 = vshll.u32 %v3435, 16
          %v3437 = vadd.s32 %v3436, %v3434
          %vm3438 = vcmp.eq.s32.totalorder %v746, %v3332
          %vm3439 = vcmp.eq.s32.totalorder %v746, %v3347
          %vm3440 = vcmp.eq.s32.totalorder %v746, %v3362
          %vm3441 = vcmp.eq.s32.totalorder %v746, %v3377
          %vm3442 = vcmp.eq.s32.totalorder %v746, %v3392
          %vm3443 = vcmp.eq.s32.totalorder %v746, %v3407
          %vm3444 = vcmp.eq.s32.totalorder %v746, %v3422
          %vm3445 = vcmp.eq.s32.totalorder %v746, %v3437
          %v3446 = vsel %vm3438, 1, 0
          %v3447 = vsel %vm3439, 1, 0
          %v3448 = vsel %vm3440, 1, 0
          %v3449 = vsel %vm3441, 1, 0
          %v3450 = vsel %vm3442, 1, 0
          %v3451 = vsel %vm3443, 1, 0
          %v3452 = vsel %vm3444, 1, 0
          %v3453 = vsel %vm3445, 1, 0
          %v3454 = vcvt.s32.f32 %v3446
          %v3455 = vcvt.s32.f32 %v3447
          %v3456 = vcvt.s32.f32 %v3448
          %v3457 = vcvt.s32.f32 %v3449
          %v3458 = vcvt.s32.f32 %v3450
          %v3459 = vcvt.s32.f32 %v3451
          %v3460 = vcvt.s32.f32 %v3452
          %v3461 = vcvt.s32.f32 %v3453
          %3462 = vxpose.xlu0.b32.start [1/16] %v3454, 128
          %3463 = vxpose.xlu0.b32.cont [2/16] %v3455, 128
          %3464 = vxpose.xlu0.b32.cont [3/16] %v3456, 128
          %3465 = vxpose.xlu0.b32.cont [4/16] %v3457, 128
          %3466 = vxpose.xlu0.b32.cont [5/16] %v3458, 128
          %3467 = vxpose.xlu0.b32.cont [6/16] %v3459, 128
          %3468 = vxpose.xlu0.b32.cont [7/16] %v3460, 128
          %3469 = vxpose.xlu0.b32.cont [8/16] %v3461, 128
          %3470 = vxpose.xlu0.b32.cont [9/16] 0.0, 128
          %3471 = vxpose.xlu0.b32.cont [10/16] 0.0, 128
          %3472 = vxpose.xlu0.b32.cont [11/16] 0.0, 128
          %3473 = vxpose.xlu0.b32.cont [12/16] 0.0, 128
          %3474 = vxpose.xlu0.b32.cont [13/16] 0.0, 128
          %3475 = vxpose.xlu0.b32.cont [14/16] 0.0, 128
          %3476 = vxpose.xlu0.b32.cont [15/16] 0.0, 128
          %3477 = vxpose.xlu0.b32.end [16/16] 0.0, 128
          %v3478 = vpop.trf.xlu0
          %v3479 = vpop.trf.xlu0
          %v3480 = vpop.trf.xlu0
          %v3481 = vpop.trf.xlu0
          %v3482 = vpop.trf.xlu0
          %v3483 = vpop.trf.xlu0
          %v3484 = vpop.trf.xlu0
          %v3485 = vpop.trf.xlu0
          %v3486 = vpop.trf.xlu0
          %v3487 = vpop.trf.xlu0
          %v3488 = vpop.trf.xlu0
          %v3489 = vpop.trf.xlu0
          %v3490 = vpop.trf.xlu0
          %v3491 = vpop.trf.xlu0
          %v3492 = vpop.trf.xlu0
          %v3493 = vpop.trf.xlu0
          %v3495 = vsel %vm725, %v3478, 0
          %3497 = vmatprep.subr.mxu0 0.0
          %3498 = vmatpush1.msra.mxu0 %v737
          %3499 = vmatprep.subr.mxu0 0.0
          %3500 = vmatpush1.msra.mxu0 %v738
          %3501 = vmatprep.subr.mxu0 0.0
          %3502 = vmatpush1.msra.mxu0 %v739
          %3503 = vmatprep.subr.mxu0 0.0
          %3504 = vmatpush1.msra.mxu0 %v740
          %3505 = vmatprep.subr.mxu0 0.0
          %3506 = vmatpush1.msra.mxu0 %v741
          %3507 = vmatprep.subr.mxu0 0.0
          %3508 = vmatpush1.msra.mxu0 %v742
          %3509 = vmatprep.subr.mxu0 0.0
          %3510 = vmatpush1.msra.mxu0 %v743
          %3511 = vmatprep.subr.mxu0 0.0
          %3512 = vmatpush1.msra.mxu0 %v744
          %3513 = vmatprep.subr.mxu0 0.0
          %3514 = vmatpush1.msra.mxu0 0.0
          %3515 = vmatprep.subr.mxu0 0.0
          %3516 = vmatpush1.msra.mxu0 0.0
          %3517 = vmatprep.subr.mxu0 0.0
          %3518 = vmatpush1.msra.mxu0 0.0
          %3519 = vmatprep.subr.mxu0 0.0
          %3520 = vmatpush1.msra.mxu0 0.0
          %3521 = vmatprep.subr.mxu0 0.0
          %3522 = vmatpush1.msra.mxu0 0.0
          %3523 = vmatprep.subr.mxu0 0.0
          %3524 = vmatpush1.msra.mxu0 0.0
          %3525 = vmatprep.subr.mxu0 0.0
          %3526 = vmatpush1.msra.mxu0 0.0
          %3527 = vmatprep.subr.mxu0 0.0
          %3528 = vmatpush1.msra.mxu0 0.0
          %3529 = vmatprep.subr.mxu0 0.0
          %3530 = vmatpush1.msra.mxu0 0.0
          %3531 = vmatprep.subr.mxu0 0.0
          %3532 = vmatpush1.msra.mxu0 0.0
          %3533 = vmatprep.subr.mxu0 0.0
          %3534 = vmatpush1.msra.mxu0 0.0
          %3535 = vmatprep.subr.mxu0 0.0
          %3536 = vmatpush1.msra.mxu0 0.0
          %3537 = vmatprep.subr.mxu0 0.0
          %3538 = vmatpush1.msra.mxu0 0.0
          %3539 = vmatprep.subr.mxu0 0.0
          %3540 = vmatpush1.msra.mxu0 0.0
          %3541 = vmatprep.subr.mxu0 0.0
          %3542 = vmatpush1.msra.mxu0 0.0
          %3543 = vmatprep.subr.mxu0 0.0
          %3544 = vmatpush1.msra.mxu0 0.0
          %3545 = vmatprep.subr.mxu0 0.0
          %3546 = vmatpush1.msra.mxu0 0.0
          %3547 = vmatprep.subr.mxu0 0.0
          %3548 = vmatpush1.msra.mxu0 0.0
          %3549 = vmatprep.subr.mxu0 0.0
          %3550 = vmatpush1.msra.mxu0 0.0
          %3551 = vmatprep.subr.mxu0 0.0
          %3552 = vmatpush1.msra.mxu0 0.0
          %3553 = vmatprep.subr.mxu0 0.0
          %3554 = vmatpush1.msra.mxu0 0.0
          %3555 = vmatprep.subr.mxu0 0.0
          %3556 = vmatpush1.msra.mxu0 0.0
          %3557 = vmatprep.subr.mxu0 0.0
          %3558 = vmatpush1.msra.mxu0 0.0
          %3559 = vmatprep.subr.mxu0 0.0
          %3560 = vmatpush1.msra.mxu0 0.0
          %3561 = vmatprep.mubr.f32.mxu0 0.0
          %3562 = vmatmul.mubr.f32.gmra.mrb[0].mxu0 %v3495
          %v3563 = vpop.f32.mrb[0].mxu0
          %v3564 = vadd.f32 0.0, %v3563
          %v3565 = vpop.f32.mrb[0].mxu0
          %3566 = vdwg.mxu0
          %3567 = vmatprep.subr.mxu0 0.0
          %3568 = vmatpush1.msra.mxu0 1.0
          %3569 = vmatprep.subr.mxu0 0.0
          %3570 = vmatpush1.msra.mxu0 1.0
          %3571 = vmatprep.subr.mxu0 0.0
          %3572 = vmatpush1.msra.mxu0 1.0
          %3573 = vmatprep.subr.mxu0 0.0
          %3574 = vmatpush1.msra.mxu0 1.0
          %3575 = vmatprep.subr.mxu0 0.0
          %3576 = vmatpush1.msra.mxu0 1.0
          %3577 = vmatprep.subr.mxu0 0.0
          %3578 = vmatpush1.msra.mxu0 1.0
          %3579 = vmatprep.subr.mxu0 0.0
          %3580 = vmatpush1.msra.mxu0 1.0
          %3581 = vmatprep.subr.mxu0 0.0
          %3582 = vmatpush1.msra.mxu0 1.0
          %3583 = vmatprep.subr.mxu0 0.0
          %3584 = vmatpush1.msra.mxu0 0.0
          %3585 = vmatprep.subr.mxu0 0.0
          %3586 = vmatpush1.msra.mxu0 0.0
          %3587 = vmatprep.subr.mxu0 0.0
          %3588 = vmatpush1.msra.mxu0 0.0
          %3589 = vmatprep.subr.mxu0 0.0
          %3590 = vmatpush1.msra.mxu0 0.0
          %3591 = vmatprep.subr.mxu0 0.0
          %3592 = vmatpush1.msra.mxu0 0.0
          %3593 = vmatprep.subr.mxu0 0.0
          %3594 = vmatpush1.msra.mxu0 0.0
          %3595 = vmatprep.subr.mxu0 0.0
          %3596 = vmatpush1.msra.mxu0 0.0
          %3597 = vmatprep.subr.mxu0 0.0
          %3598 = vmatpush1.msra.mxu0 0.0
          %3599 = vmatprep.subr.mxu0 0.0
          %3600 = vmatpush1.msra.mxu0 0.0
          %3601 = vmatprep.subr.mxu0 0.0
          %3602 = vmatpush1.msra.mxu0 0.0
          %3603 = vmatprep.subr.mxu0 0.0
          %3604 = vmatpush1.msra.mxu0 0.0
          %3605 = vmatprep.subr.mxu0 0.0
          %3606 = vmatpush1.msra.mxu0 0.0
          %3607 = vmatprep.subr.mxu0 0.0
          %3608 = vmatpush1.msra.mxu0 0.0
          %3609 = vmatprep.subr.mxu0 0.0
          %3610 = vmatpush1.msra.mxu0 0.0
          %3611 = vmatprep.subr.mxu0 0.0
          %3612 = vmatpush1.msra.mxu0 0.0
          %3613 = vmatprep.subr.mxu0 0.0
          %3614 = vmatpush1.msra.mxu0 0.0
          %3615 = vmatprep.subr.mxu0 0.0
          %3616 = vmatpush1.msra.mxu0 0.0
          %3617 = vmatprep.subr.mxu0 0.0
          %3618 = vmatpush1.msra.mxu0 0.0
          %3619 = vmatprep.subr.mxu0 0.0
          %3620 = vmatpush1.msra.mxu0 0.0
          %3621 = vmatprep.subr.mxu0 0.0
          %3622 = vmatpush1.msra.mxu0 0.0
          %3623 = vmatprep.subr.mxu0 0.0
          %3624 = vmatpush1.msra.mxu0 0.0
          %3625 = vmatprep.subr.mxu0 0.0
          %3626 = vmatpush1.msra.mxu0 0.0
          %3627 = vmatprep.subr.mxu0 0.0
          %3628 = vmatpush1.msra.mxu0 0.0
          %3629 = vmatprep.subr.mxu0 0.0
          %3630 = vmatpush1.msra.mxu0 0.0
          %3631 = vmatprep.mubr.f32.mxu0 0.0
          %3632 = vmatmul.mubr.f32.gmra.mrb[0].mxu0 %v3495
          %v3633 = vpop.f32.mrb[0].mxu0
          %v3634 = vadd.f32 0.0, %v3633
          %v3635 = vpop.f32.mrb[0].mxu0
          %3636 = vdwg.mxu0
          %vm3637 = vcmp.gt.f32.partialorder %v3634, 0.5
          %v3638 = vmax.f32 %v3634, 1.0
          %3640 = vset.pattern.permute.xlu0 0
          %3641 = vperm.xlu0 %3640, %v3638
          %v3642 = vpop.permute.xlu0 %3641
          %v3644 = vrcp.pop %v3642
          %v3645 = vmul.f32 %v3564, %v3644
          %v3646 = vsel %vm3637, 1, 0
          %3647 = vset.pattern.permute.xlu0 0
          %3648 = vperm.xlu0 %3647, %v3646
          %v3649 = vpop.permute.xlu0 %3648
          %vm3650 = vcmp.eq.s32.totalorder %v3649, 1
          %v3651 = vsel %vm3650, %v3645, %v3075
          %v3653 = vsel %vm725, %v3651, 0
          %3655 = vmatprep.subr.mxu0 0.0
          %3656 = vmatpush1.xpose.msra.mxu0 %v3653
          %3657 = vmatprep.subr.mxu0 0.0
          %3658 = vmatpush1.xpose.msra.mxu0 0.0
          %3659 = vmatprep.subr.mxu0 0.0
          %3660 = vmatpush1.xpose.msra.mxu0 0.0
          %3661 = vmatprep.subr.mxu0 0.0
          %3662 = vmatpush1.xpose.msra.mxu0 0.0
          %3663 = vmatprep.subr.mxu0 0.0
          %3664 = vmatpush1.xpose.msra.mxu0 0.0
          %3665 = vmatprep.subr.mxu0 0.0
          %3666 = vmatpush1.xpose.msra.mxu0 0.0
          %3667 = vmatprep.subr.mxu0 0.0
          %3668 = vmatpush1.xpose.msra.mxu0 0.0
          %3669 = vmatprep.subr.mxu0 0.0
          %3670 = vmatpush1.xpose.msra.mxu0 0.0
          %3671 = vmatprep.subr.mxu0 0.0
          %3672 = vmatpush1.xpose.msra.mxu0 0.0
          %3673 = vmatprep.subr.mxu0 0.0
          %3674 = vmatpush1.xpose.msra.mxu0 0.0
          %3675 = vmatprep.subr.mxu0 0.0
          %3676 = vmatpush1.xpose.msra.mxu0 0.0
          %3677 = vmatprep.subr.mxu0 0.0
          %3678 = vmatpush1.xpose.msra.mxu0 0.0
          %3679 = vmatprep.subr.mxu0 0.0
          %3680 = vmatpush1.xpose.msra.mxu0 0.0
          %3681 = vmatprep.subr.mxu0 0.0
          %3682 = vmatpush1.xpose.msra.mxu0 0.0
          %3683 = vmatprep.subr.mxu0 0.0
          %3684 = vmatpush1.xpose.msra.mxu0 0.0
          %3685 = vmatprep.subr.mxu0 0.0
          %3686 = vmatpush1.xpose.msra.mxu0 0.0
          %3687 = vmatprep.subr.mxu0 0.0
          %3688 = vmatpush1.xpose.msra.mxu0 0.0
          %3689 = vmatprep.subr.mxu0 0.0
          %3690 = vmatpush1.xpose.msra.mxu0 0.0
          %3691 = vmatprep.subr.mxu0 0.0
          %3692 = vmatpush1.xpose.msra.mxu0 0.0
          %3693 = vmatprep.subr.mxu0 0.0
          %3694 = vmatpush1.xpose.msra.mxu0 0.0
          %3695 = vmatprep.subr.mxu0 0.0
          %3696 = vmatpush1.xpose.msra.mxu0 0.0
          %3697 = vmatprep.subr.mxu0 0.0
          %3698 = vmatpush1.xpose.msra.mxu0 0.0
          %3699 = vmatprep.subr.mxu0 0.0
          %3700 = vmatpush1.xpose.msra.mxu0 0.0
          %3701 = vmatprep.subr.mxu0 0.0
          %3702 = vmatpush1.xpose.msra.mxu0 0.0
          %3703 = vmatprep.subr.mxu0 0.0
          %3704 = vmatpush1.xpose.msra.mxu0 0.0
          %3705 = vmatprep.subr.mxu0 0.0
          %3706 = vmatpush1.xpose.msra.mxu0 0.0
          %3707 = vmatprep.subr.mxu0 0.0
          %3708 = vmatpush1.xpose.msra.mxu0 0.0
          %3709 = vmatprep.subr.mxu0 0.0
          %3710 = vmatpush1.xpose.msra.mxu0 0.0
          %3711 = vmatprep.subr.mxu0 0.0
          %3712 = vmatpush1.xpose.msra.mxu0 0.0
          %3713 = vmatprep.subr.mxu0 0.0
          %3714 = vmatpush1.xpose.msra.mxu0 0.0
          %3715 = vmatprep.subr.mxu0 0.0
          %3716 = vmatpush1.xpose.msra.mxu0 0.0
          %3717 = vmatprep.subr.mxu0 0.0
          %3718 = vmatpush1.xpose.msra.mxu0 0.0
          %3719 = vmatprep.mubr.f32.mxu0 0.0
          %3720 = vmatmul.mubr.f32.gmra.mrb[0].mxu0 %v748
          %v3721 = vpop.f32.mrb[0].mxu0
          %v3722 = vadd.f32 0.0, %v3721
          %v3723 = vpop.f32.mrb[0].mxu0
          %3724 = vmatprep.mubr.f32.mxu0 0.0
          %3725 = vmatmul.mubr.f32.gmra.mrb[0].mxu0 %v751
          %v3726 = vpop.f32.mrb[0].mxu0
          %v3727 = vadd.f32 0.0, %v3726
          %v3728 = vpop.f32.mrb[0].mxu0
          %3729 = vmatprep.mubr.f32.mxu0 0.0
          %3730 = vmatmul.mubr.f32.gmra.mrb[0].mxu0 %v754
          %v3731 = vpop.f32.mrb[0].mxu0
          %v3732 = vadd.f32 0.0, %v3731
          %v3733 = vpop.f32.mrb[0].mxu0
          %3734 = vmatprep.mubr.f32.mxu0 0.0
          %3735 = vmatmul.mubr.f32.gmra.mrb[0].mxu0 %v757
          %v3736 = vpop.f32.mrb[0].mxu0
          %v3737 = vadd.f32 0.0, %v3736
          %v3738 = vpop.f32.mrb[0].mxu0
          %3739 = vmatprep.mubr.f32.mxu0 0.0
          %3740 = vmatmul.mubr.f32.gmra.mrb[0].mxu0 %v760
          %v3741 = vpop.f32.mrb[0].mxu0
          %v3742 = vadd.f32 0.0, %v3741
          %v3743 = vpop.f32.mrb[0].mxu0
          %3744 = vmatprep.mubr.f32.mxu0 0.0
          %3745 = vmatmul.mubr.f32.gmra.mrb[0].mxu0 %v763
          %v3746 = vpop.f32.mrb[0].mxu0
          %v3747 = vadd.f32 0.0, %v3746
          %v3748 = vpop.f32.mrb[0].mxu0
          %3749 = vmatprep.mubr.f32.mxu0 0.0
          %3750 = vmatmul.mubr.f32.gmra.mrb[0].mxu0 %v766
          %v3751 = vpop.f32.mrb[0].mxu0
          %v3752 = vadd.f32 0.0, %v3751
          %v3753 = vpop.f32.mrb[0].mxu0
          %3754 = vmatprep.mubr.f32.mxu0 0.0
          %3755 = vmatmul.mubr.f32.gmra.mrb[0].mxu0 %v769
          %v3756 = vpop.f32.mrb[0].mxu0
          %v3757 = vadd.f32 0.0, %v3756
          %v3758 = vpop.f32.mrb[0].mxu0
          %3759 = vdwg.mxu0
          %v3760 = vmul.f32 %v3651, %v3651
          %v3762 = vsel %vm725, %v3760, 0
          %3764 = vmatprep.subr.mxu0 0.0
          %3765 = vmatpush1.xpose.msra.mxu0 %v3762
          %3766 = vmatprep.subr.mxu0 0.0
          %3767 = vmatpush1.xpose.msra.mxu0 0.0
          %3768 = vmatprep.subr.mxu0 0.0
          %3769 = vmatpush1.xpose.msra.mxu0 0.0
          %3770 = vmatprep.subr.mxu0 0.0
          %3771 = vmatpush1.xpose.msra.mxu0 0.0
          %3772 = vmatprep.subr.mxu0 0.0
          %3773 = vmatpush1.xpose.msra.mxu0 0.0
          %3774 = vmatprep.subr.mxu0 0.0
          %3775 = vmatpush1.xpose.msra.mxu0 0.0
          %3776 = vmatprep.subr.mxu0 0.0
          %3777 = vmatpush1.xpose.msra.mxu0 0.0
          %3778 = vmatprep.subr.mxu0 0.0
          %3779 = vmatpush1.xpose.msra.mxu0 0.0
          %3780 = vmatprep.subr.mxu0 0.0
          %3781 = vmatpush1.xpose.msra.mxu0 0.0
          %3782 = vmatprep.subr.mxu0 0.0
          %3783 = vmatpush1.xpose.msra.mxu0 0.0
          %3784 = vmatprep.subr.mxu0 0.0
          %3785 = vmatpush1.xpose.msra.mxu0 0.0
          %3786 = vmatprep.subr.mxu0 0.0
          %3787 = vmatpush1.xpose.msra.mxu0 0.0
          %3788 = vmatprep.subr.mxu0 0.0
          %3789 = vmatpush1.xpose.msra.mxu0 0.0
          %3790 = vmatprep.subr.mxu0 0.0
          %3791 = vmatpush1.xpose.msra.mxu0 0.0
          %3792 = vmatprep.subr.mxu0 0.0
          %3793 = vmatpush1.xpose.msra.mxu0 0.0
          %3794 = vmatprep.subr.mxu0 0.0
          %3795 = vmatpush1.xpose.msra.mxu0 0.0
          %3796 = vmatprep.subr.mxu0 0.0
          %3797 = vmatpush1.xpose.msra.mxu0 0.0
          %3798 = vmatprep.subr.mxu0 0.0
          %3799 = vmatpush1.xpose.msra.mxu0 0.0
          %3800 = vmatprep.subr.mxu0 0.0
          %3801 = vmatpush1.xpose.msra.mxu0 0.0
          %3802 = vmatprep.subr.mxu0 0.0
          %3803 = vmatpush1.xpose.msra.mxu0 0.0
          %3804 = vmatprep.subr.mxu0 0.0
          %3805 = vmatpush1.xpose.msra.mxu0 0.0
          %3806 = vmatprep.subr.mxu0 0.0
          %3807 = vmatpush1.xpose.msra.mxu0 0.0
          %3808 = vmatprep.subr.mxu0 0.0
          %3809 = vmatpush1.xpose.msra.mxu0 0.0
          %3810 = vmatprep.subr.mxu0 0.0
          %3811 = vmatpush1.xpose.msra.mxu0 0.0
          %3812 = vmatprep.subr.mxu0 0.0
          %3813 = vmatpush1.xpose.msra.mxu0 0.0
          %3814 = vmatprep.subr.mxu0 0.0
          %3815 = vmatpush1.xpose.msra.mxu0 0.0
          %3816 = vmatprep.subr.mxu0 0.0
          %3817 = vmatpush1.xpose.msra.mxu0 0.0
          %3818 = vmatprep.subr.mxu0 0.0
          %3819 = vmatpush1.xpose.msra.mxu0 0.0
          %3820 = vmatprep.subr.mxu0 0.0
          %3821 = vmatpush1.xpose.msra.mxu0 0.0
          %3822 = vmatprep.subr.mxu0 0.0
          %3823 = vmatpush1.xpose.msra.mxu0 0.0
          %3824 = vmatprep.subr.mxu0 0.0
          %3825 = vmatpush1.xpose.msra.mxu0 0.0
          %3826 = vmatprep.subr.mxu0 0.0
          %3827 = vmatpush1.xpose.msra.mxu0 0.0
          %3828 = vmatprep.mubr.f32.mxu0 0.0
          %3829 = vmatmul.mubr.f32.gmra.mrb[0].mxu0 %v878
          %v3830 = vpop.f32.mrb[0].mxu0
          %v3831 = vadd.f32 0.0, %v3830
          %v3832 = vpop.f32.mrb[0].mxu0
          %3833 = vdwg.mxu0
          %v3834 = vmul.f32 %v3722, 2.0
          %v3835 = vmul.f32 %v3727, 2.0
          %v3836 = vmul.f32 %v3732, 2.0
          %v3837 = vmul.f32 %v3737, 2.0
          %v3838 = vmul.f32 %v3742, 2.0
          %v3839 = vmul.f32 %v3747, 2.0
          %v3840 = vmul.f32 %v3752, 2.0
          %v3841 = vmul.f32 %v3757, 2.0
          %v3842 = vlaneseq
          %v3843 = vshrl.u32 %v3842, 7
          %v3844 = vsub.s32 0, %v3843
          %v3845 = vrot.slane %v3831, %v3844
          %v3846 = vsub.f32 %v3845, %v3834
          %v3847 = vsub.f32 %v3845, %v3835
          %v3848 = vsub.f32 %v3845, %v3836
          %v3849 = vsub.f32 %v3845, %v3837
          %v3850 = vsub.f32 %v3845, %v3838
          %v3851 = vsub.f32 %v3845, %v3839
          %v3852 = vsub.f32 %v3845, %v3840
          %v3853 = vsub.f32 %v3845, %v3841
          %v3854 = vsel %vm973, %v3846, inf
          %3855 = vmin.xlane.f32.xlu0 %v3854
          %v3856 = vpop.xlane.xlu0 %3855
          %v3857 = vsel %vm973, %v3847, inf
          %3858 = vmin.xlane.f32.xlu0 %v3857
          %v3859 = vpop.xlane.xlu0 %3858
          %v3860 = vsel %vm973, %v3848, inf
          %3861 = vmin.xlane.f32.xlu0 %v3860
          %v3862 = vpop.xlane.xlu0 %3861
          %v3863 = vsel %vm973, %v3849, inf
          %3864 = vmin.xlane.f32.xlu0 %v3863
          %v3865 = vpop.xlane.xlu0 %3864
          %v3866 = vsel %vm973, %v3850, inf
          %3867 = vmin.xlane.f32.xlu0 %v3866
          %v3868 = vpop.xlane.xlu0 %3867
          %v3869 = vsel %vm973, %v3851, inf
          %3870 = vmin.xlane.f32.xlu0 %v3869
          %v3871 = vpop.xlane.xlu0 %3870
          %v3872 = vsel %vm973, %v3852, inf
          %3873 = vmin.xlane.f32.xlu0 %v3872
          %v3874 = vpop.xlane.xlu0 %3873
          %v3875 = vsel %vm973, %v3853, inf
          %3876 = vmin.xlane.f32.xlu0 %v3875
          %v3877 = vpop.xlane.xlu0 %3876
          %vm3878 = vcmp.le.f32.partialorder %v3846, %v3856
          %vm3879 = vcmp.le.f32.partialorder %v3847, %v3859
          %vm3880 = vcmp.le.f32.partialorder %v3848, %v3862
          %vm3881 = vcmp.le.f32.partialorder %v3849, %v3865
          %vm3882 = vcmp.le.f32.partialorder %v3850, %v3868
          %vm3883 = vcmp.le.f32.partialorder %v3851, %v3871
          %vm3884 = vcmp.le.f32.partialorder %v3852, %v3874
          %vm3885 = vcmp.le.f32.partialorder %v3853, %v3877
          %v3886 = vsel %vm3878, %v746, 8
          %v3887 = vsel %vm3879, %v746, 8
          %v3888 = vsel %vm3880, %v746, 8
          %v3889 = vsel %vm3881, %v746, 8
          %v3890 = vsel %vm3882, %v746, 8
          %v3891 = vsel %vm3883, %v746, 8
          %v3892 = vsel %vm3884, %v746, 8
          %v3893 = vsel %vm3885, %v746, 8
          %v3894 = vsel %vm973, %v3886, 2147483647
          %v3895 = vand.u32 %v3894, 65535
          %v3896 = vshra.s32 %v3894, 16
          %v3897 = vcvt.s32.f32 %v3895
          %v3898 = vcvt.s32.f32 %v3896
          %3899 = vmin.xlane.f32.xlu0 %v3898
          %v3900 = vpop.xlane.xlu0 %3899
          %vm3901 = vcmp.eq.f32.partialorder %v3898, %v3900
          %v3902 = vsel %vm3901, %v3897, inf
          %3903 = vmin.xlane.f32.xlu0 %v3902
          %v3904 = vpop.xlane.xlu0 %3903
          %v3905 = vcvt.f32.s32 %v3904
          %v3906 = vcvt.f32.s32 %v3900
          %v3907 = vshll.u32 %v3906, 16
          %v3908 = vadd.s32 %v3907, %v3905
          %v3909 = vsel %vm973, %v3887, 2147483647
          %v3910 = vand.u32 %v3909, 65535
          %v3911 = vshra.s32 %v3909, 16
          %v3912 = vcvt.s32.f32 %v3910
          %v3913 = vcvt.s32.f32 %v3911
          %3914 = vmin.xlane.f32.xlu0 %v3913
          %v3915 = vpop.xlane.xlu0 %3914
          %vm3916 = vcmp.eq.f32.partialorder %v3913, %v3915
          %v3917 = vsel %vm3916, %v3912, inf
          %3918 = vmin.xlane.f32.xlu0 %v3917
          %v3919 = vpop.xlane.xlu0 %3918
          %v3920 = vcvt.f32.s32 %v3919
          %v3921 = vcvt.f32.s32 %v3915
          %v3922 = vshll.u32 %v3921, 16
          %v3923 = vadd.s32 %v3922, %v3920
          %v3924 = vsel %vm973, %v3888, 2147483647
          %v3925 = vand.u32 %v3924, 65535
          %v3926 = vshra.s32 %v3924, 16
          %v3927 = vcvt.s32.f32 %v3925
          %v3928 = vcvt.s32.f32 %v3926
          %3929 = vmin.xlane.f32.xlu0 %v3928
          %v3930 = vpop.xlane.xlu0 %3929
          %vm3931 = vcmp.eq.f32.partialorder %v3928, %v3930
          %v3932 = vsel %vm3931, %v3927, inf
          %3933 = vmin.xlane.f32.xlu0 %v3932
          %v3934 = vpop.xlane.xlu0 %3933
          %v3935 = vcvt.f32.s32 %v3934
          %v3936 = vcvt.f32.s32 %v3930
          %v3937 = vshll.u32 %v3936, 16
          %v3938 = vadd.s32 %v3937, %v3935
          %v3939 = vsel %vm973, %v3889, 2147483647
          %v3940 = vand.u32 %v3939, 65535
          %v3941 = vshra.s32 %v3939, 16
          %v3942 = vcvt.s32.f32 %v3940
          %v3943 = vcvt.s32.f32 %v3941
          %3944 = vmin.xlane.f32.xlu0 %v3943
          %v3945 = vpop.xlane.xlu0 %3944
          %vm3946 = vcmp.eq.f32.partialorder %v3943, %v3945
          %v3947 = vsel %vm3946, %v3942, inf
          %3948 = vmin.xlane.f32.xlu0 %v3947
          %v3949 = vpop.xlane.xlu0 %3948
          %v3950 = vcvt.f32.s32 %v3949
          %v3951 = vcvt.f32.s32 %v3945
          %v3952 = vshll.u32 %v3951, 16
          %v3953 = vadd.s32 %v3952, %v3950
          %v3954 = vsel %vm973, %v3890, 2147483647
          %v3955 = vand.u32 %v3954, 65535
          %v3956 = vshra.s32 %v3954, 16
          %v3957 = vcvt.s32.f32 %v3955
          %v3958 = vcvt.s32.f32 %v3956
          %3959 = vmin.xlane.f32.xlu0 %v3958
          %v3960 = vpop.xlane.xlu0 %3959
          %vm3961 = vcmp.eq.f32.partialorder %v3958, %v3960
          %v3962 = vsel %vm3961, %v3957, inf
          %3963 = vmin.xlane.f32.xlu0 %v3962
          %v3964 = vpop.xlane.xlu0 %3963
          %v3965 = vcvt.f32.s32 %v3964
          %v3966 = vcvt.f32.s32 %v3960
          %v3967 = vshll.u32 %v3966, 16
          %v3968 = vadd.s32 %v3967, %v3965
          %v3969 = vsel %vm973, %v3891, 2147483647
          %v3970 = vand.u32 %v3969, 65535
          %v3971 = vshra.s32 %v3969, 16
          %v3972 = vcvt.s32.f32 %v3970
          %v3973 = vcvt.s32.f32 %v3971
          %3974 = vmin.xlane.f32.xlu0 %v3973
          %v3975 = vpop.xlane.xlu0 %3974
          %vm3976 = vcmp.eq.f32.partialorder %v3973, %v3975
          %v3977 = vsel %vm3976, %v3972, inf
          %3978 = vmin.xlane.f32.xlu0 %v3977
          %v3979 = vpop.xlane.xlu0 %3978
          %v3980 = vcvt.f32.s32 %v3979
          %v3981 = vcvt.f32.s32 %v3975
          %v3982 = vshll.u32 %v3981, 16
          %v3983 = vadd.s32 %v3982, %v3980
          %v3984 = vsel %vm973, %v3892, 2147483647
          %v3985 = vand.u32 %v3984, 65535
          %v3986 = vshra.s32 %v3984, 16
          %v3987 = vcvt.s32.f32 %v3985
          %v3988 = vcvt.s32.f32 %v3986
          %3989 = vmin.xlane.f32.xlu0 %v3988
          %v3990 = vpop.xlane.xlu0 %3989
          %vm3991 = vcmp.eq.f32.partialorder %v3988, %v3990
          %v3992 = vsel %vm3991, %v3987, inf
          %3993 = vmin.xlane.f32.xlu0 %v3992
          %v3994 = vpop.xlane.xlu0 %3993
          %v3995 = vcvt.f32.s32 %v3994
          %v3996 = vcvt.f32.s32 %v3990
          %v3997 = vshll.u32 %v3996, 16
          %v3998 = vadd.s32 %v3997, %v3995
          %v3999 = vsel %vm973, %v3893, 2147483647
          %v4000 = vand.u32 %v3999, 65535
          %v4001 = vshra.s32 %v3999, 16
          %v4002 = vcvt.s32.f32 %v4000
          %v4003 = vcvt.s32.f32 %v4001
          %4004 = vmin.xlane.f32.xlu0 %v4003
          %v4005 = vpop.xlane.xlu0 %4004
          %vm4006 = vcmp.eq.f32.partialorder %v4003, %v4005
          %v4007 = vsel %vm4006, %v4002, inf
          %4008 = vmin.xlane.f32.xlu0 %v4007
          %v4009 = vpop.xlane.xlu0 %4008
          %v4010 = vcvt.f32.s32 %v4009
          %v4011 = vcvt.f32.s32 %v4005
          %v4012 = vshll.u32 %v4011, 16
          %v4013 = vadd.s32 %v4012, %v4010
          %vm4014 = vcmp.eq.s32.totalorder %v746, %v3908
          %vm4015 = vcmp.eq.s32.totalorder %v746, %v3923
          %vm4016 = vcmp.eq.s32.totalorder %v746, %v3938
          %vm4017 = vcmp.eq.s32.totalorder %v746, %v3953
          %vm4018 = vcmp.eq.s32.totalorder %v746, %v3968
          %vm4019 = vcmp.eq.s32.totalorder %v746, %v3983
          %vm4020 = vcmp.eq.s32.totalorder %v746, %v3998
          %vm4021 = vcmp.eq.s32.totalorder %v746, %v4013
          %v4022 = vsel %vm4014, 1, 0
          %v4023 = vsel %vm4015, 1, 0
          %v4024 = vsel %vm4016, 1, 0
          %v4025 = vsel %vm4017, 1, 0
          %v4026 = vsel %vm4018, 1, 0
          %v4027 = vsel %vm4019, 1, 0
          %v4028 = vsel %vm4020, 1, 0
          %v4029 = vsel %vm4021, 1, 0
          %v4030 = vcvt.s32.f32 %v4022
          %v4031 = vcvt.s32.f32 %v4023
          %v4032 = vcvt.s32.f32 %v4024
          %v4033 = vcvt.s32.f32 %v4025
          %v4034 = vcvt.s32.f32 %v4026
          %v4035 = vcvt.s32.f32 %v4027
          %v4036 = vcvt.s32.f32 %v4028
          %v4037 = vcvt.s32.f32 %v4029
          %4038 = vxpose.xlu0.b32.start [1/16] %v4030, 128
          %4039 = vxpose.xlu0.b32.cont [2/16] %v4031, 128
          %4040 = vxpose.xlu0.b32.cont [3/16] %v4032, 128
          %4041 = vxpose.xlu0.b32.cont [4/16] %v4033, 128
          %4042 = vxpose.xlu0.b32.cont [5/16] %v4034, 128
          %4043 = vxpose.xlu0.b32.cont [6/16] %v4035, 128
          %4044 = vxpose.xlu0.b32.cont [7/16] %v4036, 128
          %4045 = vxpose.xlu0.b32.cont [8/16] %v4037, 128
          %4046 = vxpose.xlu0.b32.cont [9/16] 0.0, 128
          %4047 = vxpose.xlu0.b32.cont [10/16] 0.0, 128
          %4048 = vxpose.xlu0.b32.cont [11/16] 0.0, 128
          %4049 = vxpose.xlu0.b32.cont [12/16] 0.0, 128
          %4050 = vxpose.xlu0.b32.cont [13/16] 0.0, 128
          %4051 = vxpose.xlu0.b32.cont [14/16] 0.0, 128
          %4052 = vxpose.xlu0.b32.cont [15/16] 0.0, 128
          %4053 = vxpose.xlu0.b32.end [16/16] 0.0, 128
          %v4054 = vpop.trf.xlu0
          %v4055 = vpop.trf.xlu0
          %v4056 = vpop.trf.xlu0
          %v4057 = vpop.trf.xlu0
          %v4058 = vpop.trf.xlu0
          %v4059 = vpop.trf.xlu0
          %v4060 = vpop.trf.xlu0
          %v4061 = vpop.trf.xlu0
          %v4062 = vpop.trf.xlu0
          %v4063 = vpop.trf.xlu0
          %v4064 = vpop.trf.xlu0
          %v4065 = vpop.trf.xlu0
          %v4066 = vpop.trf.xlu0
          %v4067 = vpop.trf.xlu0
          %v4068 = vpop.trf.xlu0
          %v4069 = vpop.trf.xlu0
          %v4071 = vsel %vm725, %v4054, 0
          %4073 = vmatprep.subr.mxu0 0.0
          %4074 = vmatpush1.msra.mxu0 %v737
          %4075 = vmatprep.subr.mxu0 0.0
          %4076 = vmatpush1.msra.mxu0 %v738
          %4077 = vmatprep.subr.mxu0 0.0
          %4078 = vmatpush1.msra.mxu0 %v739
          %4079 = vmatprep.subr.mxu0 0.0
          %4080 = vmatpush1.msra.mxu0 %v740
          %4081 = vmatprep.subr.mxu0 0.0
          %4082 = vmatpush1.msra.mxu0 %v741
          %4083 = vmatprep.subr.mxu0 0.0
          %4084 = vmatpush1.msra.mxu0 %v742
          %4085 = vmatprep.subr.mxu0 0.0
          %4086 = vmatpush1.msra.mxu0 %v743
          %4087 = vmatprep.subr.mxu0 0.0
          %4088 = vmatpush1.msra.mxu0 %v744
          %4089 = vmatprep.subr.mxu0 0.0
          %4090 = vmatpush1.msra.mxu0 0.0
          %4091 = vmatprep.subr.mxu0 0.0
          %4092 = vmatpush1.msra.mxu0 0.0
          %4093 = vmatprep.subr.mxu0 0.0
          %4094 = vmatpush1.msra.mxu0 0.0
          %4095 = vmatprep.subr.mxu0 0.0
          %4096 = vmatpush1.msra.mxu0 0.0
          %4097 = vmatprep.subr.mxu0 0.0
          %4098 = vmatpush1.msra.mxu0 0.0
          %4099 = vmatprep.subr.mxu0 0.0
          %4100 = vmatpush1.msra.mxu0 0.0
          %4101 = vmatprep.subr.mxu0 0.0
          %4102 = vmatpush1.msra.mxu0 0.0
          %4103 = vmatprep.subr.mxu0 0.0
          %4104 = vmatpush1.msra.mxu0 0.0
          %4105 = vmatprep.subr.mxu0 0.0
          %4106 = vmatpush1.msra.mxu0 0.0
          %4107 = vmatprep.subr.mxu0 0.0
          %4108 = vmatpush1.msra.mxu0 0.0
          %4109 = vmatprep.subr.mxu0 0.0
          %4110 = vmatpush1.msra.mxu0 0.0
          %4111 = vmatprep.subr.mxu0 0.0
          %4112 = vmatpush1.msra.mxu0 0.0
          %4113 = vmatprep.subr.mxu0 0.0
          %4114 = vmatpush1.msra.mxu0 0.0
          %4115 = vmatprep.subr.mxu0 0.0
          %4116 = vmatpush1.msra.mxu0 0.0
          %4117 = vmatprep.subr.mxu0 0.0
          %4118 = vmatpush1.msra.mxu0 0.0
          %4119 = vmatprep.subr.mxu0 0.0
          %4120 = vmatpush1.msra.mxu0 0.0
          %4121 = vmatprep.subr.mxu0 0.0
          %4122 = vmatpush1.msra.mxu0 0.0
          %4123 = vmatprep.subr.mxu0 0.0
          %4124 = vmatpush1.msra.mxu0 0.0
          %4125 = vmatprep.subr.mxu0 0.0
          %4126 = vmatpush1.msra.mxu0 0.0
          %4127 = vmatprep.subr.mxu0 0.0
          %4128 = vmatpush1.msra.mxu0 0.0
          %4129 = vmatprep.subr.mxu0 0.0
          %4130 = vmatpush1.msra.mxu0 0.0
          %4131 = vmatprep.subr.mxu0 0.0
          %4132 = vmatpush1.msra.mxu0 0.0
          %4133 = vmatprep.subr.mxu0 0.0
          %4134 = vmatpush1.msra.mxu0 0.0
          %4135 = vmatprep.subr.mxu0 0.0
          %4136 = vmatpush1.msra.mxu0 0.0
          %4137 = vmatprep.mubr.f32.mxu0 0.0
          %4138 = vmatmul.mubr.f32.gmra.mrb[0].mxu0 %v4071
          %v4139 = vpop.f32.mrb[0].mxu0
          %v4140 = vadd.f32 0.0, %v4139
          %v4141 = vpop.f32.mrb[0].mxu0
          %4142 = vdwg.mxu0
          %4143 = vmatprep.subr.mxu0 0.0
          %4144 = vmatpush1.msra.mxu0 1.0
          %4145 = vmatprep.subr.mxu0 0.0
          %4146 = vmatpush1.msra.mxu0 1.0
          %4147 = vmatprep.subr.mxu0 0.0
          %4148 = vmatpush1.msra.mxu0 1.0
          %4149 = vmatprep.subr.mxu0 0.0
          %4150 = vmatpush1.msra.mxu0 1.0
          %4151 = vmatprep.subr.mxu0 0.0
          %4152 = vmatpush1.msra.mxu0 1.0
          %4153 = vmatprep.subr.mxu0 0.0
          %4154 = vmatpush1.msra.mxu0 1.0
          %4155 = vmatprep.subr.mxu0 0.0
          %4156 = vmatpush1.msra.mxu0 1.0
          %4157 = vmatprep.subr.mxu0 0.0
          %4158 = vmatpush1.msra.mxu0 1.0
          %4159 = vmatprep.subr.mxu0 0.0
          %4160 = vmatpush1.msra.mxu0 0.0
          %4161 = vmatprep.subr.mxu0 0.0
          %4162 = vmatpush1.msra.mxu0 0.0
          %4163 = vmatprep.subr.mxu0 0.0
          %4164 = vmatpush1.msra.mxu0 0.0
          %4165 = vmatprep.subr.mxu0 0.0
          %4166 = vmatpush1.msra.mxu0 0.0
          %4167 = vmatprep.subr.mxu0 0.0
          %4168 = vmatpush1.msra.mxu0 0.0
          %4169 = vmatprep.subr.mxu0 0.0
          %4170 = vmatpush1.msra.mxu0 0.0
          %4171 = vmatprep.subr.mxu0 0.0
          %4172 = vmatpush1.msra.mxu0 0.0
          %4173 = vmatprep.subr.mxu0 0.0
          %4174 = vmatpush1.msra.mxu0 0.0
          %4175 = vmatprep.subr.mxu0 0.0
          %4176 = vmatpush1.msra.mxu0 0.0
          %4177 = vmatprep.subr.mxu0 0.0
          %4178 = vmatpush1.msra.mxu0 0.0
          %4179 = vmatprep.subr.mxu0 0.0
          %4180 = vmatpush1.msra.mxu0 0.0
          %4181 = vmatprep.subr.mxu0 0.0
          %4182 = vmatpush1.msra.mxu0 0.0
          %4183 = vmatprep.subr.mxu0 0.0
          %4184 = vmatpush1.msra.mxu0 0.0
          %4185 = vmatprep.subr.mxu0 0.0
          %4186 = vmatpush1.msra.mxu0 0.0
          %4187 = vmatprep.subr.mxu0 0.0
          %4188 = vmatpush1.msra.mxu0 0.0
          %4189 = vmatprep.subr.mxu0 0.0
          %4190 = vmatpush1.msra.mxu0 0.0
          %4191 = vmatprep.subr.mxu0 0.0
          %4192 = vmatpush1.msra.mxu0 0.0
          %4193 = vmatprep.subr.mxu0 0.0
          %4194 = vmatpush1.msra.mxu0 0.0
          %4195 = vmatprep.subr.mxu0 0.0
          %4196 = vmatpush1.msra.mxu0 0.0
          %4197 = vmatprep.subr.mxu0 0.0
          %4198 = vmatpush1.msra.mxu0 0.0
          %4199 = vmatprep.subr.mxu0 0.0
          %4200 = vmatpush1.msra.mxu0 0.0
          %4201 = vmatprep.subr.mxu0 0.0
          %4202 = vmatpush1.msra.mxu0 0.0
          %4203 = vmatprep.subr.mxu0 0.0
          %4204 = vmatpush1.msra.mxu0 0.0
          %4205 = vmatprep.subr.mxu0 0.0
          %4206 = vmatpush1.msra.mxu0 0.0
          %4207 = vmatprep.mubr.f32.mxu0 0.0
          %4208 = vmatmul.mubr.f32.gmra.mrb[0].mxu0 %v4071
          %v4209 = vpop.f32.mrb[0].mxu0
          %v4210 = vadd.f32 0.0, %v4209
          %v4211 = vpop.f32.mrb[0].mxu0
          %4212 = vdwg.mxu0
          %vm4213 = vcmp.gt.f32.partialorder %v4210, 0.5
          %v4214 = vmax.f32 %v4210, 1.0
          %4216 = vset.pattern.permute.xlu0 0
          %4217 = vperm.xlu0 %4216, %v4214
          %v4218 = vpop.permute.xlu0 %4217
          %v4220 = vrcp.pop %v4218
          %v4221 = vmul.f32 %v4140, %v4220
          %v4222 = vsel %vm4213, 1, 0
          %4223 = vset.pattern.permute.xlu0 0
          %4224 = vperm.xlu0 %4223, %v4222
          %v4225 = vpop.permute.xlu0 %4224
          %vm4226 = vcmp.eq.s32.totalorder %v4225, 1
          %v4227 = vsel %vm4226, %v4221, %v3651
          %v4229 = vsel %vm725, %v4227, 0
          %4231 = vmatprep.subr.mxu0 0.0
          %4232 = vmatpush1.xpose.msra.mxu0 %v4229
          %4233 = vmatprep.subr.mxu0 0.0
          %4234 = vmatpush1.xpose.msra.mxu0 0.0
          %4235 = vmatprep.subr.mxu0 0.0
          %4236 = vmatpush1.xpose.msra.mxu0 0.0
          %4237 = vmatprep.subr.mxu0 0.0
          %4238 = vmatpush1.xpose.msra.mxu0 0.0
          %4239 = vmatprep.subr.mxu0 0.0
          %4240 = vmatpush1.xpose.msra.mxu0 0.0
          %4241 = vmatprep.subr.mxu0 0.0
          %4242 = vmatpush1.xpose.msra.mxu0 0.0
          %4243 = vmatprep.subr.mxu0 0.0
          %4244 = vmatpush1.xpose.msra.mxu0 0.0
          %4245 = vmatprep.subr.mxu0 0.0
          %4246 = vmatpush1.xpose.msra.mxu0 0.0
          %4247 = vmatprep.subr.mxu0 0.0
          %4248 = vmatpush1.xpose.msra.mxu0 0.0
          %4249 = vmatprep.subr.mxu0 0.0
          %4250 = vmatpush1.xpose.msra.mxu0 0.0
          %4251 = vmatprep.subr.mxu0 0.0
          %4252 = vmatpush1.xpose.msra.mxu0 0.0
          %4253 = vmatprep.subr.mxu0 0.0
          %4254 = vmatpush1.xpose.msra.mxu0 0.0
          %4255 = vmatprep.subr.mxu0 0.0
          %4256 = vmatpush1.xpose.msra.mxu0 0.0
          %4257 = vmatprep.subr.mxu0 0.0
          %4258 = vmatpush1.xpose.msra.mxu0 0.0
          %4259 = vmatprep.subr.mxu0 0.0
          %4260 = vmatpush1.xpose.msra.mxu0 0.0
          %4261 = vmatprep.subr.mxu0 0.0
          %4262 = vmatpush1.xpose.msra.mxu0 0.0
          %4263 = vmatprep.subr.mxu0 0.0
          %4264 = vmatpush1.xpose.msra.mxu0 0.0
          %4265 = vmatprep.subr.mxu0 0.0
          %4266 = vmatpush1.xpose.msra.mxu0 0.0
          %4267 = vmatprep.subr.mxu0 0.0
          %4268 = vmatpush1.xpose.msra.mxu0 0.0
          %4269 = vmatprep.subr.mxu0 0.0
          %4270 = vmatpush1.xpose.msra.mxu0 0.0
          %4271 = vmatprep.subr.mxu0 0.0
          %4272 = vmatpush1.xpose.msra.mxu0 0.0
          %4273 = vmatprep.subr.mxu0 0.0
          %4274 = vmatpush1.xpose.msra.mxu0 0.0
          %4275 = vmatprep.subr.mxu0 0.0
          %4276 = vmatpush1.xpose.msra.mxu0 0.0
          %4277 = vmatprep.subr.mxu0 0.0
          %4278 = vmatpush1.xpose.msra.mxu0 0.0
          %4279 = vmatprep.subr.mxu0 0.0
          %4280 = vmatpush1.xpose.msra.mxu0 0.0
          %4281 = vmatprep.subr.mxu0 0.0
          %4282 = vmatpush1.xpose.msra.mxu0 0.0
          %4283 = vmatprep.subr.mxu0 0.0
          %4284 = vmatpush1.xpose.msra.mxu0 0.0
          %4285 = vmatprep.subr.mxu0 0.0
          %4286 = vmatpush1.xpose.msra.mxu0 0.0
          %4287 = vmatprep.subr.mxu0 0.0
          %4288 = vmatpush1.xpose.msra.mxu0 0.0
          %4289 = vmatprep.subr.mxu0 0.0
          %4290 = vmatpush1.xpose.msra.mxu0 0.0
          %4291 = vmatprep.subr.mxu0 0.0
          %4292 = vmatpush1.xpose.msra.mxu0 0.0
          %4293 = vmatprep.subr.mxu0 0.0
          %4294 = vmatpush1.xpose.msra.mxu0 0.0
          %4295 = vmatprep.mubr.f32.mxu0 0.0
          %4296 = vmatmul.mubr.f32.gmra.mrb[0].mxu0 %v748
          %v4297 = vpop.f32.mrb[0].mxu0
          %v4298 = vadd.f32 0.0, %v4297
          %v4299 = vpop.f32.mrb[0].mxu0
          %4300 = vmatprep.mubr.f32.mxu0 0.0
          %4301 = vmatmul.mubr.f32.gmra.mrb[0].mxu0 %v751
          %v4302 = vpop.f32.mrb[0].mxu0
          %v4303 = vadd.f32 0.0, %v4302
          %v4304 = vpop.f32.mrb[0].mxu0
          %4305 = vmatprep.mubr.f32.mxu0 0.0
          %4306 = vmatmul.mubr.f32.gmra.mrb[0].mxu0 %v754
          %v4307 = vpop.f32.mrb[0].mxu0
          %v4308 = vadd.f32 0.0, %v4307
          %v4309 = vpop.f32.mrb[0].mxu0
          %4310 = vmatprep.mubr.f32.mxu0 0.0
          %4311 = vmatmul.mubr.f32.gmra.mrb[0].mxu0 %v757
          %v4312 = vpop.f32.mrb[0].mxu0
          %v4313 = vadd.f32 0.0, %v4312
          %v4314 = vpop.f32.mrb[0].mxu0
          %4315 = vmatprep.mubr.f32.mxu0 0.0
          %4316 = vmatmul.mubr.f32.gmra.mrb[0].mxu0 %v760
          %v4317 = vpop.f32.mrb[0].mxu0
          %v4318 = vadd.f32 0.0, %v4317
          %v4319 = vpop.f32.mrb[0].mxu0
          %4320 = vmatprep.mubr.f32.mxu0 0.0
          %4321 = vmatmul.mubr.f32.gmra.mrb[0].mxu0 %v763
          %v4322 = vpop.f32.mrb[0].mxu0
          %v4323 = vadd.f32 0.0, %v4322
          %v4324 = vpop.f32.mrb[0].mxu0
          %4325 = vmatprep.mubr.f32.mxu0 0.0
          %4326 = vmatmul.mubr.f32.gmra.mrb[0].mxu0 %v766
          %v4327 = vpop.f32.mrb[0].mxu0
          %v4328 = vadd.f32 0.0, %v4327
          %v4329 = vpop.f32.mrb[0].mxu0
          %4330 = vmatprep.mubr.f32.mxu0 0.0
          %4331 = vmatmul.mubr.f32.gmra.mrb[0].mxu0 %v769
          %v4332 = vpop.f32.mrb[0].mxu0
          %v4333 = vadd.f32 0.0, %v4332
          %v4334 = vpop.f32.mrb[0].mxu0
          %4335 = vdwg.mxu0
          %v4336 = vmul.f32 %v4227, %v4227
          %v4338 = vsel %vm725, %v4336, 0
          %4340 = vmatprep.subr.mxu0 0.0
          %4341 = vmatpush1.xpose.msra.mxu0 %v4338
          %4342 = vmatprep.subr.mxu0 0.0
          %4343 = vmatpush1.xpose.msra.mxu0 0.0
          %4344 = vmatprep.subr.mxu0 0.0
          %4345 = vmatpush1.xpose.msra.mxu0 0.0
          %4346 = vmatprep.subr.mxu0 0.0
          %4347 = vmatpush1.xpose.msra.mxu0 0.0
          %4348 = vmatprep.subr.mxu0 0.0
          %4349 = vmatpush1.xpose.msra.mxu0 0.0
          %4350 = vmatprep.subr.mxu0 0.0
          %4351 = vmatpush1.xpose.msra.mxu0 0.0
          %4352 = vmatprep.subr.mxu0 0.0
          %4353 = vmatpush1.xpose.msra.mxu0 0.0
          %4354 = vmatprep.subr.mxu0 0.0
          %4355 = vmatpush1.xpose.msra.mxu0 0.0
          %4356 = vmatprep.subr.mxu0 0.0
          %4357 = vmatpush1.xpose.msra.mxu0 0.0
          %4358 = vmatprep.subr.mxu0 0.0
          %4359 = vmatpush1.xpose.msra.mxu0 0.0
          %4360 = vmatprep.subr.mxu0 0.0
          %4361 = vmatpush1.xpose.msra.mxu0 0.0
          %4362 = vmatprep.subr.mxu0 0.0
          %4363 = vmatpush1.xpose.msra.mxu0 0.0
          %4364 = vmatprep.subr.mxu0 0.0
          %4365 = vmatpush1.xpose.msra.mxu0 0.0
          %4366 = vmatprep.subr.mxu0 0.0
          %4367 = vmatpush1.xpose.msra.mxu0 0.0
          %4368 = vmatprep.subr.mxu0 0.0
          %4369 = vmatpush1.xpose.msra.mxu0 0.0
          %4370 = vmatprep.subr.mxu0 0.0
          %4371 = vmatpush1.xpose.msra.mxu0 0.0
          %4372 = vmatprep.subr.mxu0 0.0
          %4373 = vmatpush1.xpose.msra.mxu0 0.0
          %4374 = vmatprep.subr.mxu0 0.0
          %4375 = vmatpush1.xpose.msra.mxu0 0.0
          %4376 = vmatprep.subr.mxu0 0.0
          %4377 = vmatpush1.xpose.msra.mxu0 0.0
          %4378 = vmatprep.subr.mxu0 0.0
          %4379 = vmatpush1.xpose.msra.mxu0 0.0
          %4380 = vmatprep.subr.mxu0 0.0
          %4381 = vmatpush1.xpose.msra.mxu0 0.0
          %4382 = vmatprep.subr.mxu0 0.0
          %4383 = vmatpush1.xpose.msra.mxu0 0.0
          %4384 = vmatprep.subr.mxu0 0.0
          %4385 = vmatpush1.xpose.msra.mxu0 0.0
          %4386 = vmatprep.subr.mxu0 0.0
          %4387 = vmatpush1.xpose.msra.mxu0 0.0
          %4388 = vmatprep.subr.mxu0 0.0
          %4389 = vmatpush1.xpose.msra.mxu0 0.0
          %4390 = vmatprep.subr.mxu0 0.0
          %4391 = vmatpush1.xpose.msra.mxu0 0.0
          %4392 = vmatprep.subr.mxu0 0.0
          %4393 = vmatpush1.xpose.msra.mxu0 0.0
          %4394 = vmatprep.subr.mxu0 0.0
          %4395 = vmatpush1.xpose.msra.mxu0 0.0
          %4396 = vmatprep.subr.mxu0 0.0
          %4397 = vmatpush1.xpose.msra.mxu0 0.0
          %4398 = vmatprep.subr.mxu0 0.0
          %4399 = vmatpush1.xpose.msra.mxu0 0.0
          %4400 = vmatprep.subr.mxu0 0.0
          %4401 = vmatpush1.xpose.msra.mxu0 0.0
          %4402 = vmatprep.subr.mxu0 0.0
          %4403 = vmatpush1.xpose.msra.mxu0 0.0
          %4404 = vmatprep.mubr.f32.mxu0 0.0
          %4405 = vmatmul.mubr.f32.gmra.mrb[0].mxu0 %v878
          %v4406 = vpop.f32.mrb[0].mxu0
          %v4407 = vadd.f32 0.0, %v4406
          %v4408 = vpop.f32.mrb[0].mxu0
          %4409 = vdwg.mxu0
          %v4410 = vmul.f32 %v4298, 2.0
          %v4411 = vmul.f32 %v4303, 2.0
          %v4412 = vmul.f32 %v4308, 2.0
          %v4413 = vmul.f32 %v4313, 2.0
          %v4414 = vmul.f32 %v4318, 2.0
          %v4415 = vmul.f32 %v4323, 2.0
          %v4416 = vmul.f32 %v4328, 2.0
          %v4417 = vmul.f32 %v4333, 2.0
          %v4418 = vlaneseq
          %v4419 = vshrl.u32 %v4418, 7
          %v4420 = vsub.s32 0, %v4419
          %v4421 = vrot.slane %v4407, %v4420
          %v4422 = vsub.f32 %v4421, %v4410
          %v4423 = vsub.f32 %v4421, %v4411
          %v4424 = vsub.f32 %v4421, %v4412
          %v4425 = vsub.f32 %v4421, %v4413
          %v4426 = vsub.f32 %v4421, %v4414
          %v4427 = vsub.f32 %v4421, %v4415
          %v4428 = vsub.f32 %v4421, %v4416
          %v4429 = vsub.f32 %v4421, %v4417
          %v4430 = vsel %vm973, %v4422, inf
          %4431 = vmin.xlane.f32.xlu0 %v4430
          %v4432 = vpop.xlane.xlu0 %4431
          %v4433 = vsel %vm973, %v4423, inf
          %4434 = vmin.xlane.f32.xlu0 %v4433
          %v4435 = vpop.xlane.xlu0 %4434
          %v4436 = vsel %vm973, %v4424, inf
          %4437 = vmin.xlane.f32.xlu0 %v4436
          %v4438 = vpop.xlane.xlu0 %4437
          %v4439 = vsel %vm973, %v4425, inf
          %4440 = vmin.xlane.f32.xlu0 %v4439
          %v4441 = vpop.xlane.xlu0 %4440
          %v4442 = vsel %vm973, %v4426, inf
          %4443 = vmin.xlane.f32.xlu0 %v4442
          %v4444 = vpop.xlane.xlu0 %4443
          %v4445 = vsel %vm973, %v4427, inf
          %4446 = vmin.xlane.f32.xlu0 %v4445
          %v4447 = vpop.xlane.xlu0 %4446
          %v4448 = vsel %vm973, %v4428, inf
          %4449 = vmin.xlane.f32.xlu0 %v4448
          %v4450 = vpop.xlane.xlu0 %4449
          %v4451 = vsel %vm973, %v4429, inf
          %4452 = vmin.xlane.f32.xlu0 %v4451
          %v4453 = vpop.xlane.xlu0 %4452
          %vm4454 = vcmp.le.f32.partialorder %v4422, %v4432
          %vm4455 = vcmp.le.f32.partialorder %v4423, %v4435
          %vm4456 = vcmp.le.f32.partialorder %v4424, %v4438
          %vm4457 = vcmp.le.f32.partialorder %v4425, %v4441
          %vm4458 = vcmp.le.f32.partialorder %v4426, %v4444
          %vm4459 = vcmp.le.f32.partialorder %v4427, %v4447
          %vm4460 = vcmp.le.f32.partialorder %v4428, %v4450
          %vm4461 = vcmp.le.f32.partialorder %v4429, %v4453
          %v4462 = vsel %vm4454, %v746, 8
          %v4463 = vsel %vm4455, %v746, 8
          %v4464 = vsel %vm4456, %v746, 8
          %v4465 = vsel %vm4457, %v746, 8
          %v4466 = vsel %vm4458, %v746, 8
          %v4467 = vsel %vm4459, %v746, 8
          %v4468 = vsel %vm4460, %v746, 8
          %v4469 = vsel %vm4461, %v746, 8
          %v4470 = vsel %vm973, %v4462, 2147483647
          %v4471 = vand.u32 %v4470, 65535
          %v4472 = vshra.s32 %v4470, 16
          %v4473 = vcvt.s32.f32 %v4471
          %v4474 = vcvt.s32.f32 %v4472
          %4475 = vmin.xlane.f32.xlu0 %v4474
          %v4476 = vpop.xlane.xlu0 %4475
          %vm4477 = vcmp.eq.f32.partialorder %v4474, %v4476
          %v4478 = vsel %vm4477, %v4473, inf
          %4479 = vmin.xlane.f32.xlu0 %v4478
          %v4480 = vpop.xlane.xlu0 %4479
          %v4481 = vcvt.f32.s32 %v4480
          %v4482 = vcvt.f32.s32 %v4476
          %v4483 = vshll.u32 %v4482, 16
          %v4484 = vadd.s32 %v4483, %v4481
          %v4485 = vsel %vm973, %v4463, 2147483647
          %v4486 = vand.u32 %v4485, 65535
          %v4487 = vshra.s32 %v4485, 16
          %v4488 = vcvt.s32.f32 %v4486
          %v4489 = vcvt.s32.f32 %v4487
          %4490 = vmin.xlane.f32.xlu0 %v4489
          %v4491 = vpop.xlane.xlu0 %4490
          %vm4492 = vcmp.eq.f32.partialorder %v4489, %v4491
          %v4493 = vsel %vm4492, %v4488, inf
          %4494 = vmin.xlane.f32.xlu0 %v4493
          %v4495 = vpop.xlane.xlu0 %4494
          %v4496 = vcvt.f32.s32 %v4495
          %v4497 = vcvt.f32.s32 %v4491
          %v4498 = vshll.u32 %v4497, 16
          %v4499 = vadd.s32 %v4498, %v4496
          %v4500 = vsel %vm973, %v4464, 2147483647
          %v4501 = vand.u32 %v4500, 65535
          %v4502 = vshra.s32 %v4500, 16
          %v4503 = vcvt.s32.f32 %v4501
          %v4504 = vcvt.s32.f32 %v4502
          %4505 = vmin.xlane.f32.xlu0 %v4504
          %v4506 = vpop.xlane.xlu0 %4505
          %vm4507 = vcmp.eq.f32.partialorder %v4504, %v4506
          %v4508 = vsel %vm4507, %v4503, inf
          %4509 = vmin.xlane.f32.xlu0 %v4508
          %v4510 = vpop.xlane.xlu0 %4509
          %v4511 = vcvt.f32.s32 %v4510
          %v4512 = vcvt.f32.s32 %v4506
          %v4513 = vshll.u32 %v4512, 16
          %v4514 = vadd.s32 %v4513, %v4511
          %v4515 = vsel %vm973, %v4465, 2147483647
          %v4516 = vand.u32 %v4515, 65535
          %v4517 = vshra.s32 %v4515, 16
          %v4518 = vcvt.s32.f32 %v4516
          %v4519 = vcvt.s32.f32 %v4517
          %4520 = vmin.xlane.f32.xlu0 %v4519
          %v4521 = vpop.xlane.xlu0 %4520
          %vm4522 = vcmp.eq.f32.partialorder %v4519, %v4521
          %v4523 = vsel %vm4522, %v4518, inf
          %4524 = vmin.xlane.f32.xlu0 %v4523
          %v4525 = vpop.xlane.xlu0 %4524
          %v4526 = vcvt.f32.s32 %v4525
          %v4527 = vcvt.f32.s32 %v4521
          %v4528 = vshll.u32 %v4527, 16
          %v4529 = vadd.s32 %v4528, %v4526
          %v4530 = vsel %vm973, %v4466, 2147483647
          %v4531 = vand.u32 %v4530, 65535
          %v4532 = vshra.s32 %v4530, 16
          %v4533 = vcvt.s32.f32 %v4531
          %v4534 = vcvt.s32.f32 %v4532
          %4535 = vmin.xlane.f32.xlu0 %v4534
          %v4536 = vpop.xlane.xlu0 %4535
          %vm4537 = vcmp.eq.f32.partialorder %v4534, %v4536
          %v4538 = vsel %vm4537, %v4533, inf
          %4539 = vmin.xlane.f32.xlu0 %v4538
          %v4540 = vpop.xlane.xlu0 %4539
          %v4541 = vcvt.f32.s32 %v4540
          %v4542 = vcvt.f32.s32 %v4536
          %v4543 = vshll.u32 %v4542, 16
          %v4544 = vadd.s32 %v4543, %v4541
          %v4545 = vsel %vm973, %v4467, 2147483647
          %v4546 = vand.u32 %v4545, 65535
          %v4547 = vshra.s32 %v4545, 16
          %v4548 = vcvt.s32.f32 %v4546
          %v4549 = vcvt.s32.f32 %v4547
          %4550 = vmin.xlane.f32.xlu0 %v4549
          %v4551 = vpop.xlane.xlu0 %4550
          %vm4552 = vcmp.eq.f32.partialorder %v4549, %v4551
          %v4553 = vsel %vm4552, %v4548, inf
          %4554 = vmin.xlane.f32.xlu0 %v4553
          %v4555 = vpop.xlane.xlu0 %4554
          %v4556 = vcvt.f32.s32 %v4555
          %v4557 = vcvt.f32.s32 %v4551
          %v4558 = vshll.u32 %v4557, 16
          %v4559 = vadd.s32 %v4558, %v4556
          %v4560 = vsel %vm973, %v4468, 2147483647
          %v4561 = vand.u32 %v4560, 65535
          %v4562 = vshra.s32 %v4560, 16
          %v4563 = vcvt.s32.f32 %v4561
          %v4564 = vcvt.s32.f32 %v4562
          %4565 = vmin.xlane.f32.xlu0 %v4564
          %v4566 = vpop.xlane.xlu0 %4565
          %vm4567 = vcmp.eq.f32.partialorder %v4564, %v4566
          %v4568 = vsel %vm4567, %v4563, inf
          %4569 = vmin.xlane.f32.xlu0 %v4568
          %v4570 = vpop.xlane.xlu0 %4569
          %v4571 = vcvt.f32.s32 %v4570
          %v4572 = vcvt.f32.s32 %v4566
          %v4573 = vshll.u32 %v4572, 16
          %v4574 = vadd.s32 %v4573, %v4571
          %v4575 = vsel %vm973, %v4469, 2147483647
          %v4576 = vand.u32 %v4575, 65535
          %v4577 = vshra.s32 %v4575, 16
          %v4578 = vcvt.s32.f32 %v4576
          %v4579 = vcvt.s32.f32 %v4577
          %4580 = vmin.xlane.f32.xlu0 %v4579
          %v4581 = vpop.xlane.xlu0 %4580
          %vm4582 = vcmp.eq.f32.partialorder %v4579, %v4581
          %v4583 = vsel %vm4582, %v4578, inf
          %4584 = vmin.xlane.f32.xlu0 %v4583
          %v4585 = vpop.xlane.xlu0 %4584
          %v4586 = vcvt.f32.s32 %v4585
          %v4587 = vcvt.f32.s32 %v4581
          %v4588 = vshll.u32 %v4587, 16
          %v4589 = vadd.s32 %v4588, %v4586
          %vm4590 = vcmp.eq.s32.totalorder %v746, %v4484
          %vm4591 = vcmp.eq.s32.totalorder %v746, %v4499
          %vm4592 = vcmp.eq.s32.totalorder %v746, %v4514
          %vm4593 = vcmp.eq.s32.totalorder %v746, %v4529
          %vm4594 = vcmp.eq.s32.totalorder %v746, %v4544
          %vm4595 = vcmp.eq.s32.totalorder %v746, %v4559
          %vm4596 = vcmp.eq.s32.totalorder %v746, %v4574
          %vm4597 = vcmp.eq.s32.totalorder %v746, %v4589
          %v4598 = vsel %vm4590, 1, 0
          %v4599 = vsel %vm4591, 1, 0
          %v4600 = vsel %vm4592, 1, 0
          %v4601 = vsel %vm4593, 1, 0
          %v4602 = vsel %vm4594, 1, 0
          %v4603 = vsel %vm4595, 1, 0
          %v4604 = vsel %vm4596, 1, 0
          %v4605 = vsel %vm4597, 1, 0
          %v4606 = vcvt.s32.f32 %v4598
          %v4607 = vcvt.s32.f32 %v4599
          %v4608 = vcvt.s32.f32 %v4600
          %v4609 = vcvt.s32.f32 %v4601
          %v4610 = vcvt.s32.f32 %v4602
          %v4611 = vcvt.s32.f32 %v4603
          %v4612 = vcvt.s32.f32 %v4604
          %v4613 = vcvt.s32.f32 %v4605
          %4614 = vxpose.xlu0.b32.start [1/16] %v4606, 128
          %4615 = vxpose.xlu0.b32.cont [2/16] %v4607, 128
          %4616 = vxpose.xlu0.b32.cont [3/16] %v4608, 128
          %4617 = vxpose.xlu0.b32.cont [4/16] %v4609, 128
          %4618 = vxpose.xlu0.b32.cont [5/16] %v4610, 128
          %4619 = vxpose.xlu0.b32.cont [6/16] %v4611, 128
          %4620 = vxpose.xlu0.b32.cont [7/16] %v4612, 128
          %4621 = vxpose.xlu0.b32.cont [8/16] %v4613, 128
          %4622 = vxpose.xlu0.b32.cont [9/16] 0.0, 128
          %4623 = vxpose.xlu0.b32.cont [10/16] 0.0, 128
          %4624 = vxpose.xlu0.b32.cont [11/16] 0.0, 128
          %4625 = vxpose.xlu0.b32.cont [12/16] 0.0, 128
          %4626 = vxpose.xlu0.b32.cont [13/16] 0.0, 128
          %4627 = vxpose.xlu0.b32.cont [14/16] 0.0, 128
          %4628 = vxpose.xlu0.b32.cont [15/16] 0.0, 128
          %4629 = vxpose.xlu0.b32.end [16/16] 0.0, 128
          %v4630 = vpop.trf.xlu0
          %v4631 = vpop.trf.xlu0
          %v4632 = vpop.trf.xlu0
          %v4633 = vpop.trf.xlu0
          %v4634 = vpop.trf.xlu0
          %v4635 = vpop.trf.xlu0
          %v4636 = vpop.trf.xlu0
          %v4637 = vpop.trf.xlu0
          %v4638 = vpop.trf.xlu0
          %v4639 = vpop.trf.xlu0
          %v4640 = vpop.trf.xlu0
          %v4641 = vpop.trf.xlu0
          %v4642 = vpop.trf.xlu0
          %v4643 = vpop.trf.xlu0
          %v4644 = vpop.trf.xlu0
          %v4645 = vpop.trf.xlu0
          %v4647 = vsel %vm725, %v4630, 0
          %4649 = vmatprep.subr.mxu0 0.0
          %4650 = vmatpush1.msra.mxu0 %v737
          %4651 = vmatprep.subr.mxu0 0.0
          %4652 = vmatpush1.msra.mxu0 %v738
          %4653 = vmatprep.subr.mxu0 0.0
          %4654 = vmatpush1.msra.mxu0 %v739
          %4655 = vmatprep.subr.mxu0 0.0
          %4656 = vmatpush1.msra.mxu0 %v740
          %4657 = vmatprep.subr.mxu0 0.0
          %4658 = vmatpush1.msra.mxu0 %v741
          %4659 = vmatprep.subr.mxu0 0.0
          %4660 = vmatpush1.msra.mxu0 %v742
          %4661 = vmatprep.subr.mxu0 0.0
          %4662 = vmatpush1.msra.mxu0 %v743
          %4663 = vmatprep.subr.mxu0 0.0
          %4664 = vmatpush1.msra.mxu0 %v744
          %4665 = vmatprep.subr.mxu0 0.0
          %4666 = vmatpush1.msra.mxu0 0.0
          %4667 = vmatprep.subr.mxu0 0.0
          %4668 = vmatpush1.msra.mxu0 0.0
          %4669 = vmatprep.subr.mxu0 0.0
          %4670 = vmatpush1.msra.mxu0 0.0
          %4671 = vmatprep.subr.mxu0 0.0
          %4672 = vmatpush1.msra.mxu0 0.0
          %4673 = vmatprep.subr.mxu0 0.0
          %4674 = vmatpush1.msra.mxu0 0.0
          %4675 = vmatprep.subr.mxu0 0.0
          %4676 = vmatpush1.msra.mxu0 0.0
          %4677 = vmatprep.subr.mxu0 0.0
          %4678 = vmatpush1.msra.mxu0 0.0
          %4679 = vmatprep.subr.mxu0 0.0
          %4680 = vmatpush1.msra.mxu0 0.0
          %4681 = vmatprep.subr.mxu0 0.0
          %4682 = vmatpush1.msra.mxu0 0.0
          %4683 = vmatprep.subr.mxu0 0.0
          %4684 = vmatpush1.msra.mxu0 0.0
          %4685 = vmatprep.subr.mxu0 0.0
          %4686 = vmatpush1.msra.mxu0 0.0
          %4687 = vmatprep.subr.mxu0 0.0
          %4688 = vmatpush1.msra.mxu0 0.0
          %4689 = vmatprep.subr.mxu0 0.0
          %4690 = vmatpush1.msra.mxu0 0.0
          %4691 = vmatprep.subr.mxu0 0.0
          %4692 = vmatpush1.msra.mxu0 0.0
          %4693 = vmatprep.subr.mxu0 0.0
          %4694 = vmatpush1.msra.mxu0 0.0
          %4695 = vmatprep.subr.mxu0 0.0
          %4696 = vmatpush1.msra.mxu0 0.0
          %4697 = vmatprep.subr.mxu0 0.0
          %4698 = vmatpush1.msra.mxu0 0.0
          %4699 = vmatprep.subr.mxu0 0.0
          %4700 = vmatpush1.msra.mxu0 0.0
          %4701 = vmatprep.subr.mxu0 0.0
          %4702 = vmatpush1.msra.mxu0 0.0
          %4703 = vmatprep.subr.mxu0 0.0
          %4704 = vmatpush1.msra.mxu0 0.0
          %4705 = vmatprep.subr.mxu0 0.0
          %4706 = vmatpush1.msra.mxu0 0.0
          %4707 = vmatprep.subr.mxu0 0.0
          %4708 = vmatpush1.msra.mxu0 0.0
          %4709 = vmatprep.subr.mxu0 0.0
          %4710 = vmatpush1.msra.mxu0 0.0
          %4711 = vmatprep.subr.mxu0 0.0
          %4712 = vmatpush1.msra.mxu0 0.0
          %4713 = vmatprep.mubr.f32.mxu0 0.0
          %4714 = vmatmul.mubr.f32.gmra.mrb[0].mxu0 %v4647
          %v4715 = vpop.f32.mrb[0].mxu0
          %v4716 = vadd.f32 0.0, %v4715
          %v4717 = vpop.f32.mrb[0].mxu0
          %4718 = vdwg.mxu0
          %4719 = vmatprep.subr.mxu0 0.0
          %4720 = vmatpush1.msra.mxu0 1.0
          %4721 = vmatprep.subr.mxu0 0.0
          %4722 = vmatpush1.msra.mxu0 1.0
          %4723 = vmatprep.subr.mxu0 0.0
          %4724 = vmatpush1.msra.mxu0 1.0
          %4725 = vmatprep.subr.mxu0 0.0
          %4726 = vmatpush1.msra.mxu0 1.0
          %4727 = vmatprep.subr.mxu0 0.0
          %4728 = vmatpush1.msra.mxu0 1.0
          %4729 = vmatprep.subr.mxu0 0.0
          %4730 = vmatpush1.msra.mxu0 1.0
          %4731 = vmatprep.subr.mxu0 0.0
          %4732 = vmatpush1.msra.mxu0 1.0
          %4733 = vmatprep.subr.mxu0 0.0
          %4734 = vmatpush1.msra.mxu0 1.0
          %4735 = vmatprep.subr.mxu0 0.0
          %4736 = vmatpush1.msra.mxu0 0.0
          %4737 = vmatprep.subr.mxu0 0.0
          %4738 = vmatpush1.msra.mxu0 0.0
          %4739 = vmatprep.subr.mxu0 0.0
          %4740 = vmatpush1.msra.mxu0 0.0
          %4741 = vmatprep.subr.mxu0 0.0
          %4742 = vmatpush1.msra.mxu0 0.0
          %4743 = vmatprep.subr.mxu0 0.0
          %4744 = vmatpush1.msra.mxu0 0.0
          %4745 = vmatprep.subr.mxu0 0.0
          %4746 = vmatpush1.msra.mxu0 0.0
          %4747 = vmatprep.subr.mxu0 0.0
          %4748 = vmatpush1.msra.mxu0 0.0
          %4749 = vmatprep.subr.mxu0 0.0
          %4750 = vmatpush1.msra.mxu0 0.0
          %4751 = vmatprep.subr.mxu0 0.0
          %4752 = vmatpush1.msra.mxu0 0.0
          %4753 = vmatprep.subr.mxu0 0.0
          %4754 = vmatpush1.msra.mxu0 0.0
          %4755 = vmatprep.subr.mxu0 0.0
          %4756 = vmatpush1.msra.mxu0 0.0
          %4757 = vmatprep.subr.mxu0 0.0
          %4758 = vmatpush1.msra.mxu0 0.0
          %4759 = vmatprep.subr.mxu0 0.0
          %4760 = vmatpush1.msra.mxu0 0.0
          %4761 = vmatprep.subr.mxu0 0.0
          %4762 = vmatpush1.msra.mxu0 0.0
          %4763 = vmatprep.subr.mxu0 0.0
          %4764 = vmatpush1.msra.mxu0 0.0
          %4765 = vmatprep.subr.mxu0 0.0
          %4766 = vmatpush1.msra.mxu0 0.0
          %4767 = vmatprep.subr.mxu0 0.0
          %4768 = vmatpush1.msra.mxu0 0.0
          %4769 = vmatprep.subr.mxu0 0.0
          %4770 = vmatpush1.msra.mxu0 0.0
          %4771 = vmatprep.subr.mxu0 0.0
          %4772 = vmatpush1.msra.mxu0 0.0
          %4773 = vmatprep.subr.mxu0 0.0
          %4774 = vmatpush1.msra.mxu0 0.0
          %4775 = vmatprep.subr.mxu0 0.0
          %4776 = vmatpush1.msra.mxu0 0.0
          %4777 = vmatprep.subr.mxu0 0.0
          %4778 = vmatpush1.msra.mxu0 0.0
          %4779 = vmatprep.subr.mxu0 0.0
          %4780 = vmatpush1.msra.mxu0 0.0
          %4781 = vmatprep.subr.mxu0 0.0
          %4782 = vmatpush1.msra.mxu0 0.0
          %4783 = vmatprep.mubr.f32.mxu0 0.0
          %4784 = vmatmul.mubr.f32.gmra.mrb[0].mxu0 %v4647
          %v4785 = vpop.f32.mrb[0].mxu0
          %v4786 = vadd.f32 0.0, %v4785
          %v4787 = vpop.f32.mrb[0].mxu0
          %4788 = vdwg.mxu0
          %vm4789 = vcmp.gt.f32.partialorder %v4786, 0.5
          %v4790 = vmax.f32 %v4786, 1.0
          %4792 = vset.pattern.permute.xlu0 0
          %4793 = vperm.xlu0 %4792, %v4790
          %v4794 = vpop.permute.xlu0 %4793
          %v4796 = vrcp.pop %v4794
          %v4797 = vmul.f32 %v4716, %v4796
          %v4798 = vsel %vm4789, 1, 0
          %4799 = vset.pattern.permute.xlu0 0
          %4800 = vperm.xlu0 %4799, %v4798
          %v4801 = vpop.permute.xlu0 %4800
          %vm4802 = vcmp.eq.s32.totalorder %v4801, 1
          %v4803 = vsel %vm4802, %v4797, %v4227
          %v4805 = vsel %vm725, %v4803, 0
          %4807 = vmatprep.subr.mxu0 0.0
          %4808 = vmatpush1.xpose.msra.mxu0 %v4805
          %4809 = vmatprep.subr.mxu0 0.0
          %4810 = vmatpush1.xpose.msra.mxu0 0.0
          %4811 = vmatprep.subr.mxu0 0.0
          %4812 = vmatpush1.xpose.msra.mxu0 0.0
          %4813 = vmatprep.subr.mxu0 0.0
          %4814 = vmatpush1.xpose.msra.mxu0 0.0
          %4815 = vmatprep.subr.mxu0 0.0
          %4816 = vmatpush1.xpose.msra.mxu0 0.0
          %4817 = vmatprep.subr.mxu0 0.0
          %4818 = vmatpush1.xpose.msra.mxu0 0.0
          %4819 = vmatprep.subr.mxu0 0.0
          %4820 = vmatpush1.xpose.msra.mxu0 0.0
          %4821 = vmatprep.subr.mxu0 0.0
          %4822 = vmatpush1.xpose.msra.mxu0 0.0
          %4823 = vmatprep.subr.mxu0 0.0
          %4824 = vmatpush1.xpose.msra.mxu0 0.0
          %4825 = vmatprep.subr.mxu0 0.0
          %4826 = vmatpush1.xpose.msra.mxu0 0.0
          %4827 = vmatprep.subr.mxu0 0.0
          %4828 = vmatpush1.xpose.msra.mxu0 0.0
          %4829 = vmatprep.subr.mxu0 0.0
          %4830 = vmatpush1.xpose.msra.mxu0 0.0
          %4831 = vmatprep.subr.mxu0 0.0
          %4832 = vmatpush1.xpose.msra.mxu0 0.0
          %4833 = vmatprep.subr.mxu0 0.0
          %4834 = vmatpush1.xpose.msra.mxu0 0.0
          %4835 = vmatprep.subr.mxu0 0.0
          %4836 = vmatpush1.xpose.msra.mxu0 0.0
          %4837 = vmatprep.subr.mxu0 0.0
          %4838 = vmatpush1.xpose.msra.mxu0 0.0
          %4839 = vmatprep.subr.mxu0 0.0
          %4840 = vmatpush1.xpose.msra.mxu0 0.0
          %4841 = vmatprep.subr.mxu0 0.0
          %4842 = vmatpush1.xpose.msra.mxu0 0.0
          %4843 = vmatprep.subr.mxu0 0.0
          %4844 = vmatpush1.xpose.msra.mxu0 0.0
          %4845 = vmatprep.subr.mxu0 0.0
          %4846 = vmatpush1.xpose.msra.mxu0 0.0
          %4847 = vmatprep.subr.mxu0 0.0
          %4848 = vmatpush1.xpose.msra.mxu0 0.0
          %4849 = vmatprep.subr.mxu0 0.0
          %4850 = vmatpush1.xpose.msra.mxu0 0.0
          %4851 = vmatprep.subr.mxu0 0.0
          %4852 = vmatpush1.xpose.msra.mxu0 0.0
          %4853 = vmatprep.subr.mxu0 0.0
          %4854 = vmatpush1.xpose.msra.mxu0 0.0
          %4855 = vmatprep.subr.mxu0 0.0
          %4856 = vmatpush1.xpose.msra.mxu0 0.0
          %4857 = vmatprep.subr.mxu0 0.0
          %4858 = vmatpush1.xpose.msra.mxu0 0.0
          %4859 = vmatprep.subr.mxu0 0.0
          %4860 = vmatpush1.xpose.msra.mxu0 0.0
          %4861 = vmatprep.subr.mxu0 0.0
          %4862 = vmatpush1.xpose.msra.mxu0 0.0
          %4863 = vmatprep.subr.mxu0 0.0
          %4864 = vmatpush1.xpose.msra.mxu0 0.0
          %4865 = vmatprep.subr.mxu0 0.0
          %4866 = vmatpush1.xpose.msra.mxu0 0.0
          %4867 = vmatprep.subr.mxu0 0.0
          %4868 = vmatpush1.xpose.msra.mxu0 0.0
          %4869 = vmatprep.subr.mxu0 0.0
          %4870 = vmatpush1.xpose.msra.mxu0 0.0
          %4871 = vmatprep.mubr.f32.mxu0 0.0
          %4872 = vmatmul.mubr.f32.gmra.mrb[0].mxu0 %v748
          %v4873 = vpop.f32.mrb[0].mxu0
          %v4874 = vadd.f32 0.0, %v4873
          %v4875 = vpop.f32.mrb[0].mxu0
          %4876 = vmatprep.mubr.f32.mxu0 0.0
          %4877 = vmatmul.mubr.f32.gmra.mrb[0].mxu0 %v751
          %v4878 = vpop.f32.mrb[0].mxu0
          %v4879 = vadd.f32 0.0, %v4878
          %v4880 = vpop.f32.mrb[0].mxu0
          %4881 = vmatprep.mubr.f32.mxu0 0.0
          %4882 = vmatmul.mubr.f32.gmra.mrb[0].mxu0 %v754
          %v4883 = vpop.f32.mrb[0].mxu0
          %v4884 = vadd.f32 0.0, %v4883
          %v4885 = vpop.f32.mrb[0].mxu0
          %4886 = vmatprep.mubr.f32.mxu0 0.0
          %4887 = vmatmul.mubr.f32.gmra.mrb[0].mxu0 %v757
          %v4888 = vpop.f32.mrb[0].mxu0
          %v4889 = vadd.f32 0.0, %v4888
          %v4890 = vpop.f32.mrb[0].mxu0
          %4891 = vmatprep.mubr.f32.mxu0 0.0
          %4892 = vmatmul.mubr.f32.gmra.mrb[0].mxu0 %v760
          %v4893 = vpop.f32.mrb[0].mxu0
          %v4894 = vadd.f32 0.0, %v4893
          %v4895 = vpop.f32.mrb[0].mxu0
          %4896 = vmatprep.mubr.f32.mxu0 0.0
          %4897 = vmatmul.mubr.f32.gmra.mrb[0].mxu0 %v763
          %v4898 = vpop.f32.mrb[0].mxu0
          %v4899 = vadd.f32 0.0, %v4898
          %v4900 = vpop.f32.mrb[0].mxu0
          %4901 = vmatprep.mubr.f32.mxu0 0.0
          %4902 = vmatmul.mubr.f32.gmra.mrb[0].mxu0 %v766
          %v4903 = vpop.f32.mrb[0].mxu0
          %v4904 = vadd.f32 0.0, %v4903
          %v4905 = vpop.f32.mrb[0].mxu0
          %4906 = vmatprep.mubr.f32.mxu0 0.0
          %4907 = vmatmul.mubr.f32.gmra.mrb[0].mxu0 %v769
          %v4908 = vpop.f32.mrb[0].mxu0
          %v4909 = vadd.f32 0.0, %v4908
          %v4910 = vpop.f32.mrb[0].mxu0
          %4911 = vdwg.mxu0
          %v4912 = vmul.f32 %v4803, %v4803
          %v4914 = vsel %vm725, %v4912, 0
          %4916 = vmatprep.subr.mxu0 0.0
          %4917 = vmatpush1.xpose.msra.mxu0 %v4914
          %4918 = vmatprep.subr.mxu0 0.0
          %4919 = vmatpush1.xpose.msra.mxu0 0.0
          %4920 = vmatprep.subr.mxu0 0.0
          %4921 = vmatpush1.xpose.msra.mxu0 0.0
          %4922 = vmatprep.subr.mxu0 0.0
          %4923 = vmatpush1.xpose.msra.mxu0 0.0
          %4924 = vmatprep.subr.mxu0 0.0
          %4925 = vmatpush1.xpose.msra.mxu0 0.0
          %4926 = vmatprep.subr.mxu0 0.0
          %4927 = vmatpush1.xpose.msra.mxu0 0.0
          %4928 = vmatprep.subr.mxu0 0.0
          %4929 = vmatpush1.xpose.msra.mxu0 0.0
          %4930 = vmatprep.subr.mxu0 0.0
          %4931 = vmatpush1.xpose.msra.mxu0 0.0
          %4932 = vmatprep.subr.mxu0 0.0
          %4933 = vmatpush1.xpose.msra.mxu0 0.0
          %4934 = vmatprep.subr.mxu0 0.0
          %4935 = vmatpush1.xpose.msra.mxu0 0.0
          %4936 = vmatprep.subr.mxu0 0.0
          %4937 = vmatpush1.xpose.msra.mxu0 0.0
          %4938 = vmatprep.subr.mxu0 0.0
          %4939 = vmatpush1.xpose.msra.mxu0 0.0
          %4940 = vmatprep.subr.mxu0 0.0
          %4941 = vmatpush1.xpose.msra.mxu0 0.0
          %4942 = vmatprep.subr.mxu0 0.0
          %4943 = vmatpush1.xpose.msra.mxu0 0.0
          %4944 = vmatprep.subr.mxu0 0.0
          %4945 = vmatpush1.xpose.msra.mxu0 0.0
          %4946 = vmatprep.subr.mxu0 0.0
          %4947 = vmatpush1.xpose.msra.mxu0 0.0
          %4948 = vmatprep.subr.mxu0 0.0
          %4949 = vmatpush1.xpose.msra.mxu0 0.0
          %4950 = vmatprep.subr.mxu0 0.0
          %4951 = vmatpush1.xpose.msra.mxu0 0.0
          %4952 = vmatprep.subr.mxu0 0.0
          %4953 = vmatpush1.xpose.msra.mxu0 0.0
          %4954 = vmatprep.subr.mxu0 0.0
          %4955 = vmatpush1.xpose.msra.mxu0 0.0
          %4956 = vmatprep.subr.mxu0 0.0
          %4957 = vmatpush1.xpose.msra.mxu0 0.0
          %4958 = vmatprep.subr.mxu0 0.0
          %4959 = vmatpush1.xpose.msra.mxu0 0.0
          %4960 = vmatprep.subr.mxu0 0.0
          %4961 = vmatpush1.xpose.msra.mxu0 0.0
          %4962 = vmatprep.subr.mxu0 0.0
          %4963 = vmatpush1.xpose.msra.mxu0 0.0
          %4964 = vmatprep.subr.mxu0 0.0
          %4965 = vmatpush1.xpose.msra.mxu0 0.0
          %4966 = vmatprep.subr.mxu0 0.0
          %4967 = vmatpush1.xpose.msra.mxu0 0.0
          %4968 = vmatprep.subr.mxu0 0.0
          %4969 = vmatpush1.xpose.msra.mxu0 0.0
          %4970 = vmatprep.subr.mxu0 0.0
          %4971 = vmatpush1.xpose.msra.mxu0 0.0
          %4972 = vmatprep.subr.mxu0 0.0
          %4973 = vmatpush1.xpose.msra.mxu0 0.0
          %4974 = vmatprep.subr.mxu0 0.0
          %4975 = vmatpush1.xpose.msra.mxu0 0.0
          %4976 = vmatprep.subr.mxu0 0.0
          %4977 = vmatpush1.xpose.msra.mxu0 0.0
          %4978 = vmatprep.subr.mxu0 0.0
          %4979 = vmatpush1.xpose.msra.mxu0 0.0
          %4980 = vmatprep.mubr.f32.mxu0 0.0
          %4981 = vmatmul.mubr.f32.gmra.mrb[0].mxu0 %v878
          %v4982 = vpop.f32.mrb[0].mxu0
          %v4983 = vadd.f32 0.0, %v4982
          %v4984 = vpop.f32.mrb[0].mxu0
          %4985 = vdwg.mxu0
          %v4986 = vmul.f32 %v4874, 2.0
          %v4987 = vmul.f32 %v4879, 2.0
          %v4988 = vmul.f32 %v4884, 2.0
          %v4989 = vmul.f32 %v4889, 2.0
          %v4990 = vmul.f32 %v4894, 2.0
          %v4991 = vmul.f32 %v4899, 2.0
          %v4992 = vmul.f32 %v4904, 2.0
          %v4993 = vmul.f32 %v4909, 2.0
          %v4994 = vlaneseq
          %v4995 = vshrl.u32 %v4994, 7
          %v4996 = vsub.s32 0, %v4995
          %v4997 = vrot.slane %v4983, %v4996
          %v4998 = vsub.f32 %v4997, %v4986
          %v4999 = vsub.f32 %v4997, %v4987
          %v5000 = vsub.f32 %v4997, %v4988
          %v5001 = vsub.f32 %v4997, %v4989
          %v5002 = vsub.f32 %v4997, %v4990
          %v5003 = vsub.f32 %v4997, %v4991
          %v5004 = vsub.f32 %v4997, %v4992
          %v5005 = vsub.f32 %v4997, %v4993
          %v5006 = vsel %vm973, %v4998, inf
          %5007 = vmin.xlane.f32.xlu0 %v5006
          %v5008 = vpop.xlane.xlu0 %5007
          %v5009 = vsel %vm973, %v4999, inf
          %5010 = vmin.xlane.f32.xlu0 %v5009
          %v5011 = vpop.xlane.xlu0 %5010
          %v5012 = vsel %vm973, %v5000, inf
          %5013 = vmin.xlane.f32.xlu0 %v5012
          %v5014 = vpop.xlane.xlu0 %5013
          %v5015 = vsel %vm973, %v5001, inf
          %5016 = vmin.xlane.f32.xlu0 %v5015
          %v5017 = vpop.xlane.xlu0 %5016
          %v5018 = vsel %vm973, %v5002, inf
          %5019 = vmin.xlane.f32.xlu0 %v5018
          %v5020 = vpop.xlane.xlu0 %5019
          %v5021 = vsel %vm973, %v5003, inf
          %5022 = vmin.xlane.f32.xlu0 %v5021
          %v5023 = vpop.xlane.xlu0 %5022
          %v5024 = vsel %vm973, %v5004, inf
          %5025 = vmin.xlane.f32.xlu0 %v5024
          %v5026 = vpop.xlane.xlu0 %5025
          %v5027 = vsel %vm973, %v5005, inf
          %5028 = vmin.xlane.f32.xlu0 %v5027
          %v5029 = vpop.xlane.xlu0 %5028
          %vm5030 = vcmp.le.f32.partialorder %v4998, %v5008
          %vm5031 = vcmp.le.f32.partialorder %v4999, %v5011
          %vm5032 = vcmp.le.f32.partialorder %v5000, %v5014
          %vm5033 = vcmp.le.f32.partialorder %v5001, %v5017
          %vm5034 = vcmp.le.f32.partialorder %v5002, %v5020
          %vm5035 = vcmp.le.f32.partialorder %v5003, %v5023
          %vm5036 = vcmp.le.f32.partialorder %v5004, %v5026
          %vm5037 = vcmp.le.f32.partialorder %v5005, %v5029
          %v5038 = vsel %vm5030, %v746, 8
          %v5039 = vsel %vm5031, %v746, 8
          %v5040 = vsel %vm5032, %v746, 8
          %v5041 = vsel %vm5033, %v746, 8
          %v5042 = vsel %vm5034, %v746, 8
          %v5043 = vsel %vm5035, %v746, 8
          %v5044 = vsel %vm5036, %v746, 8
          %v5045 = vsel %vm5037, %v746, 8
          %v5046 = vsel %vm973, %v5038, 2147483647
          %v5047 = vand.u32 %v5046, 65535
          %v5048 = vshra.s32 %v5046, 16
          %v5049 = vcvt.s32.f32 %v5047
          %v5050 = vcvt.s32.f32 %v5048
          %5051 = vmin.xlane.f32.xlu0 %v5050
          %v5052 = vpop.xlane.xlu0 %5051
          %vm5053 = vcmp.eq.f32.partialorder %v5050, %v5052
          %v5054 = vsel %vm5053, %v5049, inf
          %5055 = vmin.xlane.f32.xlu0 %v5054
          %v5056 = vpop.xlane.xlu0 %5055
          %v5057 = vcvt.f32.s32 %v5056
          %v5058 = vcvt.f32.s32 %v5052
          %v5059 = vshll.u32 %v5058, 16
          %v5060 = vadd.s32 %v5059, %v5057
          %v5061 = vsel %vm973, %v5039, 2147483647
          %v5062 = vand.u32 %v5061, 65535
          %v5063 = vshra.s32 %v5061, 16
          %v5064 = vcvt.s32.f32 %v5062
          %v5065 = vcvt.s32.f32 %v5063
          %5066 = vmin.xlane.f32.xlu0 %v5065
          %v5067 = vpop.xlane.xlu0 %5066
          %vm5068 = vcmp.eq.f32.partialorder %v5065, %v5067
          %v5069 = vsel %vm5068, %v5064, inf
          %5070 = vmin.xlane.f32.xlu0 %v5069
          %v5071 = vpop.xlane.xlu0 %5070
          %v5072 = vcvt.f32.s32 %v5071
          %v5073 = vcvt.f32.s32 %v5067
          %v5074 = vshll.u32 %v5073, 16
          %v5075 = vadd.s32 %v5074, %v5072
          %v5076 = vsel %vm973, %v5040, 2147483647
          %v5077 = vand.u32 %v5076, 65535
          %v5078 = vshra.s32 %v5076, 16
          %v5079 = vcvt.s32.f32 %v5077
          %v5080 = vcvt.s32.f32 %v5078
          %5081 = vmin.xlane.f32.xlu0 %v5080
          %v5082 = vpop.xlane.xlu0 %5081
          %vm5083 = vcmp.eq.f32.partialorder %v5080, %v5082
          %v5084 = vsel %vm5083, %v5079, inf
          %5085 = vmin.xlane.f32.xlu0 %v5084
          %v5086 = vpop.xlane.xlu0 %5085
          %v5087 = vcvt.f32.s32 %v5086
          %v5088 = vcvt.f32.s32 %v5082
          %v5089 = vshll.u32 %v5088, 16
          %v5090 = vadd.s32 %v5089, %v5087
          %v5091 = vsel %vm973, %v5041, 2147483647
          %v5092 = vand.u32 %v5091, 65535
          %v5093 = vshra.s32 %v5091, 16
          %v5094 = vcvt.s32.f32 %v5092
          %v5095 = vcvt.s32.f32 %v5093
          %5096 = vmin.xlane.f32.xlu0 %v5095
          %v5097 = vpop.xlane.xlu0 %5096
          %vm5098 = vcmp.eq.f32.partialorder %v5095, %v5097
          %v5099 = vsel %vm5098, %v5094, inf
          %5100 = vmin.xlane.f32.xlu0 %v5099
          %v5101 = vpop.xlane.xlu0 %5100
          %v5102 = vcvt.f32.s32 %v5101
          %v5103 = vcvt.f32.s32 %v5097
          %v5104 = vshll.u32 %v5103, 16
          %v5105 = vadd.s32 %v5104, %v5102
          %v5106 = vsel %vm973, %v5042, 2147483647
          %v5107 = vand.u32 %v5106, 65535
          %v5108 = vshra.s32 %v5106, 16
          %v5109 = vcvt.s32.f32 %v5107
          %v5110 = vcvt.s32.f32 %v5108
          %5111 = vmin.xlane.f32.xlu0 %v5110
          %v5112 = vpop.xlane.xlu0 %5111
          %vm5113 = vcmp.eq.f32.partialorder %v5110, %v5112
          %v5114 = vsel %vm5113, %v5109, inf
          %5115 = vmin.xlane.f32.xlu0 %v5114
          %v5116 = vpop.xlane.xlu0 %5115
          %v5117 = vcvt.f32.s32 %v5116
          %v5118 = vcvt.f32.s32 %v5112
          %v5119 = vshll.u32 %v5118, 16
          %v5120 = vadd.s32 %v5119, %v5117
          %v5121 = vsel %vm973, %v5043, 2147483647
          %v5122 = vand.u32 %v5121, 65535
          %v5123 = vshra.s32 %v5121, 16
          %v5124 = vcvt.s32.f32 %v5122
          %v5125 = vcvt.s32.f32 %v5123
          %5126 = vmin.xlane.f32.xlu0 %v5125
          %v5127 = vpop.xlane.xlu0 %5126
          %vm5128 = vcmp.eq.f32.partialorder %v5125, %v5127
          %v5129 = vsel %vm5128, %v5124, inf
          %5130 = vmin.xlane.f32.xlu0 %v5129
          %v5131 = vpop.xlane.xlu0 %5130
          %v5132 = vcvt.f32.s32 %v5131
          %v5133 = vcvt.f32.s32 %v5127
          %v5134 = vshll.u32 %v5133, 16
          %v5135 = vadd.s32 %v5134, %v5132
          %v5136 = vsel %vm973, %v5044, 2147483647
          %v5137 = vand.u32 %v5136, 65535
          %v5138 = vshra.s32 %v5136, 16
          %v5139 = vcvt.s32.f32 %v5137
          %v5140 = vcvt.s32.f32 %v5138
          %5141 = vmin.xlane.f32.xlu0 %v5140
          %v5142 = vpop.xlane.xlu0 %5141
          %vm5143 = vcmp.eq.f32.partialorder %v5140, %v5142
          %v5144 = vsel %vm5143, %v5139, inf
          %5145 = vmin.xlane.f32.xlu0 %v5144
          %v5146 = vpop.xlane.xlu0 %5145
          %v5147 = vcvt.f32.s32 %v5146
          %v5148 = vcvt.f32.s32 %v5142
          %v5149 = vshll.u32 %v5148, 16
          %v5150 = vadd.s32 %v5149, %v5147
          %v5151 = vsel %vm973, %v5045, 2147483647
          %v5152 = vand.u32 %v5151, 65535
          %v5153 = vshra.s32 %v5151, 16
          %v5154 = vcvt.s32.f32 %v5152
          %v5155 = vcvt.s32.f32 %v5153
          %5156 = vmin.xlane.f32.xlu0 %v5155
          %v5157 = vpop.xlane.xlu0 %5156
          %vm5158 = vcmp.eq.f32.partialorder %v5155, %v5157
          %v5159 = vsel %vm5158, %v5154, inf
          %5160 = vmin.xlane.f32.xlu0 %v5159
          %v5161 = vpop.xlane.xlu0 %5160
          %v5162 = vcvt.f32.s32 %v5161
          %v5163 = vcvt.f32.s32 %v5157
          %v5164 = vshll.u32 %v5163, 16
          %v5165 = vadd.s32 %v5164, %v5162
          %vm5166 = vcmp.eq.s32.totalorder %v746, %v5060
          %vm5167 = vcmp.eq.s32.totalorder %v746, %v5075
          %vm5168 = vcmp.eq.s32.totalorder %v746, %v5090
          %vm5169 = vcmp.eq.s32.totalorder %v746, %v5105
          %vm5170 = vcmp.eq.s32.totalorder %v746, %v5120
          %vm5171 = vcmp.eq.s32.totalorder %v746, %v5135
          %vm5172 = vcmp.eq.s32.totalorder %v746, %v5150
          %vm5173 = vcmp.eq.s32.totalorder %v746, %v5165
          %v5174 = vsel %vm5166, 1, 0
          %v5175 = vsel %vm5167, 1, 0
          %v5176 = vsel %vm5168, 1, 0
          %v5177 = vsel %vm5169, 1, 0
          %v5178 = vsel %vm5170, 1, 0
          %v5179 = vsel %vm5171, 1, 0
          %v5180 = vsel %vm5172, 1, 0
          %v5181 = vsel %vm5173, 1, 0
          %v5182 = vcvt.s32.f32 %v5174
          %v5183 = vcvt.s32.f32 %v5175
          %v5184 = vcvt.s32.f32 %v5176
          %v5185 = vcvt.s32.f32 %v5177
          %v5186 = vcvt.s32.f32 %v5178
          %v5187 = vcvt.s32.f32 %v5179
          %v5188 = vcvt.s32.f32 %v5180
          %v5189 = vcvt.s32.f32 %v5181
          %5190 = vxpose.xlu0.b32.start [1/16] %v5182, 128
          %5191 = vxpose.xlu0.b32.cont [2/16] %v5183, 128
          %5192 = vxpose.xlu0.b32.cont [3/16] %v5184, 128
          %5193 = vxpose.xlu0.b32.cont [4/16] %v5185, 128
          %5194 = vxpose.xlu0.b32.cont [5/16] %v5186, 128
          %5195 = vxpose.xlu0.b32.cont [6/16] %v5187, 128
          %5196 = vxpose.xlu0.b32.cont [7/16] %v5188, 128
          %5197 = vxpose.xlu0.b32.cont [8/16] %v5189, 128
          %5198 = vxpose.xlu0.b32.cont [9/16] 0.0, 128
          %5199 = vxpose.xlu0.b32.cont [10/16] 0.0, 128
          %5200 = vxpose.xlu0.b32.cont [11/16] 0.0, 128
          %5201 = vxpose.xlu0.b32.cont [12/16] 0.0, 128
          %5202 = vxpose.xlu0.b32.cont [13/16] 0.0, 128
          %5203 = vxpose.xlu0.b32.cont [14/16] 0.0, 128
          %5204 = vxpose.xlu0.b32.cont [15/16] 0.0, 128
          %5205 = vxpose.xlu0.b32.end [16/16] 0.0, 128
          %v5206 = vpop.trf.xlu0
          %v5207 = vpop.trf.xlu0
          %v5208 = vpop.trf.xlu0
          %v5209 = vpop.trf.xlu0
          %v5210 = vpop.trf.xlu0
          %v5211 = vpop.trf.xlu0
          %v5212 = vpop.trf.xlu0
          %v5213 = vpop.trf.xlu0
          %v5214 = vpop.trf.xlu0
          %v5215 = vpop.trf.xlu0
          %v5216 = vpop.trf.xlu0
          %v5217 = vpop.trf.xlu0
          %v5218 = vpop.trf.xlu0
          %v5219 = vpop.trf.xlu0
          %v5220 = vpop.trf.xlu0
          %v5221 = vpop.trf.xlu0
          %v5223 = vsel %vm725, %v5206, 0
          %5225 = vmatprep.subr.mxu0 0.0
          %5226 = vmatpush1.msra.mxu0 %v737
          %5227 = vmatprep.subr.mxu0 0.0
          %5228 = vmatpush1.msra.mxu0 %v738
          %5229 = vmatprep.subr.mxu0 0.0
          %5230 = vmatpush1.msra.mxu0 %v739
          %5231 = vmatprep.subr.mxu0 0.0
          %5232 = vmatpush1.msra.mxu0 %v740
          %5233 = vmatprep.subr.mxu0 0.0
          %5234 = vmatpush1.msra.mxu0 %v741
          %5235 = vmatprep.subr.mxu0 0.0
          %5236 = vmatpush1.msra.mxu0 %v742
          %5237 = vmatprep.subr.mxu0 0.0
          %5238 = vmatpush1.msra.mxu0 %v743
          %5239 = vmatprep.subr.mxu0 0.0
          %5240 = vmatpush1.msra.mxu0 %v744
          %5241 = vmatprep.subr.mxu0 0.0
          %5242 = vmatpush1.msra.mxu0 0.0
          %5243 = vmatprep.subr.mxu0 0.0
          %5244 = vmatpush1.msra.mxu0 0.0
          %5245 = vmatprep.subr.mxu0 0.0
          %5246 = vmatpush1.msra.mxu0 0.0
          %5247 = vmatprep.subr.mxu0 0.0
          %5248 = vmatpush1.msra.mxu0 0.0
          %5249 = vmatprep.subr.mxu0 0.0
          %5250 = vmatpush1.msra.mxu0 0.0
          %5251 = vmatprep.subr.mxu0 0.0
          %5252 = vmatpush1.msra.mxu0 0.0
          %5253 = vmatprep.subr.mxu0 0.0
          %5254 = vmatpush1.msra.mxu0 0.0
          %5255 = vmatprep.subr.mxu0 0.0
          %5256 = vmatpush1.msra.mxu0 0.0
          %5257 = vmatprep.subr.mxu0 0.0
          %5258 = vmatpush1.msra.mxu0 0.0
          %5259 = vmatprep.subr.mxu0 0.0
          %5260 = vmatpush1.msra.mxu0 0.0
          %5261 = vmatprep.subr.mxu0 0.0
          %5262 = vmatpush1.msra.mxu0 0.0
          %5263 = vmatprep.subr.mxu0 0.0
          %5264 = vmatpush1.msra.mxu0 0.0
          %5265 = vmatprep.subr.mxu0 0.0
          %5266 = vmatpush1.msra.mxu0 0.0
          %5267 = vmatprep.subr.mxu0 0.0
          %5268 = vmatpush1.msra.mxu0 0.0
          %5269 = vmatprep.subr.mxu0 0.0
          %5270 = vmatpush1.msra.mxu0 0.0
          %5271 = vmatprep.subr.mxu0 0.0
          %5272 = vmatpush1.msra.mxu0 0.0
          %5273 = vmatprep.subr.mxu0 0.0
          %5274 = vmatpush1.msra.mxu0 0.0
          %5275 = vmatprep.subr.mxu0 0.0
          %5276 = vmatpush1.msra.mxu0 0.0
          %5277 = vmatprep.subr.mxu0 0.0
          %5278 = vmatpush1.msra.mxu0 0.0
          %5279 = vmatprep.subr.mxu0 0.0
          %5280 = vmatpush1.msra.mxu0 0.0
          %5281 = vmatprep.subr.mxu0 0.0
          %5282 = vmatpush1.msra.mxu0 0.0
          %5283 = vmatprep.subr.mxu0 0.0
          %5284 = vmatpush1.msra.mxu0 0.0
          %5285 = vmatprep.subr.mxu0 0.0
          %5286 = vmatpush1.msra.mxu0 0.0
          %5287 = vmatprep.subr.mxu0 0.0
          %5288 = vmatpush1.msra.mxu0 0.0
          %5289 = vmatprep.mubr.f32.mxu0 0.0
          %5290 = vmatmul.mubr.f32.gmra.mrb[0].mxu0 %v5223
          %v5291 = vpop.f32.mrb[0].mxu0
          %v5292 = vadd.f32 0.0, %v5291
          %v5293 = vpop.f32.mrb[0].mxu0
          %5294 = vdwg.mxu0
          %5295 = vmatprep.subr.mxu0 0.0
          %5296 = vmatpush1.msra.mxu0 1.0
          %5297 = vmatprep.subr.mxu0 0.0
          %5298 = vmatpush1.msra.mxu0 1.0
          %5299 = vmatprep.subr.mxu0 0.0
          %5300 = vmatpush1.msra.mxu0 1.0
          %5301 = vmatprep.subr.mxu0 0.0
          %5302 = vmatpush1.msra.mxu0 1.0
          %5303 = vmatprep.subr.mxu0 0.0
          %5304 = vmatpush1.msra.mxu0 1.0
          %5305 = vmatprep.subr.mxu0 0.0
          %5306 = vmatpush1.msra.mxu0 1.0
          %5307 = vmatprep.subr.mxu0 0.0
          %5308 = vmatpush1.msra.mxu0 1.0
          %5309 = vmatprep.subr.mxu0 0.0
          %5310 = vmatpush1.msra.mxu0 1.0
          %5311 = vmatprep.subr.mxu0 0.0
          %5312 = vmatpush1.msra.mxu0 0.0
          %5313 = vmatprep.subr.mxu0 0.0
          %5314 = vmatpush1.msra.mxu0 0.0
          %5315 = vmatprep.subr.mxu0 0.0
          %5316 = vmatpush1.msra.mxu0 0.0
          %5317 = vmatprep.subr.mxu0 0.0
          %5318 = vmatpush1.msra.mxu0 0.0
          %5319 = vmatprep.subr.mxu0 0.0
          %5320 = vmatpush1.msra.mxu0 0.0
          %5321 = vmatprep.subr.mxu0 0.0
          %5322 = vmatpush1.msra.mxu0 0.0
          %5323 = vmatprep.subr.mxu0 0.0
          %5324 = vmatpush1.msra.mxu0 0.0
          %5325 = vmatprep.subr.mxu0 0.0
          %5326 = vmatpush1.msra.mxu0 0.0
          %5327 = vmatprep.subr.mxu0 0.0
          %5328 = vmatpush1.msra.mxu0 0.0
          %5329 = vmatprep.subr.mxu0 0.0
          %5330 = vmatpush1.msra.mxu0 0.0
          %5331 = vmatprep.subr.mxu0 0.0
          %5332 = vmatpush1.msra.mxu0 0.0
          %5333 = vmatprep.subr.mxu0 0.0
          %5334 = vmatpush1.msra.mxu0 0.0
          %5335 = vmatprep.subr.mxu0 0.0
          %5336 = vmatpush1.msra.mxu0 0.0
          %5337 = vmatprep.subr.mxu0 0.0
          %5338 = vmatpush1.msra.mxu0 0.0
          %5339 = vmatprep.subr.mxu0 0.0
          %5340 = vmatpush1.msra.mxu0 0.0
          %5341 = vmatprep.subr.mxu0 0.0
          %5342 = vmatpush1.msra.mxu0 0.0
          %5343 = vmatprep.subr.mxu0 0.0
          %5344 = vmatpush1.msra.mxu0 0.0
          %5345 = vmatprep.subr.mxu0 0.0
          %5346 = vmatpush1.msra.mxu0 0.0
          %5347 = vmatprep.subr.mxu0 0.0
          %5348 = vmatpush1.msra.mxu0 0.0
          %5349 = vmatprep.subr.mxu0 0.0
          %5350 = vmatpush1.msra.mxu0 0.0
          %5351 = vmatprep.subr.mxu0 0.0
          %5352 = vmatpush1.msra.mxu0 0.0
          %5353 = vmatprep.subr.mxu0 0.0
          %5354 = vmatpush1.msra.mxu0 0.0
          %5355 = vmatprep.subr.mxu0 0.0
          %5356 = vmatpush1.msra.mxu0 0.0
          %5357 = vmatprep.subr.mxu0 0.0
          %5358 = vmatpush1.msra.mxu0 0.0
          %5359 = vmatprep.mubr.f32.mxu0 0.0
          %5360 = vmatmul.mubr.f32.gmra.mrb[0].mxu0 %v5223
          %v5361 = vpop.f32.mrb[0].mxu0
          %v5362 = vadd.f32 0.0, %v5361
          %v5363 = vpop.f32.mrb[0].mxu0
          %5364 = vdwg.mxu0
          %vm5365 = vcmp.gt.f32.partialorder %v5362, 0.5
          %v5366 = vmax.f32 %v5362, 1.0
          %5368 = vset.pattern.permute.xlu0 0
          %5369 = vperm.xlu0 %5368, %v5366
          %v5370 = vpop.permute.xlu0 %5369
          %v5372 = vrcp.pop %v5370
          %v5373 = vmul.f32 %v5292, %v5372
          %v5374 = vsel %vm5365, 1, 0
          %5375 = vset.pattern.permute.xlu0 0
          %5376 = vperm.xlu0 %5375, %v5374
          %v5377 = vpop.permute.xlu0 %5376
          %vm5378 = vcmp.eq.s32.totalorder %v5377, 1
          %v5379 = vsel %vm5378, %v5373, %v4803
          %v5381 = vsel %vm725, %v5379, 0
          %5383 = vmatprep.subr.mxu0 0.0
          %5384 = vmatpush1.xpose.msra.mxu0 %v5381
          %5385 = vmatprep.subr.mxu0 0.0
          %5386 = vmatpush1.xpose.msra.mxu0 0.0
          %5387 = vmatprep.subr.mxu0 0.0
          %5388 = vmatpush1.xpose.msra.mxu0 0.0
          %5389 = vmatprep.subr.mxu0 0.0
          %5390 = vmatpush1.xpose.msra.mxu0 0.0
          %5391 = vmatprep.subr.mxu0 0.0
          %5392 = vmatpush1.xpose.msra.mxu0 0.0
          %5393 = vmatprep.subr.mxu0 0.0
          %5394 = vmatpush1.xpose.msra.mxu0 0.0
          %5395 = vmatprep.subr.mxu0 0.0
          %5396 = vmatpush1.xpose.msra.mxu0 0.0
          %5397 = vmatprep.subr.mxu0 0.0
          %5398 = vmatpush1.xpose.msra.mxu0 0.0
          %5399 = vmatprep.subr.mxu0 0.0
          %5400 = vmatpush1.xpose.msra.mxu0 0.0
          %5401 = vmatprep.subr.mxu0 0.0
          %5402 = vmatpush1.xpose.msra.mxu0 0.0
          %5403 = vmatprep.subr.mxu0 0.0
          %5404 = vmatpush1.xpose.msra.mxu0 0.0
          %5405 = vmatprep.subr.mxu0 0.0
          %5406 = vmatpush1.xpose.msra.mxu0 0.0
          %5407 = vmatprep.subr.mxu0 0.0
          %5408 = vmatpush1.xpose.msra.mxu0 0.0
          %5409 = vmatprep.subr.mxu0 0.0
          %5410 = vmatpush1.xpose.msra.mxu0 0.0
          %5411 = vmatprep.subr.mxu0 0.0
          %5412 = vmatpush1.xpose.msra.mxu0 0.0
          %5413 = vmatprep.subr.mxu0 0.0
          %5414 = vmatpush1.xpose.msra.mxu0 0.0
          %5415 = vmatprep.subr.mxu0 0.0
          %5416 = vmatpush1.xpose.msra.mxu0 0.0
          %5417 = vmatprep.subr.mxu0 0.0
          %5418 = vmatpush1.xpose.msra.mxu0 0.0
          %5419 = vmatprep.subr.mxu0 0.0
          %5420 = vmatpush1.xpose.msra.mxu0 0.0
          %5421 = vmatprep.subr.mxu0 0.0
          %5422 = vmatpush1.xpose.msra.mxu0 0.0
          %5423 = vmatprep.subr.mxu0 0.0
          %5424 = vmatpush1.xpose.msra.mxu0 0.0
          %5425 = vmatprep.subr.mxu0 0.0
          %5426 = vmatpush1.xpose.msra.mxu0 0.0
          %5427 = vmatprep.subr.mxu0 0.0
          %5428 = vmatpush1.xpose.msra.mxu0 0.0
          %5429 = vmatprep.subr.mxu0 0.0
          %5430 = vmatpush1.xpose.msra.mxu0 0.0
          %5431 = vmatprep.subr.mxu0 0.0
          %5432 = vmatpush1.xpose.msra.mxu0 0.0
          %5433 = vmatprep.subr.mxu0 0.0
          %5434 = vmatpush1.xpose.msra.mxu0 0.0
          %5435 = vmatprep.subr.mxu0 0.0
          %5436 = vmatpush1.xpose.msra.mxu0 0.0
          %5437 = vmatprep.subr.mxu0 0.0
          %5438 = vmatpush1.xpose.msra.mxu0 0.0
          %5439 = vmatprep.subr.mxu0 0.0
          %5440 = vmatpush1.xpose.msra.mxu0 0.0
          %5441 = vmatprep.subr.mxu0 0.0
          %5442 = vmatpush1.xpose.msra.mxu0 0.0
          %5443 = vmatprep.subr.mxu0 0.0
          %5444 = vmatpush1.xpose.msra.mxu0 0.0
          %5445 = vmatprep.subr.mxu0 0.0
          %5446 = vmatpush1.xpose.msra.mxu0 0.0
          %5447 = vmatprep.mubr.f32.mxu0 0.0
          %5448 = vmatmul.mubr.f32.gmra.mrb[0].mxu0 %v748
          %v5449 = vpop.f32.mrb[0].mxu0
          %v5450 = vadd.f32 0.0, %v5449
          %v5451 = vpop.f32.mrb[0].mxu0
          %5452 = vmatprep.mubr.f32.mxu0 0.0
          %5453 = vmatmul.mubr.f32.gmra.mrb[0].mxu0 %v751
          %v5454 = vpop.f32.mrb[0].mxu0
          %v5455 = vadd.f32 0.0, %v5454
          %v5456 = vpop.f32.mrb[0].mxu0
          %5457 = vmatprep.mubr.f32.mxu0 0.0
          %5458 = vmatmul.mubr.f32.gmra.mrb[0].mxu0 %v754
          %v5459 = vpop.f32.mrb[0].mxu0
          %v5460 = vadd.f32 0.0, %v5459
          %v5461 = vpop.f32.mrb[0].mxu0
          %5462 = vmatprep.mubr.f32.mxu0 0.0
          %5463 = vmatmul.mubr.f32.gmra.mrb[0].mxu0 %v757
          %v5464 = vpop.f32.mrb[0].mxu0
          %v5465 = vadd.f32 0.0, %v5464
          %v5466 = vpop.f32.mrb[0].mxu0
          %5467 = vmatprep.mubr.f32.mxu0 0.0
          %5468 = vmatmul.mubr.f32.gmra.mrb[0].mxu0 %v760
          %v5469 = vpop.f32.mrb[0].mxu0
          %v5470 = vadd.f32 0.0, %v5469
          %v5471 = vpop.f32.mrb[0].mxu0
          %5472 = vmatprep.mubr.f32.mxu0 0.0
          %5473 = vmatmul.mubr.f32.gmra.mrb[0].mxu0 %v763
          %v5474 = vpop.f32.mrb[0].mxu0
          %v5475 = vadd.f32 0.0, %v5474
          %v5476 = vpop.f32.mrb[0].mxu0
          %5477 = vmatprep.mubr.f32.mxu0 0.0
          %5478 = vmatmul.mubr.f32.gmra.mrb[0].mxu0 %v766
          %v5479 = vpop.f32.mrb[0].mxu0
          %v5480 = vadd.f32 0.0, %v5479
          %v5481 = vpop.f32.mrb[0].mxu0
          %5482 = vmatprep.mubr.f32.mxu0 0.0
          %5483 = vmatmul.mubr.f32.gmra.mrb[0].mxu0 %v769
          %v5484 = vpop.f32.mrb[0].mxu0
          %v5485 = vadd.f32 0.0, %v5484
          %v5486 = vpop.f32.mrb[0].mxu0
          %5487 = vdwg.mxu0
          %v5488 = vmul.f32 %v5379, %v5379
          %v5490 = vsel %vm725, %v5488, 0
          %5492 = vmatprep.subr.mxu0 0.0
          %5493 = vmatpush1.xpose.msra.mxu0 %v5490
          %5494 = vmatprep.subr.mxu0 0.0
          %5495 = vmatpush1.xpose.msra.mxu0 0.0
          %5496 = vmatprep.subr.mxu0 0.0
          %5497 = vmatpush1.xpose.msra.mxu0 0.0
          %5498 = vmatprep.subr.mxu0 0.0
          %5499 = vmatpush1.xpose.msra.mxu0 0.0
          %5500 = vmatprep.subr.mxu0 0.0
          %5501 = vmatpush1.xpose.msra.mxu0 0.0
          %5502 = vmatprep.subr.mxu0 0.0
          %5503 = vmatpush1.xpose.msra.mxu0 0.0
          %5504 = vmatprep.subr.mxu0 0.0
          %5505 = vmatpush1.xpose.msra.mxu0 0.0
          %5506 = vmatprep.subr.mxu0 0.0
          %5507 = vmatpush1.xpose.msra.mxu0 0.0
          %5508 = vmatprep.subr.mxu0 0.0
          %5509 = vmatpush1.xpose.msra.mxu0 0.0
          %5510 = vmatprep.subr.mxu0 0.0
          %5511 = vmatpush1.xpose.msra.mxu0 0.0
          %5512 = vmatprep.subr.mxu0 0.0
          %5513 = vmatpush1.xpose.msra.mxu0 0.0
          %5514 = vmatprep.subr.mxu0 0.0
          %5515 = vmatpush1.xpose.msra.mxu0 0.0
          %5516 = vmatprep.subr.mxu0 0.0
          %5517 = vmatpush1.xpose.msra.mxu0 0.0
          %5518 = vmatprep.subr.mxu0 0.0
          %5519 = vmatpush1.xpose.msra.mxu0 0.0
          %5520 = vmatprep.subr.mxu0 0.0
          %5521 = vmatpush1.xpose.msra.mxu0 0.0
          %5522 = vmatprep.subr.mxu0 0.0
          %5523 = vmatpush1.xpose.msra.mxu0 0.0
          %5524 = vmatprep.subr.mxu0 0.0
          %5525 = vmatpush1.xpose.msra.mxu0 0.0
          %5526 = vmatprep.subr.mxu0 0.0
          %5527 = vmatpush1.xpose.msra.mxu0 0.0
          %5528 = vmatprep.subr.mxu0 0.0
          %5529 = vmatpush1.xpose.msra.mxu0 0.0
          %5530 = vmatprep.subr.mxu0 0.0
          %5531 = vmatpush1.xpose.msra.mxu0 0.0
          %5532 = vmatprep.subr.mxu0 0.0
          %5533 = vmatpush1.xpose.msra.mxu0 0.0
          %5534 = vmatprep.subr.mxu0 0.0
          %5535 = vmatpush1.xpose.msra.mxu0 0.0
          %5536 = vmatprep.subr.mxu0 0.0
          %5537 = vmatpush1.xpose.msra.mxu0 0.0
          %5538 = vmatprep.subr.mxu0 0.0
          %5539 = vmatpush1.xpose.msra.mxu0 0.0
          %5540 = vmatprep.subr.mxu0 0.0
          %5541 = vmatpush1.xpose.msra.mxu0 0.0
          %5542 = vmatprep.subr.mxu0 0.0
          %5543 = vmatpush1.xpose.msra.mxu0 0.0
          %5544 = vmatprep.subr.mxu0 0.0
          %5545 = vmatpush1.xpose.msra.mxu0 0.0
          %5546 = vmatprep.subr.mxu0 0.0
          %5547 = vmatpush1.xpose.msra.mxu0 0.0
          %5548 = vmatprep.subr.mxu0 0.0
          %5549 = vmatpush1.xpose.msra.mxu0 0.0
          %5550 = vmatprep.subr.mxu0 0.0
          %5551 = vmatpush1.xpose.msra.mxu0 0.0
          %5552 = vmatprep.subr.mxu0 0.0
          %5553 = vmatpush1.xpose.msra.mxu0 0.0
          %5554 = vmatprep.subr.mxu0 0.0
          %5555 = vmatpush1.xpose.msra.mxu0 0.0
          %5556 = vmatprep.mubr.f32.mxu0 0.0
          %5557 = vmatmul.mubr.f32.gmra.mrb[0].mxu0 %v878
          %v5558 = vpop.f32.mrb[0].mxu0
          %v5559 = vadd.f32 0.0, %v5558
          %v5560 = vpop.f32.mrb[0].mxu0
          %5561 = vdwg.mxu0
          %v5562 = vmul.f32 %v5450, 2.0
          %v5563 = vmul.f32 %v5455, 2.0
          %v5564 = vmul.f32 %v5460, 2.0
          %v5565 = vmul.f32 %v5465, 2.0
          %v5566 = vmul.f32 %v5470, 2.0
          %v5567 = vmul.f32 %v5475, 2.0
          %v5568 = vmul.f32 %v5480, 2.0
          %v5569 = vmul.f32 %v5485, 2.0
          %v5570 = vlaneseq
          %v5571 = vshrl.u32 %v5570, 7
          %v5572 = vsub.s32 0, %v5571
          %v5573 = vrot.slane %v5559, %v5572
          %v5574 = vsub.f32 %v5573, %v5562
          %v5575 = vsub.f32 %v5573, %v5563
          %v5576 = vsub.f32 %v5573, %v5564
          %v5577 = vsub.f32 %v5573, %v5565
          %v5578 = vsub.f32 %v5573, %v5566
          %v5579 = vsub.f32 %v5573, %v5567
          %v5580 = vsub.f32 %v5573, %v5568
          %v5581 = vsub.f32 %v5573, %v5569
          %v5582 = vsel %vm973, %v5574, inf
          %5583 = vmin.xlane.f32.xlu0 %v5582
          %v5584 = vpop.xlane.xlu0 %5583
          %v5585 = vsel %vm973, %v5575, inf
          %5586 = vmin.xlane.f32.xlu0 %v5585
          %v5587 = vpop.xlane.xlu0 %5586
          %v5588 = vsel %vm973, %v5576, inf
          %5589 = vmin.xlane.f32.xlu0 %v5588
          %v5590 = vpop.xlane.xlu0 %5589
          %v5591 = vsel %vm973, %v5577, inf
          %5592 = vmin.xlane.f32.xlu0 %v5591
          %v5593 = vpop.xlane.xlu0 %5592
          %v5594 = vsel %vm973, %v5578, inf
          %5595 = vmin.xlane.f32.xlu0 %v5594
          %v5596 = vpop.xlane.xlu0 %5595
          %v5597 = vsel %vm973, %v5579, inf
          %5598 = vmin.xlane.f32.xlu0 %v5597
          %v5599 = vpop.xlane.xlu0 %5598
          %v5600 = vsel %vm973, %v5580, inf
          %5601 = vmin.xlane.f32.xlu0 %v5600
          %v5602 = vpop.xlane.xlu0 %5601
          %v5603 = vsel %vm973, %v5581, inf
          %5604 = vmin.xlane.f32.xlu0 %v5603
          %v5605 = vpop.xlane.xlu0 %5604
          %vm5606 = vcmp.le.f32.partialorder %v5574, %v5584
          %vm5607 = vcmp.le.f32.partialorder %v5575, %v5587
          %vm5608 = vcmp.le.f32.partialorder %v5576, %v5590
          %vm5609 = vcmp.le.f32.partialorder %v5577, %v5593
          %vm5610 = vcmp.le.f32.partialorder %v5578, %v5596
          %vm5611 = vcmp.le.f32.partialorder %v5579, %v5599
          %vm5612 = vcmp.le.f32.partialorder %v5580, %v5602
          %vm5613 = vcmp.le.f32.partialorder %v5581, %v5605
          %v5614 = vsel %vm5606, %v746, 8
          %v5615 = vsel %vm5607, %v746, 8
          %v5616 = vsel %vm5608, %v746, 8
          %v5617 = vsel %vm5609, %v746, 8
          %v5618 = vsel %vm5610, %v746, 8
          %v5619 = vsel %vm5611, %v746, 8
          %v5620 = vsel %vm5612, %v746, 8
          %v5621 = vsel %vm5613, %v746, 8
          %v5622 = vsel %vm973, %v5614, 2147483647
          %v5623 = vand.u32 %v5622, 65535
          %v5624 = vshra.s32 %v5622, 16
          %v5625 = vcvt.s32.f32 %v5623
          %v5626 = vcvt.s32.f32 %v5624
          %5627 = vmin.xlane.f32.xlu0 %v5626
          %v5628 = vpop.xlane.xlu0 %5627
          %vm5629 = vcmp.eq.f32.partialorder %v5626, %v5628
          %v5630 = vsel %vm5629, %v5625, inf
          %5631 = vmin.xlane.f32.xlu0 %v5630
          %v5632 = vpop.xlane.xlu0 %5631
          %v5633 = vcvt.f32.s32 %v5632
          %v5634 = vcvt.f32.s32 %v5628
          %v5635 = vshll.u32 %v5634, 16
          %v5636 = vadd.s32 %v5635, %v5633
          %v5637 = vsel %vm973, %v5615, 2147483647
          %v5638 = vand.u32 %v5637, 65535
          %v5639 = vshra.s32 %v5637, 16
          %v5640 = vcvt.s32.f32 %v5638
          %v5641 = vcvt.s32.f32 %v5639
          %5642 = vmin.xlane.f32.xlu0 %v5641
          %v5643 = vpop.xlane.xlu0 %5642
          %vm5644 = vcmp.eq.f32.partialorder %v5641, %v5643
          %v5645 = vsel %vm5644, %v5640, inf
          %5646 = vmin.xlane.f32.xlu0 %v5645
          %v5647 = vpop.xlane.xlu0 %5646
          %v5648 = vcvt.f32.s32 %v5647
          %v5649 = vcvt.f32.s32 %v5643
          %v5650 = vshll.u32 %v5649, 16
          %v5651 = vadd.s32 %v5650, %v5648
          %v5652 = vsel %vm973, %v5616, 2147483647
          %v5653 = vand.u32 %v5652, 65535
          %v5654 = vshra.s32 %v5652, 16
          %v5655 = vcvt.s32.f32 %v5653
          %v5656 = vcvt.s32.f32 %v5654
          %5657 = vmin.xlane.f32.xlu0 %v5656
          %v5658 = vpop.xlane.xlu0 %5657
          %vm5659 = vcmp.eq.f32.partialorder %v5656, %v5658
          %v5660 = vsel %vm5659, %v5655, inf
          %5661 = vmin.xlane.f32.xlu0 %v5660
          %v5662 = vpop.xlane.xlu0 %5661
          %v5663 = vcvt.f32.s32 %v5662
          %v5664 = vcvt.f32.s32 %v5658
          %v5665 = vshll.u32 %v5664, 16
          %v5666 = vadd.s32 %v5665, %v5663
          %v5667 = vsel %vm973, %v5617, 2147483647
          %v5668 = vand.u32 %v5667, 65535
          %v5669 = vshra.s32 %v5667, 16
          %v5670 = vcvt.s32.f32 %v5668
          %v5671 = vcvt.s32.f32 %v5669
          %5672 = vmin.xlane.f32.xlu0 %v5671
          %v5673 = vpop.xlane.xlu0 %5672
          %vm5674 = vcmp.eq.f32.partialorder %v5671, %v5673
          %v5675 = vsel %vm5674, %v5670, inf
          %5676 = vmin.xlane.f32.xlu0 %v5675
          %v5677 = vpop.xlane.xlu0 %5676
          %v5678 = vcvt.f32.s32 %v5677
          %v5679 = vcvt.f32.s32 %v5673
          %v5680 = vshll.u32 %v5679, 16
          %v5681 = vadd.s32 %v5680, %v5678
          %v5682 = vsel %vm973, %v5618, 2147483647
          %v5683 = vand.u32 %v5682, 65535
          %v5684 = vshra.s32 %v5682, 16
          %v5685 = vcvt.s32.f32 %v5683
          %v5686 = vcvt.s32.f32 %v5684
          %5687 = vmin.xlane.f32.xlu0 %v5686
          %v5688 = vpop.xlane.xlu0 %5687
          %vm5689 = vcmp.eq.f32.partialorder %v5686, %v5688
          %v5690 = vsel %vm5689, %v5685, inf
          %5691 = vmin.xlane.f32.xlu0 %v5690
          %v5692 = vpop.xlane.xlu0 %5691
          %v5693 = vcvt.f32.s32 %v5692
          %v5694 = vcvt.f32.s32 %v5688
          %v5695 = vshll.u32 %v5694, 16
          %v5696 = vadd.s32 %v5695, %v5693
          %v5697 = vsel %vm973, %v5619, 2147483647
          %v5698 = vand.u32 %v5697, 65535
          %v5699 = vshra.s32 %v5697, 16
          %v5700 = vcvt.s32.f32 %v5698
          %v5701 = vcvt.s32.f32 %v5699
          %5702 = vmin.xlane.f32.xlu0 %v5701
          %v5703 = vpop.xlane.xlu0 %5702
          %vm5704 = vcmp.eq.f32.partialorder %v5701, %v5703
          %v5705 = vsel %vm5704, %v5700, inf
          %5706 = vmin.xlane.f32.xlu0 %v5705
          %v5707 = vpop.xlane.xlu0 %5706
          %v5708 = vcvt.f32.s32 %v5707
          %v5709 = vcvt.f32.s32 %v5703
          %v5710 = vshll.u32 %v5709, 16
          %v5711 = vadd.s32 %v5710, %v5708
          %v5712 = vsel %vm973, %v5620, 2147483647
          %v5713 = vand.u32 %v5712, 65535
          %v5714 = vshra.s32 %v5712, 16
          %v5715 = vcvt.s32.f32 %v5713
          %v5716 = vcvt.s32.f32 %v5714
          %5717 = vmin.xlane.f32.xlu0 %v5716
          %v5718 = vpop.xlane.xlu0 %5717
          %vm5719 = vcmp.eq.f32.partialorder %v5716, %v5718
          %v5720 = vsel %vm5719, %v5715, inf
          %5721 = vmin.xlane.f32.xlu0 %v5720
          %v5722 = vpop.xlane.xlu0 %5721
          %v5723 = vcvt.f32.s32 %v5722
          %v5724 = vcvt.f32.s32 %v5718
          %v5725 = vshll.u32 %v5724, 16
          %v5726 = vadd.s32 %v5725, %v5723
          %v5727 = vsel %vm973, %v5621, 2147483647
          %v5728 = vand.u32 %v5727, 65535
          %v5729 = vshra.s32 %v5727, 16
          %v5730 = vcvt.s32.f32 %v5728
          %v5731 = vcvt.s32.f32 %v5729
          %5732 = vmin.xlane.f32.xlu0 %v5731
          %v5733 = vpop.xlane.xlu0 %5732
          %vm5734 = vcmp.eq.f32.partialorder %v5731, %v5733
          %v5735 = vsel %vm5734, %v5730, inf
          %5736 = vmin.xlane.f32.xlu0 %v5735
          %v5737 = vpop.xlane.xlu0 %5736
          %v5738 = vcvt.f32.s32 %v5737
          %v5739 = vcvt.f32.s32 %v5733
          %v5740 = vshll.u32 %v5739, 16
          %v5741 = vadd.s32 %v5740, %v5738
          %vm5742 = vcmp.eq.s32.totalorder %v746, %v5636
          %vm5743 = vcmp.eq.s32.totalorder %v746, %v5651
          %vm5744 = vcmp.eq.s32.totalorder %v746, %v5666
          %vm5745 = vcmp.eq.s32.totalorder %v746, %v5681
          %vm5746 = vcmp.eq.s32.totalorder %v746, %v5696
          %vm5747 = vcmp.eq.s32.totalorder %v746, %v5711
          %vm5748 = vcmp.eq.s32.totalorder %v746, %v5726
          %vm5749 = vcmp.eq.s32.totalorder %v746, %v5741
          %v5750 = vsel %vm5742, 1, 0
          %v5751 = vsel %vm5743, 1, 0
          %v5752 = vsel %vm5744, 1, 0
          %v5753 = vsel %vm5745, 1, 0
          %v5754 = vsel %vm5746, 1, 0
          %v5755 = vsel %vm5747, 1, 0
          %v5756 = vsel %vm5748, 1, 0
          %v5757 = vsel %vm5749, 1, 0
          %v5758 = vcvt.s32.f32 %v5750
          %v5759 = vcvt.s32.f32 %v5751
          %v5760 = vcvt.s32.f32 %v5752
          %v5761 = vcvt.s32.f32 %v5753
          %v5762 = vcvt.s32.f32 %v5754
          %v5763 = vcvt.s32.f32 %v5755
          %v5764 = vcvt.s32.f32 %v5756
          %v5765 = vcvt.s32.f32 %v5757
          %5766 = vxpose.xlu0.b32.start [1/16] %v5758, 128
          %5767 = vxpose.xlu0.b32.cont [2/16] %v5759, 128
          %5768 = vxpose.xlu0.b32.cont [3/16] %v5760, 128
          %5769 = vxpose.xlu0.b32.cont [4/16] %v5761, 128
          %5770 = vxpose.xlu0.b32.cont [5/16] %v5762, 128
          %5771 = vxpose.xlu0.b32.cont [6/16] %v5763, 128
          %5772 = vxpose.xlu0.b32.cont [7/16] %v5764, 128
          %5773 = vxpose.xlu0.b32.cont [8/16] %v5765, 128
          %5774 = vxpose.xlu0.b32.cont [9/16] 0.0, 128
          %5775 = vxpose.xlu0.b32.cont [10/16] 0.0, 128
          %5776 = vxpose.xlu0.b32.cont [11/16] 0.0, 128
          %5777 = vxpose.xlu0.b32.cont [12/16] 0.0, 128
          %5778 = vxpose.xlu0.b32.cont [13/16] 0.0, 128
          %5779 = vxpose.xlu0.b32.cont [14/16] 0.0, 128
          %5780 = vxpose.xlu0.b32.cont [15/16] 0.0, 128
          %5781 = vxpose.xlu0.b32.end [16/16] 0.0, 128
          %v5782 = vpop.trf.xlu0
          %v5783 = vpop.trf.xlu0
          %v5784 = vpop.trf.xlu0
          %v5785 = vpop.trf.xlu0
          %v5786 = vpop.trf.xlu0
          %v5787 = vpop.trf.xlu0
          %v5788 = vpop.trf.xlu0
          %v5789 = vpop.trf.xlu0
          %v5790 = vpop.trf.xlu0
          %v5791 = vpop.trf.xlu0
          %v5792 = vpop.trf.xlu0
          %v5793 = vpop.trf.xlu0
          %v5794 = vpop.trf.xlu0
          %v5795 = vpop.trf.xlu0
          %v5796 = vpop.trf.xlu0
          %v5797 = vpop.trf.xlu0
          %v5799 = vsel %vm725, %v5782, 0
          %5801 = vmatprep.subr.mxu0 0.0
          %5802 = vmatpush1.msra.mxu0 %v737
          %5803 = vmatprep.subr.mxu0 0.0
          %5804 = vmatpush1.msra.mxu0 %v738
          %5805 = vmatprep.subr.mxu0 0.0
          %5806 = vmatpush1.msra.mxu0 %v739
          %5807 = vmatprep.subr.mxu0 0.0
          %5808 = vmatpush1.msra.mxu0 %v740
          %5809 = vmatprep.subr.mxu0 0.0
          %5810 = vmatpush1.msra.mxu0 %v741
          %5811 = vmatprep.subr.mxu0 0.0
          %5812 = vmatpush1.msra.mxu0 %v742
          %5813 = vmatprep.subr.mxu0 0.0
          %5814 = vmatpush1.msra.mxu0 %v743
          %5815 = vmatprep.subr.mxu0 0.0
          %5816 = vmatpush1.msra.mxu0 %v744
          %5817 = vmatprep.subr.mxu0 0.0
          %5818 = vmatpush1.msra.mxu0 0.0
          %5819 = vmatprep.subr.mxu0 0.0
          %5820 = vmatpush1.msra.mxu0 0.0
          %5821 = vmatprep.subr.mxu0 0.0
          %5822 = vmatpush1.msra.mxu0 0.0
          %5823 = vmatprep.subr.mxu0 0.0
          %5824 = vmatpush1.msra.mxu0 0.0
          %5825 = vmatprep.subr.mxu0 0.0
          %5826 = vmatpush1.msra.mxu0 0.0
          %5827 = vmatprep.subr.mxu0 0.0
          %5828 = vmatpush1.msra.mxu0 0.0
          %5829 = vmatprep.subr.mxu0 0.0
          %5830 = vmatpush1.msra.mxu0 0.0
          %5831 = vmatprep.subr.mxu0 0.0
          %5832 = vmatpush1.msra.mxu0 0.0
          %5833 = vmatprep.subr.mxu0 0.0
          %5834 = vmatpush1.msra.mxu0 0.0
          %5835 = vmatprep.subr.mxu0 0.0
          %5836 = vmatpush1.msra.mxu0 0.0
          %5837 = vmatprep.subr.mxu0 0.0
          %5838 = vmatpush1.msra.mxu0 0.0
          %5839 = vmatprep.subr.mxu0 0.0
          %5840 = vmatpush1.msra.mxu0 0.0
          %5841 = vmatprep.subr.mxu0 0.0
          %5842 = vmatpush1.msra.mxu0 0.0
          %5843 = vmatprep.subr.mxu0 0.0
          %5844 = vmatpush1.msra.mxu0 0.0
          %5845 = vmatprep.subr.mxu0 0.0
          %5846 = vmatpush1.msra.mxu0 0.0
          %5847 = vmatprep.subr.mxu0 0.0
          %5848 = vmatpush1.msra.mxu0 0.0
          %5849 = vmatprep.subr.mxu0 0.0
          %5850 = vmatpush1.msra.mxu0 0.0
          %5851 = vmatprep.subr.mxu0 0.0
          %5852 = vmatpush1.msra.mxu0 0.0
          %5853 = vmatprep.subr.mxu0 0.0
          %5854 = vmatpush1.msra.mxu0 0.0
          %5855 = vmatprep.subr.mxu0 0.0
          %5856 = vmatpush1.msra.mxu0 0.0
          %5857 = vmatprep.subr.mxu0 0.0
          %5858 = vmatpush1.msra.mxu0 0.0
          %5859 = vmatprep.subr.mxu0 0.0
          %5860 = vmatpush1.msra.mxu0 0.0
          %5861 = vmatprep.subr.mxu0 0.0
          %5862 = vmatpush1.msra.mxu0 0.0
          %5863 = vmatprep.subr.mxu0 0.0
          %5864 = vmatpush1.msra.mxu0 0.0
          %5865 = vmatprep.mubr.f32.mxu0 0.0
          %5866 = vmatmul.mubr.f32.gmra.mrb[0].mxu0 %v5799
          %v5867 = vpop.f32.mrb[0].mxu0
          %v5868 = vadd.f32 0.0, %v5867
          %v5869 = vpop.f32.mrb[0].mxu0
          %5870 = vdwg.mxu0
          %5871 = vmatprep.subr.mxu0 0.0
          %5872 = vmatpush1.msra.mxu0 1.0
          %5873 = vmatprep.subr.mxu0 0.0
          %5874 = vmatpush1.msra.mxu0 1.0
          %5875 = vmatprep.subr.mxu0 0.0
          %5876 = vmatpush1.msra.mxu0 1.0
          %5877 = vmatprep.subr.mxu0 0.0
          %5878 = vmatpush1.msra.mxu0 1.0
          %5879 = vmatprep.subr.mxu0 0.0
          %5880 = vmatpush1.msra.mxu0 1.0
          %5881 = vmatprep.subr.mxu0 0.0
          %5882 = vmatpush1.msra.mxu0 1.0
          %5883 = vmatprep.subr.mxu0 0.0
          %5884 = vmatpush1.msra.mxu0 1.0
          %5885 = vmatprep.subr.mxu0 0.0
          %5886 = vmatpush1.msra.mxu0 1.0
          %5887 = vmatprep.subr.mxu0 0.0
          %5888 = vmatpush1.msra.mxu0 0.0
          %5889 = vmatprep.subr.mxu0 0.0
          %5890 = vmatpush1.msra.mxu0 0.0
          %5891 = vmatprep.subr.mxu0 0.0
          %5892 = vmatpush1.msra.mxu0 0.0
          %5893 = vmatprep.subr.mxu0 0.0
          %5894 = vmatpush1.msra.mxu0 0.0
          %5895 = vmatprep.subr.mxu0 0.0
          %5896 = vmatpush1.msra.mxu0 0.0
          %5897 = vmatprep.subr.mxu0 0.0
          %5898 = vmatpush1.msra.mxu0 0.0
          %5899 = vmatprep.subr.mxu0 0.0
          %5900 = vmatpush1.msra.mxu0 0.0
          %5901 = vmatprep.subr.mxu0 0.0
          %5902 = vmatpush1.msra.mxu0 0.0
          %5903 = vmatprep.subr.mxu0 0.0
          %5904 = vmatpush1.msra.mxu0 0.0
          %5905 = vmatprep.subr.mxu0 0.0
          %5906 = vmatpush1.msra.mxu0 0.0
          %5907 = vmatprep.subr.mxu0 0.0
          %5908 = vmatpush1.msra.mxu0 0.0
          %5909 = vmatprep.subr.mxu0 0.0
          %5910 = vmatpush1.msra.mxu0 0.0
          %5911 = vmatprep.subr.mxu0 0.0
          %5912 = vmatpush1.msra.mxu0 0.0
          %5913 = vmatprep.subr.mxu0 0.0
          %5914 = vmatpush1.msra.mxu0 0.0
          %5915 = vmatprep.subr.mxu0 0.0
          %5916 = vmatpush1.msra.mxu0 0.0
          %5917 = vmatprep.subr.mxu0 0.0
          %5918 = vmatpush1.msra.mxu0 0.0
          %5919 = vmatprep.subr.mxu0 0.0
          %5920 = vmatpush1.msra.mxu0 0.0
          %5921 = vmatprep.subr.mxu0 0.0
          %5922 = vmatpush1.msra.mxu0 0.0
          %5923 = vmatprep.subr.mxu0 0.0
          %5924 = vmatpush1.msra.mxu0 0.0
          %5925 = vmatprep.subr.mxu0 0.0
          %5926 = vmatpush1.msra.mxu0 0.0
          %5927 = vmatprep.subr.mxu0 0.0
          %5928 = vmatpush1.msra.mxu0 0.0
          %5929 = vmatprep.subr.mxu0 0.0
          %5930 = vmatpush1.msra.mxu0 0.0
          %5931 = vmatprep.subr.mxu0 0.0
          %5932 = vmatpush1.msra.mxu0 0.0
          %5933 = vmatprep.subr.mxu0 0.0
          %5934 = vmatpush1.msra.mxu0 0.0
          %5935 = vmatprep.mubr.f32.mxu0 0.0
          %5936 = vmatmul.mubr.f32.gmra.mrb[0].mxu0 %v5799
          %v5937 = vpop.f32.mrb[0].mxu0
          %v5938 = vadd.f32 0.0, %v5937
          %v5939 = vpop.f32.mrb[0].mxu0
          %5940 = vdwg.mxu0
          %vm5941 = vcmp.gt.f32.partialorder %v5938, 0.5
          %v5942 = vmax.f32 %v5938, 1.0
          %5944 = vset.pattern.permute.xlu0 0
          %5945 = vperm.xlu0 %5944, %v5942
          %v5946 = vpop.permute.xlu0 %5945
          %v5948 = vrcp.pop %v5946
          %v5949 = vmul.f32 %v5868, %v5948
          %v5950 = vsel %vm5941, 1, 0
          %5951 = vset.pattern.permute.xlu0 0
          %5952 = vperm.xlu0 %5951, %v5950
          %v5953 = vpop.permute.xlu0 %5952
          %vm5954 = vcmp.eq.s32.totalorder %v5953, 1
          %v5955 = vsel %vm5954, %v5949, %v5379
          %v5957 = vsel %vm725, %v5955, 0
          %5959 = vmatprep.subr.mxu0 0.0
          %5960 = vmatpush1.xpose.msra.mxu0 %v5957
          %5961 = vmatprep.subr.mxu0 0.0
          %5962 = vmatpush1.xpose.msra.mxu0 0.0
          %5963 = vmatprep.subr.mxu0 0.0
          %5964 = vmatpush1.xpose.msra.mxu0 0.0
          %5965 = vmatprep.subr.mxu0 0.0
          %5966 = vmatpush1.xpose.msra.mxu0 0.0
          %5967 = vmatprep.subr.mxu0 0.0
          %5968 = vmatpush1.xpose.msra.mxu0 0.0
          %5969 = vmatprep.subr.mxu0 0.0
          %5970 = vmatpush1.xpose.msra.mxu0 0.0
          %5971 = vmatprep.subr.mxu0 0.0
          %5972 = vmatpush1.xpose.msra.mxu0 0.0
          %5973 = vmatprep.subr.mxu0 0.0
          %5974 = vmatpush1.xpose.msra.mxu0 0.0
          %5975 = vmatprep.subr.mxu0 0.0
          %5976 = vmatpush1.xpose.msra.mxu0 0.0
          %5977 = vmatprep.subr.mxu0 0.0
          %5978 = vmatpush1.xpose.msra.mxu0 0.0
          %5979 = vmatprep.subr.mxu0 0.0
          %5980 = vmatpush1.xpose.msra.mxu0 0.0
          %5981 = vmatprep.subr.mxu0 0.0
          %5982 = vmatpush1.xpose.msra.mxu0 0.0
          %5983 = vmatprep.subr.mxu0 0.0
          %5984 = vmatpush1.xpose.msra.mxu0 0.0
          %5985 = vmatprep.subr.mxu0 0.0
          %5986 = vmatpush1.xpose.msra.mxu0 0.0
          %5987 = vmatprep.subr.mxu0 0.0
          %5988 = vmatpush1.xpose.msra.mxu0 0.0
          %5989 = vmatprep.subr.mxu0 0.0
          %5990 = vmatpush1.xpose.msra.mxu0 0.0
          %5991 = vmatprep.subr.mxu0 0.0
          %5992 = vmatpush1.xpose.msra.mxu0 0.0
          %5993 = vmatprep.subr.mxu0 0.0
          %5994 = vmatpush1.xpose.msra.mxu0 0.0
          %5995 = vmatprep.subr.mxu0 0.0
          %5996 = vmatpush1.xpose.msra.mxu0 0.0
          %5997 = vmatprep.subr.mxu0 0.0
          %5998 = vmatpush1.xpose.msra.mxu0 0.0
          %5999 = vmatprep.subr.mxu0 0.0
          %6000 = vmatpush1.xpose.msra.mxu0 0.0
          %6001 = vmatprep.subr.mxu0 0.0
          %6002 = vmatpush1.xpose.msra.mxu0 0.0
          %6003 = vmatprep.subr.mxu0 0.0
          %6004 = vmatpush1.xpose.msra.mxu0 0.0
          %6005 = vmatprep.subr.mxu0 0.0
          %6006 = vmatpush1.xpose.msra.mxu0 0.0
          %6007 = vmatprep.subr.mxu0 0.0
          %6008 = vmatpush1.xpose.msra.mxu0 0.0
          %6009 = vmatprep.subr.mxu0 0.0
          %6010 = vmatpush1.xpose.msra.mxu0 0.0
          %6011 = vmatprep.subr.mxu0 0.0
          %6012 = vmatpush1.xpose.msra.mxu0 0.0
          %6013 = vmatprep.subr.mxu0 0.0
          %6014 = vmatpush1.xpose.msra.mxu0 0.0
          %6015 = vmatprep.subr.mxu0 0.0
          %6016 = vmatpush1.xpose.msra.mxu0 0.0
          %6017 = vmatprep.subr.mxu0 0.0
          %6018 = vmatpush1.xpose.msra.mxu0 0.0
          %6019 = vmatprep.subr.mxu0 0.0
          %6020 = vmatpush1.xpose.msra.mxu0 0.0
          %6021 = vmatprep.subr.mxu0 0.0
          %6022 = vmatpush1.xpose.msra.mxu0 0.0
          %6023 = vmatprep.mubr.f32.mxu0 0.0
          %6024 = vmatmul.mubr.f32.gmra.mrb[0].mxu0 %v748
          %v6025 = vpop.f32.mrb[0].mxu0
          %v6026 = vadd.f32 0.0, %v6025
          %v6027 = vpop.f32.mrb[0].mxu0
          %6028 = vmatprep.mubr.f32.mxu0 0.0
          %6029 = vmatmul.mubr.f32.gmra.mrb[0].mxu0 %v751
          %v6030 = vpop.f32.mrb[0].mxu0
          %v6031 = vadd.f32 0.0, %v6030
          %v6032 = vpop.f32.mrb[0].mxu0
          %6033 = vmatprep.mubr.f32.mxu0 0.0
          %6034 = vmatmul.mubr.f32.gmra.mrb[0].mxu0 %v754
          %v6035 = vpop.f32.mrb[0].mxu0
          %v6036 = vadd.f32 0.0, %v6035
          %v6037 = vpop.f32.mrb[0].mxu0
          %6038 = vmatprep.mubr.f32.mxu0 0.0
          %6039 = vmatmul.mubr.f32.gmra.mrb[0].mxu0 %v757
          %v6040 = vpop.f32.mrb[0].mxu0
          %v6041 = vadd.f32 0.0, %v6040
          %v6042 = vpop.f32.mrb[0].mxu0
          %6043 = vmatprep.mubr.f32.mxu0 0.0
          %6044 = vmatmul.mubr.f32.gmra.mrb[0].mxu0 %v760
          %v6045 = vpop.f32.mrb[0].mxu0
          %v6046 = vadd.f32 0.0, %v6045
          %v6047 = vpop.f32.mrb[0].mxu0
          %6048 = vmatprep.mubr.f32.mxu0 0.0
          %6049 = vmatmul.mubr.f32.gmra.mrb[0].mxu0 %v763
          %v6050 = vpop.f32.mrb[0].mxu0
          %v6051 = vadd.f32 0.0, %v6050
          %v6052 = vpop.f32.mrb[0].mxu0
          %6053 = vmatprep.mubr.f32.mxu0 0.0
          %6054 = vmatmul.mubr.f32.gmra.mrb[0].mxu0 %v766
          %v6055 = vpop.f32.mrb[0].mxu0
          %v6056 = vadd.f32 0.0, %v6055
          %v6057 = vpop.f32.mrb[0].mxu0
          %6058 = vmatprep.mubr.f32.mxu0 0.0
          %6059 = vmatmul.mubr.f32.gmra.mrb[0].mxu0 %v769
          %v6060 = vpop.f32.mrb[0].mxu0
          %v6061 = vadd.f32 0.0, %v6060
          %v6062 = vpop.f32.mrb[0].mxu0
          %6063 = vdwg.mxu0
          %v6064 = vmul.f32 %v5955, %v5955
          %v6066 = vsel %vm725, %v6064, 0
          %6068 = vmatprep.subr.mxu0 0.0
          %6069 = vmatpush1.xpose.msra.mxu0 %v6066
          %6070 = vmatprep.subr.mxu0 0.0
          %6071 = vmatpush1.xpose.msra.mxu0 0.0
          %6072 = vmatprep.subr.mxu0 0.0
          %6073 = vmatpush1.xpose.msra.mxu0 0.0
          %6074 = vmatprep.subr.mxu0 0.0
          %6075 = vmatpush1.xpose.msra.mxu0 0.0
          %6076 = vmatprep.subr.mxu0 0.0
          %6077 = vmatpush1.xpose.msra.mxu0 0.0
          %6078 = vmatprep.subr.mxu0 0.0
          %6079 = vmatpush1.xpose.msra.mxu0 0.0
          %6080 = vmatprep.subr.mxu0 0.0
          %6081 = vmatpush1.xpose.msra.mxu0 0.0
          %6082 = vmatprep.subr.mxu0 0.0
          %6083 = vmatpush1.xpose.msra.mxu0 0.0
          %6084 = vmatprep.subr.mxu0 0.0
          %6085 = vmatpush1.xpose.msra.mxu0 0.0
          %6086 = vmatprep.subr.mxu0 0.0
          %6087 = vmatpush1.xpose.msra.mxu0 0.0
          %6088 = vmatprep.subr.mxu0 0.0
          %6089 = vmatpush1.xpose.msra.mxu0 0.0
          %6090 = vmatprep.subr.mxu0 0.0
          %6091 = vmatpush1.xpose.msra.mxu0 0.0
          %6092 = vmatprep.subr.mxu0 0.0
          %6093 = vmatpush1.xpose.msra.mxu0 0.0
          %6094 = vmatprep.subr.mxu0 0.0
          %6095 = vmatpush1.xpose.msra.mxu0 0.0
          %6096 = vmatprep.subr.mxu0 0.0
          %6097 = vmatpush1.xpose.msra.mxu0 0.0
          %6098 = vmatprep.subr.mxu0 0.0
          %6099 = vmatpush1.xpose.msra.mxu0 0.0
          %6100 = vmatprep.subr.mxu0 0.0
          %6101 = vmatpush1.xpose.msra.mxu0 0.0
          %6102 = vmatprep.subr.mxu0 0.0
          %6103 = vmatpush1.xpose.msra.mxu0 0.0
          %6104 = vmatprep.subr.mxu0 0.0
          %6105 = vmatpush1.xpose.msra.mxu0 0.0
          %6106 = vmatprep.subr.mxu0 0.0
          %6107 = vmatpush1.xpose.msra.mxu0 0.0
          %6108 = vmatprep.subr.mxu0 0.0
          %6109 = vmatpush1.xpose.msra.mxu0 0.0
          %6110 = vmatprep.subr.mxu0 0.0
          %6111 = vmatpush1.xpose.msra.mxu0 0.0
          %6112 = vmatprep.subr.mxu0 0.0
          %6113 = vmatpush1.xpose.msra.mxu0 0.0
          %6114 = vmatprep.subr.mxu0 0.0
          %6115 = vmatpush1.xpose.msra.mxu0 0.0
          %6116 = vmatprep.subr.mxu0 0.0
          %6117 = vmatpush1.xpose.msra.mxu0 0.0
          %6118 = vmatprep.subr.mxu0 0.0
          %6119 = vmatpush1.xpose.msra.mxu0 0.0
          %6120 = vmatprep.subr.mxu0 0.0
          %6121 = vmatpush1.xpose.msra.mxu0 0.0
          %6122 = vmatprep.subr.mxu0 0.0
          %6123 = vmatpush1.xpose.msra.mxu0 0.0
          %6124 = vmatprep.subr.mxu0 0.0
          %6125 = vmatpush1.xpose.msra.mxu0 0.0
          %6126 = vmatprep.subr.mxu0 0.0
          %6127 = vmatpush1.xpose.msra.mxu0 0.0
          %6128 = vmatprep.subr.mxu0 0.0
          %6129 = vmatpush1.xpose.msra.mxu0 0.0
          %6130 = vmatprep.subr.mxu0 0.0
          %6131 = vmatpush1.xpose.msra.mxu0 0.0
          %6132 = vmatprep.mubr.f32.mxu0 0.0
          %6133 = vmatmul.mubr.f32.gmra.mrb[0].mxu0 %v878
          %v6134 = vpop.f32.mrb[0].mxu0
          %v6135 = vadd.f32 0.0, %v6134
          %v6136 = vpop.f32.mrb[0].mxu0
          %6137 = vdwg.mxu0
          %v6138 = vmul.f32 %v6026, 2.0
          %v6139 = vmul.f32 %v6031, 2.0
          %v6140 = vmul.f32 %v6036, 2.0
          %v6141 = vmul.f32 %v6041, 2.0
          %v6142 = vmul.f32 %v6046, 2.0
          %v6143 = vmul.f32 %v6051, 2.0
          %v6144 = vmul.f32 %v6056, 2.0
          %v6145 = vmul.f32 %v6061, 2.0
          %v6146 = vlaneseq
          %v6147 = vshrl.u32 %v6146, 7
          %v6148 = vsub.s32 0, %v6147
          %v6149 = vrot.slane %v6135, %v6148
          %v6150 = vsub.f32 %v6149, %v6138
          %v6151 = vsub.f32 %v6149, %v6139
          %v6152 = vsub.f32 %v6149, %v6140
          %v6153 = vsub.f32 %v6149, %v6141
          %v6154 = vsub.f32 %v6149, %v6142
          %v6155 = vsub.f32 %v6149, %v6143
          %v6156 = vsub.f32 %v6149, %v6144
          %v6157 = vsub.f32 %v6149, %v6145
          %v6158 = vsel %vm973, %v6150, inf
          %6159 = vmin.xlane.f32.xlu0 %v6158
          %v6160 = vpop.xlane.xlu0 %6159
          %v6161 = vsel %vm973, %v6151, inf
          %6162 = vmin.xlane.f32.xlu0 %v6161
          %v6163 = vpop.xlane.xlu0 %6162
          %v6164 = vsel %vm973, %v6152, inf
          %6165 = vmin.xlane.f32.xlu0 %v6164
          %v6166 = vpop.xlane.xlu0 %6165
          %v6167 = vsel %vm973, %v6153, inf
          %6168 = vmin.xlane.f32.xlu0 %v6167
          %v6169 = vpop.xlane.xlu0 %6168
          %v6170 = vsel %vm973, %v6154, inf
          %6171 = vmin.xlane.f32.xlu0 %v6170
          %v6172 = vpop.xlane.xlu0 %6171
          %v6173 = vsel %vm973, %v6155, inf
          %6174 = vmin.xlane.f32.xlu0 %v6173
          %v6175 = vpop.xlane.xlu0 %6174
          %v6176 = vsel %vm973, %v6156, inf
          %6177 = vmin.xlane.f32.xlu0 %v6176
          %v6178 = vpop.xlane.xlu0 %6177
          %v6179 = vsel %vm973, %v6157, inf
          %6180 = vmin.xlane.f32.xlu0 %v6179
          %v6181 = vpop.xlane.xlu0 %6180
          %vm6182 = vcmp.le.f32.partialorder %v6150, %v6160
          %vm6183 = vcmp.le.f32.partialorder %v6151, %v6163
          %vm6184 = vcmp.le.f32.partialorder %v6152, %v6166
          %vm6185 = vcmp.le.f32.partialorder %v6153, %v6169
          %vm6186 = vcmp.le.f32.partialorder %v6154, %v6172
          %vm6187 = vcmp.le.f32.partialorder %v6155, %v6175
          %vm6188 = vcmp.le.f32.partialorder %v6156, %v6178
          %vm6189 = vcmp.le.f32.partialorder %v6157, %v6181
          %v6190 = vsel %vm6182, %v746, 8
          %v6191 = vsel %vm6183, %v746, 8
          %v6192 = vsel %vm6184, %v746, 8
          %v6193 = vsel %vm6185, %v746, 8
          %v6194 = vsel %vm6186, %v746, 8
          %v6195 = vsel %vm6187, %v746, 8
          %v6196 = vsel %vm6188, %v746, 8
          %v6197 = vsel %vm6189, %v746, 8
          %v6198 = vsel %vm973, %v6190, 2147483647
          %v6199 = vand.u32 %v6198, 65535
          %v6200 = vshra.s32 %v6198, 16
          %v6201 = vcvt.s32.f32 %v6199
          %v6202 = vcvt.s32.f32 %v6200
          %6203 = vmin.xlane.f32.xlu0 %v6202
          %v6204 = vpop.xlane.xlu0 %6203
          %vm6205 = vcmp.eq.f32.partialorder %v6202, %v6204
          %v6206 = vsel %vm6205, %v6201, inf
          %6207 = vmin.xlane.f32.xlu0 %v6206
          %v6208 = vpop.xlane.xlu0 %6207
          %v6209 = vcvt.f32.s32 %v6208
          %v6210 = vcvt.f32.s32 %v6204
          %v6211 = vshll.u32 %v6210, 16
          %v6212 = vadd.s32 %v6211, %v6209
          %v6213 = vsel %vm973, %v6191, 2147483647
          %v6214 = vand.u32 %v6213, 65535
          %v6215 = vshra.s32 %v6213, 16
          %v6216 = vcvt.s32.f32 %v6214
          %v6217 = vcvt.s32.f32 %v6215
          %6218 = vmin.xlane.f32.xlu0 %v6217
          %v6219 = vpop.xlane.xlu0 %6218
          %vm6220 = vcmp.eq.f32.partialorder %v6217, %v6219
          %v6221 = vsel %vm6220, %v6216, inf
          %6222 = vmin.xlane.f32.xlu0 %v6221
          %v6223 = vpop.xlane.xlu0 %6222
          %v6224 = vcvt.f32.s32 %v6223
          %v6225 = vcvt.f32.s32 %v6219
          %v6226 = vshll.u32 %v6225, 16
          %v6227 = vadd.s32 %v6226, %v6224
          %v6228 = vsel %vm973, %v6192, 2147483647
          %v6229 = vand.u32 %v6228, 65535
          %v6230 = vshra.s32 %v6228, 16
          %v6231 = vcvt.s32.f32 %v6229
          %v6232 = vcvt.s32.f32 %v6230
          %6233 = vmin.xlane.f32.xlu0 %v6232
          %v6234 = vpop.xlane.xlu0 %6233
          %vm6235 = vcmp.eq.f32.partialorder %v6232, %v6234
          %v6236 = vsel %vm6235, %v6231, inf
          %6237 = vmin.xlane.f32.xlu0 %v6236
          %v6238 = vpop.xlane.xlu0 %6237
          %v6239 = vcvt.f32.s32 %v6238
          %v6240 = vcvt.f32.s32 %v6234
          %v6241 = vshll.u32 %v6240, 16
          %v6242 = vadd.s32 %v6241, %v6239
          %v6243 = vsel %vm973, %v6193, 2147483647
          %v6244 = vand.u32 %v6243, 65535
          %v6245 = vshra.s32 %v6243, 16
          %v6246 = vcvt.s32.f32 %v6244
          %v6247 = vcvt.s32.f32 %v6245
          %6248 = vmin.xlane.f32.xlu0 %v6247
          %v6249 = vpop.xlane.xlu0 %6248
          %vm6250 = vcmp.eq.f32.partialorder %v6247, %v6249
          %v6251 = vsel %vm6250, %v6246, inf
          %6252 = vmin.xlane.f32.xlu0 %v6251
          %v6253 = vpop.xlane.xlu0 %6252
          %v6254 = vcvt.f32.s32 %v6253
          %v6255 = vcvt.f32.s32 %v6249
          %v6256 = vshll.u32 %v6255, 16
          %v6257 = vadd.s32 %v6256, %v6254
          %v6258 = vsel %vm973, %v6194, 2147483647
          %v6259 = vand.u32 %v6258, 65535
          %v6260 = vshra.s32 %v6258, 16
          %v6261 = vcvt.s32.f32 %v6259
          %v6262 = vcvt.s32.f32 %v6260
          %6263 = vmin.xlane.f32.xlu0 %v6262
          %v6264 = vpop.xlane.xlu0 %6263
          %vm6265 = vcmp.eq.f32.partialorder %v6262, %v6264
          %v6266 = vsel %vm6265, %v6261, inf
          %6267 = vmin.xlane.f32.xlu0 %v6266
          %v6268 = vpop.xlane.xlu0 %6267
          %v6269 = vcvt.f32.s32 %v6268
          %v6270 = vcvt.f32.s32 %v6264
          %v6271 = vshll.u32 %v6270, 16
          %v6272 = vadd.s32 %v6271, %v6269
          %v6273 = vsel %vm973, %v6195, 2147483647
          %v6274 = vand.u32 %v6273, 65535
          %v6275 = vshra.s32 %v6273, 16
          %v6276 = vcvt.s32.f32 %v6274
          %v6277 = vcvt.s32.f32 %v6275
          %6278 = vmin.xlane.f32.xlu0 %v6277
          %v6279 = vpop.xlane.xlu0 %6278
          %vm6280 = vcmp.eq.f32.partialorder %v6277, %v6279
          %v6281 = vsel %vm6280, %v6276, inf
          %6282 = vmin.xlane.f32.xlu0 %v6281
          %v6283 = vpop.xlane.xlu0 %6282
          %v6284 = vcvt.f32.s32 %v6283
          %v6285 = vcvt.f32.s32 %v6279
          %v6286 = vshll.u32 %v6285, 16
          %v6287 = vadd.s32 %v6286, %v6284
          %v6288 = vsel %vm973, %v6196, 2147483647
          %v6289 = vand.u32 %v6288, 65535
          %v6290 = vshra.s32 %v6288, 16
          %v6291 = vcvt.s32.f32 %v6289
          %v6292 = vcvt.s32.f32 %v6290
          %6293 = vmin.xlane.f32.xlu0 %v6292
          %v6294 = vpop.xlane.xlu0 %6293
          %vm6295 = vcmp.eq.f32.partialorder %v6292, %v6294
          %v6296 = vsel %vm6295, %v6291, inf
          %6297 = vmin.xlane.f32.xlu0 %v6296
          %v6298 = vpop.xlane.xlu0 %6297
          %v6299 = vcvt.f32.s32 %v6298
          %v6300 = vcvt.f32.s32 %v6294
          %v6301 = vshll.u32 %v6300, 16
          %v6302 = vadd.s32 %v6301, %v6299
          %v6303 = vsel %vm973, %v6197, 2147483647
          %v6304 = vand.u32 %v6303, 65535
          %v6305 = vshra.s32 %v6303, 16
          %v6306 = vcvt.s32.f32 %v6304
          %v6307 = vcvt.s32.f32 %v6305
          %6308 = vmin.xlane.f32.xlu0 %v6307
          %v6309 = vpop.xlane.xlu0 %6308
          %vm6310 = vcmp.eq.f32.partialorder %v6307, %v6309
          %v6311 = vsel %vm6310, %v6306, inf
          %6312 = vmin.xlane.f32.xlu0 %v6311
          %v6313 = vpop.xlane.xlu0 %6312
          %v6314 = vcvt.f32.s32 %v6313
          %v6315 = vcvt.f32.s32 %v6309
          %v6316 = vshll.u32 %v6315, 16
          %v6317 = vadd.s32 %v6316, %v6314
          %vm6318 = vcmp.eq.s32.totalorder %v746, %v6212
          %vm6319 = vcmp.eq.s32.totalorder %v746, %v6227
          %vm6320 = vcmp.eq.s32.totalorder %v746, %v6242
          %vm6321 = vcmp.eq.s32.totalorder %v746, %v6257
          %vm6322 = vcmp.eq.s32.totalorder %v746, %v6272
          %vm6323 = vcmp.eq.s32.totalorder %v746, %v6287
          %vm6324 = vcmp.eq.s32.totalorder %v746, %v6302
          %vm6325 = vcmp.eq.s32.totalorder %v746, %v6317
          %v6326 = vsel %vm6318, 1, 0
          %v6327 = vsel %vm6319, 1, 0
          %v6328 = vsel %vm6320, 1, 0
          %v6329 = vsel %vm6321, 1, 0
          %v6330 = vsel %vm6322, 1, 0
          %v6331 = vsel %vm6323, 1, 0
          %v6332 = vsel %vm6324, 1, 0
          %v6333 = vsel %vm6325, 1, 0
          %v6334 = vcvt.s32.f32 %v6326
          %v6335 = vcvt.s32.f32 %v6327
          %v6336 = vcvt.s32.f32 %v6328
          %v6337 = vcvt.s32.f32 %v6329
          %v6338 = vcvt.s32.f32 %v6330
          %v6339 = vcvt.s32.f32 %v6331
          %v6340 = vcvt.s32.f32 %v6332
          %v6341 = vcvt.s32.f32 %v6333
          %6342 = vxpose.xlu0.b32.start [1/16] %v6334, 128
          %6343 = vxpose.xlu0.b32.cont [2/16] %v6335, 128
          %6344 = vxpose.xlu0.b32.cont [3/16] %v6336, 128
          %6345 = vxpose.xlu0.b32.cont [4/16] %v6337, 128
          %6346 = vxpose.xlu0.b32.cont [5/16] %v6338, 128
          %6347 = vxpose.xlu0.b32.cont [6/16] %v6339, 128
          %6348 = vxpose.xlu0.b32.cont [7/16] %v6340, 128
          %6349 = vxpose.xlu0.b32.cont [8/16] %v6341, 128
          %6350 = vxpose.xlu0.b32.cont [9/16] 0.0, 128
          %6351 = vxpose.xlu0.b32.cont [10/16] 0.0, 128
          %6352 = vxpose.xlu0.b32.cont [11/16] 0.0, 128
          %6353 = vxpose.xlu0.b32.cont [12/16] 0.0, 128
          %6354 = vxpose.xlu0.b32.cont [13/16] 0.0, 128
          %6355 = vxpose.xlu0.b32.cont [14/16] 0.0, 128
          %6356 = vxpose.xlu0.b32.cont [15/16] 0.0, 128
          %6357 = vxpose.xlu0.b32.end [16/16] 0.0, 128
          %v6358 = vpop.trf.xlu0
          %v6359 = vpop.trf.xlu0
          %v6360 = vpop.trf.xlu0
          %v6361 = vpop.trf.xlu0
          %v6362 = vpop.trf.xlu0
          %v6363 = vpop.trf.xlu0
          %v6364 = vpop.trf.xlu0
          %v6365 = vpop.trf.xlu0
          %v6366 = vpop.trf.xlu0
          %v6367 = vpop.trf.xlu0
          %v6368 = vpop.trf.xlu0
          %v6369 = vpop.trf.xlu0
          %v6370 = vpop.trf.xlu0
          %v6371 = vpop.trf.xlu0
          %v6372 = vpop.trf.xlu0
          %v6373 = vpop.trf.xlu0
          %v6375 = vsel %vm725, %v6358, 0
          %6377 = vmatprep.subr.mxu0 0.0
          %6378 = vmatpush1.msra.mxu0 %v737
          %6379 = vmatprep.subr.mxu0 0.0
          %6380 = vmatpush1.msra.mxu0 %v738
          %6381 = vmatprep.subr.mxu0 0.0
          %6382 = vmatpush1.msra.mxu0 %v739
          %6383 = vmatprep.subr.mxu0 0.0
          %6384 = vmatpush1.msra.mxu0 %v740
          %6385 = vmatprep.subr.mxu0 0.0
          %6386 = vmatpush1.msra.mxu0 %v741
          %6387 = vmatprep.subr.mxu0 0.0
          %6388 = vmatpush1.msra.mxu0 %v742
          %6389 = vmatprep.subr.mxu0 0.0
          %6390 = vmatpush1.msra.mxu0 %v743
          %6391 = vmatprep.subr.mxu0 0.0
          %6392 = vmatpush1.msra.mxu0 %v744
          %6393 = vmatprep.subr.mxu0 0.0
          %6394 = vmatpush1.msra.mxu0 0.0
          %6395 = vmatprep.subr.mxu0 0.0
          %6396 = vmatpush1.msra.mxu0 0.0
          %6397 = vmatprep.subr.mxu0 0.0
          %6398 = vmatpush1.msra.mxu0 0.0
          %6399 = vmatprep.subr.mxu0 0.0
          %6400 = vmatpush1.msra.mxu0 0.0
          %6401 = vmatprep.subr.mxu0 0.0
          %6402 = vmatpush1.msra.mxu0 0.0
          %6403 = vmatprep.subr.mxu0 0.0
          %6404 = vmatpush1.msra.mxu0 0.0
          %6405 = vmatprep.subr.mxu0 0.0
          %6406 = vmatpush1.msra.mxu0 0.0
          %6407 = vmatprep.subr.mxu0 0.0
          %6408 = vmatpush1.msra.mxu0 0.0
          %6409 = vmatprep.subr.mxu0 0.0
          %6410 = vmatpush1.msra.mxu0 0.0
          %6411 = vmatprep.subr.mxu0 0.0
          %6412 = vmatpush1.msra.mxu0 0.0
          %6413 = vmatprep.subr.mxu0 0.0
          %6414 = vmatpush1.msra.mxu0 0.0
          %6415 = vmatprep.subr.mxu0 0.0
          %6416 = vmatpush1.msra.mxu0 0.0
          %6417 = vmatprep.subr.mxu0 0.0
          %6418 = vmatpush1.msra.mxu0 0.0
          %6419 = vmatprep.subr.mxu0 0.0
          %6420 = vmatpush1.msra.mxu0 0.0
          %6421 = vmatprep.subr.mxu0 0.0
          %6422 = vmatpush1.msra.mxu0 0.0
          %6423 = vmatprep.subr.mxu0 0.0
          %6424 = vmatpush1.msra.mxu0 0.0
          %6425 = vmatprep.subr.mxu0 0.0
          %6426 = vmatpush1.msra.mxu0 0.0
          %6427 = vmatprep.subr.mxu0 0.0
          %6428 = vmatpush1.msra.mxu0 0.0
          %6429 = vmatprep.subr.mxu0 0.0
          %6430 = vmatpush1.msra.mxu0 0.0
          %6431 = vmatprep.subr.mxu0 0.0
          %6432 = vmatpush1.msra.mxu0 0.0
          %6433 = vmatprep.subr.mxu0 0.0
          %6434 = vmatpush1.msra.mxu0 0.0
          %6435 = vmatprep.subr.mxu0 0.0
          %6436 = vmatpush1.msra.mxu0 0.0
          %6437 = vmatprep.subr.mxu0 0.0
          %6438 = vmatpush1.msra.mxu0 0.0
          %6439 = vmatprep.subr.mxu0 0.0
          %6440 = vmatpush1.msra.mxu0 0.0
          %6441 = vmatprep.mubr.f32.mxu0 0.0
          %6442 = vmatmul.mubr.f32.gmra.mrb[0].mxu0 %v6375
          %v6443 = vpop.f32.mrb[0].mxu0
          %v6444 = vadd.f32 0.0, %v6443
          %v6445 = vpop.f32.mrb[0].mxu0
          %6446 = vdwg.mxu0
          %6447 = vmatprep.subr.mxu0 0.0
          %6448 = vmatpush1.msra.mxu0 1.0
          %6449 = vmatprep.subr.mxu0 0.0
          %6450 = vmatpush1.msra.mxu0 1.0
          %6451 = vmatprep.subr.mxu0 0.0
          %6452 = vmatpush1.msra.mxu0 1.0
          %6453 = vmatprep.subr.mxu0 0.0
          %6454 = vmatpush1.msra.mxu0 1.0
          %6455 = vmatprep.subr.mxu0 0.0
          %6456 = vmatpush1.msra.mxu0 1.0
          %6457 = vmatprep.subr.mxu0 0.0
          %6458 = vmatpush1.msra.mxu0 1.0
          %6459 = vmatprep.subr.mxu0 0.0
          %6460 = vmatpush1.msra.mxu0 1.0
          %6461 = vmatprep.subr.mxu0 0.0
          %6462 = vmatpush1.msra.mxu0 1.0
          %6463 = vmatprep.subr.mxu0 0.0
          %6464 = vmatpush1.msra.mxu0 0.0
          %6465 = vmatprep.subr.mxu0 0.0
          %6466 = vmatpush1.msra.mxu0 0.0
          %6467 = vmatprep.subr.mxu0 0.0
          %6468 = vmatpush1.msra.mxu0 0.0
          %6469 = vmatprep.subr.mxu0 0.0
          %6470 = vmatpush1.msra.mxu0 0.0
          %6471 = vmatprep.subr.mxu0 0.0
          %6472 = vmatpush1.msra.mxu0 0.0
          %6473 = vmatprep.subr.mxu0 0.0
          %6474 = vmatpush1.msra.mxu0 0.0
          %6475 = vmatprep.subr.mxu0 0.0
          %6476 = vmatpush1.msra.mxu0 0.0
          %6477 = vmatprep.subr.mxu0 0.0
          %6478 = vmatpush1.msra.mxu0 0.0
          %6479 = vmatprep.subr.mxu0 0.0
          %6480 = vmatpush1.msra.mxu0 0.0
          %6481 = vmatprep.subr.mxu0 0.0
          %6482 = vmatpush1.msra.mxu0 0.0
          %6483 = vmatprep.subr.mxu0 0.0
          %6484 = vmatpush1.msra.mxu0 0.0
          %6485 = vmatprep.subr.mxu0 0.0
          %6486 = vmatpush1.msra.mxu0 0.0
          %6487 = vmatprep.subr.mxu0 0.0
          %6488 = vmatpush1.msra.mxu0 0.0
          %6489 = vmatprep.subr.mxu0 0.0
          %6490 = vmatpush1.msra.mxu0 0.0
          %6491 = vmatprep.subr.mxu0 0.0
          %6492 = vmatpush1.msra.mxu0 0.0
          %6493 = vmatprep.subr.mxu0 0.0
          %6494 = vmatpush1.msra.mxu0 0.0
          %6495 = vmatprep.subr.mxu0 0.0
          %6496 = vmatpush1.msra.mxu0 0.0
          %6497 = vmatprep.subr.mxu0 0.0
          %6498 = vmatpush1.msra.mxu0 0.0
          %6499 = vmatprep.subr.mxu0 0.0
          %6500 = vmatpush1.msra.mxu0 0.0
          %6501 = vmatprep.subr.mxu0 0.0
          %6502 = vmatpush1.msra.mxu0 0.0
          %6503 = vmatprep.subr.mxu0 0.0
          %6504 = vmatpush1.msra.mxu0 0.0
          %6505 = vmatprep.subr.mxu0 0.0
          %6506 = vmatpush1.msra.mxu0 0.0
          %6507 = vmatprep.subr.mxu0 0.0
          %6508 = vmatpush1.msra.mxu0 0.0
          %6509 = vmatprep.subr.mxu0 0.0
          %6510 = vmatpush1.msra.mxu0 0.0
          %6511 = vmatprep.mubr.f32.mxu0 0.0
          %6512 = vmatmul.mubr.f32.gmra.mrb[0].mxu0 %v6375
          %v6513 = vpop.f32.mrb[0].mxu0
          %v6514 = vadd.f32 0.0, %v6513
          %v6515 = vpop.f32.mrb[0].mxu0
          %6516 = vdwg.mxu0
          %vm6517 = vcmp.gt.f32.partialorder %v6514, 0.5
          %v6518 = vmax.f32 %v6514, 1.0
          %6520 = vset.pattern.permute.xlu0 0
          %6521 = vperm.xlu0 %6520, %v6518
          %v6522 = vpop.permute.xlu0 %6521
          %v6524 = vrcp.pop %v6522
          %v6525 = vmul.f32 %v6444, %v6524
          %v6526 = vsel %vm6517, 1, 0
          %6527 = vset.pattern.permute.xlu0 0
          %6528 = vperm.xlu0 %6527, %v6526
          %v6529 = vpop.permute.xlu0 %6528
          %vm6530 = vcmp.eq.s32.totalorder %v6529, 1
          %v6531 = vsel %vm6530, %v6525, %v5955
          %v6533 = vsel %vm725, %v6531, 0
          %6535 = vmatprep.subr.mxu0 0.0
          %6536 = vmatpush1.xpose.msra.mxu0 %v6533
          %6537 = vmatprep.subr.mxu0 0.0
          %6538 = vmatpush1.xpose.msra.mxu0 0.0
          %6539 = vmatprep.subr.mxu0 0.0
          %6540 = vmatpush1.xpose.msra.mxu0 0.0
          %6541 = vmatprep.subr.mxu0 0.0
          %6542 = vmatpush1.xpose.msra.mxu0 0.0
          %6543 = vmatprep.subr.mxu0 0.0
          %6544 = vmatpush1.xpose.msra.mxu0 0.0
          %6545 = vmatprep.subr.mxu0 0.0
          %6546 = vmatpush1.xpose.msra.mxu0 0.0
          %6547 = vmatprep.subr.mxu0 0.0
          %6548 = vmatpush1.xpose.msra.mxu0 0.0
          %6549 = vmatprep.subr.mxu0 0.0
          %6550 = vmatpush1.xpose.msra.mxu0 0.0
          %6551 = vmatprep.subr.mxu0 0.0
          %6552 = vmatpush1.xpose.msra.mxu0 0.0
          %6553 = vmatprep.subr.mxu0 0.0
          %6554 = vmatpush1.xpose.msra.mxu0 0.0
          %6555 = vmatprep.subr.mxu0 0.0
          %6556 = vmatpush1.xpose.msra.mxu0 0.0
          %6557 = vmatprep.subr.mxu0 0.0
          %6558 = vmatpush1.xpose.msra.mxu0 0.0
          %6559 = vmatprep.subr.mxu0 0.0
          %6560 = vmatpush1.xpose.msra.mxu0 0.0
          %6561 = vmatprep.subr.mxu0 0.0
          %6562 = vmatpush1.xpose.msra.mxu0 0.0
          %6563 = vmatprep.subr.mxu0 0.0
          %6564 = vmatpush1.xpose.msra.mxu0 0.0
          %6565 = vmatprep.subr.mxu0 0.0
          %6566 = vmatpush1.xpose.msra.mxu0 0.0
          %6567 = vmatprep.subr.mxu0 0.0
          %6568 = vmatpush1.xpose.msra.mxu0 0.0
          %6569 = vmatprep.subr.mxu0 0.0
          %6570 = vmatpush1.xpose.msra.mxu0 0.0
          %6571 = vmatprep.subr.mxu0 0.0
          %6572 = vmatpush1.xpose.msra.mxu0 0.0
          %6573 = vmatprep.subr.mxu0 0.0
          %6574 = vmatpush1.xpose.msra.mxu0 0.0
          %6575 = vmatprep.subr.mxu0 0.0
          %6576 = vmatpush1.xpose.msra.mxu0 0.0
          %6577 = vmatprep.subr.mxu0 0.0
          %6578 = vmatpush1.xpose.msra.mxu0 0.0
          %6579 = vmatprep.subr.mxu0 0.0
          %6580 = vmatpush1.xpose.msra.mxu0 0.0
          %6581 = vmatprep.subr.mxu0 0.0
          %6582 = vmatpush1.xpose.msra.mxu0 0.0
          %6583 = vmatprep.subr.mxu0 0.0
          %6584 = vmatpush1.xpose.msra.mxu0 0.0
          %6585 = vmatprep.subr.mxu0 0.0
          %6586 = vmatpush1.xpose.msra.mxu0 0.0
          %6587 = vmatprep.subr.mxu0 0.0
          %6588 = vmatpush1.xpose.msra.mxu0 0.0
          %6589 = vmatprep.subr.mxu0 0.0
          %6590 = vmatpush1.xpose.msra.mxu0 0.0
          %6591 = vmatprep.subr.mxu0 0.0
          %6592 = vmatpush1.xpose.msra.mxu0 0.0
          %6593 = vmatprep.subr.mxu0 0.0
          %6594 = vmatpush1.xpose.msra.mxu0 0.0
          %6595 = vmatprep.subr.mxu0 0.0
          %6596 = vmatpush1.xpose.msra.mxu0 0.0
          %6597 = vmatprep.subr.mxu0 0.0
          %6598 = vmatpush1.xpose.msra.mxu0 0.0
          %6599 = vmatprep.mubr.f32.mxu0 0.0
          %6600 = vmatmul.mubr.f32.gmra.mrb[0].mxu0 %v748
          %v6601 = vpop.f32.mrb[0].mxu0
          %v6602 = vadd.f32 0.0, %v6601
          %v6603 = vpop.f32.mrb[0].mxu0
          %6604 = vmatprep.mubr.f32.mxu0 0.0
          %6605 = vmatmul.mubr.f32.gmra.mrb[0].mxu0 %v751
          %v6606 = vpop.f32.mrb[0].mxu0
          %v6607 = vadd.f32 0.0, %v6606
          %v6608 = vpop.f32.mrb[0].mxu0
          %6609 = vmatprep.mubr.f32.mxu0 0.0
          %6610 = vmatmul.mubr.f32.gmra.mrb[0].mxu0 %v754
          %v6611 = vpop.f32.mrb[0].mxu0
          %v6612 = vadd.f32 0.0, %v6611
          %v6613 = vpop.f32.mrb[0].mxu0
          %6614 = vmatprep.mubr.f32.mxu0 0.0
          %6615 = vmatmul.mubr.f32.gmra.mrb[0].mxu0 %v757
          %v6616 = vpop.f32.mrb[0].mxu0
          %v6617 = vadd.f32 0.0, %v6616
          %v6618 = vpop.f32.mrb[0].mxu0
          %6619 = vmatprep.mubr.f32.mxu0 0.0
          %6620 = vmatmul.mubr.f32.gmra.mrb[0].mxu0 %v760
          %v6621 = vpop.f32.mrb[0].mxu0
          %v6622 = vadd.f32 0.0, %v6621
          %v6623 = vpop.f32.mrb[0].mxu0
          %6624 = vmatprep.mubr.f32.mxu0 0.0
          %6625 = vmatmul.mubr.f32.gmra.mrb[0].mxu0 %v763
          %v6626 = vpop.f32.mrb[0].mxu0
          %v6627 = vadd.f32 0.0, %v6626
          %v6628 = vpop.f32.mrb[0].mxu0
          %6629 = vmatprep.mubr.f32.mxu0 0.0
          %6630 = vmatmul.mubr.f32.gmra.mrb[0].mxu0 %v766
          %v6631 = vpop.f32.mrb[0].mxu0
          %v6632 = vadd.f32 0.0, %v6631
          %v6633 = vpop.f32.mrb[0].mxu0
          %6634 = vmatprep.mubr.f32.mxu0 0.0
          %6635 = vmatmul.mubr.f32.gmra.mrb[0].mxu0 %v769
          %v6636 = vpop.f32.mrb[0].mxu0
          %v6637 = vadd.f32 0.0, %v6636
          %v6638 = vpop.f32.mrb[0].mxu0
          %6639 = vdwg.mxu0
          %v6640 = vmul.f32 %v6531, %v6531
          %v6642 = vsel %vm725, %v6640, 0
          %6644 = vmatprep.subr.mxu0 0.0
          %6645 = vmatpush1.xpose.msra.mxu0 %v6642
          %6646 = vmatprep.subr.mxu0 0.0
          %6647 = vmatpush1.xpose.msra.mxu0 0.0
          %6648 = vmatprep.subr.mxu0 0.0
          %6649 = vmatpush1.xpose.msra.mxu0 0.0
          %6650 = vmatprep.subr.mxu0 0.0
          %6651 = vmatpush1.xpose.msra.mxu0 0.0
          %6652 = vmatprep.subr.mxu0 0.0
          %6653 = vmatpush1.xpose.msra.mxu0 0.0
          %6654 = vmatprep.subr.mxu0 0.0
          %6655 = vmatpush1.xpose.msra.mxu0 0.0
          %6656 = vmatprep.subr.mxu0 0.0
          %6657 = vmatpush1.xpose.msra.mxu0 0.0
          %6658 = vmatprep.subr.mxu0 0.0
          %6659 = vmatpush1.xpose.msra.mxu0 0.0
          %6660 = vmatprep.subr.mxu0 0.0
          %6661 = vmatpush1.xpose.msra.mxu0 0.0
          %6662 = vmatprep.subr.mxu0 0.0
          %6663 = vmatpush1.xpose.msra.mxu0 0.0
          %6664 = vmatprep.subr.mxu0 0.0
          %6665 = vmatpush1.xpose.msra.mxu0 0.0
          %6666 = vmatprep.subr.mxu0 0.0
          %6667 = vmatpush1.xpose.msra.mxu0 0.0
          %6668 = vmatprep.subr.mxu0 0.0
          %6669 = vmatpush1.xpose.msra.mxu0 0.0
          %6670 = vmatprep.subr.mxu0 0.0
          %6671 = vmatpush1.xpose.msra.mxu0 0.0
          %6672 = vmatprep.subr.mxu0 0.0
          %6673 = vmatpush1.xpose.msra.mxu0 0.0
          %6674 = vmatprep.subr.mxu0 0.0
          %6675 = vmatpush1.xpose.msra.mxu0 0.0
          %6676 = vmatprep.subr.mxu0 0.0
          %6677 = vmatpush1.xpose.msra.mxu0 0.0
          %6678 = vmatprep.subr.mxu0 0.0
          %6679 = vmatpush1.xpose.msra.mxu0 0.0
          %6680 = vmatprep.subr.mxu0 0.0
          %6681 = vmatpush1.xpose.msra.mxu0 0.0
          %6682 = vmatprep.subr.mxu0 0.0
          %6683 = vmatpush1.xpose.msra.mxu0 0.0
          %6684 = vmatprep.subr.mxu0 0.0
          %6685 = vmatpush1.xpose.msra.mxu0 0.0
          %6686 = vmatprep.subr.mxu0 0.0
          %6687 = vmatpush1.xpose.msra.mxu0 0.0
          %6688 = vmatprep.subr.mxu0 0.0
          %6689 = vmatpush1.xpose.msra.mxu0 0.0
          %6690 = vmatprep.subr.mxu0 0.0
          %6691 = vmatpush1.xpose.msra.mxu0 0.0
          %6692 = vmatprep.subr.mxu0 0.0
          %6693 = vmatpush1.xpose.msra.mxu0 0.0
          %6694 = vmatprep.subr.mxu0 0.0
          %6695 = vmatpush1.xpose.msra.mxu0 0.0
          %6696 = vmatprep.subr.mxu0 0.0
          %6697 = vmatpush1.xpose.msra.mxu0 0.0
          %6698 = vmatprep.subr.mxu0 0.0
          %6699 = vmatpush1.xpose.msra.mxu0 0.0
          %6700 = vmatprep.subr.mxu0 0.0
          %6701 = vmatpush1.xpose.msra.mxu0 0.0
          %6702 = vmatprep.subr.mxu0 0.0
          %6703 = vmatpush1.xpose.msra.mxu0 0.0
          %6704 = vmatprep.subr.mxu0 0.0
          %6705 = vmatpush1.xpose.msra.mxu0 0.0
          %6706 = vmatprep.subr.mxu0 0.0
          %6707 = vmatpush1.xpose.msra.mxu0 0.0
          %6708 = vmatprep.mubr.f32.mxu0 0.0
          %6709 = vmatmul.mubr.f32.gmra.mrb[0].mxu0 %v878
          %v6710 = vpop.f32.mrb[0].mxu0
          %v6711 = vadd.f32 0.0, %v6710
          %v6712 = vpop.f32.mrb[0].mxu0
          %6713 = vdwg.mxu0
          %v6714 = vmul.f32 %v6602, 2.0
          %v6715 = vmul.f32 %v6607, 2.0
          %v6716 = vmul.f32 %v6612, 2.0
          %v6717 = vmul.f32 %v6617, 2.0
          %v6718 = vmul.f32 %v6622, 2.0
          %v6719 = vmul.f32 %v6627, 2.0
          %v6720 = vmul.f32 %v6632, 2.0
          %v6721 = vmul.f32 %v6637, 2.0
          %v6722 = vlaneseq
          %v6723 = vshrl.u32 %v6722, 7
          %v6724 = vsub.s32 0, %v6723
          %v6725 = vrot.slane %v6711, %v6724
          %v6726 = vsub.f32 %v6725, %v6714
          %v6727 = vsub.f32 %v6725, %v6715
          %v6728 = vsub.f32 %v6725, %v6716
          %v6729 = vsub.f32 %v6725, %v6717
          %v6730 = vsub.f32 %v6725, %v6718
          %v6731 = vsub.f32 %v6725, %v6719
          %v6732 = vsub.f32 %v6725, %v6720
          %v6733 = vsub.f32 %v6725, %v6721
          %v6734 = vsel %vm973, %v6726, inf
          %6735 = vmin.xlane.f32.xlu0 %v6734
          %v6736 = vpop.xlane.xlu0 %6735
          %v6737 = vsel %vm973, %v6727, inf
          %6738 = vmin.xlane.f32.xlu0 %v6737
          %v6739 = vpop.xlane.xlu0 %6738
          %v6740 = vsel %vm973, %v6728, inf
          %6741 = vmin.xlane.f32.xlu0 %v6740
          %v6742 = vpop.xlane.xlu0 %6741
          %v6743 = vsel %vm973, %v6729, inf
          %6744 = vmin.xlane.f32.xlu0 %v6743
          %v6745 = vpop.xlane.xlu0 %6744
          %v6746 = vsel %vm973, %v6730, inf
          %6747 = vmin.xlane.f32.xlu0 %v6746
          %v6748 = vpop.xlane.xlu0 %6747
          %v6749 = vsel %vm973, %v6731, inf
          %6750 = vmin.xlane.f32.xlu0 %v6749
          %v6751 = vpop.xlane.xlu0 %6750
          %v6752 = vsel %vm973, %v6732, inf
          %6753 = vmin.xlane.f32.xlu0 %v6752
          %v6754 = vpop.xlane.xlu0 %6753
          %v6755 = vsel %vm973, %v6733, inf
          %6756 = vmin.xlane.f32.xlu0 %v6755
          %v6757 = vpop.xlane.xlu0 %6756
          %vm6758 = vcmp.le.f32.partialorder %v6726, %v6736
          %vm6759 = vcmp.le.f32.partialorder %v6727, %v6739
          %vm6760 = vcmp.le.f32.partialorder %v6728, %v6742
          %vm6761 = vcmp.le.f32.partialorder %v6729, %v6745
          %vm6762 = vcmp.le.f32.partialorder %v6730, %v6748
          %vm6763 = vcmp.le.f32.partialorder %v6731, %v6751
          %vm6764 = vcmp.le.f32.partialorder %v6732, %v6754
          %vm6765 = vcmp.le.f32.partialorder %v6733, %v6757
          %v6766 = vsel %vm6758, %v746, 8
          %v6767 = vsel %vm6759, %v746, 8
          %v6768 = vsel %vm6760, %v746, 8
          %v6769 = vsel %vm6761, %v746, 8
          %v6770 = vsel %vm6762, %v746, 8
          %v6771 = vsel %vm6763, %v746, 8
          %v6772 = vsel %vm6764, %v746, 8
          %v6773 = vsel %vm6765, %v746, 8
          %v6774 = vsel %vm973, %v6766, 2147483647
          %v6775 = vand.u32 %v6774, 65535
          %v6776 = vshra.s32 %v6774, 16
          %v6777 = vcvt.s32.f32 %v6775
          %v6778 = vcvt.s32.f32 %v6776
          %6779 = vmin.xlane.f32.xlu0 %v6778
          %v6780 = vpop.xlane.xlu0 %6779
          %vm6781 = vcmp.eq.f32.partialorder %v6778, %v6780
          %v6782 = vsel %vm6781, %v6777, inf
          %6783 = vmin.xlane.f32.xlu0 %v6782
          %v6784 = vpop.xlane.xlu0 %6783
          %v6785 = vcvt.f32.s32 %v6784
          %v6786 = vcvt.f32.s32 %v6780
          %v6787 = vshll.u32 %v6786, 16
          %v6788 = vadd.s32 %v6787, %v6785
          %v6789 = vsel %vm973, %v6767, 2147483647
          %v6790 = vand.u32 %v6789, 65535
          %v6791 = vshra.s32 %v6789, 16
          %v6792 = vcvt.s32.f32 %v6790
          %v6793 = vcvt.s32.f32 %v6791
          %6794 = vmin.xlane.f32.xlu0 %v6793
          %v6795 = vpop.xlane.xlu0 %6794
          %vm6796 = vcmp.eq.f32.partialorder %v6793, %v6795
          %v6797 = vsel %vm6796, %v6792, inf
          %6798 = vmin.xlane.f32.xlu0 %v6797
          %v6799 = vpop.xlane.xlu0 %6798
          %v6800 = vcvt.f32.s32 %v6799
          %v6801 = vcvt.f32.s32 %v6795
          %v6802 = vshll.u32 %v6801, 16
          %v6803 = vadd.s32 %v6802, %v6800
          %v6804 = vsel %vm973, %v6768, 2147483647
          %v6805 = vand.u32 %v6804, 65535
          %v6806 = vshra.s32 %v6804, 16
          %v6807 = vcvt.s32.f32 %v6805
          %v6808 = vcvt.s32.f32 %v6806
          %6809 = vmin.xlane.f32.xlu0 %v6808
          %v6810 = vpop.xlane.xlu0 %6809
          %vm6811 = vcmp.eq.f32.partialorder %v6808, %v6810
          %v6812 = vsel %vm6811, %v6807, inf
          %6813 = vmin.xlane.f32.xlu0 %v6812
          %v6814 = vpop.xlane.xlu0 %6813
          %v6815 = vcvt.f32.s32 %v6814
          %v6816 = vcvt.f32.s32 %v6810
          %v6817 = vshll.u32 %v6816, 16
          %v6818 = vadd.s32 %v6817, %v6815
          %v6819 = vsel %vm973, %v6769, 2147483647
          %v6820 = vand.u32 %v6819, 65535
          %v6821 = vshra.s32 %v6819, 16
          %v6822 = vcvt.s32.f32 %v6820
          %v6823 = vcvt.s32.f32 %v6821
          %6824 = vmin.xlane.f32.xlu0 %v6823
          %v6825 = vpop.xlane.xlu0 %6824
          %vm6826 = vcmp.eq.f32.partialorder %v6823, %v6825
          %v6827 = vsel %vm6826, %v6822, inf
          %6828 = vmin.xlane.f32.xlu0 %v6827
          %v6829 = vpop.xlane.xlu0 %6828
          %v6830 = vcvt.f32.s32 %v6829
          %v6831 = vcvt.f32.s32 %v6825
          %v6832 = vshll.u32 %v6831, 16
          %v6833 = vadd.s32 %v6832, %v6830
          %v6834 = vsel %vm973, %v6770, 2147483647
          %v6835 = vand.u32 %v6834, 65535
          %v6836 = vshra.s32 %v6834, 16
          %v6837 = vcvt.s32.f32 %v6835
          %v6838 = vcvt.s32.f32 %v6836
          %6839 = vmin.xlane.f32.xlu0 %v6838
          %v6840 = vpop.xlane.xlu0 %6839
          %vm6841 = vcmp.eq.f32.partialorder %v6838, %v6840
          %v6842 = vsel %vm6841, %v6837, inf
          %6843 = vmin.xlane.f32.xlu0 %v6842
          %v6844 = vpop.xlane.xlu0 %6843
          %v6845 = vcvt.f32.s32 %v6844
          %v6846 = vcvt.f32.s32 %v6840
          %v6847 = vshll.u32 %v6846, 16
          %v6848 = vadd.s32 %v6847, %v6845
          %v6849 = vsel %vm973, %v6771, 2147483647
          %v6850 = vand.u32 %v6849, 65535
          %v6851 = vshra.s32 %v6849, 16
          %v6852 = vcvt.s32.f32 %v6850
          %v6853 = vcvt.s32.f32 %v6851
          %6854 = vmin.xlane.f32.xlu0 %v6853
          %v6855 = vpop.xlane.xlu0 %6854
          %vm6856 = vcmp.eq.f32.partialorder %v6853, %v6855
          %v6857 = vsel %vm6856, %v6852, inf
          %6858 = vmin.xlane.f32.xlu0 %v6857
          %v6859 = vpop.xlane.xlu0 %6858
          %v6860 = vcvt.f32.s32 %v6859
          %v6861 = vcvt.f32.s32 %v6855
          %v6862 = vshll.u32 %v6861, 16
          %v6863 = vadd.s32 %v6862, %v6860
          %v6864 = vsel %vm973, %v6772, 2147483647
          %v6865 = vand.u32 %v6864, 65535
          %v6866 = vshra.s32 %v6864, 16
          %v6867 = vcvt.s32.f32 %v6865
          %v6868 = vcvt.s32.f32 %v6866
          %6869 = vmin.xlane.f32.xlu0 %v6868
          %v6870 = vpop.xlane.xlu0 %6869
          %vm6871 = vcmp.eq.f32.partialorder %v6868, %v6870
          %v6872 = vsel %vm6871, %v6867, inf
          %6873 = vmin.xlane.f32.xlu0 %v6872
          %v6874 = vpop.xlane.xlu0 %6873
          %v6875 = vcvt.f32.s32 %v6874
          %v6876 = vcvt.f32.s32 %v6870
          %v6877 = vshll.u32 %v6876, 16
          %v6878 = vadd.s32 %v6877, %v6875
          %v6879 = vsel %vm973, %v6773, 2147483647
          %v6880 = vand.u32 %v6879, 65535
          %v6881 = vshra.s32 %v6879, 16
          %v6882 = vcvt.s32.f32 %v6880
          %v6883 = vcvt.s32.f32 %v6881
          %6884 = vmin.xlane.f32.xlu0 %v6883
          %v6885 = vpop.xlane.xlu0 %6884
          %vm6886 = vcmp.eq.f32.partialorder %v6883, %v6885
          %v6887 = vsel %vm6886, %v6882, inf
          %6888 = vmin.xlane.f32.xlu0 %v6887
          %v6889 = vpop.xlane.xlu0 %6888
          %v6890 = vcvt.f32.s32 %v6889
          %v6891 = vcvt.f32.s32 %v6885
          %v6892 = vshll.u32 %v6891, 16
          %v6893 = vadd.s32 %v6892, %v6890
          %vm6894 = vcmp.eq.s32.totalorder %v746, %v6788
          %vm6895 = vcmp.eq.s32.totalorder %v746, %v6803
          %vm6896 = vcmp.eq.s32.totalorder %v746, %v6818
          %vm6897 = vcmp.eq.s32.totalorder %v746, %v6833
          %vm6898 = vcmp.eq.s32.totalorder %v746, %v6848
          %vm6899 = vcmp.eq.s32.totalorder %v746, %v6863
          %vm6900 = vcmp.eq.s32.totalorder %v746, %v6878
          %vm6901 = vcmp.eq.s32.totalorder %v746, %v6893
          %v6902 = vsel %vm6894, 1, 0
          %v6903 = vsel %vm6895, 1, 0
          %v6904 = vsel %vm6896, 1, 0
          %v6905 = vsel %vm6897, 1, 0
          %v6906 = vsel %vm6898, 1, 0
          %v6907 = vsel %vm6899, 1, 0
          %v6908 = vsel %vm6900, 1, 0
          %v6909 = vsel %vm6901, 1, 0
          %v6910 = vcvt.s32.f32 %v6902
          %v6911 = vcvt.s32.f32 %v6903
          %v6912 = vcvt.s32.f32 %v6904
          %v6913 = vcvt.s32.f32 %v6905
          %v6914 = vcvt.s32.f32 %v6906
          %v6915 = vcvt.s32.f32 %v6907
          %v6916 = vcvt.s32.f32 %v6908
          %v6917 = vcvt.s32.f32 %v6909
          %6918 = vst.msk [vmem:[%s246] sm:$0xff] %vm973, %v6910
          %6919 = vst.msk [vmem:[%s246 + $0x8] sm:$0xff] %vm973, %v6911
          %6920 = vst.msk [vmem:[%s246 + $0x10] sm:$0xff] %vm973, %v6912
          %6921 = vst.msk [vmem:[%s246 + $0x18] sm:$0xff] %vm973, %v6913
          %6922 = vst.msk [vmem:[%s246 + $0x20] sm:$0xff] %vm973, %v6914
          %6923 = vst.msk [vmem:[%s246 + $0x28] sm:$0xff] %vm973, %v6915
          %6924 = vst.msk [vmem:[%s246 + $0x30] sm:$0xff] %vm973, %v6916
          %6925 = vst.msk [vmem:[%s246 + $0x38] sm:$0xff] %vm973, %v6917
        $region44: #{neural_quickshift_groups.2} parent=31 // pred_fallthru
          _
        %p6926 = scmp.lt.s32.totalorder %s19, 1
        %s6927 = scalar_select %p6926, %s19, 1
        %s6928 = smul.addr %s6927, 8
        %s6929 = smul.addr %s6928, 8
        %s6930 = scalar_lea.vmem %s3, %s6929
        // Predicated region
        $region45: #{neural_quickshift_groups.2} parent=31 // pred_check
          %p6931 = pneg %p122
        $region46: #{neural_quickshift_groups.2} parent=31 // pred_check_branch
          %6933 = sbr.rel (%p6931) target = $region48
        $region47: #{neural_quickshift_groups.2} parent=31 // pred_region
          _
        $region48: #{neural_quickshift_groups.2} parent=31 // pred_fallthru
          _
      $region32: #{neural_quickshift_groups.2} parent=5 // pred_fallthru
        _
      %p6934 = scmp.le.s32.totalorder 2, %s10
      // Predicated region
      $region49: #{neural_quickshift_groups.2} parent=5 // pred_check
        %p6935 = pneg %p6934
      $region50: #{neural_quickshift_groups.2} parent=5 // pred_check_branch
        %6937 = sbr.rel (%p6935) target = $region52
      $region51: #{neural_quickshift_groups.2} parent=5 // pred_region
        %s6938 = ssub.s32 %s10, 2
        // Predicated region
        $region53: #{neural_quickshift_groups.2} parent=51 // pred_check
          %p6939 = pneg %p128
        $region54: #{neural_quickshift_groups.2} parent=51 // pred_check_branch
          %6941 = sbr.rel (%p6939) target = $region56
        $region55: #{neural_quickshift_groups.2} parent=51 // pred_region
          %p6942 = scmp.lt.s32.totalorder %s21, 1
          %s6943 = scalar_select %p6942, %s21, 1
          %s6944 = smul.addr %s6943, 8
          %s6945 = smul.addr %s6944, 8
          %s6946 = scalar_lea.vmem %s3, %s6945
        $region56: #{neural_quickshift_groups.2} parent=51 // pred_fallthru
          _
      $region52: #{neural_quickshift_groups.2} parent=5 // pred_fallthru
        _
    $region6: #{neural_quickshift_groups.2} parent=1 // loop_footer
      %s14 = sadd.s32 1, %s10
    $region7: #{neural_quickshift_groups.2} parent=1 // loop_footer_branch
      %9 = sbr.rel target = $region3
    $region8: #{neural_quickshift_groups.2} parent=1 // loop_exit
      _
    %6947 = vsyncpa [#allocation4], 1
    %s6948 = scalar_lea.sflag [#allocation4], 1
    %6949 = vsyncpa %s6948, 1

</llo_original>
